<compile_context>
chip_gen: v7x
topology: tpu7x:2x2x1
jax: 0.10.0
libtpu: 0.0.40
codegen_flags: <defaults>
</compile_context>

<pallas_src>
import math
from functools import partial

import numpy as np
import jax
import jax.numpy as jnp
from jax.experimental import pallas as pl
from jax.experimental.pallas import tpu as pltpu

SQRT2 = math.sqrt(2.0)
RGB_PAD = 128   # ToRGB out-channel padding for lane-dense stores
WL = 8          # left (and right) sublane-aligned W padding of the activation


# ----------------------------------------------------------------------------
# Fused Pallas kernel: one (batch, layer) grid step
# ----------------------------------------------------------------------------
def _refine_rdr_kernel(x_ref, sconv_ref, srgb_ref, demod_ref, w_ref, noise_ref,
                       bias_ref, rgbw_ref, rgbb_ref, o_ref, xpad, xsh,
                       *, H, W, K, TM):
    """
    x_ref     : (1, H, W, C)        f32   input feature map (batch b)
    sconv_ref : (1, 1, 1, C)        f32   conv modulation style (layer l)
    srgb_ref  : (1, 1, C)           f32   ToRGB modulation style (batch b)
    demod_ref : (1, 1, 1, C)        f32   demodulation coeffs (batch b, layer l)
    w_ref     : (1, K, K*C, C)      bf16  scale*weight, contraction = kw*C+cin
    noise_ref : (1, H*W, 1)         f32   noise_weight * noise (layer l)
    bias_ref  : (1, 1, C)           f32   FusedLeakyReLU bias (layer l)
    rgbw_ref  : (C, RGB_PAD)        bf16  ToRGB 1x1 weight (zero-padded)
    rgbb_ref  : (1, RGB_PAD)        f32   ToRGB bias (zero-padded)
    o_ref     : (1, H*W, RGB_PAD)   f32
    xpad      : (H+2p, WL+W+8, C)   f32   persistent padded activation scratch
    xsh       : (Hp*W, K*C)         bf16  W-shifted modulated operand scratch
    """
    C = x_ref.shape[-1]
    pad = K // 2
    HW = H * W
    Hp = H + 2 * pad
    TMH = TM // W                 # H-rows covered by one M tile
    n_mt = HW // TM
    l = pl.program_id(1)
    n_layers = pl.num_programs(1)

    # ---- first layer step for this batch element: init padded activation ----
    @pl.when(l == 0)
    def _():
        # Zero only the halo (sublane-aligned strips), input into the interior.
        zcol = jnp.zeros((Hp, 8, C), jnp.float32)
        xpad[:, pl.ds(0, 8), :] = zcol                 # covers left halo col 7
        xpad[:, pl.ds(WL + W, 8), :] = zcol            # covers right halo col 24
        zrow = jnp.zeros((1, W, C), jnp.float32)
        xpad[pl.ds(0, 1), pl.ds(WL, W), :] = zrow      # top halo row
        xpad[pl.ds(Hp - 1, 1), pl.ds(WL, W), :] = zrow # bottom halo row
        xpad[pl.ds(pad, H), pl.ds(WL, W), :] = x_ref[0]

    # ---- StyledConv layer l: modulate + W-shifted operand scratch (bf16) ----
    style = sconv_ref[0, 0, 0, :]                                     # (C,)
    for kw in range(K):
        slab = xpad[:, pl.ds(WL - pad + kw, W), :]                    # (Hp,W,C)
        xsh[:, pl.ds(kw * C, C)] = (
            (slab * style[None, None, :]).astype(xsh.dtype).reshape(Hp * W, C))

    demod = demod_ref[0, 0, 0, :]                                      # (C,)
    bias = bias_ref[0, 0, :]                                           # (C,)
    for mi in range(n_mt):
        # Full-width (TM, C) f32 accumulator; K dots with contraction K*C.
        a0 = xsh[pl.ds((mi * TMH) * W, TM), :]                         # (TM,K*C)
        acc = jnp.dot(a0, w_ref[0, 0], preferred_element_type=jnp.float32)
        for kh in range(1, K):
            a = xsh[pl.ds((mi * TMH + kh) * W, TM), :]
            acc = acc + jnp.dot(a, w_ref[0, kh],
                                preferred_element_type=jnp.float32)
        # f32 epilogue: demodulate, noise, bias, fused leaky relu
        out = acc * demod[None, :]
        out = out + noise_ref[0, pl.ds(mi * TM, TM), :]                # (TM,1)
        out = out + bias[None, :]
        out = jnp.where(out >= 0.0, out, 0.2 * out) * SQRT2
        # Aligned store back into the interior of the padded buffer.
        xpad[pl.ds(pad + mi * TMH, TMH), pl.ds(WL, W), :] = (
            out.reshape(TMH, W, C))

    # ---- ToRGB after the last conv layer: 1x1 modulated conv, no demod ------
    @pl.when(l == n_layers - 1)
    def _():
        srgb = srgb_ref[0, 0, :]                                       # (C,)
        for mi in range(n_mt):
            xin = xpad[pl.ds(pad + mi * TMH, TMH), pl.ds(WL, W), :]    # (TMH,W,C)
            xs = (xin * srgb[None, None, :]).astype(rgbw_ref.dtype)
            xs = xs.reshape(TM, C)
            rgb = jnp.dot(xs, rgbw_ref[...], preferred_element_type=jnp.float32)
            o_ref[0, pl.ds(mi * TM, TM), :] = rgb + rgbb_ref[...]


# ----------------------------------------------------------------------------
# One-time weight preparation (hoisted out of the per-call path)
# ----------------------------------------------------------------------------
def prepare_refine_rdr(params, cfg, compute_dtype=jnp.bfloat16):
    C, K, n = cfg['C'], cfg['K'], cfg['n']
    size, imc = cfg['size'], cfg['im_channel']
    scale = 1.0 / math.sqrt(C * K * K)

    w_taps, wsq, noise, act_bias, mod_w, mod_b = [], [], [], [], [], []
    for p in params['convs']:
        w = scale * p['conv_w']                                # (Cout,Cin,K,K)
        wt = jnp.transpose(w, (2, 3, 1, 0))                    # (kh,kw,Cin,Cout)
        w_taps.append(wt.reshape(K, K * C, C))                 # contraction=kw*C+cin
        wsq.append(jnp.transpose(jnp.sum(w * w, axis=(2, 3)), (1, 0)))  # (Cin,Cout)
        noise.append((p['noise_w'] * p['noise']).reshape(size * size, 1))
        act_bias.append(p['act_bias'].reshape(1, C))
        mod_w.append(p['mod_w'])
        mod_b.append(p['mod_b'])

    pr = params['to_rgb']
    rgb_scale = 1.0 / math.sqrt(C)                             # 1x1 kernel
    rgb_w = rgb_scale * pr['conv_w'].reshape(imc, C).T         # (C, imc)
    rgb_w = jnp.pad(rgb_w, ((0, 0), (0, RGB_PAD - imc)))
    rgb_b = jnp.pad(pr['bias'].reshape(1, imc), ((0, 0), (0, RGB_PAD - imc)))

    return dict(
        w_taps=jnp.stack(w_taps).astype(compute_dtype),   # (n, K, K*C, C)
        wsq=jnp.stack(wsq),                                # (n, Cin, Cout) f32
        noise=jnp.stack(noise).astype(jnp.float32),        # (n, H*W, 1)
        act_bias=jnp.stack(act_bias).astype(jnp.float32),  # (n, 1, C)
        mod_w=jnp.stack(mod_w),                            # (n, C, sd)
        mod_b=jnp.stack(mod_b),                            # (n, C)
        rgb_mod_w=pr['mod_w'], rgb_mod_b=pr['mod_b'],
        rgb_w=rgb_w.astype(compute_dtype),                 # (C, RGB_PAD)
        rgb_b=rgb_b.astype(jnp.float32),                   # (1, RGB_PAD)
    )


# ----------------------------------------------------------------------------
# RefineRdr forward: tiny plain-JAX glue + one fused pallas_call
# ----------------------------------------------------------------------------
def refine_rdr_forward(x_nhwc, styles, prepped, cfg):
    B, H, W, C = x_nhwc.shape
    K, sd, imc, n = cfg['K'], cfg['style_dim'], cfg['im_channel'], cfg['n']
    HW = H * W
    TM = 128
    pad = K // 2
    Hp = H + 2 * pad
    WP = WL + W + 8                       # sublane-aligned interior at offset WL
    assert HW % TM == 0 and TM % W == 0 and C % 128 == 0
    assert W % 8 == 0 and WL >= pad and K % 2 == 1
    compute_dtype = prepped['w_taps'].dtype

    lin_scale = 1.0 / math.sqrt(sd)
    # EqualLinear modulation for the n conv layers + ToRGB (tiny matmuls)
    s_conv = (jnp.einsum('bs,lcs->blc', styles, prepped['mod_w']) * lin_scale
              + prepped['mod_b'][None])                              # (B, n, C)
    s_rgb = (styles @ (prepped['rgb_mod_w'] * lin_scale).T
             + prepped['rgb_mod_b'])[:, None, :]                     # (B, 1, C)

    # demodulation: rsqrt(sum_ic style^2 * sum_kk (scale*W)^2 + eps)
    demod = jax.lax.rsqrt(
        jnp.einsum('blc,lco->blo', s_conv * s_conv, prepped['wsq']) + 1e-8)

    # Per-layer-blocked small tensors: layer axis leading, last two dims full.
    s_conv4 = jnp.transpose(s_conv, (1, 0, 2))[:, :, None, :]        # (n,B,1,C)
    demod4 = jnp.transpose(demod, (1, 0, 2))[:, :, None, :]          # (n,B,1,C)

    kernel = partial(_refine_rdr_kernel, H=H, W=W, K=K, TM=TM)
    out = pl.pallas_call(
        kernel,
        out_shape=jax.ShapeDtypeStruct((B, HW, RGB_PAD), jnp.float32),
        grid_spec=pltpu.PrefetchScalarGridSpec(
            num_scalar_prefetch=0,
            grid=(B, n),
            in_specs=[
                pl.BlockSpec((1, H, W, C), lambda b, l: (b, 0, 0, 0)),
                pl.BlockSpec((1, 1, 1, C), lambda b, l: (l, b, 0, 0)),
                pl.BlockSpec((1, 1, C), lambda b, l: (b, 0, 0)),
                pl.BlockSpec((1, 1, 1, C), lambda b, l: (l, b, 0, 0)),
                pl.BlockSpec((1, K, K * C, C), lambda b, l: (l, 0, 0, 0)),
                pl.BlockSpec((1, HW, 1), lambda b, l: (l, 0, 0)),
                pl.BlockSpec((1, 1, C), lambda b, l: (l, 0, 0)),
                pl.BlockSpec((C, RGB_PAD), lambda b, l: (0, 0)),
                pl.BlockSpec((1, RGB_PAD), lambda b, l: (0, 0)),
            ],
            out_specs=pl.BlockSpec((1, HW, RGB_PAD), lambda b, l: (b, 0, 0)),
            scratch_shapes=[
                pltpu.VMEM((Hp, WP, C), jnp.float32),        # padded activation
                pltpu.VMEM((Hp * W, K * C), compute_dtype),  # W-shifted operands
            ],
        ),
        compiler_params=pltpu.CompilerParams(
            dimension_semantics=("parallel", "arbitrary"),
            vmem_limit_bytes=32 * 1024 * 1024),
    )(x_nhwc, s_conv4, s_rgb, demod4, prepped['w_taps'], prepped['noise'],
      prepped['act_bias'], prepped['rgb_w'], prepped['rgb_b'])

    return out.reshape(B, H, W, RGB_PAD)[:, :, :, :imc]


# ----------------------------------------------------------------------------
# Pure-JAX reference (mirrors the PyTorch module, NCHW) for validation
# ----------------------------------------------------------------------------
def reference_forward(input_feat_nhwc, styles, params, cfg):
    K, sd, imc = cfg['K'], cfg['style_dim'], cfg['im_channel']
    x = jnp.transpose(input_feat_nhwc, (0, 3, 1, 2))   # NCHW
    B, C = x.shape[0], x.shape[1]

    def per_batch_conv(inp, w, pad):
        outs = []
        for b in range(B):
            outs.append(jax.lax.conv_general_dilated(
                inp[b:b + 1], w[b], (1, 1), ((pad, pad), (pad, pad)),
                dimension_numbers=('NCHW', 'OIHW', 'NCHW'),
                precision=jax.lax.Precision.HIGHEST))
        return jnp.concatenate(outs, 0)

    for i in range(cfg['n']):
        p = params['convs'][i]
        s = styles @ (p['mod_w'] * (1.0 / math.sqrt(sd))).T + p['mod_b']
        scale = 1.0 / math.sqrt(C * K * K)
        w = scale * p['conv_w'][None] * s[:, None, :, None, None]
        demod = jax.lax.rsqrt(jnp.sum(w ** 2, axis=(2, 3, 4)) + 1e-8)
        w = w * demod[:, :, None, None, None]
        out = per_batch_conv(x, w, K // 2)
        out = out + p['noise_w'] * p['noise'][None, None, :, :]
        pre = out + p['act_bias'][None, :, None, None]
        x = jnp.where(pre >= 0, pre, 0.2 * pre) * math.sqrt(2.0)

    pr = params['to_rgb']
    s = styles @ (pr['mod_w'] * (1.0 / math.sqrt(sd))).T + pr['mod_b']
    scale = 1.0 / math.sqrt(C)
    w = scale * pr['conv_w'][None] * s[:, None, :, None, None]
    img = per_batch_conv(x, w, 0) + pr['bias'][None, :, None, None]
    return jnp.transpose(img, (0, 2, 3, 1))


# ----------------------------------------------------------------------------
# Deterministic parameter init (shapes per the module __init__)
# ----------------------------------------------------------------------------
def init_params(key, cfg):
    C, K, sd = cfg['C'], cfg['K'], cfg['style_dim']
    size, imc = cfg['size'], cfg['im_channel']
    keys = iter(jax.random.split(key, 6 * cfg['n'] + 4))
    convs = []
    for _ in range(cfg['n']):
        convs.append(dict(
            conv_w=jax.random.normal(next(keys), (C, C, K, K), jnp.float32),
            mod_w=jax.random.normal(next(keys), (C, sd), jnp.float32),
            mod_b=jnp.ones((C,), jnp.float32),               # bias_init=1
            # NoiseInjection weight is zero-init in torch; small nonzero here
            # so the noise path is actually exercised.
            noise_w=0.1 * jax.random.normal(next(keys), (), jnp.float32),
            act_bias=0.1 * jax.random.normal(next(keys), (C,), jnp.float32),
            noise=jax.random.normal(next(keys), (size, size), jnp.float32),
        ))
    to_rgb = dict(
        conv_w=jax.random.normal(next(keys), (imc, C, 1, 1), jnp.float32),
        mod_w=jax.random.normal(next(keys), (C, sd), jnp.float32),
        mod_b=jnp.ones((C,), jnp.float32),
        bias=0.1 * jax.random.normal(next(keys), (imc,), jnp.float32),
    )
    return dict(convs=convs, to_rgb=to_rgb)


# ----------------------------------------------------------------------------
if __name__ == "__main__":
    # RefineRdr(style_dim=32, n_styledconv=2, kernal_size=3, im_channel=3,
    #           size=16)  -> channels[16] = 256
    cfg = dict(n=2, K=3, style_dim=32, size=16, C=256, im_channel=3)
    B = 2

    key = jax.random.PRNGKey(0)
    k_in, k_sty, k_par = jax.random.split(key, 3)
    input_feat = jax.random.normal(
        k_in, (B, cfg['size'], cfg['size'], cfg['C']), jnp.float32)  # NHWC
    styles = jax.random.normal(k_sty, (B, cfg['style_dim']), jnp.float32)
    params = init_params(k_par, cfg)

    ref = jax.block_until_ready(
        reference_forward(input_feat, styles, params, cfg))

    fwd = jax.jit(lambda x, s, p: refine_rdr_forward(x, s, p, cfg))

    # f32 compute path: tight check
    prepped_f32 = prepare_refine_rdr(params, cfg, compute_dtype=jnp.float32)
    img_f32 = jax.block_until_ready(fwd(input_feat, styles, prepped_f32))
    assert img_f32.shape == (B, cfg['size'], cfg['size'], cfg['im_channel'])
    np.testing.assert_allclose(np.asarray(img_f32), np.asarray(ref),
                               rtol=1e-2, atol=1e-2)

    # bf16 matmul-operand path (production): looser check
    prepped_bf16 = prepare_refine_rdr(params, cfg, compute_dtype=jnp.bfloat16)
    img_bf16 = jax.block_until_ready(fwd(input_feat, styles, prepped_bf16))
    np.testing.assert_allclose(np.asarray(img_bf16), np.asarray(ref),
                               rtol=1e-1, atol=1e-1)

    print("KERNEL_OK")
</pallas_src>

<mosaic_0001>
module attributes {stable_mosaic.version = 11 : i64} {
  func.func @_refine_rdr_kernel(%arg0: i32, %arg1: i32, %arg2: memref<1x16x16x256xf32, #tpu.memory_space<vmem>>, %arg3: memref<1x1x1x256xf32, #tpu.memory_space<vmem>>, %arg4: memref<1x1x256xf32, #tpu.memory_space<vmem>>, %arg5: memref<1x1x1x256xf32, #tpu.memory_space<vmem>>, %arg6: memref<1x3x768x256xf32, #tpu.memory_space<vmem>>, %arg7: memref<1x256x1xf32, #tpu.memory_space<vmem>>, %arg8: memref<1x1x256xf32, #tpu.memory_space<vmem>>, %arg9: memref<256x128xf32, #tpu.memory_space<vmem>>, %arg10: memref<1x128xf32, #tpu.memory_space<vmem>>, %arg11: memref<1x256x128xf32, #tpu.memory_space<vmem>>, %arg12: memref<18x32x256xf32, #tpu.memory_space<vmem>>, %arg13: memref<288x768xf32, #tpu.memory_space<vmem>>) attributes {dimension_semantics = [#tpu.dimension_semantics<parallel>, #tpu.dimension_semantics<arbitrary>], iteration_bounds = array<i64: 2, 2>, scalar_prefetch = 0 : i64, scratch_operands = 2 : i64, tpu.core_type = #tpu.core_type<tc>, window_params = [{transform_indices = @transform_0, window_bounds = array<i64: 1, 16, 16, 256>}, {transform_indices = @transform_1, window_bounds = array<i64: 1, 1, 1, 256>}, {transform_indices = @transform_2, window_bounds = array<i64: 1, 1, 256>}, {transform_indices = @transform_3, window_bounds = array<i64: 1, 1, 1, 256>}, {transform_indices = @transform_4, window_bounds = array<i64: 1, 3, 768, 256>}, {transform_indices = @transform_5, window_bounds = array<i64: 1, 256, 1>}, {transform_indices = @transform_6, window_bounds = array<i64: 1, 1, 256>}, {pipeline_mode = #tpu.pipeline_mode<synchronous>, transform_indices = @transform_7, window_bounds = array<i64: 256, 128>}, {pipeline_mode = #tpu.pipeline_mode<synchronous>, transform_indices = @transform_8, window_bounds = array<i64: 1, 128>}, {transform_indices = @transform_9, window_bounds = array<i64: 1, 256, 128>}]} {
    %c0_i32 = arith.constant 0 : i32
    %0 = arith.cmpi eq, %arg1, %c0_i32 : i32
    %1 = arith.extui %0 : i1 to i32
    %c0_i32_0 = arith.constant 0 : i32
    %2 = arith.cmpi ne, %1, %c0_i32_0 : i32
    scf.if %2 {
      %cst_74 = arith.constant 0.000000e+00 : f32
      %96 = vector.broadcast %cst_74 : f32 to vector<18x8x256xf32>
      %c0_75 = arith.constant 0 : index
      %c0_76 = arith.constant 0 : index
      %c0_77 = arith.constant 0 : index
      %97 = vector.load %arg12[%c0_75, %c0_76, %c0_77] : memref<18x32x256xf32, #tpu.memory_space<vmem>>, vector<18x8x256xf32>
      tpu.vector_store %arg12[%c0_75, %c0_76, %c0_77], %96 {strides = array<i32>} : memref<18x32x256xf32, #tpu.memory_space<vmem>>, vector<18x8x256xf32>,
      %c0_78 = arith.constant 0 : index
      %c24 = arith.constant 24 : index
      %c0_79 = arith.constant 0 : index
      %98 = vector.load %arg12[%c0_78, %c24, %c0_79] : memref<18x32x256xf32, #tpu.memory_space<vmem>>, vector<18x8x256xf32>
      tpu.vector_store %arg12[%c0_78, %c24, %c0_79], %96 {strides = array<i32>} : memref<18x32x256xf32, #tpu.memory_space<vmem>>, vector<18x8x256xf32>,
      %cst_80 = arith.constant 0.000000e+00 : f32
      %99 = vector.broadcast %cst_80 : f32 to vector<1x16x256xf32>
      %c0_81 = arith.constant 0 : index
      %c8_82 = arith.constant 8 : index
      %c0_83 = arith.constant 0 : index
      %100 = vector.load %arg12[%c0_81, %c8_82, %c0_83] : memref<18x32x256xf32, #tpu.memory_space<vmem>>, vector<1x16x256xf32>
      tpu.vector_store %arg12[%c0_81, %c8_82, %c0_83], %99 {strides = array<i32>} : memref<18x32x256xf32, #tpu.memory_space<vmem>>, vector<1x16x256xf32>,
      %c17 = arith.constant 17 : index
      %c8_84 = arith.constant 8 : index
      %c0_85 = arith.constant 0 : index
      %101 = vector.load %arg12[%c17, %c8_84, %c0_85] : memref<18x32x256xf32, #tpu.memory_space<vmem>>, vector<1x16x256xf32>
      tpu.vector_store %arg12[%c17, %c8_84, %c0_85], %99 {strides = array<i32>} : memref<18x32x256xf32, #tpu.memory_space<vmem>>, vector<1x16x256xf32>,
      %c0_86 = arith.constant 0 : index
      %c0_87 = arith.constant 0 : index
      %c0_88 = arith.constant 0 : index
      %c0_89 = arith.constant 0 : index
      %102 = vector.load %arg2[%c0_86, %c0_87, %c0_88, %c0_89] : memref<1x16x16x256xf32, #tpu.memory_space<vmem>>, vector<1x16x16x256xf32>
      %103 = vector.shape_cast %102 : vector<1x16x16x256xf32> to vector<16x16x256xf32>
      %c1_90 = arith.constant 1 : index
      %c8_91 = arith.constant 8 : index
      %c0_92 = arith.constant 0 : index
      %104 = vector.load %arg12[%c1_90, %c8_91, %c0_92] : memref<18x32x256xf32, #tpu.memory_space<vmem>>, vector<16x16x256xf32>
      tpu.vector_store %arg12[%c1_90, %c8_91, %c0_92], %103 {strides = array<i32>} : memref<18x32x256xf32, #tpu.memory_space<vmem>>, vector<16x16x256xf32>,
    } else {
    }
    %c0 = arith.constant 0 : index
    %c0_1 = arith.constant 0 : index
    %c0_2 = arith.constant 0 : index
    %c0_3 = arith.constant 0 : index
    %3 = vector.load %arg3[%c0, %c0_1, %c0_2, %c0_3] : memref<1x1x1x256xf32, #tpu.memory_space<vmem>>, vector<1x1x1x256xf32>
    %4 = vector.shape_cast %3 : vector<1x1x1x256xf32> to vector<256xf32>
    %c0_4 = arith.constant 0 : index
    %c7 = arith.constant 7 : index
    %c0_5 = arith.constant 0 : index
    %5 = vector.load %arg12[%c0_4, %c7, %c0_5] : memref<18x32x256xf32, #tpu.memory_space<vmem>>, vector<18x16x256xf32>
    %6 = vector.shape_cast %4 : vector<256xf32> to vector<1x1x256xf32>
    %7 = vector.broadcast %6 : vector<1x1x256xf32> to vector<18x16x256xf32>
    %8 = arith.mulf %5, %7 : vector<18x16x256xf32>
    %9 = vector.shape_cast %8 : vector<18x16x256xf32> to vector<288x256xf32>
    %c0_6 = arith.constant 0 : index
    %c0_7 = arith.constant 0 : index
    %10 = vector.load %arg13[%c0_6, %c0_7] : memref<288x768xf32, #tpu.memory_space<vmem>>, vector<288x256xf32>
    tpu.vector_store %arg13[%c0_6, %c0_7], %9 {strides = array<i32>} : memref<288x768xf32, #tpu.memory_space<vmem>>, vector<288x256xf32>,
    %c0_8 = arith.constant 0 : index
    %c8 = arith.constant 8 : index
    %c0_9 = arith.constant 0 : index
    %11 = vector.load %arg12[%c0_8, %c8, %c0_9] : memref<18x32x256xf32, #tpu.memory_space<vmem>>, vector<18x16x256xf32>
    %12 = vector.shape_cast %4 : vector<256xf32> to vector<1x1x256xf32>
    %13 = vector.broadcast %12 : vector<1x1x256xf32> to vector<18x16x256xf32>
    %14 = arith.mulf %11, %13 : vector<18x16x256xf32>
    %15 = vector.shape_cast %14 : vector<18x16x256xf32> to vector<288x256xf32>
    %c0_10 = arith.constant 0 : index
    %c256 = arith.constant 256 : index
    %16 = vector.load %arg13[%c0_10, %c256] : memref<288x768xf32, #tpu.memory_space<vmem>>, vector<288x256xf32>
    tpu.vector_store %arg13[%c0_10, %c256], %15 {strides = array<i32>} : memref<288x768xf32, #tpu.memory_space<vmem>>, vector<288x256xf32>,
    %c0_11 = arith.constant 0 : index
    %c9 = arith.constant 9 : index
    %c0_12 = arith.constant 0 : index
    %17 = vector.load %arg12[%c0_11, %c9, %c0_12] : memref<18x32x256xf32, #tpu.memory_space<vmem>>, vector<18x16x256xf32>
    %18 = vector.shape_cast %4 : vector<256xf32> to vector<1x1x256xf32>
    %19 = vector.broadcast %18 : vector<1x1x256xf32> to vector<18x16x256xf32>
    %20 = arith.mulf %17, %19 : vector<18x16x256xf32>
    %21 = vector.shape_cast %20 : vector<18x16x256xf32> to vector<288x256xf32>
    %c0_13 = arith.constant 0 : index
    %c512 = arith.constant 512 : index
    %22 = vector.load %arg13[%c0_13, %c512] : memref<288x768xf32, #tpu.memory_space<vmem>>, vector<288x256xf32>
    tpu.vector_store %arg13[%c0_13, %c512], %21 {strides = array<i32>} : memref<288x768xf32, #tpu.memory_space<vmem>>, vector<288x256xf32>,
    %c0_14 = arith.constant 0 : index
    %c0_15 = arith.constant 0 : index
    %c0_16 = arith.constant 0 : index
    %c0_17 = arith.constant 0 : index
    %23 = vector.load %arg5[%c0_14, %c0_15, %c0_16, %c0_17] : memref<1x1x1x256xf32, #tpu.memory_space<vmem>>, vector<1x1x1x256xf32>
    %24 = vector.shape_cast %23 : vector<1x1x1x256xf32> to vector<256xf32>
    %c0_18 = arith.constant 0 : index
    %c0_19 = arith.constant 0 : index
    %c0_20 = arith.constant 0 : index
    %25 = vector.load %arg8[%c0_18, %c0_19, %c0_20] : memref<1x1x256xf32, #tpu.memory_space<vmem>>, vector<1x1x256xf32>
    %26 = vector.shape_cast %25 : vector<1x1x256xf32> to vector<256xf32>
    %c0_21 = arith.constant 0 : index
    %c0_22 = arith.constant 0 : index
    %27 = vector.load %arg13[%c0_21, %c0_22] : memref<288x768xf32, #tpu.memory_space<vmem>>, vector<128x768xf32>
    %c0_23 = arith.constant 0 : index
    %c0_24 = arith.constant 0 : index
    %c0_25 = arith.constant 0 : index
    %c0_26 = arith.constant 0 : index
    %28 = vector.load %arg6[%c0_23, %c0_24, %c0_25, %c0_26] : memref<1x3x768x256xf32, #tpu.memory_space<vmem>>, vector<1x1x768x256xf32>
    %29 = vector.shape_cast %28 : vector<1x1x768x256xf32> to vector<768x256xf32>
    %cst = arith.constant dense<0.000000e+00> : vector<128x256xf32>
    %30 = tpu.matmul %27, %29, %cst {dimension_numbers = #tpu.dot_dimension_numbers<[1], [0], [0], [1], [0, 0, 1, 1], [], []>} : vector<128x768xf32>, vector<768x256xf32>, vector<128x256xf32> -> vector<128x256xf32>
    %c16 = arith.constant 16 : index
    %c0_27 = arith.constant 0 : index
    %31 = vector.load %arg13[%c16, %c0_27] : memref<288x768xf32, #tpu.memory_space<vmem>>, vector<128x768xf32>
    %c0_28 = arith.constant 0 : index
    %c1 = arith.constant 1 : index
    %c0_29 = arith.constant 0 : index
    %c0_30 = arith.constant 0 : index
    %32 = vector.load %arg6[%c0_28, %c1, %c0_29, %c0_30] : memref<1x3x768x256xf32, #tpu.memory_space<vmem>>, vector<1x1x768x256xf32>
    %33 = vector.shape_cast %32 : vector<1x1x768x256xf32> to vector<768x256xf32>
    %cst_31 = arith.constant dense<0.000000e+00> : vector<128x256xf32>
    %34 = tpu.matmul %31, %33, %cst_31 {dimension_numbers = #tpu.dot_dimension_numbers<[1], [0], [0], [1], [0, 0, 1, 1], [], []>} : vector<128x768xf32>, vector<768x256xf32>, vector<128x256xf32> -> vector<128x256xf32>
    %35 = arith.addf %30, %34 : vector<128x256xf32>
    %c32 = arith.constant 32 : index
    %c0_32 = arith.constant 0 : index
    %36 = vector.load %arg13[%c32, %c0_32] : memref<288x768xf32, #tpu.memory_space<vmem>>, vector<128x768xf32>
    %c0_33 = arith.constant 0 : index
    %c2 = arith.constant 2 : index
    %c0_34 = arith.constant 0 : index
    %c0_35 = arith.constant 0 : index
    %37 = vector.load %arg6[%c0_33, %c2, %c0_34, %c0_35] : memref<1x3x768x256xf32, #tpu.memory_space<vmem>>, vector<1x1x768x256xf32>
    %38 = vector.shape_cast %37 : vector<1x1x768x256xf32> to vector<768x256xf32>
    %cst_36 = arith.constant dense<0.000000e+00> : vector<128x256xf32>
    %39 = tpu.matmul %36, %38, %cst_36 {dimension_numbers = #tpu.dot_dimension_numbers<[1], [0], [0], [1], [0, 0, 1, 1], [], []>} : vector<128x768xf32>, vector<768x256xf32>, vector<128x256xf32> -> vector<128x256xf32>
    %40 = arith.addf %35, %39 : vector<128x256xf32>
    %41 = vector.shape_cast %24 : vector<256xf32> to vector<1x256xf32>
    %42 = vector.broadcast %41 : vector<1x256xf32> to vector<128x256xf32>
    %43 = arith.mulf %40, %42 : vector<128x256xf32>
    %c0_37 = arith.constant 0 : index
    %c0_38 = arith.constant 0 : index
    %c0_39 = arith.constant 0 : index
    %44 = vector.load %arg7[%c0_37, %c0_38, %c0_39] : memref<1x256x1xf32, #tpu.memory_space<vmem>>, vector<1x128x1xf32>
    %45 = vector.shape_cast %44 : vector<1x128x1xf32> to vector<128x1xf32>
    %46 = vector.broadcast %45 : vector<128x1xf32> to vector<128x256xf32>
    %47 = arith.addf %43, %46 : vector<128x256xf32>
    %48 = vector.shape_cast %26 : vector<256xf32> to vector<1x256xf32>
    %49 = vector.broadcast %48 : vector<1x256xf32> to vector<128x256xf32>
    %50 = arith.addf %47, %49 : vector<128x256xf32>
    %cst_40 = arith.constant 0.000000e+00 : f32
    %51 = vector.broadcast %cst_40 : f32 to vector<128x256xf32>
    %52 = arith.cmpf oge, %50, %51 : vector<128x256xf32>
    %cst_41 = arith.constant 2.000000e-01 : f32
    %53 = vector.broadcast %cst_41 : f32 to vector<128x256xf32>
    %54 = arith.mulf %53, %50 : vector<128x256xf32>
    %55 = arith.select %52, %50, %54 : vector<128x256xi1>, vector<128x256xf32>
    %cst_42 = arith.constant 1.41421354 : f32
    %56 = vector.broadcast %cst_42 : f32 to vector<128x256xf32>
    %57 = arith.mulf %55, %56 : vector<128x256xf32>
    %58 = vector.shape_cast %57 : vector<128x256xf32> to vector<8x16x256xf32>
    %c1_43 = arith.constant 1 : index
    %c8_44 = arith.constant 8 : index
    %c0_45 = arith.constant 0 : index
    %59 = vector.load %arg12[%c1_43, %c8_44, %c0_45] : memref<18x32x256xf32, #tpu.memory_space<vmem>>, vector<8x16x256xf32>
    tpu.vector_store %arg12[%c1_43, %c8_44, %c0_45], %58 {strides = array<i32>} : memref<18x32x256xf32, #tpu.memory_space<vmem>>, vector<8x16x256xf32>,
    %c128 = arith.constant 128 : index
    %c0_46 = arith.constant 0 : index
    %60 = vector.load %arg13[%c128, %c0_46] : memref<288x768xf32, #tpu.memory_space<vmem>>, vector<128x768xf32>
    %c0_47 = arith.constant 0 : index
    %c0_48 = arith.constant 0 : index
    %c0_49 = arith.constant 0 : index
    %c0_50 = arith.constant 0 : index
    %61 = vector.load %arg6[%c0_47, %c0_48, %c0_49, %c0_50] : memref<1x3x768x256xf32, #tpu.memory_space<vmem>>, vector<1x1x768x256xf32>
    %62 = vector.shape_cast %61 : vector<1x1x768x256xf32> to vector<768x256xf32>
    %cst_51 = arith.constant dense<0.000000e+00> : vector<128x256xf32>
    %63 = tpu.matmul %60, %62, %cst_51 {dimension_numbers = #tpu.dot_dimension_numbers<[1], [0], [0], [1], [0, 0, 1, 1], [], []>} : vector<128x768xf32>, vector<768x256xf32>, vector<128x256xf32> -> vector<128x256xf32>
    %c144 = arith.constant 144 : index
    %c0_52 = arith.constant 0 : index
    %64 = vector.load %arg13[%c144, %c0_52] : memref<288x768xf32, #tpu.memory_space<vmem>>, vector<128x768xf32>
    %c0_53 = arith.constant 0 : index
    %c1_54 = arith.constant 1 : index
    %c0_55 = arith.constant 0 : index
    %c0_56 = arith.constant 0 : index
    %65 = vector.load %arg6[%c0_53, %c1_54, %c0_55, %c0_56] : memref<1x3x768x256xf32, #tpu.memory_space<vmem>>, vector<1x1x768x256xf32>
    %66 = vector.shape_cast %65 : vector<1x1x768x256xf32> to vector<768x256xf32>
    %cst_57 = arith.constant dense<0.000000e+00> : vector<128x256xf32>
    %67 = tpu.matmul %64, %66, %cst_57 {dimension_numbers = #tpu.dot_dimension_numbers<[1], [0], [0], [1], [0, 0, 1, 1], [], []>} : vector<128x768xf32>, vector<768x256xf32>, vector<128x256xf32> -> vector<128x256xf32>
    %68 = arith.addf %63, %67 : vector<128x256xf32>
    %c160 = arith.constant 160 : index
    %c0_58 = arith.constant 0 : index
    %69 = vector.load %arg13[%c160, %c0_58] : memref<288x768xf32, #tpu.memory_space<vmem>>, vector<128x768xf32>
    %c0_59 = arith.constant 0 : index
    %c2_60 = arith.constant 2 : index
    %c0_61 = arith.constant 0 : index
    %c0_62 = arith.constant 0 : index
    %70 = vector.load %arg6[%c0_59, %c2_60, %c0_61, %c0_62] : memref<1x3x768x256xf32, #tpu.memory_space<vmem>>, vector<1x1x768x256xf32>
    %71 = vector.shape_cast %70 : vector<1x1x768x256xf32> to vector<768x256xf32>
    %cst_63 = arith.constant dense<0.000000e+00> : vector<128x256xf32>
    %72 = tpu.matmul %69, %71, %cst_63 {dimension_numbers = #tpu.dot_dimension_numbers<[1], [0], [0], [1], [0, 0, 1, 1], [], []>} : vector<128x768xf32>, vector<768x256xf32>, vector<128x256xf32> -> vector<128x256xf32>
    %73 = arith.addf %68, %72 : vector<128x256xf32>
    %74 = vector.shape_cast %24 : vector<256xf32> to vector<1x256xf32>
    %75 = vector.broadcast %74 : vector<1x256xf32> to vector<128x256xf32>
    %76 = arith.mulf %73, %75 : vector<128x256xf32>
    %c0_64 = arith.constant 0 : index
    %c128_65 = arith.constant 128 : index
    %c0_66 = arith.constant 0 : index
    %77 = vector.load %arg7[%c0_64, %c128_65, %c0_66] : memref<1x256x1xf32, #tpu.memory_space<vmem>>, vector<1x128x1xf32>
    %78 = vector.shape_cast %77 : vector<1x128x1xf32> to vector<128x1xf32>
    %79 = vector.broadcast %78 : vector<128x1xf32> to vector<128x256xf32>
    %80 = arith.addf %76, %79 : vector<128x256xf32>
    %81 = vector.shape_cast %26 : vector<256xf32> to vector<1x256xf32>
    %82 = vector.broadcast %81 : vector<1x256xf32> to vector<128x256xf32>
    %83 = arith.addf %80, %82 : vector<128x256xf32>
    %cst_67 = arith.constant 0.000000e+00 : f32
    %84 = vector.broadcast %cst_67 : f32 to vector<128x256xf32>
    %85 = arith.cmpf oge, %83, %84 : vector<128x256xf32>
    %cst_68 = arith.constant 2.000000e-01 : f32
    %86 = vector.broadcast %cst_68 : f32 to vector<128x256xf32>
    %87 = arith.mulf %86, %83 : vector<128x256xf32>
    %88 = arith.select %85, %83, %87 : vector<128x256xi1>, vector<128x256xf32>
    %cst_69 = arith.constant 1.41421354 : f32
    %89 = vector.broadcast %cst_69 : f32 to vector<128x256xf32>
    %90 = arith.mulf %88, %89 : vector<128x256xf32>
    %91 = vector.shape_cast %90 : vector<128x256xf32> to vector<8x16x256xf32>
    %c9_70 = arith.constant 9 : index
    %c8_71 = arith.constant 8 : index
    %c0_72 = arith.constant 0 : index
    %92 = vector.load %arg12[%c9_70, %c8_71, %c0_72] : memref<18x32x256xf32, #tpu.memory_space<vmem>>, vector<8x16x256xf32>
    tpu.vector_store %arg12[%c9_70, %c8_71, %c0_72], %91 {strides = array<i32>} : memref<18x32x256xf32, #tpu.memory_space<vmem>>, vector<8x16x256xf32>,
    %c1_i32 = arith.constant 1 : i32
    %93 = arith.cmpi eq, %arg1, %c1_i32 : i32
    %94 = arith.extui %93 : i1 to i32
    %c0_i32_73 = arith.constant 0 : i32
    %95 = arith.cmpi ne, %94, %c0_i32_73 : i32
    scf.if %95 {
      %c0_74 = arith.constant 0 : index
      %c0_75 = arith.constant 0 : index
      %c0_76 = arith.constant 0 : index
      %96 = vector.load %arg4[%c0_74, %c0_75, %c0_76] : memref<1x1x256xf32, #tpu.memory_space<vmem>>, vector<1x1x256xf32>
      %97 = vector.shape_cast %96 : vector<1x1x256xf32> to vector<256xf32>
      %c1_77 = arith.constant 1 : index
      %c8_78 = arith.constant 8 : index
      %c0_79 = arith.constant 0 : index
      %98 = vector.load %arg12[%c1_77, %c8_78, %c0_79] : memref<18x32x256xf32, #tpu.memory_space<vmem>>, vector<8x16x256xf32>
      %99 = vector.shape_cast %97 : vector<256xf32> to vector<1x1x256xf32>
      %100 = vector.broadcast %99 : vector<1x1x256xf32> to vector<8x16x256xf32>
      %101 = arith.mulf %98, %100 : vector<8x16x256xf32>
      %102 = vector.shape_cast %101 : vector<8x16x256xf32> to vector<128x256xf32>
      %c0_80 = arith.constant 0 : index
      %c0_81 = arith.constant 0 : index
      %103 = vector.load %arg9[%c0_80, %c0_81] : memref<256x128xf32, #tpu.memory_space<vmem>>, vector<256x128xf32>
      %cst_82 = arith.constant dense<0.000000e+00> : vector<128x128xf32>
      %104 = tpu.matmul %102, %103, %cst_82 {dimension_numbers = #tpu.dot_dimension_numbers<[1], [0], [0], [1], [0, 0, 1, 1], [], []>} : vector<128x256xf32>, vector<256x128xf32>, vector<128x128xf32> -> vector<128x128xf32>
      %c0_83 = arith.constant 0 : index
      %c0_84 = arith.constant 0 : index
      %105 = vector.load %arg10[%c0_83, %c0_84] : memref<1x128xf32, #tpu.memory_space<vmem>>, vector<1x128xf32>
      %106 = vector.broadcast %105 : vector<1x128xf32> to vector<128x128xf32>
      %107 = arith.addf %104, %106 : vector<128x128xf32>
      %c0_85 = arith.constant 0 : index
      %c0_86 = arith.constant 0 : index
      %c0_87 = arith.constant 0 : index
      %108 = vector.load %arg11[%c0_85, %c0_86, %c0_87] : memref<1x256x128xf32, #tpu.memory_space<vmem>>, vector<1x128x128xf32>
      %109 = vector.shape_cast %108 : vector<1x128x128xf32> to vector<128x128xf32>
      %110 = vector.shape_cast %107 : vector<128x128xf32> to vector<1x128x128xf32>
      tpu.vector_store %arg11[%c0_85, %c0_86, %c0_87], %110 {strides = array<i32>} : memref<1x256x128xf32, #tpu.memory_space<vmem>>, vector<1x128x128xf32>,
      %c9_88 = arith.constant 9 : index
      %c8_89 = arith.constant 8 : index
      %c0_90 = arith.constant 0 : index
      %111 = vector.load %arg12[%c9_88, %c8_89, %c0_90] : memref<18x32x256xf32, #tpu.memory_space<vmem>>, vector<8x16x256xf32>
      %112 = vector.shape_cast %97 : vector<256xf32> to vector<1x1x256xf32>
      %113 = vector.broadcast %112 : vector<1x1x256xf32> to vector<8x16x256xf32>
      %114 = arith.mulf %111, %113 : vector<8x16x256xf32>
      %115 = vector.shape_cast %114 : vector<8x16x256xf32> to vector<128x256xf32>
      %c0_91 = arith.constant 0 : index
      %c0_92 = arith.constant 0 : index
      %116 = vector.load %arg9[%c0_91, %c0_92] : memref<256x128xf32, #tpu.memory_space<vmem>>, vector<256x128xf32>
      %cst_93 = arith.constant dense<0.000000e+00> : vector<128x128xf32>
      %117 = tpu.matmul %115, %116, %cst_93 {dimension_numbers = #tpu.dot_dimension_numbers<[1], [0], [0], [1], [0, 0, 1, 1], [], []>} : vector<128x256xf32>, vector<256x128xf32>, vector<128x128xf32> -> vector<128x128xf32>
      %c0_94 = arith.constant 0 : index
      %c0_95 = arith.constant 0 : index
      %118 = vector.load %arg10[%c0_94, %c0_95] : memref<1x128xf32, #tpu.memory_space<vmem>>, vector<1x128xf32>
      %119 = vector.broadcast %118 : vector<1x128xf32> to vector<128x128xf32>
      %120 = arith.addf %117, %119 : vector<128x128xf32>
      %c0_96 = arith.constant 0 : index
      %c128_97 = arith.constant 128 : index
      %c0_98 = arith.constant 0 : index
      %121 = vector.load %arg11[%c0_96, %c128_97, %c0_98] : memref<1x256x128xf32, #tpu.memory_space<vmem>>, vector<1x128x128xf32>
      %122 = vector.shape_cast %121 : vector<1x128x128xf32> to vector<128x128xf32>
      %123 = vector.shape_cast %120 : vector<128x128xf32> to vector<1x128x128xf32>
      tpu.vector_store %arg11[%c0_96, %c128_97, %c0_98], %123 {strides = array<i32>} : memref<1x256x128xf32, #tpu.memory_space<vmem>>, vector<1x128x128xf32>,
    } else {
    }
    return
  }
  func.func @transform_0(%arg0: i32, %arg1: i32) -> (i32, i32, i32, i32) {
    %c0_i32 = arith.constant 0 : i32
    %c0_i32_0 = arith.constant 0 : i32
    %c0_i32_1 = arith.constant 0 : i32
    %c0_i32_2 = arith.constant 0 : i32
    return %arg0, %c0_i32, %c0_i32_0, %c0_i32_1 : i32, i32, i32, i32
  }
  func.func @transform_1(%arg0: i32, %arg1: i32) -> (i32, i32, i32, i32) {
    %c0_i32 = arith.constant 0 : i32
    %c0_i32_0 = arith.constant 0 : i32
    %c0_i32_1 = arith.constant 0 : i32
    return %arg1, %arg0, %c0_i32, %c0_i32_0 : i32, i32, i32, i32
  }
  func.func @transform_2(%arg0: i32, %arg1: i32) -> (i32, i32, i32) {
    %c0_i32 = arith.constant 0 : i32
    %c0_i32_0 = arith.constant 0 : i32
    %c0_i32_1 = arith.constant 0 : i32
    return %arg0, %c0_i32, %c0_i32_0 : i32, i32, i32
  }
  func.func @transform_3(%arg0: i32, %arg1: i32) -> (i32, i32, i32, i32) {
    %c0_i32 = arith.constant 0 : i32
    %c0_i32_0 = arith.constant 0 : i32
    %c0_i32_1 = arith.constant 0 : i32
    return %arg1, %arg0, %c0_i32, %c0_i32_0 : i32, i32, i32, i32
  }
  func.func @transform_4(%arg0: i32, %arg1: i32) -> (i32, i32, i32, i32) {
    %c0_i32 = arith.constant 0 : i32
    %c0_i32_0 = arith.constant 0 : i32
    %c0_i32_1 = arith.constant 0 : i32
    %c0_i32_2 = arith.constant 0 : i32
    return %arg1, %c0_i32, %c0_i32_0, %c0_i32_1 : i32, i32, i32, i32
  }
  func.func @transform_5(%arg0: i32, %arg1: i32) -> (i32, i32, i32) {
    %c0_i32 = arith.constant 0 : i32
    %c0_i32_0 = arith.constant 0 : i32
    %c0_i32_1 = arith.constant 0 : i32
    return %arg1, %c0_i32, %c0_i32_0 : i32, i32, i32
  }
  func.func @transform_6(%arg0: i32, %arg1: i32) -> (i32, i32, i32) {
    %c0_i32 = arith.constant 0 : i32
    %c0_i32_0 = arith.constant 0 : i32
    %c0_i32_1 = arith.constant 0 : i32
    return %arg1, %c0_i32, %c0_i32_0 : i32, i32, i32
  }
  func.func @transform_7(%arg0: i32, %arg1: i32) -> (i32, i32) {
    %c0_i32 = arith.constant 0 : i32
    %c0_i32_0 = arith.constant 0 : i32
    %c0_i32_1 = arith.constant 0 : i32
    return %c0_i32, %c0_i32_0 : i32, i32
  }
  func.func @transform_8(%arg0: i32, %arg1: i32) -> (i32, i32) {
    %c0_i32 = arith.constant 0 : i32
    %c0_i32_0 = arith.constant 0 : i32
    %c0_i32_1 = arith.constant 0 : i32
    return %c0_i32, %c0_i32_0 : i32, i32
  }
  func.func @transform_9(%arg0: i32, %arg1: i32) -> (i32, i32, i32) {
    %c0_i32 = arith.constant 0 : i32
    %c0_i32_0 = arith.constant 0 : i32
    %c0_i32_1 = arith.constant 0 : i32
    return %arg0, %c0_i32, %c0_i32_0 : i32, i32, i32
  }
}

</mosaic_0001>

<llo_original>
// kernel: _lambda_.1
$region0: #{_lambda_.1}
  #allocation0 [shape = 'u32[]', space=smem, size = 0x4, offset = 0x4, fixed_abs, tag = 'smem constant byte address 0x4 - core index']
  #allocation1 [shape = 'u32[144,128]{1,0:T(1,128)}', space=vmem, size = 0x12000, scoped, tag = 'internal scratch']
  #allocation2 [shape = 'f32[18,32,256]{2,1,0:T(8,128)}', space=vmem, size = 0x90000, scoped, tag = 'scratch operand']
  #allocation3 [shape = 'f32[288,768]{1,0:T(8,128)}', space=vmem, size = 0xd8000, scoped, tag = 'scratch operand']
  %s0 = inlined_call_operand.hbm [shape: f32[2,16,16,256], index: 0, kind: input, shape index: {}]
  %s1 = inlined_call_operand.vmem [shape: f32[2,2,1,256], index: 1, kind: input, shape index: {}]
  %s2 = inlined_call_operand.vmem [shape: f32[2,1,256], index: 2, kind: input, shape index: {}]
  %s3 = inlined_call_operand.vmem [shape: f32[2,2,1,256], index: 3, kind: input, shape index: {}]
  %s4 = inlined_call_operand.hbm [shape: f32[2,3,768,256], index: 4, kind: input, shape index: {}]
  %s5 = inlined_call_operand.vmem [shape: f32[2,256,1], index: 5, kind: input, shape index: {}]
  %s6 = inlined_call_operand.hbm [shape: f32[2,1,256], index: 6, kind: input, shape index: {}]
  %s7 = inlined_call_operand.hbm [shape: f32[256,128], index: 7, kind: input, shape index: {}]
  %s8 = inlined_call_operand.hbm [shape: f32[1,128], index: 8, kind: input, shape index: {}]
  %s9 = inlined_call_operand.vmem [shape: f32[2,256,128], index: 9, kind: output, shape index: {}]
  %s10 = sld [smem:[#allocation0]]
  $region97: #{_lambda_.1} parent=0
    _
  %s12 = ssub.s32 1, %s10
  %s13 = scalar_select 0, %s12, %s10
  $region1: #{_lambda_.1} parent=0
    #allocation4 [shape = 'u8[524288]{0}', space=vmem, size = 0x80000, scoped, tag = 'input window, operand 0']
    #allocation5 [shape = 's32[2]{0}', space=sflag, size = 0x8, scoped, tag = 'scoped memory for _lambda_.1']
    #allocation6 [shape = 'u8[4718592]{0}', space=vmem, size = 0x480000, scoped, tag = 'input window, operand 4']
    #allocation7 [shape = 's32[2]{0}', space=sflag, size = 0x8, scoped, tag = 'scoped memory for _lambda_.1']
    #allocation8 [shape = 'u8[2048]{0}', space=vmem, size = 0x800, scoped, tag = 'input window, operand 6']
    #allocation9 [shape = 'u8[131072]{0}', space=vmem, size = 0x20000, scoped, tag = 'input window, operand 7, single buffered']
    #allocation10 [shape = 's32[1]{0}', space=sflag, size = 0x4, scoped, tag = 'scoped memory for _lambda_.1']
    #allocation11 [shape = 'u8[512]{0}', space=vmem, size = 0x400, scoped, tag = 'input window, operand 8, single buffered']
    %14 = vsyncpa [#allocation5], 0
    %s15 = scalar_lea.sflag [#allocation5], 1
    %16 = vsyncpa %s15, 0
    %17 = vsyncpa [#allocation7], 0
    %s18 = scalar_lea.sflag [#allocation7], 1
    %19 = vsyncpa %s18, 0
    %20 = vsyncpa [#allocation10], 0
    loop: start=0, step=1, limit=6
    $region2: #{_lambda_.1} parent=1 // loop_pre_header
      _
    $region3: #{_lambda_.1} parent=1 // loop_header
      %s22 = sphi 0, %s26
      %p23 = scmp.ge.s32.totalorder %s22, 6
      %s29 = sphi 0, %s41
      %s30 = sphi 0, %s37
      %s31 = sphi 0, %s29
      %s32 = sphi 0, %s30
      %s33 = sphi 0, %s31
      %s34 = sphi 0, %s32
      %s44 = sphi 0, %s46
      %s47 = sphi 0, %s44
      %s48 = sphi 0, %s47
      %s64 = sphi 0, %s48
      %s72 = sphi 0, %s74
      %s75 = sphi 0, %s72
      %s76 = sphi 0, %s75
      %s92 = sphi 0, %s76
      %s98 = sphi 0, %s100
      %s101 = sphi 0, %s98
      %s102 = sphi 0, %s101
      %s118 = sphi 0, %s102
      %s126 = sphi 0, %s128
      %s129 = sphi 0, %s126
      %s130 = sphi 0, %s129
      %s146 = sphi 0, %s130
      %s152 = sphi 0, %s154
      %s155 = sphi 0, %s152
      %s156 = sphi 0, %s155
      %s172 = sphi 0, %s156
      %s178 = sphi 0, %s180
      %s181 = sphi 0, %s178
      %s182 = sphi 0, %s181
      %s198 = sphi 0, %s182
      %s204 = sphi 0, %s206
      %s207 = sphi 0, %s204
      %s208 = sphi 0, %s207
      %s224 = sphi 0, %s208
      %s228 = sphi 0, %s228
      %s230 = sphi 0, %s228
      %s231 = sphi 0, %s230
      %s245 = sphi 0, %s231
      %s249 = sphi 0, %s249
      %s251 = sphi 0, %s249
      %s252 = sphi 0, %s251
      %s266 = sphi 0, %s252
      %s272 = sphi 0, %s274
      %s275 = sphi 0, %s272
      %s276 = sphi 0, %s275
      %s292 = sphi 0, %s276
    $region4: #{_lambda_.1} parent=1 // loop_header_branch
      %25 = sbr.rel (%p23) target = $region8
    $region5: #{_lambda_.1} parent=1 // loop_body
      %s27 = ssub.s32 %s22, 1
      %s28 = ssub.s32 %s22, 2
      %s35 = sadd.s32 1, %s30
      %p36 = scmp.ge.s32.totalorder %s35, 2
      %s37 = scalar_select %p36, 0, %s35
      %s38 = sadd.s32 1, %s29
      %s39 = scalar_select %p36, %s38, %s29
      %p40 = scmp.ge.s32.totalorder %s39, 2
      %s41 = scalar_select %p40, 0, %s39
      %s42 = ssub.s32 %s29, %s41
      %p43 = scmp.eq.s32.totalorder %s42, 0
      %s45 = sadd.s32 %s44, 1
      %s46 = scalar_select %p43, %s44, %s45
      %p49 = pneg %p43
      %p50 = scmp.eq.s32.totalorder %s22, 3
      %p51 = por %p49, %p50
      %p52 = scmp.ne.s32.totalorder %s44, %s47
      %p53 = scmp.eq.s32.totalorder %s22, 0
      %p54 = por %p52, %p53
      %p55 = scmp.ne.s32.totalorder %s44, %s47
      %p56 = scmp.eq.s32.totalorder %s27, 3
      %p57 = por %p55, %p56
      %p58 = scmp.ne.s32.totalorder %s47, %s48
      %p59 = scmp.eq.s32.totalorder %s27, 0
      %p60 = por %p58, %p59
      %p61 = scmp.ne.s32.totalorder %s47, %s48
      %p62 = scmp.eq.s32.totalorder %s28, 3
      %p63 = por %p61, %p62
      %p65 = scmp.ne.s32.totalorder %s48, %s64
      %p66 = scmp.eq.s32.totalorder %s28, 0
      %p67 = por %p65, %p66
      %s68 = ssub.s32 %s30, %s37
      %s69 = ssub.s32 %s29, %s41
      %s70 = sor.u32 %s68, %s69
      %p71 = scmp.eq.s32.totalorder %s70, 0
      %s73 = sadd.s32 %s72, 1
      %s74 = scalar_select %p71, %s72, %s73
      %p77 = pneg %p71
      %p78 = scmp.eq.s32.totalorder %s22, 3
      %p79 = por %p77, %p78
      %p80 = scmp.ne.s32.totalorder %s72, %s75
      %p81 = scmp.eq.s32.totalorder %s22, 0
      %p82 = por %p80, %p81
      %p83 = scmp.ne.s32.totalorder %s72, %s75
      %p84 = scmp.eq.s32.totalorder %s27, 3
      %p85 = por %p83, %p84
      %p86 = scmp.ne.s32.totalorder %s75, %s76
      %p87 = scmp.eq.s32.totalorder %s27, 0
      %p88 = por %p86, %p87
      %p89 = scmp.ne.s32.totalorder %s75, %s76
      %p90 = scmp.eq.s32.totalorder %s28, 3
      %p91 = por %p89, %p90
      %p93 = scmp.ne.s32.totalorder %s76, %s92
      %p94 = scmp.eq.s32.totalorder %s28, 0
      %p95 = por %p93, %p94
      %s96 = ssub.s32 %s29, %s41
      %p97 = scmp.eq.s32.totalorder %s96, 0
      %s99 = sadd.s32 %s98, 1
      %s100 = scalar_select %p97, %s98, %s99
      %p103 = pneg %p97
      %p104 = scmp.eq.s32.totalorder %s22, 3
      %p105 = por %p103, %p104
      %p106 = scmp.ne.s32.totalorder %s98, %s101
      %p107 = scmp.eq.s32.totalorder %s22, 0
      %p108 = por %p106, %p107
      %p109 = scmp.ne.s32.totalorder %s98, %s101
      %p110 = scmp.eq.s32.totalorder %s27, 3
      %p111 = por %p109, %p110
      %p112 = scmp.ne.s32.totalorder %s101, %s102
      %p113 = scmp.eq.s32.totalorder %s27, 0
      %p114 = por %p112, %p113
      %p115 = scmp.ne.s32.totalorder %s101, %s102
      %p116 = scmp.eq.s32.totalorder %s28, 3
      %p117 = por %p115, %p116
      %p119 = scmp.ne.s32.totalorder %s102, %s118
      %p120 = scmp.eq.s32.totalorder %s28, 0
      %p121 = por %p119, %p120
      %s122 = ssub.s32 %s30, %s37
      %s123 = ssub.s32 %s29, %s41
      %s124 = sor.u32 %s122, %s123
      %p125 = scmp.eq.s32.totalorder %s124, 0
      %s127 = sadd.s32 %s126, 1
      %s128 = scalar_select %p125, %s126, %s127
      %p131 = pneg %p125
      %p132 = scmp.eq.s32.totalorder %s22, 3
      %p133 = por %p131, %p132
      %p134 = scmp.ne.s32.totalorder %s126, %s129
      %p135 = scmp.eq.s32.totalorder %s22, 0
      %p136 = por %p134, %p135
      %p137 = scmp.ne.s32.totalorder %s126, %s129
      %p138 = scmp.eq.s32.totalorder %s27, 3
      %p139 = por %p137, %p138
      %p140 = scmp.ne.s32.totalorder %s129, %s130
      %p141 = scmp.eq.s32.totalorder %s27, 0
      %p142 = por %p140, %p141
      %p143 = scmp.ne.s32.totalorder %s129, %s130
      %p144 = scmp.eq.s32.totalorder %s28, 3
      %p145 = por %p143, %p144
      %p147 = scmp.ne.s32.totalorder %s130, %s146
      %p148 = scmp.eq.s32.totalorder %s28, 0
      %p149 = por %p147, %p148
      %s150 = ssub.s32 %s30, %s37
      %p151 = scmp.eq.s32.totalorder %s150, 0
      %s153 = sadd.s32 %s152, 1
      %s154 = scalar_select %p151, %s152, %s153
      %p157 = pneg %p151
      %p158 = scmp.eq.s32.totalorder %s22, 3
      %p159 = por %p157, %p158
      %p160 = scmp.ne.s32.totalorder %s152, %s155
      %p161 = scmp.eq.s32.totalorder %s22, 0
      %p162 = por %p160, %p161
      %p163 = scmp.ne.s32.totalorder %s152, %s155
      %p164 = scmp.eq.s32.totalorder %s27, 3
      %p165 = por %p163, %p164
      %p166 = scmp.ne.s32.totalorder %s155, %s156
      %p167 = scmp.eq.s32.totalorder %s27, 0
      %p168 = por %p166, %p167
      %p169 = scmp.ne.s32.totalorder %s155, %s156
      %p170 = scmp.eq.s32.totalorder %s28, 3
      %p171 = por %p169, %p170
      %p173 = scmp.ne.s32.totalorder %s156, %s172
      %p174 = scmp.eq.s32.totalorder %s28, 0
      %p175 = por %p173, %p174
      %s176 = ssub.s32 %s30, %s37
      %p177 = scmp.eq.s32.totalorder %s176, 0
      %s179 = sadd.s32 %s178, 1
      %s180 = scalar_select %p177, %s178, %s179
      %p183 = pneg %p177
      %p184 = scmp.eq.s32.totalorder %s22, 3
      %p185 = por %p183, %p184
      %p186 = scmp.ne.s32.totalorder %s178, %s181
      %p187 = scmp.eq.s32.totalorder %s22, 0
      %p188 = por %p186, %p187
      %p189 = scmp.ne.s32.totalorder %s178, %s181
      %p190 = scmp.eq.s32.totalorder %s27, 3
      %p191 = por %p189, %p190
      %p192 = scmp.ne.s32.totalorder %s181, %s182
      %p193 = scmp.eq.s32.totalorder %s27, 0
      %p194 = por %p192, %p193
      %p195 = scmp.ne.s32.totalorder %s181, %s182
      %p196 = scmp.eq.s32.totalorder %s28, 3
      %p197 = por %p195, %p196
      %p199 = scmp.ne.s32.totalorder %s182, %s198
      %p200 = scmp.eq.s32.totalorder %s28, 0
      %p201 = por %p199, %p200
      %s202 = ssub.s32 %s30, %s37
      %p203 = scmp.eq.s32.totalorder %s202, 0
      %s205 = sadd.s32 %s204, 1
      %s206 = scalar_select %p203, %s204, %s205
      %p209 = pneg %p203
      %p210 = scmp.eq.s32.totalorder %s22, 3
      %p211 = por %p209, %p210
      %p212 = scmp.ne.s32.totalorder %s204, %s207
      %p213 = scmp.eq.s32.totalorder %s22, 0
      %p214 = por %p212, %p213
      %p215 = scmp.ne.s32.totalorder %s204, %s207
      %p216 = scmp.eq.s32.totalorder %s27, 3
      %p217 = por %p215, %p216
      %p218 = scmp.ne.s32.totalorder %s207, %s208
      %p219 = scmp.eq.s32.totalorder %s27, 0
      %p220 = por %p218, %p219
      %p221 = scmp.ne.s32.totalorder %s207, %s208
      %p222 = scmp.eq.s32.totalorder %s28, 3
      %p223 = por %p221, %p222
      %p225 = scmp.ne.s32.totalorder %s208, %s224
      %p226 = scmp.eq.s32.totalorder %s28, 0
      %p227 = por %p225, %p226
      %s229 = sadd.s32 %s228, 1
      %p232 = scmp.eq.s32.totalorder %s22, 3
      %p233 = scmp.ne.s32.totalorder %s228, %s230
      %p234 = scmp.eq.s32.totalorder %s22, 0
      %p235 = por %p233, %p234
      %p236 = scmp.ne.s32.totalorder %s228, %s230
      %p237 = scmp.eq.s32.totalorder %s27, 3
      %p238 = por %p236, %p237
      %p239 = scmp.ne.s32.totalorder %s230, %s231
      %p240 = scmp.eq.s32.totalorder %s27, 0
      %p241 = por %p239, %p240
      %p242 = scmp.ne.s32.totalorder %s230, %s231
      %p243 = scmp.eq.s32.totalorder %s28, 3
      %p244 = por %p242, %p243
      %p246 = scmp.ne.s32.totalorder %s231, %s245
      %p247 = scmp.eq.s32.totalorder %s28, 0
      %p248 = por %p246, %p247
      %s250 = sadd.s32 %s249, 1
      %p253 = scmp.eq.s32.totalorder %s22, 3
      %p254 = scmp.ne.s32.totalorder %s249, %s251
      %p255 = scmp.eq.s32.totalorder %s22, 0
      %p256 = por %p254, %p255
      %p257 = scmp.ne.s32.totalorder %s249, %s251
      %p258 = scmp.eq.s32.totalorder %s27, 3
      %p259 = por %p257, %p258
      %p260 = scmp.ne.s32.totalorder %s251, %s252
      %p261 = scmp.eq.s32.totalorder %s27, 0
      %p262 = por %p260, %p261
      %p263 = scmp.ne.s32.totalorder %s251, %s252
      %p264 = scmp.eq.s32.totalorder %s28, 3
      %p265 = por %p263, %p264
      %p267 = scmp.ne.s32.totalorder %s252, %s266
      %p268 = scmp.eq.s32.totalorder %s28, 0
      %p269 = por %p267, %p268
      %s270 = ssub.s32 %s29, %s41
      %p271 = scmp.eq.s32.totalorder %s270, 0
      %s273 = sadd.s32 %s272, 1
      %s274 = scalar_select %p271, %s272, %s273
      %p277 = pneg %p271
      %p278 = scmp.eq.s32.totalorder %s22, 3
      %p279 = por %p277, %p278
      %p280 = scmp.ne.s32.totalorder %s272, %s275
      %p281 = scmp.eq.s32.totalorder %s22, 0
      %p282 = por %p280, %p281
      %p283 = scmp.ne.s32.totalorder %s272, %s275
      %p284 = scmp.eq.s32.totalorder %s27, 3
      %p285 = por %p283, %p284
      %p286 = scmp.ne.s32.totalorder %s275, %s276
      %p287 = scmp.eq.s32.totalorder %s27, 0
      %p288 = por %p286, %p287
      %p289 = scmp.ne.s32.totalorder %s275, %s276
      %p290 = scmp.eq.s32.totalorder %s28, 3
      %p291 = por %p289, %p290
      %p293 = scmp.ne.s32.totalorder %s276, %s292
      %p294 = scmp.eq.s32.totalorder %s28, 0
      %p295 = por %p293, %p294
      %p296 = scmp.le.s32.totalorder 1, %s22
      %p297 = scmp.lt.s32.totalorder %s22, 5
      %p298 = pnand %p296, %p297
      %p299 = pneg %p298
      // Predicated region
      $region9: #{_lambda_.1} parent=5 // pred_check
        _
      $region10: #{_lambda_.1} parent=5 // pred_check_branch
        %301 = sbr.rel (%p298) target = $region12
      $region11: #{_lambda_.1} parent=5 // pred_region
        %s302 = ssub.s32 %s22, 1
        // Predicated region
        $region13: #{_lambda_.1} parent=11 // pred_check
          %p303 = pneg %p241
        $region14: #{_lambda_.1} parent=11 // pred_check_branch
          %305 = sbr.rel (%p303) target = $region16
        $region15: #{_lambda_.1} parent=11 // pred_region
          %s307 = ssub.s32 4096, 4096
          %308 = vsyncadd [#allocation10], %s307
          %s309 = sshll.u32 [#allocation9], 4
          %s310 = int_to_ptr.vmem [resolvable:$true] %s309
          %315 = dma.hbm_to_vmem [thread:$0]  %s7, 4096, %s310, [#allocation10], 128, 128, 8
        $region16: #{_lambda_.1} parent=11 // pred_fallthru
          _
        // Predicated region
        $region17: #{_lambda_.1} parent=11 // pred_check
          %p316 = pneg %p262
        $region18: #{_lambda_.1} parent=11 // pred_check_branch
          %318 = sbr.rel (%p316) target = $region20
        $region19: #{_lambda_.1} parent=11 // pred_region
          %s320 = ssub.s32 16, 16
          %321 = vsyncadd [#allocation10], %s320
          %s323 = sshll.u32 [#allocation11], 4
          %s324 = int_to_ptr.vmem [resolvable:$true] %s323
          %326 = dma.hbm_to_vmem [thread:$0]  %s8, 16, %s324, [#allocation10]
        $region20: #{_lambda_.1} parent=11 // pred_fallthru
          _
      $region12: #{_lambda_.1} parent=5 // pred_fallthru
        _
      %p327 = scmp.lt.s32.totalorder %s22, 4
      // Predicated region
      $region21: #{_lambda_.1} parent=5 // pred_check
        %p328 = pneg %p327
      $region22: #{_lambda_.1} parent=5 // pred_check_branch
        %330 = sbr.rel (%p328) target = $region24
      $region23: #{_lambda_.1} parent=5 // pred_region
        // Predicated region
        $region25: #{_lambda_.1} parent=23 // pred_check
          %p331 = pneg %p54
        $region26: #{_lambda_.1} parent=23 // pred_check_branch
          %333 = sbr.rel (%p331) target = $region28
        $region27: #{_lambda_.1} parent=23 // pred_region
          %s334 = sand.u32 %s44, 1
          %s335 = scalar_lea.sflag [#allocation5], %s334
          %s336 = sand.u32 %s44, 1
          %s337 = smul.addr %s336, 512
          %s338 = scalar_lea.vmem [#allocation4], %s337
          %s340 = ssub.s32 8192, 8192
          %341 = vsyncadd %s335, %s340
          %s342 = smul.addr %s29, 64
          %s343 = smul.addr %s342, 128
          %s344 = scalar_lea.hbm %s0, %s343
          %s345 = sshll.u32 %s338, 4
          %s346 = int_to_ptr.vmem [resolvable:$true] %s345
          %351 = dma.hbm_to_vmem [thread:$0]  %s344, 8192, %s346, %s335, 256, 256, 16
        $region28: #{_lambda_.1} parent=23 // pred_fallthru
          _
        // Predicated region
        $region29: #{_lambda_.1} parent=23 // pred_check
          %p352 = pneg %p82
        $region30: #{_lambda_.1} parent=23 // pred_check_branch
          %354 = sbr.rel (%p352) target = $region32
        $region31: #{_lambda_.1} parent=23 // pred_region
          %p355 = scmp.lt.s32.totalorder %s30, 1
          %s356 = scalar_select %p355, %s30, 1
          %p357 = scmp.lt.s32.totalorder %s29, 1
          %s358 = scalar_select %p357, %s29, 1
          %s359 = smul.addr %s358, 2
          %s360 = smul.addr %s356, 4
          %s361 = sadd.s32 %s359, %s360
          %s362 = scalar_lea.vmem %s1, %s361
        $region32: #{_lambda_.1} parent=23 // pred_fallthru
          _
        // Predicated region
        $region33: #{_lambda_.1} parent=23 // pred_check
          %p363 = pneg %p108
        $region34: #{_lambda_.1} parent=23 // pred_check_branch
          %365 = sbr.rel (%p363) target = $region36
        $region35: #{_lambda_.1} parent=23 // pred_region
          %p366 = scmp.lt.s32.totalorder %s29, 1
          %s367 = scalar_select %p366, %s29, 1
          %s368 = smul.addr %s367, 2
          %s369 = scalar_lea.vmem %s2, %s368
        $region36: #{_lambda_.1} parent=23 // pred_fallthru
          _
        // Predicated region
        $region37: #{_lambda_.1} parent=23 // pred_check
          %p370 = pneg %p136
        $region38: #{_lambda_.1} parent=23 // pred_check_branch
          %372 = sbr.rel (%p370) target = $region40
        $region39: #{_lambda_.1} parent=23 // pred_region
          %p373 = scmp.lt.s32.totalorder %s30, 1
          %s374 = scalar_select %p373, %s30, 1
          %p375 = scmp.lt.s32.totalorder %s29, 1
          %s376 = scalar_select %p375, %s29, 1
          %s377 = smul.addr %s376, 2
          %s378 = smul.addr %s374, 4
          %s379 = sadd.s32 %s377, %s378
          %s380 = scalar_lea.vmem %s3, %s379
        $region40: #{_lambda_.1} parent=23 // pred_fallthru
          _
        // Predicated region
        $region41: #{_lambda_.1} parent=23 // pred_check
          %p381 = pneg %p162
        $region42: #{_lambda_.1} parent=23 // pred_check_branch
          %383 = sbr.rel (%p381) target = $region44
        $region43: #{_lambda_.1} parent=23 // pred_region
          %s384 = sand.u32 %s22, 1
          %s385 = scalar_lea.sflag [#allocation7], %s384
          %s386 = sand.u32 %s152, 1
          %s387 = smul.addr %s386, 4608
          %s388 = scalar_lea.vmem [#allocation6], %s387
          %s390 = ssub.s32 73728, 73728
          %391 = vsyncadd %s385, %s390
          %s392 = smul.addr %s30, 576
          %s393 = smul.addr %s392, 128
          %s394 = scalar_lea.hbm %s4, %s393
          %s395 = sshll.u32 %s388, 4
          %s396 = int_to_ptr.vmem [resolvable:$true] %s395
          %401 = dma.hbm_to_vmem [thread:$0]  %s394, 73728, %s396, %s385, 256, 256, 16
        $region44: #{_lambda_.1} parent=23 // pred_fallthru
          _
        // Predicated region
        $region45: #{_lambda_.1} parent=23 // pred_check
          %p402 = pneg %p188
        $region46: #{_lambda_.1} parent=23 // pred_check_branch
          %404 = sbr.rel (%p402) target = $region48
        $region47: #{_lambda_.1} parent=23 // pred_region
          %p405 = scmp.lt.s32.totalorder %s30, 1
          %s406 = scalar_select %p405, %s30, 1
          %s407 = smul.addr %s406, 32
          %s408 = smul.addr %s407, 8
          %s409 = scalar_lea.vmem %s5, %s408
        $region48: #{_lambda_.1} parent=23 // pred_fallthru
          _
        // Predicated region
        $region49: #{_lambda_.1} parent=23 // pred_check
          %p410 = pneg %p214
        $region50: #{_lambda_.1} parent=23 // pred_check_branch
          %412 = sbr.rel (%p410) target = $region52
        $region51: #{_lambda_.1} parent=23 // pred_region
          %s413 = sand.u32 %s22, 1
          %s414 = scalar_lea.sflag [#allocation7], %s413
          %s415 = sand.u32 %s204, 1
          %s416 = smul.addr %s415, 2
          %s417 = scalar_lea.vmem [#allocation8], %s416
          %s419 = ssub.s32 32, 32
          %420 = vsyncadd %s414, %s419
          %s421 = smul.addr %s30, 2
          %s422 = smul.addr %s421, 16
          %s423 = scalar_lea.hbm %s6, %s422
          %s425 = sshll.u32 %s417, 4
          %s426 = int_to_ptr.vmem [resolvable:$true] %s425
          %428 = dma.hbm_to_vmem [thread:$0]  %s423, 32, %s426, %s414
        $region52: #{_lambda_.1} parent=23 // pred_fallthru
          _
      $region24: #{_lambda_.1} parent=5 // pred_fallthru
        _
      %p429 = scmp.le.s32.totalorder 1, %s22
      %p430 = scmp.lt.s32.totalorder %s22, 5
      %p431 = pnand %p429, %p430
      %p432 = pneg %p431
      // Predicated region
      $region53: #{_lambda_.1} parent=5 // pred_check
        _
      $region54: #{_lambda_.1} parent=5 // pred_check_branch
        %434 = sbr.rel (%p431) target = $region56
      $region55: #{_lambda_.1} parent=5 // pred_region
        %s435 = ssub.s32 %s22, 1
        %s436 = sand.u32 %s47, 1
        %s437 = scalar_lea.sflag [#allocation5], %s436
        %s438 = sand.u32 %s47, 1
        %s439 = smul.addr %s438, 512
        %s440 = scalar_lea.vmem [#allocation4], %s439
        // Predicated region
        $region57: #{_lambda_.1} parent=55 // pred_check
          %p441 = pneg %p60
        $region58: #{_lambda_.1} parent=55 // pred_check_branch
          %443 = sbr.rel (%p441) target = $region60
        $region59: #{_lambda_.1} parent=55 // pred_region
          %444 = dma.done %s437, 8192
        $region60: #{_lambda_.1} parent=55 // pred_fallthru
          _
        %s445 = sand.u32 %s27, 1
        %s446 = scalar_lea.sflag [#allocation7], %s445
        %s447 = sand.u32 %s155, 1
        %s448 = smul.addr %s447, 4608
        %s449 = scalar_lea.vmem [#allocation6], %s448
        // Predicated region
        $region61: #{_lambda_.1} parent=55 // pred_check
          %p450 = pneg %p168
        $region62: #{_lambda_.1} parent=55 // pred_check_branch
          %452 = sbr.rel (%p450) target = $region64
        $region63: #{_lambda_.1} parent=55 // pred_region
          %453 = dma.done %s446, 73728
        $region64: #{_lambda_.1} parent=55 // pred_fallthru
          _
        %s454 = sand.u32 %s27, 1
        %s455 = scalar_lea.sflag [#allocation7], %s454
        %s456 = sand.u32 %s207, 1
        %s457 = smul.addr %s456, 2
        %s458 = scalar_lea.vmem [#allocation8], %s457
        // Predicated region
        $region65: #{_lambda_.1} parent=55 // pred_check
          %p459 = pneg %p220
        $region66: #{_lambda_.1} parent=55 // pred_check_branch
          %461 = sbr.rel (%p459) target = $region68
        $region67: #{_lambda_.1} parent=55 // pred_region
          %462 = dma.done %s455, 32
        $region68: #{_lambda_.1} parent=55 // pred_fallthru
          _
        // Predicated region
        $region69: #{_lambda_.1} parent=55 // pred_check
          %p463 = pneg %p241
        $region70: #{_lambda_.1} parent=55 // pred_check_branch
          %465 = sbr.rel (%p463) target = $region72
        $region71: #{_lambda_.1} parent=55 // pred_region
          %466 = dma.done [#allocation10], 4096
        $region72: #{_lambda_.1} parent=55 // pred_fallthru
          _
        // Predicated region
        $region73: #{_lambda_.1} parent=55 // pred_check
          %p467 = pneg %p262
        $region74: #{_lambda_.1} parent=55 // pred_check_branch
          %469 = sbr.rel (%p467) target = $region76
        $region75: #{_lambda_.1} parent=55 // pred_region
          %470 = dma.done [#allocation10], 16
        $region76: #{_lambda_.1} parent=55 // pred_fallthru
          _
        %s471 = sand.u32 %s47, 1
        %s472 = scalar_lea.sflag [#allocation5], %s471
        %s473 = sand.u32 %s47, 1
        %s474 = smul.addr %s473, 512
        %s475 = scalar_lea.vmem [#allocation4], %s474
        %p476 = pneg %p60
        %p477 = pneg %p57
        %p478 = scmp.lt.s32.totalorder %s32, 1
        %s479 = scalar_select %p478, %s32, 1
        %p480 = scmp.lt.s32.totalorder %s31, 1
        %s481 = scalar_select %p480, %s31, 1
        %s482 = smul.addr %s481, 2
        %s483 = smul.addr %s479, 4
        %s484 = sadd.s32 %s482, %s483
        %s485 = scalar_lea.vmem %s1, %s484
        %p486 = pneg %p88
        %p487 = pneg %p85
        %p488 = scmp.lt.s32.totalorder %s31, 1
        %s489 = scalar_select %p488, %s31, 1
        %s490 = smul.addr %s489, 2
        %s491 = scalar_lea.vmem %s2, %s490
        %p492 = pneg %p114
        %p493 = pneg %p111
        %p494 = scmp.lt.s32.totalorder %s32, 1
        %s495 = scalar_select %p494, %s32, 1
        %p496 = scmp.lt.s32.totalorder %s31, 1
        %s497 = scalar_select %p496, %s31, 1
        %s498 = smul.addr %s497, 2
        %s499 = smul.addr %s495, 4
        %s500 = sadd.s32 %s498, %s499
        %s501 = scalar_lea.vmem %s3, %s500
        %p502 = pneg %p142
        %p503 = pneg %p139
        %s504 = sand.u32 %s27, 1
        %s505 = scalar_lea.sflag [#allocation7], %s504
        %s506 = sand.u32 %s155, 1
        %s507 = smul.addr %s506, 4608
        %s508 = scalar_lea.vmem [#allocation6], %s507
        %p509 = pneg %p168
        %p510 = pneg %p165
        %p511 = scmp.lt.s32.totalorder %s32, 1
        %s512 = scalar_select %p511, %s32, 1
        %s513 = smul.addr %s512, 32
        %s514 = smul.addr %s513, 8
        %s515 = scalar_lea.vmem %s5, %s514
        %p516 = pneg %p194
        %p517 = pneg %p191
        %s518 = sand.u32 %s27, 1
        %s519 = scalar_lea.sflag [#allocation7], %s518
        %s520 = sand.u32 %s207, 1
        %s521 = smul.addr %s520, 2
        %s522 = scalar_lea.vmem [#allocation8], %s521
        %p523 = pneg %p220
        %p524 = pneg %p217
        %p525 = pneg %p241
        %p526 = pneg %p238
        %p527 = pneg %p262
        %p528 = pneg %p259
        %p529 = pneg %p288
        %p530 = pneg %p285
        %p531 = scmp.lt.s32.totalorder %s31, 1
        %s532 = scalar_select %p531, %s31, 1
        %s533 = smul.addr %s532, 32
        %s534 = smul.addr %s533, 8
        %s535 = scalar_lea.vmem %s9, %s534
        %p536 = scmp.lt.s32.totalorder %s32, 1
        %s537 = scalar_select %p536, %s32, 1
        %p538 = scmp.lt.s32.totalorder %s31, 1
        %s539 = scalar_select %p538, %s31, 1
        %s540 = smul.addr %s539, 2
        %s541 = smul.addr %s537, 4
        %s542 = sadd.s32 %s540, %s541
        %s543 = scalar_lea.vmem %s1, %s542
        %p544 = scmp.lt.s32.totalorder %s31, 1
        %s545 = scalar_select %p544, %s31, 1
        %s546 = smul.addr %s545, 2
        %s547 = scalar_lea.vmem %s2, %s546
        %p548 = scmp.lt.s32.totalorder %s32, 1
        %s549 = scalar_select %p548, %s32, 1
        %p550 = scmp.lt.s32.totalorder %s31, 1
        %s551 = scalar_select %p550, %s31, 1
        %s552 = smul.addr %s551, 2
        %s553 = smul.addr %s549, 4
        %s554 = sadd.s32 %s552, %s553
        %s555 = scalar_lea.vmem %s3, %s554
        %p556 = scmp.lt.s32.totalorder %s32, 1
        %s557 = scalar_select %p556, %s32, 1
        %s558 = smul.addr %s557, 32
        %s559 = smul.addr %s558, 8
        %s560 = scalar_lea.vmem %s5, %s559
        %p561 = scmp.lt.s32.totalorder %s31, 1
        %s562 = scalar_select %p561, %s31, 1
        %s563 = smul.addr %s562, 32
        %s564 = smul.addr %s563, 8
        %s565 = scalar_lea.vmem %s9, %s564
        %p566 = scmp.eq.s32.totalorder %s32, 0
        // Predicated region
        $region77: #{_lambda_.1} parent=55 // pred_check
          %p567 = pneg %p566
        $region78: #{_lambda_.1} parent=55 // pred_check_branch
          %569 = sbr.rel (%p567) target = $region80
        $region79: #{_lambda_.1} parent=55 // pred_region
          %570 = vst [vmem:[#allocation2] sm:$0xff] 0.0
          %571 = vst [vmem:[#allocation2 + $0x8] sm:$0xff] 0.0
          %572 = vst [vmem:[#allocation2 + $0x40] sm:$0xff] 0.0
          %573 = vst [vmem:[#allocation2 + $0x48] sm:$0xff] 0.0
          %574 = vst [vmem:[#allocation2 + $0x80] sm:$0xff] 0.0
          %575 = vst [vmem:[#allocation2 + $0x88] sm:$0xff] 0.0
          %576 = vst [vmem:[#allocation2 + $0xc0] sm:$0xff] 0.0
          %577 = vst [vmem:[#allocation2 + $0xc8] sm:$0xff] 0.0
          %578 = vst [vmem:[#allocation2 + $0x100] sm:$0xff] 0.0
          %579 = vst [vmem:[#allocation2 + $0x108] sm:$0xff] 0.0
          %580 = vst [vmem:[#allocation2 + $0x140] sm:$0xff] 0.0
          %581 = vst [vmem:[#allocation2 + $0x148] sm:$0xff] 0.0
          %582 = vst [vmem:[#allocation2 + $0x180] sm:$0xff] 0.0
          %583 = vst [vmem:[#allocation2 + $0x188] sm:$0xff] 0.0
          %584 = vst [vmem:[#allocation2 + $0x1c0] sm:$0xff] 0.0
          %585 = vst [vmem:[#allocation2 + $0x1c8] sm:$0xff] 0.0
          %586 = vst [vmem:[#allocation2 + $0x200] sm:$0xff] 0.0
          %587 = vst [vmem:[#allocation2 + $0x208] sm:$0xff] 0.0
          %588 = vst [vmem:[#allocation2 + $0x240] sm:$0xff] 0.0
          %589 = vst [vmem:[#allocation2 + $0x248] sm:$0xff] 0.0
          %590 = vst [vmem:[#allocation2 + $0x280] sm:$0xff] 0.0
          %591 = vst [vmem:[#allocation2 + $0x288] sm:$0xff] 0.0
          %592 = vst [vmem:[#allocation2 + $0x2c0] sm:$0xff] 0.0
          %593 = vst [vmem:[#allocation2 + $0x2c8] sm:$0xff] 0.0
          %594 = vst [vmem:[#allocation2 + $0x300] sm:$0xff] 0.0
          %595 = vst [vmem:[#allocation2 + $0x308] sm:$0xff] 0.0
          %596 = vst [vmem:[#allocation2 + $0x340] sm:$0xff] 0.0
          %597 = vst [vmem:[#allocation2 + $0x348] sm:$0xff] 0.0
          %598 = vst [vmem:[#allocation2 + $0x380] sm:$0xff] 0.0
          %599 = vst [vmem:[#allocation2 + $0x388] sm:$0xff] 0.0
          %600 = vst [vmem:[#allocation2 + $0x3c0] sm:$0xff] 0.0
          %601 = vst [vmem:[#allocation2 + $0x3c8] sm:$0xff] 0.0
          %602 = vst [vmem:[#allocation2 + $0x400] sm:$0xff] 0.0
          %603 = vst [vmem:[#allocation2 + $0x408] sm:$0xff] 0.0
          %604 = vst [vmem:[#allocation2 + $0x440] sm:$0xff] 0.0
          %605 = vst [vmem:[#allocation2 + $0x448] sm:$0xff] 0.0
          %606 = vst [vmem:[#allocation2 + $0x30] sm:$0xff] 0.0
          %607 = vst [vmem:[#allocation2 + $0x38] sm:$0xff] 0.0
          %608 = vst [vmem:[#allocation2 + $0x70] sm:$0xff] 0.0
          %609 = vst [vmem:[#allocation2 + $0x78] sm:$0xff] 0.0
          %610 = vst [vmem:[#allocation2 + $0xb0] sm:$0xff] 0.0
          %611 = vst [vmem:[#allocation2 + $0xb8] sm:$0xff] 0.0
          %612 = vst [vmem:[#allocation2 + $0xf0] sm:$0xff] 0.0
          %613 = vst [vmem:[#allocation2 + $0xf8] sm:$0xff] 0.0
          %614 = vst [vmem:[#allocation2 + $0x130] sm:$0xff] 0.0
          %615 = vst [vmem:[#allocation2 + $0x138] sm:$0xff] 0.0
          %616 = vst [vmem:[#allocation2 + $0x170] sm:$0xff] 0.0
          %617 = vst [vmem:[#allocation2 + $0x178] sm:$0xff] 0.0
          %618 = vst [vmem:[#allocation2 + $0x1b0] sm:$0xff] 0.0
          %619 = vst [vmem:[#allocation2 + $0x1b8] sm:$0xff] 0.0
          %620 = vst [vmem:[#allocation2 + $0x1f0] sm:$0xff] 0.0
          %621 = vst [vmem:[#allocation2 + $0x1f8] sm:$0xff] 0.0
          %622 = vst [vmem:[#allocation2 + $0x230] sm:$0xff] 0.0
          %623 = vst [vmem:[#allocation2 + $0x238] sm:$0xff] 0.0
          %624 = vst [vmem:[#allocation2 + $0x270] sm:$0xff] 0.0
          %625 = vst [vmem:[#allocation2 + $0x278] sm:$0xff] 0.0
          %626 = vst [vmem:[#allocation2 + $0x2b0] sm:$0xff] 0.0
          %627 = vst [vmem:[#allocation2 + $0x2b8] sm:$0xff] 0.0
          %628 = vst [vmem:[#allocation2 + $0x2f0] sm:$0xff] 0.0
          %629 = vst [vmem:[#allocation2 + $0x2f8] sm:$0xff] 0.0
          %630 = vst [vmem:[#allocation2 + $0x330] sm:$0xff] 0.0
          %631 = vst [vmem:[#allocation2 + $0x338] sm:$0xff] 0.0
          %632 = vst [vmem:[#allocation2 + $0x370] sm:$0xff] 0.0
          %633 = vst [vmem:[#allocation2 + $0x378] sm:$0xff] 0.0
          %634 = vst [vmem:[#allocation2 + $0x3b0] sm:$0xff] 0.0
          %635 = vst [vmem:[#allocation2 + $0x3b8] sm:$0xff] 0.0
          %636 = vst [vmem:[#allocation2 + $0x3f0] sm:$0xff] 0.0
          %637 = vst [vmem:[#allocation2 + $0x3f8] sm:$0xff] 0.0
          %638 = vst [vmem:[#allocation2 + $0x430] sm:$0xff] 0.0
          %639 = vst [vmem:[#allocation2 + $0x438] sm:$0xff] 0.0
          %640 = vst [vmem:[#allocation2 + $0x470] sm:$0xff] 0.0
          %641 = vst [vmem:[#allocation2 + $0x478] sm:$0xff] 0.0
          %642 = vst [vmem:[#allocation2 + $0x10] sm:$0xff] 0.0
          %643 = vst [vmem:[#allocation2 + $0x18] sm:$0xff] 0.0
          %644 = vst [vmem:[#allocation2 + $0x20] sm:$0xff] 0.0
          %645 = vst [vmem:[#allocation2 + $0x28] sm:$0xff] 0.0
          %s646 = scalar_lea.vmem [#allocation2], 1088
          %647 = vst [vmem:[%s646 + $0x10] sm:$0xff] 0.0
          %648 = vst [vmem:[%s646 + $0x18] sm:$0xff] 0.0
          %649 = vst [vmem:[%s646 + $0x20] sm:$0xff] 0.0
          %650 = vst [vmem:[%s646 + $0x28] sm:$0xff] 0.0
          %v651 = vld [vmem:[%s440] sm:$0xff]
          %v652 = vld [vmem:[%s440 + $0x8] sm:$0xff]
          %v653 = vld [vmem:[%s440 + $0x10] sm:$0xff]
          %v654 = vld [vmem:[%s440 + $0x18] sm:$0xff]
          %v655 = vld [vmem:[%s440 + $0x20] sm:$0xff]
          %v656 = vld [vmem:[%s440 + $0x28] sm:$0xff]
          %v657 = vld [vmem:[%s440 + $0x30] sm:$0xff]
          %v658 = vld [vmem:[%s440 + $0x38] sm:$0xff]
          %v659 = vld [vmem:[%s440 + $0x40] sm:$0xff]
          %v660 = vld [vmem:[%s440 + $0x48] sm:$0xff]
          %v661 = vld [vmem:[%s440 + $0x50] sm:$0xff]
          %v662 = vld [vmem:[%s440 + $0x58] sm:$0xff]
          %v663 = vld [vmem:[%s440 + $0x60] sm:$0xff]
          %v664 = vld [vmem:[%s440 + $0x68] sm:$0xff]
          %v665 = vld [vmem:[%s440 + $0x70] sm:$0xff]
          %v666 = vld [vmem:[%s440 + $0x78] sm:$0xff]
          %v667 = vld [vmem:[%s440 + $0x80] sm:$0xff]
          %v668 = vld [vmem:[%s440 + $0x88] sm:$0xff]
          %v669 = vld [vmem:[%s440 + $0x90] sm:$0xff]
          %v670 = vld [vmem:[%s440 + $0x98] sm:$0xff]
          %v671 = vld [vmem:[%s440 + $0xa0] sm:$0xff]
          %v672 = vld [vmem:[%s440 + $0xa8] sm:$0xff]
          %v673 = vld [vmem:[%s440 + $0xb0] sm:$0xff]
          %v674 = vld [vmem:[%s440 + $0xb8] sm:$0xff]
          %v675 = vld [vmem:[%s440 + $0xc0] sm:$0xff]
          %v676 = vld [vmem:[%s440 + $0xc8] sm:$0xff]
          %v677 = vld [vmem:[%s440 + $0xd0] sm:$0xff]
          %v678 = vld [vmem:[%s440 + $0xd8] sm:$0xff]
          %v679 = vld [vmem:[%s440 + $0xe0] sm:$0xff]
          %v680 = vld [vmem:[%s440 + $0xe8] sm:$0xff]
          %v681 = vld [vmem:[%s440 + $0xf0] sm:$0xff]
          %v682 = vld [vmem:[%s440 + $0xf8] sm:$0xff]
          %v683 = vld [vmem:[%s440 + $0x100] sm:$0xff]
          %v684 = vld [vmem:[%s440 + $0x108] sm:$0xff]
          %v685 = vld [vmem:[%s440 + $0x110] sm:$0xff]
          %v686 = vld [vmem:[%s440 + $0x118] sm:$0xff]
          %v687 = vld [vmem:[%s440 + $0x120] sm:$0xff]
          %v688 = vld [vmem:[%s440 + $0x128] sm:$0xff]
          %v689 = vld [vmem:[%s440 + $0x130] sm:$0xff]
          %v690 = vld [vmem:[%s440 + $0x138] sm:$0xff]
          %v691 = vld [vmem:[%s440 + $0x140] sm:$0xff]
          %v692 = vld [vmem:[%s440 + $0x148] sm:$0xff]
          %v693 = vld [vmem:[%s440 + $0x150] sm:$0xff]
          %v694 = vld [vmem:[%s440 + $0x158] sm:$0xff]
          %v695 = vld [vmem:[%s440 + $0x160] sm:$0xff]
          %v696 = vld [vmem:[%s440 + $0x168] sm:$0xff]
          %v697 = vld [vmem:[%s440 + $0x170] sm:$0xff]
          %v698 = vld [vmem:[%s440 + $0x178] sm:$0xff]
          %v699 = vld [vmem:[%s440 + $0x180] sm:$0xff]
          %v700 = vld [vmem:[%s440 + $0x188] sm:$0xff]
          %v701 = vld [vmem:[%s440 + $0x190] sm:$0xff]
          %v702 = vld [vmem:[%s440 + $0x198] sm:$0xff]
          %v703 = vld [vmem:[%s440 + $0x1a0] sm:$0xff]
          %v704 = vld [vmem:[%s440 + $0x1a8] sm:$0xff]
          %v705 = vld [vmem:[%s440 + $0x1b0] sm:$0xff]
          %v706 = vld [vmem:[%s440 + $0x1b8] sm:$0xff]
          %v707 = vld [vmem:[%s440 + $0x1c0] sm:$0xff]
          %v708 = vld [vmem:[%s440 + $0x1c8] sm:$0xff]
          %v709 = vld [vmem:[%s440 + $0x1d0] sm:$0xff]
          %v710 = vld [vmem:[%s440 + $0x1d8] sm:$0xff]
          %v711 = vld [vmem:[%s440 + $0x1e0] sm:$0xff]
          %v712 = vld [vmem:[%s440 + $0x1e8] sm:$0xff]
          %v713 = vld [vmem:[%s440 + $0x1f0] sm:$0xff]
          %v714 = vld [vmem:[%s440 + $0x1f8] sm:$0xff]
          %s715 = scalar_lea.vmem [#allocation2], 64
          %716 = vst [vmem:[%s715 + $0x10] sm:$0xff] %v651
          %717 = vst [vmem:[%s715 + $0x18] sm:$0xff] %v652
          %718 = vst [vmem:[%s715 + $0x20] sm:$0xff] %v653
          %719 = vst [vmem:[%s715 + $0x28] sm:$0xff] %v654
          %720 = vst [vmem:[%s715 + $0x50] sm:$0xff] %v655
          %721 = vst [vmem:[%s715 + $0x58] sm:$0xff] %v656
          %722 = vst [vmem:[%s715 + $0x60] sm:$0xff] %v657
          %723 = vst [vmem:[%s715 + $0x68] sm:$0xff] %v658
          %724 = vst [vmem:[%s715 + $0x90] sm:$0xff] %v659
          %725 = vst [vmem:[%s715 + $0x98] sm:$0xff] %v660
          %726 = vst [vmem:[%s715 + $0xa0] sm:$0xff] %v661
          %727 = vst [vmem:[%s715 + $0xa8] sm:$0xff] %v662
          %728 = vst [vmem:[%s715 + $0xd0] sm:$0xff] %v663
          %729 = vst [vmem:[%s715 + $0xd8] sm:$0xff] %v664
          %730 = vst [vmem:[%s715 + $0xe0] sm:$0xff] %v665
          %731 = vst [vmem:[%s715 + $0xe8] sm:$0xff] %v666
          %732 = vst [vmem:[%s715 + $0x110] sm:$0xff] %v667
          %733 = vst [vmem:[%s715 + $0x118] sm:$0xff] %v668
          %734 = vst [vmem:[%s715 + $0x120] sm:$0xff] %v669
          %735 = vst [vmem:[%s715 + $0x128] sm:$0xff] %v670
          %736 = vst [vmem:[%s715 + $0x150] sm:$0xff] %v671
          %737 = vst [vmem:[%s715 + $0x158] sm:$0xff] %v672
          %738 = vst [vmem:[%s715 + $0x160] sm:$0xff] %v673
          %739 = vst [vmem:[%s715 + $0x168] sm:$0xff] %v674
          %740 = vst [vmem:[%s715 + $0x190] sm:$0xff] %v675
          %741 = vst [vmem:[%s715 + $0x198] sm:$0xff] %v676
          %742 = vst [vmem:[%s715 + $0x1a0] sm:$0xff] %v677
          %743 = vst [vmem:[%s715 + $0x1a8] sm:$0xff] %v678
          %744 = vst [vmem:[%s715 + $0x1d0] sm:$0xff] %v679
          %745 = vst [vmem:[%s715 + $0x1d8] sm:$0xff] %v680
          %746 = vst [vmem:[%s715 + $0x1e0] sm:$0xff] %v681
          %747 = vst [vmem:[%s715 + $0x1e8] sm:$0xff] %v682
          %748 = vst [vmem:[%s715 + $0x210] sm:$0xff] %v683
          %749 = vst [vmem:[%s715 + $0x218] sm:$0xff] %v684
          %750 = vst [vmem:[%s715 + $0x220] sm:$0xff] %v685
          %751 = vst [vmem:[%s715 + $0x228] sm:$0xff] %v686
          %752 = vst [vmem:[%s715 + $0x250] sm:$0xff] %v687
          %753 = vst [vmem:[%s715 + $0x258] sm:$0xff] %v688
          %754 = vst [vmem:[%s715 + $0x260] sm:$0xff] %v689
          %755 = vst [vmem:[%s715 + $0x268] sm:$0xff] %v690
          %756 = vst [vmem:[%s715 + $0x290] sm:$0xff] %v691
          %757 = vst [vmem:[%s715 + $0x298] sm:$0xff] %v692
          %758 = vst [vmem:[%s715 + $0x2a0] sm:$0xff] %v693
          %759 = vst [vmem:[%s715 + $0x2a8] sm:$0xff] %v694
          %760 = vst [vmem:[%s715 + $0x2d0] sm:$0xff] %v695
          %761 = vst [vmem:[%s715 + $0x2d8] sm:$0xff] %v696
          %762 = vst [vmem:[%s715 + $0x2e0] sm:$0xff] %v697
          %763 = vst [vmem:[%s715 + $0x2e8] sm:$0xff] %v698
          %764 = vst [vmem:[%s715 + $0x310] sm:$0xff] %v699
          %765 = vst [vmem:[%s715 + $0x318] sm:$0xff] %v700
          %766 = vst [vmem:[%s715 + $0x320] sm:$0xff] %v701
          %767 = vst [vmem:[%s715 + $0x328] sm:$0xff] %v702
          %768 = vst [vmem:[%s715 + $0x350] sm:$0xff] %v703
          %769 = vst [vmem:[%s715 + $0x358] sm:$0xff] %v704
          %770 = vst [vmem:[%s715 + $0x360] sm:$0xff] %v705
          %771 = vst [vmem:[%s715 + $0x368] sm:$0xff] %v706
          %772 = vst [vmem:[%s715 + $0x390] sm:$0xff] %v707
          %773 = vst [vmem:[%s715 + $0x398] sm:$0xff] %v708
          %774 = vst [vmem:[%s715 + $0x3a0] sm:$0xff] %v709
          %775 = vst [vmem:[%s715 + $0x3a8] sm:$0xff] %v710
          %776 = vst [vmem:[%s715 + $0x3d0] sm:$0xff] %v711
          %777 = vst [vmem:[%s715 + $0x3d8] sm:$0xff] %v712
          %778 = vst [vmem:[%s715 + $0x3e0] sm:$0xff] %v713
          %779 = vst [vmem:[%s715 + $0x3e8] sm:$0xff] %v714
        $region80: #{_lambda_.1} parent=55 // pred_fallthru
          _
        %v780 = vld [vmem:[%s543] sm:$0x3]
        %v781 = vld [vmem:[#allocation2] sm:$0x80]
        %v782 = vld [vmem:[#allocation2 + $0x8] sm:$0x80]
        %v783 = vld [vmem:[#allocation2 + $0x10] sm:$0xff]
        %v784 = vld [vmem:[#allocation2 + $0x18] sm:$0xff]
        %v785 = vld [vmem:[#allocation2 + $0x20] sm:$0x7f]
        %v786 = vld [vmem:[#allocation2 + $0x28] sm:$0x7f]
        %v787 = vld [vmem:[#allocation2 + $0x40] sm:$0x80]
        %v788 = vld [vmem:[#allocation2 + $0x48] sm:$0x80]
        %v789 = vld [vmem:[#allocation2 + $0x50] sm:$0xff]
        %v790 = vld [vmem:[#allocation2 + $0x58] sm:$0xff]
        %v791 = vld [vmem:[#allocation2 + $0x60] sm:$0x7f]
        %v792 = vld [vmem:[#allocation2 + $0x68] sm:$0x7f]
        %v793 = vld [vmem:[#allocation2 + $0x80] sm:$0x80]
        %v794 = vld [vmem:[#allocation2 + $0x88] sm:$0x80]
        %v795 = vld [vmem:[#allocation2 + $0x90] sm:$0xff]
        %v796 = vld [vmem:[#allocation2 + $0x98] sm:$0xff]
        %v797 = vld [vmem:[#allocation2 + $0xa0] sm:$0x7f]
        %v798 = vld [vmem:[#allocation2 + $0xa8] sm:$0x7f]
        %v799 = vld [vmem:[#allocation2 + $0xc0] sm:$0x80]
        %v800 = vld [vmem:[#allocation2 + $0xc8] sm:$0x80]
        %v801 = vld [vmem:[#allocation2 + $0xd0] sm:$0xff]
        %v802 = vld [vmem:[#allocation2 + $0xd8] sm:$0xff]
        %v803 = vld [vmem:[#allocation2 + $0xe0] sm:$0x7f]
        %v804 = vld [vmem:[#allocation2 + $0xe8] sm:$0x7f]
        %v805 = vld [vmem:[#allocation2 + $0x100] sm:$0x80]
        %v806 = vld [vmem:[#allocation2 + $0x108] sm:$0x80]
        %v807 = vld [vmem:[#allocation2 + $0x110] sm:$0xff]
        %v808 = vld [vmem:[#allocation2 + $0x118] sm:$0xff]
        %v809 = vld [vmem:[#allocation2 + $0x120] sm:$0x7f]
        %v810 = vld [vmem:[#allocation2 + $0x128] sm:$0x7f]
        %v811 = vld [vmem:[#allocation2 + $0x140] sm:$0x80]
        %v812 = vld [vmem:[#allocation2 + $0x148] sm:$0x80]
        %v813 = vld [vmem:[#allocation2 + $0x150] sm:$0xff]
        %v814 = vld [vmem:[#allocation2 + $0x158] sm:$0xff]
        %v815 = vld [vmem:[#allocation2 + $0x160] sm:$0x7f]
        %v816 = vld [vmem:[#allocation2 + $0x168] sm:$0x7f]
        %v817 = vld [vmem:[#allocation2 + $0x180] sm:$0x80]
        %v818 = vld [vmem:[#allocation2 + $0x188] sm:$0x80]
        %v819 = vld [vmem:[#allocation2 + $0x190] sm:$0xff]
        %v820 = vld [vmem:[#allocation2 + $0x198] sm:$0xff]
        %v821 = vld [vmem:[#allocation2 + $0x1a0] sm:$0x7f]
        %v822 = vld [vmem:[#allocation2 + $0x1a8] sm:$0x7f]
        %v823 = vld [vmem:[#allocation2 + $0x1c0] sm:$0x80]
        %v824 = vld [vmem:[#allocation2 + $0x1c8] sm:$0x80]
        %v825 = vld [vmem:[#allocation2 + $0x1d0] sm:$0xff]
        %v826 = vld [vmem:[#allocation2 + $0x1d8] sm:$0xff]
        %v827 = vld [vmem:[#allocation2 + $0x1e0] sm:$0x7f]
        %v828 = vld [vmem:[#allocation2 + $0x1e8] sm:$0x7f]
        %v829 = vld [vmem:[#allocation2 + $0x200] sm:$0x80]
        %v830 = vld [vmem:[#allocation2 + $0x208] sm:$0x80]
        %v831 = vld [vmem:[#allocation2 + $0x210] sm:$0xff]
        %v832 = vld [vmem:[#allocation2 + $0x218] sm:$0xff]
        %v833 = vld [vmem:[#allocation2 + $0x220] sm:$0x7f]
        %v834 = vld [vmem:[#allocation2 + $0x228] sm:$0x7f]
        %v835 = vld [vmem:[#allocation2 + $0x240] sm:$0x80]
        %v836 = vld [vmem:[#allocation2 + $0x248] sm:$0x80]
        %v837 = vld [vmem:[#allocation2 + $0x250] sm:$0xff]
        %v838 = vld [vmem:[#allocation2 + $0x258] sm:$0xff]
        %v839 = vld [vmem:[#allocation2 + $0x260] sm:$0x7f]
        %v840 = vld [vmem:[#allocation2 + $0x268] sm:$0x7f]
        %v841 = vld [vmem:[#allocation2 + $0x280] sm:$0x80]
        %v842 = vld [vmem:[#allocation2 + $0x288] sm:$0x80]
        %v843 = vld [vmem:[#allocation2 + $0x290] sm:$0xff]
        %v844 = vld [vmem:[#allocation2 + $0x298] sm:$0xff]
        %v845 = vld [vmem:[#allocation2 + $0x2a0] sm:$0x7f]
        %v846 = vld [vmem:[#allocation2 + $0x2a8] sm:$0x7f]
        %v847 = vld [vmem:[#allocation2 + $0x2c0] sm:$0x80]
        %v848 = vld [vmem:[#allocation2 + $0x2c8] sm:$0x80]
        %v849 = vld [vmem:[#allocation2 + $0x2d0] sm:$0xff]
        %v850 = vld [vmem:[#allocation2 + $0x2d8] sm:$0xff]
        %v851 = vld [vmem:[#allocation2 + $0x2e0] sm:$0x7f]
        %v852 = vld [vmem:[#allocation2 + $0x2e8] sm:$0x7f]
        %v853 = vld [vmem:[#allocation2 + $0x300] sm:$0x80]
        %v854 = vld [vmem:[#allocation2 + $0x308] sm:$0x80]
        %v855 = vld [vmem:[#allocation2 + $0x310] sm:$0xff]
        %v856 = vld [vmem:[#allocation2 + $0x318] sm:$0xff]
        %v857 = vld [vmem:[#allocation2 + $0x320] sm:$0x7f]
        %v858 = vld [vmem:[#allocation2 + $0x328] sm:$0x7f]
        %v859 = vld [vmem:[#allocation2 + $0x340] sm:$0x80]
        %v860 = vld [vmem:[#allocation2 + $0x348] sm:$0x80]
        %v861 = vld [vmem:[#allocation2 + $0x350] sm:$0xff]
        %v862 = vld [vmem:[#allocation2 + $0x358] sm:$0xff]
        %v863 = vld [vmem:[#allocation2 + $0x360] sm:$0x7f]
        %v864 = vld [vmem:[#allocation2 + $0x368] sm:$0x7f]
        %v865 = vld [vmem:[#allocation2 + $0x380] sm:$0x80]
        %v866 = vld [vmem:[#allocation2 + $0x388] sm:$0x80]
        %v867 = vld [vmem:[#allocation2 + $0x390] sm:$0xff]
        %v868 = vld [vmem:[#allocation2 + $0x398] sm:$0xff]
        %v869 = vld [vmem:[#allocation2 + $0x3a0] sm:$0x7f]
        %v870 = vld [vmem:[#allocation2 + $0x3a8] sm:$0x7f]
        %v871 = vld [vmem:[#allocation2 + $0x3c0] sm:$0x80]
        %v872 = vld [vmem:[#allocation2 + $0x3c8] sm:$0x80]
        %v873 = vld [vmem:[#allocation2 + $0x3d0] sm:$0xff]
        %v874 = vld [vmem:[#allocation2 + $0x3d8] sm:$0xff]
        %v875 = vld [vmem:[#allocation2 + $0x3e0] sm:$0x7f]
        %v876 = vld [vmem:[#allocation2 + $0x3e8] sm:$0x7f]
        %v877 = vld [vmem:[#allocation2 + $0x400] sm:$0x80]
        %v878 = vld [vmem:[#allocation2 + $0x408] sm:$0x80]
        %v879 = vld [vmem:[#allocation2 + $0x410] sm:$0xff]
        %v880 = vld [vmem:[#allocation2 + $0x418] sm:$0xff]
        %v881 = vld [vmem:[#allocation2 + $0x420] sm:$0x7f]
        %v882 = vld [vmem:[#allocation2 + $0x428] sm:$0x7f]
        %v883 = vld [vmem:[#allocation2 + $0x440] sm:$0x80]
        %v884 = vld [vmem:[#allocation2 + $0x448] sm:$0x80]
        %v885 = vld [vmem:[#allocation2 + $0x450] sm:$0xff]
        %v886 = vld [vmem:[#allocation2 + $0x458] sm:$0xff]
        %v887 = vld [vmem:[#allocation2 + $0x460] sm:$0x7f]
        %v888 = vld [vmem:[#allocation2 + $0x468] sm:$0x7f]
        %v890 = vlaneseq
        %v891 = vshrl.u32 %v890, 7
        %v892 = vsub.s32 0, %v891
        %v893 = vrot.slane %v780, %v892
        %v894 = vlaneseq
        %v895 = vshrl.u32 %v894, 7
        %v896 = vsub.s32 1, %v895
        %v897 = vrot.slane %v780, %v896
        %v900 = vmul.f32 %v781, %v893
        %v901 = vmul.f32 %v782, %v897
        %v902 = vmul.f32 %v783, %v893
        %v903 = vmul.f32 %v784, %v897
        %v904 = vmul.f32 %v785, %v893
        %v905 = vmul.f32 %v786, %v897
        %v906 = vmul.f32 %v787, %v893
        %v907 = vmul.f32 %v788, %v897
        %v908 = vmul.f32 %v789, %v893
        %v909 = vmul.f32 %v790, %v897
        %v910 = vmul.f32 %v791, %v893
        %v911 = vmul.f32 %v792, %v897
        %v912 = vmul.f32 %v793, %v893
        %v913 = vmul.f32 %v794, %v897
        %v914 = vmul.f32 %v795, %v893
        %v915 = vmul.f32 %v796, %v897
        %v916 = vmul.f32 %v797, %v893
        %v917 = vmul.f32 %v798, %v897
        %v918 = vmul.f32 %v799, %v893
        %v919 = vmul.f32 %v800, %v897
        %v920 = vmul.f32 %v801, %v893
        %v921 = vmul.f32 %v802, %v897
        %v922 = vmul.f32 %v803, %v893
        %v923 = vmul.f32 %v804, %v897
        %v924 = vmul.f32 %v805, %v893
        %v925 = vmul.f32 %v806, %v897
        %v926 = vmul.f32 %v807, %v893
        %v927 = vmul.f32 %v808, %v897
        %v928 = vmul.f32 %v809, %v893
        %v929 = vmul.f32 %v810, %v897
        %v930 = vmul.f32 %v811, %v893
        %v931 = vmul.f32 %v812, %v897
        %v932 = vmul.f32 %v813, %v893
        %v933 = vmul.f32 %v814, %v897
        %v934 = vmul.f32 %v815, %v893
        %v935 = vmul.f32 %v816, %v897
        %v936 = vmul.f32 %v817, %v893
        %v937 = vmul.f32 %v818, %v897
        %v938 = vmul.f32 %v819, %v893
        %v939 = vmul.f32 %v820, %v897
        %v940 = vmul.f32 %v821, %v893
        %v941 = vmul.f32 %v822, %v897
        %v942 = vmul.f32 %v823, %v893
        %v943 = vmul.f32 %v824, %v897
        %v944 = vmul.f32 %v825, %v893
        %v945 = vmul.f32 %v826, %v897
        %v946 = vmul.f32 %v827, %v893
        %v947 = vmul.f32 %v828, %v897
        %v948 = vmul.f32 %v829, %v893
        %v949 = vmul.f32 %v830, %v897
        %v950 = vmul.f32 %v831, %v893
        %v951 = vmul.f32 %v832, %v897
        %v952 = vmul.f32 %v833, %v893
        %v953 = vmul.f32 %v834, %v897
        %v954 = vmul.f32 %v835, %v893
        %v955 = vmul.f32 %v836, %v897
        %v956 = vmul.f32 %v837, %v893
        %v957 = vmul.f32 %v838, %v897
        %v958 = vmul.f32 %v839, %v893
        %v959 = vmul.f32 %v840, %v897
        %v960 = vmul.f32 %v841, %v893
        %v961 = vmul.f32 %v842, %v897
        %v962 = vmul.f32 %v843, %v893
        %v963 = vmul.f32 %v844, %v897
        %v964 = vmul.f32 %v845, %v893
        %v965 = vmul.f32 %v846, %v897
        %v966 = vmul.f32 %v847, %v893
        %v967 = vmul.f32 %v848, %v897
        %v968 = vmul.f32 %v849, %v893
        %v969 = vmul.f32 %v850, %v897
        %v970 = vmul.f32 %v851, %v893
        %v971 = vmul.f32 %v852, %v897
        %v972 = vmul.f32 %v853, %v893
        %v973 = vmul.f32 %v854, %v897
        %v974 = vmul.f32 %v855, %v893
        %v975 = vmul.f32 %v856, %v897
        %v976 = vmul.f32 %v857, %v893
        %v977 = vmul.f32 %v858, %v897
        %v978 = vmul.f32 %v859, %v893
        %v979 = vmul.f32 %v860, %v897
        %v980 = vmul.f32 %v861, %v893
        %v981 = vmul.f32 %v862, %v897
        %v982 = vmul.f32 %v863, %v893
        %v983 = vmul.f32 %v864, %v897
        %v984 = vmul.f32 %v865, %v893
        %v985 = vmul.f32 %v866, %v897
        %v986 = vmul.f32 %v867, %v893
        %v987 = vmul.f32 %v868, %v897
        %v988 = vmul.f32 %v869, %v893
        %v989 = vmul.f32 %v870, %v897
        %v990 = vmul.f32 %v871, %v893
        %v991 = vmul.f32 %v872, %v897
        %v992 = vmul.f32 %v873, %v893
        %v993 = vmul.f32 %v874, %v897
        %v994 = vmul.f32 %v875, %v893
        %v995 = vmul.f32 %v876, %v897
        %v996 = vmul.f32 %v877, %v893
        %v997 = vmul.f32 %v878, %v897
        %v998 = vmul.f32 %v879, %v893
        %v999 = vmul.f32 %v880, %v897
        %v1000 = vmul.f32 %v881, %v893
        %v1001 = vmul.f32 %v882, %v897
        %v1002 = vmul.f32 %v883, %v893
        %v1003 = vmul.f32 %v884, %v897
        %v1004 = vmul.f32 %v885, %v893
        %v1005 = vmul.f32 %v886, %v897
        %v1006 = vmul.f32 %v887, %v893
        %v1007 = vmul.f32 %v888, %v897
        %vm1116 = vcmask 1040384
        %v1117 = vrot.slane %v900, 7
        %v1118 = vrot.slane %v902, 7
        %v1119 = vsel %vm1116, %v1117, %v1118
        %v1120 = vrot.slane %v901, 7
        %v1121 = vrot.slane %v903, 7
        %v1122 = vsel %vm1116, %v1120, %v1121
        %v1123 = vrot.slane %v904, 7
        %v1124 = vsel %vm1116, %v1118, %v1123
        %v1125 = vrot.slane %v905, 7
        %v1126 = vsel %vm1116, %v1121, %v1125
        %v1127 = vrot.slane %v906, 7
        %v1128 = vrot.slane %v908, 7
        %v1129 = vsel %vm1116, %v1127, %v1128
        %v1130 = vrot.slane %v907, 7
        %v1131 = vrot.slane %v909, 7
        %v1132 = vsel %vm1116, %v1130, %v1131
        %v1133 = vrot.slane %v910, 7
        %v1134 = vsel %vm1116, %v1128, %v1133
        %v1135 = vrot.slane %v911, 7
        %v1136 = vsel %vm1116, %v1131, %v1135
        %v1137 = vrot.slane %v912, 7
        %v1138 = vrot.slane %v914, 7
        %v1139 = vsel %vm1116, %v1137, %v1138
        %v1140 = vrot.slane %v913, 7
        %v1141 = vrot.slane %v915, 7
        %v1142 = vsel %vm1116, %v1140, %v1141
        %v1143 = vrot.slane %v916, 7
        %v1144 = vsel %vm1116, %v1138, %v1143
        %v1145 = vrot.slane %v917, 7
        %v1146 = vsel %vm1116, %v1141, %v1145
        %v1147 = vrot.slane %v918, 7
        %v1148 = vrot.slane %v920, 7
        %v1149 = vsel %vm1116, %v1147, %v1148
        %v1150 = vrot.slane %v919, 7
        %v1151 = vrot.slane %v921, 7
        %v1152 = vsel %vm1116, %v1150, %v1151
        %v1153 = vrot.slane %v922, 7
        %v1154 = vsel %vm1116, %v1148, %v1153
        %v1155 = vrot.slane %v923, 7
        %v1156 = vsel %vm1116, %v1151, %v1155
        %v1157 = vrot.slane %v924, 7
        %v1158 = vrot.slane %v926, 7
        %v1159 = vsel %vm1116, %v1157, %v1158
        %v1160 = vrot.slane %v925, 7
        %v1161 = vrot.slane %v927, 7
        %v1162 = vsel %vm1116, %v1160, %v1161
        %v1163 = vrot.slane %v928, 7
        %v1164 = vsel %vm1116, %v1158, %v1163
        %v1165 = vrot.slane %v929, 7
        %v1166 = vsel %vm1116, %v1161, %v1165
        %v1167 = vrot.slane %v930, 7
        %v1168 = vrot.slane %v932, 7
        %v1169 = vsel %vm1116, %v1167, %v1168
        %v1170 = vrot.slane %v931, 7
        %v1171 = vrot.slane %v933, 7
        %v1172 = vsel %vm1116, %v1170, %v1171
        %v1173 = vrot.slane %v934, 7
        %v1174 = vsel %vm1116, %v1168, %v1173
        %v1175 = vrot.slane %v935, 7
        %v1176 = vsel %vm1116, %v1171, %v1175
        %v1177 = vrot.slane %v936, 7
        %v1178 = vrot.slane %v938, 7
        %v1179 = vsel %vm1116, %v1177, %v1178
        %v1180 = vrot.slane %v937, 7
        %v1181 = vrot.slane %v939, 7
        %v1182 = vsel %vm1116, %v1180, %v1181
        %v1183 = vrot.slane %v940, 7
        %v1184 = vsel %vm1116, %v1178, %v1183
        %v1185 = vrot.slane %v941, 7
        %v1186 = vsel %vm1116, %v1181, %v1185
        %v1187 = vrot.slane %v942, 7
        %v1188 = vrot.slane %v944, 7
        %v1189 = vsel %vm1116, %v1187, %v1188
        %v1190 = vrot.slane %v943, 7
        %v1191 = vrot.slane %v945, 7
        %v1192 = vsel %vm1116, %v1190, %v1191
        %v1193 = vrot.slane %v946, 7
        %v1194 = vsel %vm1116, %v1188, %v1193
        %v1195 = vrot.slane %v947, 7
        %v1196 = vsel %vm1116, %v1191, %v1195
        %v1197 = vrot.slane %v948, 7
        %v1198 = vrot.slane %v950, 7
        %v1199 = vsel %vm1116, %v1197, %v1198
        %v1200 = vrot.slane %v949, 7
        %v1201 = vrot.slane %v951, 7
        %v1202 = vsel %vm1116, %v1200, %v1201
        %v1203 = vrot.slane %v952, 7
        %v1204 = vsel %vm1116, %v1198, %v1203
        %v1205 = vrot.slane %v953, 7
        %v1206 = vsel %vm1116, %v1201, %v1205
        %v1207 = vrot.slane %v954, 7
        %v1208 = vrot.slane %v956, 7
        %v1209 = vsel %vm1116, %v1207, %v1208
        %v1210 = vrot.slane %v955, 7
        %v1211 = vrot.slane %v957, 7
        %v1212 = vsel %vm1116, %v1210, %v1211
        %v1213 = vrot.slane %v958, 7
        %v1214 = vsel %vm1116, %v1208, %v1213
        %v1215 = vrot.slane %v959, 7
        %v1216 = vsel %vm1116, %v1211, %v1215
        %v1217 = vrot.slane %v960, 7
        %v1218 = vrot.slane %v962, 7
        %v1219 = vsel %vm1116, %v1217, %v1218
        %v1220 = vrot.slane %v961, 7
        %v1221 = vrot.slane %v963, 7
        %v1222 = vsel %vm1116, %v1220, %v1221
        %v1223 = vrot.slane %v964, 7
        %v1224 = vsel %vm1116, %v1218, %v1223
        %v1225 = vrot.slane %v965, 7
        %v1226 = vsel %vm1116, %v1221, %v1225
        %v1227 = vrot.slane %v966, 7
        %v1228 = vrot.slane %v968, 7
        %v1229 = vsel %vm1116, %v1227, %v1228
        %v1230 = vrot.slane %v967, 7
        %v1231 = vrot.slane %v969, 7
        %v1232 = vsel %vm1116, %v1230, %v1231
        %v1233 = vrot.slane %v970, 7
        %v1234 = vsel %vm1116, %v1228, %v1233
        %v1235 = vrot.slane %v971, 7
        %v1236 = vsel %vm1116, %v1231, %v1235
        %v1237 = vrot.slane %v972, 7
        %v1238 = vrot.slane %v974, 7
        %v1239 = vsel %vm1116, %v1237, %v1238
        %v1240 = vrot.slane %v973, 7
        %v1241 = vrot.slane %v975, 7
        %v1242 = vsel %vm1116, %v1240, %v1241
        %v1243 = vrot.slane %v976, 7
        %v1244 = vsel %vm1116, %v1238, %v1243
        %v1245 = vrot.slane %v977, 7
        %v1246 = vsel %vm1116, %v1241, %v1245
        %v1247 = vrot.slane %v978, 7
        %v1248 = vrot.slane %v980, 7
        %v1249 = vsel %vm1116, %v1247, %v1248
        %v1250 = vrot.slane %v979, 7
        %v1251 = vrot.slane %v981, 7
        %v1252 = vsel %vm1116, %v1250, %v1251
        %v1253 = vrot.slane %v982, 7
        %v1254 = vsel %vm1116, %v1248, %v1253
        %v1255 = vrot.slane %v983, 7
        %v1256 = vsel %vm1116, %v1251, %v1255
        %v1257 = vrot.slane %v984, 7
        %v1258 = vrot.slane %v986, 7
        %v1259 = vsel %vm1116, %v1257, %v1258
        %v1260 = vrot.slane %v985, 7
        %v1261 = vrot.slane %v987, 7
        %v1262 = vsel %vm1116, %v1260, %v1261
        %v1263 = vrot.slane %v988, 7
        %v1264 = vsel %vm1116, %v1258, %v1263
        %v1265 = vrot.slane %v989, 7
        %v1266 = vsel %vm1116, %v1261, %v1265
        %v1267 = vrot.slane %v990, 7
        %v1268 = vrot.slane %v992, 7
        %v1269 = vsel %vm1116, %v1267, %v1268
        %v1270 = vrot.slane %v991, 7
        %v1271 = vrot.slane %v993, 7
        %v1272 = vsel %vm1116, %v1270, %v1271
        %v1273 = vrot.slane %v994, 7
        %v1274 = vsel %vm1116, %v1268, %v1273
        %v1275 = vrot.slane %v995, 7
        %v1276 = vsel %vm1116, %v1271, %v1275
        %v1277 = vrot.slane %v996, 7
        %v1278 = vrot.slane %v998, 7
        %v1279 = vsel %vm1116, %v1277, %v1278
        %v1280 = vrot.slane %v997, 7
        %v1281 = vrot.slane %v999, 7
        %v1282 = vsel %vm1116, %v1280, %v1281
        %v1283 = vrot.slane %v1000, 7
        %v1284 = vsel %vm1116, %v1278, %v1283
        %v1285 = vrot.slane %v1001, 7
        %v1286 = vsel %vm1116, %v1281, %v1285
        %v1287 = vrot.slane %v1002, 7
        %v1288 = vrot.slane %v1004, 7
        %v1289 = vsel %vm1116, %v1287, %v1288
        %v1290 = vrot.slane %v1003, 7
        %v1291 = vrot.slane %v1005, 7
        %v1292 = vsel %vm1116, %v1290, %v1291
        %v1293 = vrot.slane %v1006, 7
        %v1294 = vsel %vm1116, %v1288, %v1293
        %v1295 = vrot.slane %v1007, 7
        %v1296 = vsel %vm1116, %v1291, %v1295
        %1369 = vst [vmem:[#allocation3] sm:$0xff] %v1119
        %1370 = vst [vmem:[#allocation3 + $0x8] sm:$0xff] %v1122
        %1371 = vst [vmem:[#allocation3 + $0x30] sm:$0xff] %v1124
        %1372 = vst [vmem:[#allocation3 + $0x38] sm:$0xff] %v1126
        %1373 = vst [vmem:[#allocation3 + $0x60] sm:$0xff] %v1129
        %1374 = vst [vmem:[#allocation3 + $0x68] sm:$0xff] %v1132
        %1375 = vst [vmem:[#allocation3 + $0x90] sm:$0xff] %v1134
        %1376 = vst [vmem:[#allocation3 + $0x98] sm:$0xff] %v1136
        %1377 = vst [vmem:[#allocation3 + $0xc0] sm:$0xff] %v1139
        %1378 = vst [vmem:[#allocation3 + $0xc8] sm:$0xff] %v1142
        %1379 = vst [vmem:[#allocation3 + $0xf0] sm:$0xff] %v1144
        %1380 = vst [vmem:[#allocation3 + $0xf8] sm:$0xff] %v1146
        %1381 = vst [vmem:[#allocation3 + $0x120] sm:$0xff] %v1149
        %1382 = vst [vmem:[#allocation3 + $0x128] sm:$0xff] %v1152
        %1383 = vst [vmem:[#allocation3 + $0x150] sm:$0xff] %v1154
        %1384 = vst [vmem:[#allocation3 + $0x158] sm:$0xff] %v1156
        %1385 = vst [vmem:[#allocation3 + $0x180] sm:$0xff] %v1159
        %1386 = vst [vmem:[#allocation3 + $0x188] sm:$0xff] %v1162
        %1387 = vst [vmem:[#allocation3 + $0x1b0] sm:$0xff] %v1164
        %1388 = vst [vmem:[#allocation3 + $0x1b8] sm:$0xff] %v1166
        %1389 = vst [vmem:[#allocation3 + $0x1e0] sm:$0xff] %v1169
        %1390 = vst [vmem:[#allocation3 + $0x1e8] sm:$0xff] %v1172
        %1391 = vst [vmem:[#allocation3 + $0x210] sm:$0xff] %v1174
        %1392 = vst [vmem:[#allocation3 + $0x218] sm:$0xff] %v1176
        %1393 = vst [vmem:[#allocation3 + $0x240] sm:$0xff] %v1179
        %1394 = vst [vmem:[#allocation3 + $0x248] sm:$0xff] %v1182
        %1395 = vst [vmem:[#allocation3 + $0x270] sm:$0xff] %v1184
        %1396 = vst [vmem:[#allocation3 + $0x278] sm:$0xff] %v1186
        %1397 = vst [vmem:[#allocation3 + $0x2a0] sm:$0xff] %v1189
        %1398 = vst [vmem:[#allocation3 + $0x2a8] sm:$0xff] %v1192
        %1399 = vst [vmem:[#allocation3 + $0x2d0] sm:$0xff] %v1194
        %1400 = vst [vmem:[#allocation3 + $0x2d8] sm:$0xff] %v1196
        %1401 = vst [vmem:[#allocation3 + $0x300] sm:$0xff] %v1199
        %1402 = vst [vmem:[#allocation3 + $0x308] sm:$0xff] %v1202
        %1403 = vst [vmem:[#allocation3 + $0x330] sm:$0xff] %v1204
        %1404 = vst [vmem:[#allocation3 + $0x338] sm:$0xff] %v1206
        %1405 = vst [vmem:[#allocation3 + $0x360] sm:$0xff] %v1209
        %1406 = vst [vmem:[#allocation3 + $0x368] sm:$0xff] %v1212
        %1407 = vst [vmem:[#allocation3 + $0x390] sm:$0xff] %v1214
        %1408 = vst [vmem:[#allocation3 + $0x398] sm:$0xff] %v1216
        %1409 = vst [vmem:[#allocation3 + $0x3c0] sm:$0xff] %v1219
        %1410 = vst [vmem:[#allocation3 + $0x3c8] sm:$0xff] %v1222
        %1411 = vst [vmem:[#allocation3 + $0x3f0] sm:$0xff] %v1224
        %1412 = vst [vmem:[#allocation3 + $0x3f8] sm:$0xff] %v1226
        %1413 = vst [vmem:[#allocation3 + $0x420] sm:$0xff] %v1229
        %1414 = vst [vmem:[#allocation3 + $0x428] sm:$0xff] %v1232
        %1415 = vst [vmem:[#allocation3 + $0x450] sm:$0xff] %v1234
        %1416 = vst [vmem:[#allocation3 + $0x458] sm:$0xff] %v1236
        %1417 = vst [vmem:[#allocation3 + $0x480] sm:$0xff] %v1239
        %1418 = vst [vmem:[#allocation3 + $0x488] sm:$0xff] %v1242
        %1419 = vst [vmem:[#allocation3 + $0x4b0] sm:$0xff] %v1244
        %1420 = vst [vmem:[#allocation3 + $0x4b8] sm:$0xff] %v1246
        %1421 = vst [vmem:[#allocation3 + $0x4e0] sm:$0xff] %v1249
        %1422 = vst [vmem:[#allocation3 + $0x4e8] sm:$0xff] %v1252
        %1423 = vst [vmem:[#allocation3 + $0x510] sm:$0xff] %v1254
        %1424 = vst [vmem:[#allocation3 + $0x518] sm:$0xff] %v1256
        %1425 = vst [vmem:[#allocation3 + $0x540] sm:$0xff] %v1259
        %1426 = vst [vmem:[#allocation3 + $0x548] sm:$0xff] %v1262
        %1427 = vst [vmem:[#allocation3 + $0x570] sm:$0xff] %v1264
        %1428 = vst [vmem:[#allocation3 + $0x578] sm:$0xff] %v1266
        %1429 = vst [vmem:[#allocation3 + $0x5a0] sm:$0xff] %v1269
        %1430 = vst [vmem:[#allocation3 + $0x5a8] sm:$0xff] %v1272
        %1431 = vst [vmem:[#allocation3 + $0x5d0] sm:$0xff] %v1274
        %1432 = vst [vmem:[#allocation3 + $0x5d8] sm:$0xff] %v1276
        %1433 = vst [vmem:[#allocation3 + $0x600] sm:$0xff] %v1279
        %1434 = vst [vmem:[#allocation3 + $0x608] sm:$0xff] %v1282
        %1435 = vst [vmem:[#allocation3 + $0x630] sm:$0xff] %v1284
        %1436 = vst [vmem:[#allocation3 + $0x638] sm:$0xff] %v1286
        %1437 = vst [vmem:[#allocation3 + $0x660] sm:$0xff] %v1289
        %1438 = vst [vmem:[#allocation3 + $0x668] sm:$0xff] %v1292
        %1439 = vst [vmem:[#allocation3 + $0x690] sm:$0xff] %v1294
        %1440 = vst [vmem:[#allocation3 + $0x698] sm:$0xff] %v1296
        %v1441 = vld [vmem:[#allocation2 + $0x10] sm:$0xff]
        %v1442 = vld [vmem:[#allocation2 + $0x18] sm:$0xff]
        %v1443 = vld [vmem:[#allocation2 + $0x20] sm:$0xff]
        %v1444 = vld [vmem:[#allocation2 + $0x28] sm:$0xff]
        %v1445 = vld [vmem:[#allocation2 + $0x50] sm:$0xff]
        %v1446 = vld [vmem:[#allocation2 + $0x58] sm:$0xff]
        %v1447 = vld [vmem:[#allocation2 + $0x60] sm:$0xff]
        %v1448 = vld [vmem:[#allocation2 + $0x68] sm:$0xff]
        %v1449 = vld [vmem:[#allocation2 + $0x90] sm:$0xff]
        %v1450 = vld [vmem:[#allocation2 + $0x98] sm:$0xff]
        %v1451 = vld [vmem:[#allocation2 + $0xa0] sm:$0xff]
        %v1452 = vld [vmem:[#allocation2 + $0xa8] sm:$0xff]
        %v1453 = vld [vmem:[#allocation2 + $0xd0] sm:$0xff]
        %v1454 = vld [vmem:[#allocation2 + $0xd8] sm:$0xff]
        %v1455 = vld [vmem:[#allocation2 + $0xe0] sm:$0xff]
        %v1456 = vld [vmem:[#allocation2 + $0xe8] sm:$0xff]
        %v1457 = vld [vmem:[#allocation2 + $0x110] sm:$0xff]
        %v1458 = vld [vmem:[#allocation2 + $0x118] sm:$0xff]
        %v1459 = vld [vmem:[#allocation2 + $0x120] sm:$0xff]
        %v1460 = vld [vmem:[#allocation2 + $0x128] sm:$0xff]
        %v1461 = vld [vmem:[#allocation2 + $0x150] sm:$0xff]
        %v1462 = vld [vmem:[#allocation2 + $0x158] sm:$0xff]
        %v1463 = vld [vmem:[#allocation2 + $0x160] sm:$0xff]
        %v1464 = vld [vmem:[#allocation2 + $0x168] sm:$0xff]
        %v1465 = vld [vmem:[#allocation2 + $0x190] sm:$0xff]
        %v1466 = vld [vmem:[#allocation2 + $0x198] sm:$0xff]
        %v1467 = vld [vmem:[#allocation2 + $0x1a0] sm:$0xff]
        %v1468 = vld [vmem:[#allocation2 + $0x1a8] sm:$0xff]
        %v1469 = vld [vmem:[#allocation2 + $0x1d0] sm:$0xff]
        %v1470 = vld [vmem:[#allocation2 + $0x1d8] sm:$0xff]
        %v1471 = vld [vmem:[#allocation2 + $0x1e0] sm:$0xff]
        %v1472 = vld [vmem:[#allocation2 + $0x1e8] sm:$0xff]
        %v1473 = vld [vmem:[#allocation2 + $0x210] sm:$0xff]
        %v1474 = vld [vmem:[#allocation2 + $0x218] sm:$0xff]
        %v1475 = vld [vmem:[#allocation2 + $0x220] sm:$0xff]
        %v1476 = vld [vmem:[#allocation2 + $0x228] sm:$0xff]
        %v1477 = vld [vmem:[#allocation2 + $0x250] sm:$0xff]
        %v1478 = vld [vmem:[#allocation2 + $0x258] sm:$0xff]
        %v1479 = vld [vmem:[#allocation2 + $0x260] sm:$0xff]
        %v1480 = vld [vmem:[#allocation2 + $0x268] sm:$0xff]
        %v1481 = vld [vmem:[#allocation2 + $0x290] sm:$0xff]
        %v1482 = vld [vmem:[#allocation2 + $0x298] sm:$0xff]
        %v1483 = vld [vmem:[#allocation2 + $0x2a0] sm:$0xff]
        %v1484 = vld [vmem:[#allocation2 + $0x2a8] sm:$0xff]
        %v1485 = vld [vmem:[#allocation2 + $0x2d0] sm:$0xff]
        %v1486 = vld [vmem:[#allocation2 + $0x2d8] sm:$0xff]
        %v1487 = vld [vmem:[#allocation2 + $0x2e0] sm:$0xff]
        %v1488 = vld [vmem:[#allocation2 + $0x2e8] sm:$0xff]
        %v1489 = vld [vmem:[#allocation2 + $0x310] sm:$0xff]
        %v1490 = vld [vmem:[#allocation2 + $0x318] sm:$0xff]
        %v1491 = vld [vmem:[#allocation2 + $0x320] sm:$0xff]
        %v1492 = vld [vmem:[#allocation2 + $0x328] sm:$0xff]
        %v1493 = vld [vmem:[#allocation2 + $0x350] sm:$0xff]
        %v1494 = vld [vmem:[#allocation2 + $0x358] sm:$0xff]
        %v1495 = vld [vmem:[#allocation2 + $0x360] sm:$0xff]
        %v1496 = vld [vmem:[#allocation2 + $0x368] sm:$0xff]
        %v1497 = vld [vmem:[#allocation2 + $0x390] sm:$0xff]
        %v1498 = vld [vmem:[#allocation2 + $0x398] sm:$0xff]
        %v1499 = vld [vmem:[#allocation2 + $0x3a0] sm:$0xff]
        %v1500 = vld [vmem:[#allocation2 + $0x3a8] sm:$0xff]
        %v1501 = vld [vmem:[#allocation2 + $0x3d0] sm:$0xff]
        %v1502 = vld [vmem:[#allocation2 + $0x3d8] sm:$0xff]
        %v1503 = vld [vmem:[#allocation2 + $0x3e0] sm:$0xff]
        %v1504 = vld [vmem:[#allocation2 + $0x3e8] sm:$0xff]
        %v1505 = vld [vmem:[#allocation2 + $0x410] sm:$0xff]
        %v1506 = vld [vmem:[#allocation2 + $0x418] sm:$0xff]
        %v1507 = vld [vmem:[#allocation2 + $0x420] sm:$0xff]
        %v1508 = vld [vmem:[#allocation2 + $0x428] sm:$0xff]
        %v1509 = vld [vmem:[#allocation2 + $0x450] sm:$0xff]
        %v1510 = vld [vmem:[#allocation2 + $0x458] sm:$0xff]
        %v1511 = vld [vmem:[#allocation2 + $0x460] sm:$0xff]
        %v1512 = vld [vmem:[#allocation2 + $0x468] sm:$0xff]
        %v1513 = vmul.f32 %v1441, %v893
        %v1514 = vmul.f32 %v1442, %v897
        %v1515 = vmul.f32 %v1443, %v893
        %v1516 = vmul.f32 %v1444, %v897
        %v1517 = vmul.f32 %v1445, %v893
        %v1518 = vmul.f32 %v1446, %v897
        %v1519 = vmul.f32 %v1447, %v893
        %v1520 = vmul.f32 %v1448, %v897
        %v1521 = vmul.f32 %v1449, %v893
        %v1522 = vmul.f32 %v1450, %v897
        %v1523 = vmul.f32 %v1451, %v893
        %v1524 = vmul.f32 %v1452, %v897
        %v1525 = vmul.f32 %v1453, %v893
        %v1526 = vmul.f32 %v1454, %v897
        %v1527 = vmul.f32 %v1455, %v893
        %v1528 = vmul.f32 %v1456, %v897
        %v1529 = vmul.f32 %v1457, %v893
        %v1530 = vmul.f32 %v1458, %v897
        %v1531 = vmul.f32 %v1459, %v893
        %v1532 = vmul.f32 %v1460, %v897
        %v1533 = vmul.f32 %v1461, %v893
        %v1534 = vmul.f32 %v1462, %v897
        %v1535 = vmul.f32 %v1463, %v893
        %v1536 = vmul.f32 %v1464, %v897
        %v1537 = vmul.f32 %v1465, %v893
        %v1538 = vmul.f32 %v1466, %v897
        %v1539 = vmul.f32 %v1467, %v893
        %v1540 = vmul.f32 %v1468, %v897
        %v1541 = vmul.f32 %v1469, %v893
        %v1542 = vmul.f32 %v1470, %v897
        %v1543 = vmul.f32 %v1471, %v893
        %v1544 = vmul.f32 %v1472, %v897
        %v1545 = vmul.f32 %v1473, %v893
        %v1546 = vmul.f32 %v1474, %v897
        %v1547 = vmul.f32 %v1475, %v893
        %v1548 = vmul.f32 %v1476, %v897
        %v1549 = vmul.f32 %v1477, %v893
        %v1550 = vmul.f32 %v1478, %v897
        %v1551 = vmul.f32 %v1479, %v893
        %v1552 = vmul.f32 %v1480, %v897
        %v1553 = vmul.f32 %v1481, %v893
        %v1554 = vmul.f32 %v1482, %v897
        %v1555 = vmul.f32 %v1483, %v893
        %v1556 = vmul.f32 %v1484, %v897
        %v1557 = vmul.f32 %v1485, %v893
        %v1558 = vmul.f32 %v1486, %v897
        %v1559 = vmul.f32 %v1487, %v893
        %v1560 = vmul.f32 %v1488, %v897
        %v1561 = vmul.f32 %v1489, %v893
        %v1562 = vmul.f32 %v1490, %v897
        %v1563 = vmul.f32 %v1491, %v893
        %v1564 = vmul.f32 %v1492, %v897
        %v1565 = vmul.f32 %v1493, %v893
        %v1566 = vmul.f32 %v1494, %v897
        %v1567 = vmul.f32 %v1495, %v893
        %v1568 = vmul.f32 %v1496, %v897
        %v1569 = vmul.f32 %v1497, %v893
        %v1570 = vmul.f32 %v1498, %v897
        %v1571 = vmul.f32 %v1499, %v893
        %v1572 = vmul.f32 %v1500, %v897
        %v1573 = vmul.f32 %v1501, %v893
        %v1574 = vmul.f32 %v1502, %v897
        %v1575 = vmul.f32 %v1503, %v893
        %v1576 = vmul.f32 %v1504, %v897
        %v1577 = vmul.f32 %v1505, %v893
        %v1578 = vmul.f32 %v1506, %v897
        %v1579 = vmul.f32 %v1507, %v893
        %v1580 = vmul.f32 %v1508, %v897
        %v1581 = vmul.f32 %v1509, %v893
        %v1582 = vmul.f32 %v1510, %v897
        %v1583 = vmul.f32 %v1511, %v893
        %v1584 = vmul.f32 %v1512, %v897
        %1585 = vst [vmem:[#allocation3 + $0x10] sm:$0xff] %v1513
        %1586 = vst [vmem:[#allocation3 + $0x18] sm:$0xff] %v1514
        %1587 = vst [vmem:[#allocation3 + $0x40] sm:$0xff] %v1515
        %1588 = vst [vmem:[#allocation3 + $0x48] sm:$0xff] %v1516
        %1589 = vst [vmem:[#allocation3 + $0x70] sm:$0xff] %v1517
        %1590 = vst [vmem:[#allocation3 + $0x78] sm:$0xff] %v1518
        %1591 = vst [vmem:[#allocation3 + $0xa0] sm:$0xff] %v1519
        %1592 = vst [vmem:[#allocation3 + $0xa8] sm:$0xff] %v1520
        %1593 = vst [vmem:[#allocation3 + $0xd0] sm:$0xff] %v1521
        %1594 = vst [vmem:[#allocation3 + $0xd8] sm:$0xff] %v1522
        %1595 = vst [vmem:[#allocation3 + $0x100] sm:$0xff] %v1523
        %1596 = vst [vmem:[#allocation3 + $0x108] sm:$0xff] %v1524
        %1597 = vst [vmem:[#allocation3 + $0x130] sm:$0xff] %v1525
        %1598 = vst [vmem:[#allocation3 + $0x138] sm:$0xff] %v1526
        %1599 = vst [vmem:[#allocation3 + $0x160] sm:$0xff] %v1527
        %1600 = vst [vmem:[#allocation3 + $0x168] sm:$0xff] %v1528
        %1601 = vst [vmem:[#allocation3 + $0x190] sm:$0xff] %v1529
        %1602 = vst [vmem:[#allocation3 + $0x198] sm:$0xff] %v1530
        %1603 = vst [vmem:[#allocation3 + $0x1c0] sm:$0xff] %v1531
        %1604 = vst [vmem:[#allocation3 + $0x1c8] sm:$0xff] %v1532
        %1605 = vst [vmem:[#allocation3 + $0x1f0] sm:$0xff] %v1533
        %1606 = vst [vmem:[#allocation3 + $0x1f8] sm:$0xff] %v1534
        %1607 = vst [vmem:[#allocation3 + $0x220] sm:$0xff] %v1535
        %1608 = vst [vmem:[#allocation3 + $0x228] sm:$0xff] %v1536
        %1609 = vst [vmem:[#allocation3 + $0x250] sm:$0xff] %v1537
        %1610 = vst [vmem:[#allocation3 + $0x258] sm:$0xff] %v1538
        %1611 = vst [vmem:[#allocation3 + $0x280] sm:$0xff] %v1539
        %1612 = vst [vmem:[#allocation3 + $0x288] sm:$0xff] %v1540
        %1613 = vst [vmem:[#allocation3 + $0x2b0] sm:$0xff] %v1541
        %1614 = vst [vmem:[#allocation3 + $0x2b8] sm:$0xff] %v1542
        %1615 = vst [vmem:[#allocation3 + $0x2e0] sm:$0xff] %v1543
        %1616 = vst [vmem:[#allocation3 + $0x2e8] sm:$0xff] %v1544
        %1617 = vst [vmem:[#allocation3 + $0x310] sm:$0xff] %v1545
        %1618 = vst [vmem:[#allocation3 + $0x318] sm:$0xff] %v1546
        %1619 = vst [vmem:[#allocation3 + $0x340] sm:$0xff] %v1547
        %1620 = vst [vmem:[#allocation3 + $0x348] sm:$0xff] %v1548
        %1621 = vst [vmem:[#allocation3 + $0x370] sm:$0xff] %v1549
        %1622 = vst [vmem:[#allocation3 + $0x378] sm:$0xff] %v1550
        %1623 = vst [vmem:[#allocation3 + $0x3a0] sm:$0xff] %v1551
        %1624 = vst [vmem:[#allocation3 + $0x3a8] sm:$0xff] %v1552
        %1625 = vst [vmem:[#allocation3 + $0x3d0] sm:$0xff] %v1553
        %1626 = vst [vmem:[#allocation3 + $0x3d8] sm:$0xff] %v1554
        %1627 = vst [vmem:[#allocation3 + $0x400] sm:$0xff] %v1555
        %1628 = vst [vmem:[#allocation3 + $0x408] sm:$0xff] %v1556
        %1629 = vst [vmem:[#allocation3 + $0x430] sm:$0xff] %v1557
        %1630 = vst [vmem:[#allocation3 + $0x438] sm:$0xff] %v1558
        %1631 = vst [vmem:[#allocation3 + $0x460] sm:$0xff] %v1559
        %1632 = vst [vmem:[#allocation3 + $0x468] sm:$0xff] %v1560
        %1633 = vst [vmem:[#allocation3 + $0x490] sm:$0xff] %v1561
        %1634 = vst [vmem:[#allocation3 + $0x498] sm:$0xff] %v1562
        %1635 = vst [vmem:[#allocation3 + $0x4c0] sm:$0xff] %v1563
        %1636 = vst [vmem:[#allocation3 + $0x4c8] sm:$0xff] %v1564
        %1637 = vst [vmem:[#allocation3 + $0x4f0] sm:$0xff] %v1565
        %1638 = vst [vmem:[#allocation3 + $0x4f8] sm:$0xff] %v1566
        %1639 = vst [vmem:[#allocation3 + $0x520] sm:$0xff] %v1567
        %1640 = vst [vmem:[#allocation3 + $0x528] sm:$0xff] %v1568
        %1641 = vst [vmem:[#allocation3 + $0x550] sm:$0xff] %v1569
        %1642 = vst [vmem:[#allocation3 + $0x558] sm:$0xff] %v1570
        %1643 = vst [vmem:[#allocation3 + $0x580] sm:$0xff] %v1571
        %1644 = vst [vmem:[#allocation3 + $0x588] sm:$0xff] %v1572
        %1645 = vst [vmem:[#allocation3 + $0x5b0] sm:$0xff] %v1573
        %1646 = vst [vmem:[#allocation3 + $0x5b8] sm:$0xff] %v1574
        %1647 = vst [vmem:[#allocation3 + $0x5e0] sm:$0xff] %v1575
        %1648 = vst [vmem:[#allocation3 + $0x5e8] sm:$0xff] %v1576
        %1649 = vst [vmem:[#allocation3 + $0x610] sm:$0xff] %v1577
        %1650 = vst [vmem:[#allocation3 + $0x618] sm:$0xff] %v1578
        %1651 = vst [vmem:[#allocation3 + $0x640] sm:$0xff] %v1579
        %1652 = vst [vmem:[#allocation3 + $0x648] sm:$0xff] %v1580
        %1653 = vst [vmem:[#allocation3 + $0x670] sm:$0xff] %v1581
        %1654 = vst [vmem:[#allocation3 + $0x678] sm:$0xff] %v1582
        %1655 = vst [vmem:[#allocation3 + $0x6a0] sm:$0xff] %v1583
        %1656 = vst [vmem:[#allocation3 + $0x6a8] sm:$0xff] %v1584
        %v1657 = vld [vmem:[#allocation2 + $0x10] sm:$0xfe]
        %v1658 = vld [vmem:[#allocation2 + $0x18] sm:$0xfe]
        %v1659 = vld [vmem:[#allocation2 + $0x20] sm:$0xff]
        %v1660 = vld [vmem:[#allocation2 + $0x28] sm:$0xff]
        %v1661 = vld [vmem:[#allocation2 + $0x30] sm:$0x1]
        %v1662 = vld [vmem:[#allocation2 + $0x38] sm:$0x1]
        %v1663 = vld [vmem:[#allocation2 + $0x50] sm:$0xfe]
        %v1664 = vld [vmem:[#allocation2 + $0x58] sm:$0xfe]
        %v1665 = vld [vmem:[#allocation2 + $0x60] sm:$0xff]
        %v1666 = vld [vmem:[#allocation2 + $0x68] sm:$0xff]
        %v1667 = vld [vmem:[#allocation2 + $0x70] sm:$0x1]
        %v1668 = vld [vmem:[#allocation2 + $0x78] sm:$0x1]
        %v1669 = vld [vmem:[#allocation2 + $0x90] sm:$0xfe]
        %v1670 = vld [vmem:[#allocation2 + $0x98] sm:$0xfe]
        %v1671 = vld [vmem:[#allocation2 + $0xa0] sm:$0xff]
        %v1672 = vld [vmem:[#allocation2 + $0xa8] sm:$0xff]
        %v1673 = vld [vmem:[#allocation2 + $0xb0] sm:$0x1]
        %v1674 = vld [vmem:[#allocation2 + $0xb8] sm:$0x1]
        %v1675 = vld [vmem:[#allocation2 + $0xd0] sm:$0xfe]
        %v1676 = vld [vmem:[#allocation2 + $0xd8] sm:$0xfe]
        %v1677 = vld [vmem:[#allocation2 + $0xe0] sm:$0xff]
        %v1678 = vld [vmem:[#allocation2 + $0xe8] sm:$0xff]
        %v1679 = vld [vmem:[#allocation2 + $0xf0] sm:$0x1]
        %v1680 = vld [vmem:[#allocation2 + $0xf8] sm:$0x1]
        %v1681 = vld [vmem:[#allocation2 + $0x110] sm:$0xfe]
        %v1682 = vld [vmem:[#allocation2 + $0x118] sm:$0xfe]
        %v1683 = vld [vmem:[#allocation2 + $0x120] sm:$0xff]
        %v1684 = vld [vmem:[#allocation2 + $0x128] sm:$0xff]
        %v1685 = vld [vmem:[#allocation2 + $0x130] sm:$0x1]
        %v1686 = vld [vmem:[#allocation2 + $0x138] sm:$0x1]
        %v1687 = vld [vmem:[#allocation2 + $0x150] sm:$0xfe]
        %v1688 = vld [vmem:[#allocation2 + $0x158] sm:$0xfe]
        %v1689 = vld [vmem:[#allocation2 + $0x160] sm:$0xff]
        %v1690 = vld [vmem:[#allocation2 + $0x168] sm:$0xff]
        %v1691 = vld [vmem:[#allocation2 + $0x170] sm:$0x1]
        %v1692 = vld [vmem:[#allocation2 + $0x178] sm:$0x1]
        %v1693 = vld [vmem:[#allocation2 + $0x190] sm:$0xfe]
        %v1694 = vld [vmem:[#allocation2 + $0x198] sm:$0xfe]
        %v1695 = vld [vmem:[#allocation2 + $0x1a0] sm:$0xff]
        %v1696 = vld [vmem:[#allocation2 + $0x1a8] sm:$0xff]
        %v1697 = vld [vmem:[#allocation2 + $0x1b0] sm:$0x1]
        %v1698 = vld [vmem:[#allocation2 + $0x1b8] sm:$0x1]
        %v1699 = vld [vmem:[#allocation2 + $0x1d0] sm:$0xfe]
        %v1700 = vld [vmem:[#allocation2 + $0x1d8] sm:$0xfe]
        %v1701 = vld [vmem:[#allocation2 + $0x1e0] sm:$0xff]
        %v1702 = vld [vmem:[#allocation2 + $0x1e8] sm:$0xff]
        %v1703 = vld [vmem:[#allocation2 + $0x1f0] sm:$0x1]
        %v1704 = vld [vmem:[#allocation2 + $0x1f8] sm:$0x1]
        %v1705 = vld [vmem:[#allocation2 + $0x210] sm:$0xfe]
        %v1706 = vld [vmem:[#allocation2 + $0x218] sm:$0xfe]
        %v1707 = vld [vmem:[#allocation2 + $0x220] sm:$0xff]
        %v1708 = vld [vmem:[#allocation2 + $0x228] sm:$0xff]
        %v1709 = vld [vmem:[#allocation2 + $0x230] sm:$0x1]
        %v1710 = vld [vmem:[#allocation2 + $0x238] sm:$0x1]
        %v1711 = vld [vmem:[#allocation2 + $0x250] sm:$0xfe]
        %v1712 = vld [vmem:[#allocation2 + $0x258] sm:$0xfe]
        %v1713 = vld [vmem:[#allocation2 + $0x260] sm:$0xff]
        %v1714 = vld [vmem:[#allocation2 + $0x268] sm:$0xff]
        %v1715 = vld [vmem:[#allocation2 + $0x270] sm:$0x1]
        %v1716 = vld [vmem:[#allocation2 + $0x278] sm:$0x1]
        %v1717 = vld [vmem:[#allocation2 + $0x290] sm:$0xfe]
        %v1718 = vld [vmem:[#allocation2 + $0x298] sm:$0xfe]
        %v1719 = vld [vmem:[#allocation2 + $0x2a0] sm:$0xff]
        %v1720 = vld [vmem:[#allocation2 + $0x2a8] sm:$0xff]
        %v1721 = vld [vmem:[#allocation2 + $0x2b0] sm:$0x1]
        %v1722 = vld [vmem:[#allocation2 + $0x2b8] sm:$0x1]
        %v1723 = vld [vmem:[#allocation2 + $0x2d0] sm:$0xfe]
        %v1724 = vld [vmem:[#allocation2 + $0x2d8] sm:$0xfe]
        %v1725 = vld [vmem:[#allocation2 + $0x2e0] sm:$0xff]
        %v1726 = vld [vmem:[#allocation2 + $0x2e8] sm:$0xff]
        %v1727 = vld [vmem:[#allocation2 + $0x2f0] sm:$0x1]
        %v1728 = vld [vmem:[#allocation2 + $0x2f8] sm:$0x1]
        %v1729 = vld [vmem:[#allocation2 + $0x310] sm:$0xfe]
        %v1730 = vld [vmem:[#allocation2 + $0x318] sm:$0xfe]
        %v1731 = vld [vmem:[#allocation2 + $0x320] sm:$0xff]
        %v1732 = vld [vmem:[#allocation2 + $0x328] sm:$0xff]
        %v1733 = vld [vmem:[#allocation2 + $0x330] sm:$0x1]
        %v1734 = vld [vmem:[#allocation2 + $0x338] sm:$0x1]
        %v1735 = vld [vmem:[#allocation2 + $0x350] sm:$0xfe]
        %v1736 = vld [vmem:[#allocation2 + $0x358] sm:$0xfe]
        %v1737 = vld [vmem:[#allocation2 + $0x360] sm:$0xff]
        %v1738 = vld [vmem:[#allocation2 + $0x368] sm:$0xff]
        %v1739 = vld [vmem:[#allocation2 + $0x370] sm:$0x1]
        %v1740 = vld [vmem:[#allocation2 + $0x378] sm:$0x1]
        %v1741 = vld [vmem:[#allocation2 + $0x390] sm:$0xfe]
        %v1742 = vld [vmem:[#allocation2 + $0x398] sm:$0xfe]
        %v1743 = vld [vmem:[#allocation2 + $0x3a0] sm:$0xff]
        %v1744 = vld [vmem:[#allocation2 + $0x3a8] sm:$0xff]
        %v1745 = vld [vmem:[#allocation2 + $0x3b0] sm:$0x1]
        %v1746 = vld [vmem:[#allocation2 + $0x3b8] sm:$0x1]
        %v1747 = vld [vmem:[#allocation2 + $0x3d0] sm:$0xfe]
        %v1748 = vld [vmem:[#allocation2 + $0x3d8] sm:$0xfe]
        %v1749 = vld [vmem:[#allocation2 + $0x3e0] sm:$0xff]
        %v1750 = vld [vmem:[#allocation2 + $0x3e8] sm:$0xff]
        %v1751 = vld [vmem:[#allocation2 + $0x3f0] sm:$0x1]
        %v1752 = vld [vmem:[#allocation2 + $0x3f8] sm:$0x1]
        %v1753 = vld [vmem:[#allocation2 + $0x410] sm:$0xfe]
        %v1754 = vld [vmem:[#allocation2 + $0x418] sm:$0xfe]
        %v1755 = vld [vmem:[#allocation2 + $0x420] sm:$0xff]
        %v1756 = vld [vmem:[#allocation2 + $0x428] sm:$0xff]
        %v1757 = vld [vmem:[#allocation2 + $0x430] sm:$0x1]
        %v1758 = vld [vmem:[#allocation2 + $0x438] sm:$0x1]
        %v1759 = vld [vmem:[#allocation2 + $0x450] sm:$0xfe]
        %v1760 = vld [vmem:[#allocation2 + $0x458] sm:$0xfe]
        %v1761 = vld [vmem:[#allocation2 + $0x460] sm:$0xff]
        %v1762 = vld [vmem:[#allocation2 + $0x468] sm:$0xff]
        %v1763 = vld [vmem:[#allocation2 + $0x470] sm:$0x1]
        %v1764 = vld [vmem:[#allocation2 + $0x478] sm:$0x1]
        %v1765 = vmul.f32 %v1657, %v893
        %v1766 = vmul.f32 %v1658, %v897
        %v1767 = vmul.f32 %v1659, %v893
        %v1768 = vmul.f32 %v1660, %v897
        %v1769 = vmul.f32 %v1661, %v893
        %v1770 = vmul.f32 %v1662, %v897
        %v1771 = vmul.f32 %v1663, %v893
        %v1772 = vmul.f32 %v1664, %v897
        %v1773 = vmul.f32 %v1665, %v893
        %v1774 = vmul.f32 %v1666, %v897
        %v1775 = vmul.f32 %v1667, %v893
        %v1776 = vmul.f32 %v1668, %v897
        %v1777 = vmul.f32 %v1669, %v893
        %v1778 = vmul.f32 %v1670, %v897
        %v1779 = vmul.f32 %v1671, %v893
        %v1780 = vmul.f32 %v1672, %v897
        %v1781 = vmul.f32 %v1673, %v893
        %v1782 = vmul.f32 %v1674, %v897
        %v1783 = vmul.f32 %v1675, %v893
        %v1784 = vmul.f32 %v1676, %v897
        %v1785 = vmul.f32 %v1677, %v893
        %v1786 = vmul.f32 %v1678, %v897
        %v1787 = vmul.f32 %v1679, %v893
        %v1788 = vmul.f32 %v1680, %v897
        %v1789 = vmul.f32 %v1681, %v893
        %v1790 = vmul.f32 %v1682, %v897
        %v1791 = vmul.f32 %v1683, %v893
        %v1792 = vmul.f32 %v1684, %v897
        %v1793 = vmul.f32 %v1685, %v893
        %v1794 = vmul.f32 %v1686, %v897
        %v1795 = vmul.f32 %v1687, %v893
        %v1796 = vmul.f32 %v1688, %v897
        %v1797 = vmul.f32 %v1689, %v893
        %v1798 = vmul.f32 %v1690, %v897
        %v1799 = vmul.f32 %v1691, %v893
        %v1800 = vmul.f32 %v1692, %v897
        %v1801 = vmul.f32 %v1693, %v893
        %v1802 = vmul.f32 %v1694, %v897
        %v1803 = vmul.f32 %v1695, %v893
        %v1804 = vmul.f32 %v1696, %v897
        %v1805 = vmul.f32 %v1697, %v893
        %v1806 = vmul.f32 %v1698, %v897
        %v1807 = vmul.f32 %v1699, %v893
        %v1808 = vmul.f32 %v1700, %v897
        %v1809 = vmul.f32 %v1701, %v893
        %v1810 = vmul.f32 %v1702, %v897
        %v1811 = vmul.f32 %v1703, %v893
        %v1812 = vmul.f32 %v1704, %v897
        %v1813 = vmul.f32 %v1705, %v893
        %v1814 = vmul.f32 %v1706, %v897
        %v1815 = vmul.f32 %v1707, %v893
        %v1816 = vmul.f32 %v1708, %v897
        %v1817 = vmul.f32 %v1709, %v893
        %v1818 = vmul.f32 %v1710, %v897
        %v1819 = vmul.f32 %v1711, %v893
        %v1820 = vmul.f32 %v1712, %v897
        %v1821 = vmul.f32 %v1713, %v893
        %v1822 = vmul.f32 %v1714, %v897
        %v1823 = vmul.f32 %v1715, %v893
        %v1824 = vmul.f32 %v1716, %v897
        %v1825 = vmul.f32 %v1717, %v893
        %v1826 = vmul.f32 %v1718, %v897
        %v1827 = vmul.f32 %v1719, %v893
        %v1828 = vmul.f32 %v1720, %v897
        %v1829 = vmul.f32 %v1721, %v893
        %v1830 = vmul.f32 %v1722, %v897
        %v1831 = vmul.f32 %v1723, %v893
        %v1832 = vmul.f32 %v1724, %v897
        %v1833 = vmul.f32 %v1725, %v893
        %v1834 = vmul.f32 %v1726, %v897
        %v1835 = vmul.f32 %v1727, %v893
        %v1836 = vmul.f32 %v1728, %v897
        %v1837 = vmul.f32 %v1729, %v893
        %v1838 = vmul.f32 %v1730, %v897
        %v1839 = vmul.f32 %v1731, %v893
        %v1840 = vmul.f32 %v1732, %v897
        %v1841 = vmul.f32 %v1733, %v893
        %v1842 = vmul.f32 %v1734, %v897
        %v1843 = vmul.f32 %v1735, %v893
        %v1844 = vmul.f32 %v1736, %v897
        %v1845 = vmul.f32 %v1737, %v893
        %v1846 = vmul.f32 %v1738, %v897
        %v1847 = vmul.f32 %v1739, %v893
        %v1848 = vmul.f32 %v1740, %v897
        %v1849 = vmul.f32 %v1741, %v893
        %v1850 = vmul.f32 %v1742, %v897
        %v1851 = vmul.f32 %v1743, %v893
        %v1852 = vmul.f32 %v1744, %v897
        %v1853 = vmul.f32 %v1745, %v893
        %v1854 = vmul.f32 %v1746, %v897
        %v1855 = vmul.f32 %v1747, %v893
        %v1856 = vmul.f32 %v1748, %v897
        %v1857 = vmul.f32 %v1749, %v893
        %v1858 = vmul.f32 %v1750, %v897
        %v1859 = vmul.f32 %v1751, %v893
        %v1860 = vmul.f32 %v1752, %v897
        %v1861 = vmul.f32 %v1753, %v893
        %v1862 = vmul.f32 %v1754, %v897
        %v1863 = vmul.f32 %v1755, %v893
        %v1864 = vmul.f32 %v1756, %v897
        %v1865 = vmul.f32 %v1757, %v893
        %v1866 = vmul.f32 %v1758, %v897
        %v1867 = vmul.f32 %v1759, %v893
        %v1868 = vmul.f32 %v1760, %v897
        %v1869 = vmul.f32 %v1761, %v893
        %v1870 = vmul.f32 %v1762, %v897
        %v1871 = vmul.f32 %v1763, %v893
        %v1872 = vmul.f32 %v1764, %v897
        %vm1981 = vcmask 1046528
        %v1982 = vrot.slane %v1765, 1
        %v1983 = vrot.slane %v1767, 1
        %v1984 = vsel %vm1981, %v1982, %v1983
        %v1985 = vrot.slane %v1766, 1
        %v1986 = vrot.slane %v1768, 1
        %v1987 = vsel %vm1981, %v1985, %v1986
        %v1988 = vrot.slane %v1769, 1
        %v1989 = vsel %vm1981, %v1983, %v1988
        %v1990 = vrot.slane %v1770, 1
        %v1991 = vsel %vm1981, %v1986, %v1990
        %v1992 = vrot.slane %v1771, 1
        %v1993 = vrot.slane %v1773, 1
        %v1994 = vsel %vm1981, %v1992, %v1993
        %v1995 = vrot.slane %v1772, 1
        %v1996 = vrot.slane %v1774, 1
        %v1997 = vsel %vm1981, %v1995, %v1996
        %v1998 = vrot.slane %v1775, 1
        %v1999 = vsel %vm1981, %v1993, %v1998
        %v2000 = vrot.slane %v1776, 1
        %v2001 = vsel %vm1981, %v1996, %v2000
        %v2002 = vrot.slane %v1777, 1
        %v2003 = vrot.slane %v1779, 1
        %v2004 = vsel %vm1981, %v2002, %v2003
        %v2005 = vrot.slane %v1778, 1
        %v2006 = vrot.slane %v1780, 1
        %v2007 = vsel %vm1981, %v2005, %v2006
        %v2008 = vrot.slane %v1781, 1
        %v2009 = vsel %vm1981, %v2003, %v2008
        %v2010 = vrot.slane %v1782, 1
        %v2011 = vsel %vm1981, %v2006, %v2010
        %v2012 = vrot.slane %v1783, 1
        %v2013 = vrot.slane %v1785, 1
        %v2014 = vsel %vm1981, %v2012, %v2013
        %v2015 = vrot.slane %v1784, 1
        %v2016 = vrot.slane %v1786, 1
        %v2017 = vsel %vm1981, %v2015, %v2016
        %v2018 = vrot.slane %v1787, 1
        %v2019 = vsel %vm1981, %v2013, %v2018
        %v2020 = vrot.slane %v1788, 1
        %v2021 = vsel %vm1981, %v2016, %v2020
        %v2022 = vrot.slane %v1789, 1
        %v2023 = vrot.slane %v1791, 1
        %v2024 = vsel %vm1981, %v2022, %v2023
        %v2025 = vrot.slane %v1790, 1
        %v2026 = vrot.slane %v1792, 1
        %v2027 = vsel %vm1981, %v2025, %v2026
        %v2028 = vrot.slane %v1793, 1
        %v2029 = vsel %vm1981, %v2023, %v2028
        %v2030 = vrot.slane %v1794, 1
        %v2031 = vsel %vm1981, %v2026, %v2030
        %v2032 = vrot.slane %v1795, 1
        %v2033 = vrot.slane %v1797, 1
        %v2034 = vsel %vm1981, %v2032, %v2033
        %v2035 = vrot.slane %v1796, 1
        %v2036 = vrot.slane %v1798, 1
        %v2037 = vsel %vm1981, %v2035, %v2036
        %v2038 = vrot.slane %v1799, 1
        %v2039 = vsel %vm1981, %v2033, %v2038
        %v2040 = vrot.slane %v1800, 1
        %v2041 = vsel %vm1981, %v2036, %v2040
        %v2042 = vrot.slane %v1801, 1
        %v2043 = vrot.slane %v1803, 1
        %v2044 = vsel %vm1981, %v2042, %v2043
        %v2045 = vrot.slane %v1802, 1
        %v2046 = vrot.slane %v1804, 1
        %v2047 = vsel %vm1981, %v2045, %v2046
        %v2048 = vrot.slane %v1805, 1
        %v2049 = vsel %vm1981, %v2043, %v2048
        %v2050 = vrot.slane %v1806, 1
        %v2051 = vsel %vm1981, %v2046, %v2050
        %v2052 = vrot.slane %v1807, 1
        %v2053 = vrot.slane %v1809, 1
        %v2054 = vsel %vm1981, %v2052, %v2053
        %v2055 = vrot.slane %v1808, 1
        %v2056 = vrot.slane %v1810, 1
        %v2057 = vsel %vm1981, %v2055, %v2056
        %v2058 = vrot.slane %v1811, 1
        %v2059 = vsel %vm1981, %v2053, %v2058
        %v2060 = vrot.slane %v1812, 1
        %v2061 = vsel %vm1981, %v2056, %v2060
        %v2062 = vrot.slane %v1813, 1
        %v2063 = vrot.slane %v1815, 1
        %v2064 = vsel %vm1981, %v2062, %v2063
        %v2065 = vrot.slane %v1814, 1
        %v2066 = vrot.slane %v1816, 1
        %v2067 = vsel %vm1981, %v2065, %v2066
        %v2068 = vrot.slane %v1817, 1
        %v2069 = vsel %vm1981, %v2063, %v2068
        %v2070 = vrot.slane %v1818, 1
        %v2071 = vsel %vm1981, %v2066, %v2070
        %v2072 = vrot.slane %v1819, 1
        %v2073 = vrot.slane %v1821, 1
        %v2074 = vsel %vm1981, %v2072, %v2073
        %v2075 = vrot.slane %v1820, 1
        %v2076 = vrot.slane %v1822, 1
        %v2077 = vsel %vm1981, %v2075, %v2076
        %v2078 = vrot.slane %v1823, 1
        %v2079 = vsel %vm1981, %v2073, %v2078
        %v2080 = vrot.slane %v1824, 1
        %v2081 = vsel %vm1981, %v2076, %v2080
        %v2082 = vrot.slane %v1825, 1
        %v2083 = vrot.slane %v1827, 1
        %v2084 = vsel %vm1981, %v2082, %v2083
        %v2085 = vrot.slane %v1826, 1
        %v2086 = vrot.slane %v1828, 1
        %v2087 = vsel %vm1981, %v2085, %v2086
        %v2088 = vrot.slane %v1829, 1
        %v2089 = vsel %vm1981, %v2083, %v2088
        %v2090 = vrot.slane %v1830, 1
        %v2091 = vsel %vm1981, %v2086, %v2090
        %v2092 = vrot.slane %v1831, 1
        %v2093 = vrot.slane %v1833, 1
        %v2094 = vsel %vm1981, %v2092, %v2093
        %v2095 = vrot.slane %v1832, 1
        %v2096 = vrot.slane %v1834, 1
        %v2097 = vsel %vm1981, %v2095, %v2096
        %v2098 = vrot.slane %v1835, 1
        %v2099 = vsel %vm1981, %v2093, %v2098
        %v2100 = vrot.slane %v1836, 1
        %v2101 = vsel %vm1981, %v2096, %v2100
        %v2102 = vrot.slane %v1837, 1
        %v2103 = vrot.slane %v1839, 1
        %v2104 = vsel %vm1981, %v2102, %v2103
        %v2105 = vrot.slane %v1838, 1
        %v2106 = vrot.slane %v1840, 1
        %v2107 = vsel %vm1981, %v2105, %v2106
        %v2108 = vrot.slane %v1841, 1
        %v2109 = vsel %vm1981, %v2103, %v2108
        %v2110 = vrot.slane %v1842, 1
        %v2111 = vsel %vm1981, %v2106, %v2110
        %v2112 = vrot.slane %v1843, 1
        %v2113 = vrot.slane %v1845, 1
        %v2114 = vsel %vm1981, %v2112, %v2113
        %v2115 = vrot.slane %v1844, 1
        %v2116 = vrot.slane %v1846, 1
        %v2117 = vsel %vm1981, %v2115, %v2116
        %v2118 = vrot.slane %v1847, 1
        %v2119 = vsel %vm1981, %v2113, %v2118
        %v2120 = vrot.slane %v1848, 1
        %v2121 = vsel %vm1981, %v2116, %v2120
        %v2122 = vrot.slane %v1849, 1
        %v2123 = vrot.slane %v1851, 1
        %v2124 = vsel %vm1981, %v2122, %v2123
        %v2125 = vrot.slane %v1850, 1
        %v2126 = vrot.slane %v1852, 1
        %v2127 = vsel %vm1981, %v2125, %v2126
        %v2128 = vrot.slane %v1853, 1
        %v2129 = vsel %vm1981, %v2123, %v2128
        %v2130 = vrot.slane %v1854, 1
        %v2131 = vsel %vm1981, %v2126, %v2130
        %v2132 = vrot.slane %v1855, 1
        %v2133 = vrot.slane %v1857, 1
        %v2134 = vsel %vm1981, %v2132, %v2133
        %v2135 = vrot.slane %v1856, 1
        %v2136 = vrot.slane %v1858, 1
        %v2137 = vsel %vm1981, %v2135, %v2136
        %v2138 = vrot.slane %v1859, 1
        %v2139 = vsel %vm1981, %v2133, %v2138
        %v2140 = vrot.slane %v1860, 1
        %v2141 = vsel %vm1981, %v2136, %v2140
        %v2142 = vrot.slane %v1861, 1
        %v2143 = vrot.slane %v1863, 1
        %v2144 = vsel %vm1981, %v2142, %v2143
        %v2145 = vrot.slane %v1862, 1
        %v2146 = vrot.slane %v1864, 1
        %v2147 = vsel %vm1981, %v2145, %v2146
        %v2148 = vrot.slane %v1865, 1
        %v2149 = vsel %vm1981, %v2143, %v2148
        %v2150 = vrot.slane %v1866, 1
        %v2151 = vsel %vm1981, %v2146, %v2150
        %v2152 = vrot.slane %v1867, 1
        %v2153 = vrot.slane %v1869, 1
        %v2154 = vsel %vm1981, %v2152, %v2153
        %v2155 = vrot.slane %v1868, 1
        %v2156 = vrot.slane %v1870, 1
        %v2157 = vsel %vm1981, %v2155, %v2156
        %v2158 = vrot.slane %v1871, 1
        %v2159 = vsel %vm1981, %v2153, %v2158
        %v2160 = vrot.slane %v1872, 1
        %v2161 = vsel %vm1981, %v2156, %v2160
        %2234 = vst [vmem:[#allocation3 + $0x20] sm:$0xff] %v1984
        %2235 = vst [vmem:[#allocation3 + $0x28] sm:$0xff] %v1987
        %2236 = vst [vmem:[#allocation3 + $0x50] sm:$0xff] %v1989
        %2237 = vst [vmem:[#allocation3 + $0x58] sm:$0xff] %v1991
        %2238 = vst [vmem:[#allocation3 + $0x80] sm:$0xff] %v1994
        %2239 = vst [vmem:[#allocation3 + $0x88] sm:$0xff] %v1997
        %2240 = vst [vmem:[#allocation3 + $0xb0] sm:$0xff] %v1999
        %2241 = vst [vmem:[#allocation3 + $0xb8] sm:$0xff] %v2001
        %2242 = vst [vmem:[#allocation3 + $0xe0] sm:$0xff] %v2004
        %2243 = vst [vmem:[#allocation3 + $0xe8] sm:$0xff] %v2007
        %2244 = vst [vmem:[#allocation3 + $0x110] sm:$0xff] %v2009
        %2245 = vst [vmem:[#allocation3 + $0x118] sm:$0xff] %v2011
        %2246 = vst [vmem:[#allocation3 + $0x140] sm:$0xff] %v2014
        %2247 = vst [vmem:[#allocation3 + $0x148] sm:$0xff] %v2017
        %2248 = vst [vmem:[#allocation3 + $0x170] sm:$0xff] %v2019
        %2249 = vst [vmem:[#allocation3 + $0x178] sm:$0xff] %v2021
        %2250 = vst [vmem:[#allocation3 + $0x1a0] sm:$0xff] %v2024
        %2251 = vst [vmem:[#allocation3 + $0x1a8] sm:$0xff] %v2027
        %2252 = vst [vmem:[#allocation3 + $0x1d0] sm:$0xff] %v2029
        %2253 = vst [vmem:[#allocation3 + $0x1d8] sm:$0xff] %v2031
        %2254 = vst [vmem:[#allocation3 + $0x200] sm:$0xff] %v2034
        %2255 = vst [vmem:[#allocation3 + $0x208] sm:$0xff] %v2037
        %2256 = vst [vmem:[#allocation3 + $0x230] sm:$0xff] %v2039
        %2257 = vst [vmem:[#allocation3 + $0x238] sm:$0xff] %v2041
        %2258 = vst [vmem:[#allocation3 + $0x260] sm:$0xff] %v2044
        %2259 = vst [vmem:[#allocation3 + $0x268] sm:$0xff] %v2047
        %2260 = vst [vmem:[#allocation3 + $0x290] sm:$0xff] %v2049
        %2261 = vst [vmem:[#allocation3 + $0x298] sm:$0xff] %v2051
        %2262 = vst [vmem:[#allocation3 + $0x2c0] sm:$0xff] %v2054
        %2263 = vst [vmem:[#allocation3 + $0x2c8] sm:$0xff] %v2057
        %2264 = vst [vmem:[#allocation3 + $0x2f0] sm:$0xff] %v2059
        %2265 = vst [vmem:[#allocation3 + $0x2f8] sm:$0xff] %v2061
        %2266 = vst [vmem:[#allocation3 + $0x320] sm:$0xff] %v2064
        %2267 = vst [vmem:[#allocation3 + $0x328] sm:$0xff] %v2067
        %2268 = vst [vmem:[#allocation3 + $0x350] sm:$0xff] %v2069
        %2269 = vst [vmem:[#allocation3 + $0x358] sm:$0xff] %v2071
        %2270 = vst [vmem:[#allocation3 + $0x380] sm:$0xff] %v2074
        %2271 = vst [vmem:[#allocation3 + $0x388] sm:$0xff] %v2077
        %2272 = vst [vmem:[#allocation3 + $0x3b0] sm:$0xff] %v2079
        %2273 = vst [vmem:[#allocation3 + $0x3b8] sm:$0xff] %v2081
        %2274 = vst [vmem:[#allocation3 + $0x3e0] sm:$0xff] %v2084
        %2275 = vst [vmem:[#allocation3 + $0x3e8] sm:$0xff] %v2087
        %2276 = vst [vmem:[#allocation3 + $0x410] sm:$0xff] %v2089
        %2277 = vst [vmem:[#allocation3 + $0x418] sm:$0xff] %v2091
        %2278 = vst [vmem:[#allocation3 + $0x440] sm:$0xff] %v2094
        %2279 = vst [vmem:[#allocation3 + $0x448] sm:$0xff] %v2097
        %2280 = vst [vmem:[#allocation3 + $0x470] sm:$0xff] %v2099
        %2281 = vst [vmem:[#allocation3 + $0x478] sm:$0xff] %v2101
        %2282 = vst [vmem:[#allocation3 + $0x4a0] sm:$0xff] %v2104
        %2283 = vst [vmem:[#allocation3 + $0x4a8] sm:$0xff] %v2107
        %2284 = vst [vmem:[#allocation3 + $0x4d0] sm:$0xff] %v2109
        %2285 = vst [vmem:[#allocation3 + $0x4d8] sm:$0xff] %v2111
        %2286 = vst [vmem:[#allocation3 + $0x500] sm:$0xff] %v2114
        %2287 = vst [vmem:[#allocation3 + $0x508] sm:$0xff] %v2117
        %2288 = vst [vmem:[#allocation3 + $0x530] sm:$0xff] %v2119
        %2289 = vst [vmem:[#allocation3 + $0x538] sm:$0xff] %v2121
        %2290 = vst [vmem:[#allocation3 + $0x560] sm:$0xff] %v2124
        %2291 = vst [vmem:[#allocation3 + $0x568] sm:$0xff] %v2127
        %2292 = vst [vmem:[#allocation3 + $0x590] sm:$0xff] %v2129
        %2293 = vst [vmem:[#allocation3 + $0x598] sm:$0xff] %v2131
        %2294 = vst [vmem:[#allocation3 + $0x5c0] sm:$0xff] %v2134
        %2295 = vst [vmem:[#allocation3 + $0x5c8] sm:$0xff] %v2137
        %2296 = vst [vmem:[#allocation3 + $0x5f0] sm:$0xff] %v2139
        %2297 = vst [vmem:[#allocation3 + $0x5f8] sm:$0xff] %v2141
        %2298 = vst [vmem:[#allocation3 + $0x620] sm:$0xff] %v2144
        %2299 = vst [vmem:[#allocation3 + $0x628] sm:$0xff] %v2147
        %2300 = vst [vmem:[#allocation3 + $0x650] sm:$0xff] %v2149
        %2301 = vst [vmem:[#allocation3 + $0x658] sm:$0xff] %v2151
        %2302 = vst [vmem:[#allocation3 + $0x680] sm:$0xff] %v2154
        %2303 = vst [vmem:[#allocation3 + $0x688] sm:$0xff] %v2157
        %2304 = vst [vmem:[#allocation3 + $0x6b0] sm:$0xff] %v2159
        %2305 = vst [vmem:[#allocation3 + $0x6b8] sm:$0xff] %v2161
        %v2306 = vld [vmem:[%s555] sm:$0x3]
        %v2307 = vld [vmem:[%s458] sm:$0x3]
        %v2308 = vld [vmem:[#allocation3] sm:$0xff]
        %v2309 = vld [vmem:[#allocation3 + $0x8] sm:$0xff]
        %v2310 = vld [vmem:[#allocation3 + $0x10] sm:$0xff]
        %v2311 = vld [vmem:[#allocation3 + $0x18] sm:$0xff]
        %v2312 = vld [vmem:[#allocation3 + $0x20] sm:$0xff]
        %v2313 = vld [vmem:[#allocation3 + $0x28] sm:$0xff]
        %v2314 = vld [vmem:[#allocation3 + $0x30] sm:$0xff]
        %v2315 = vld [vmem:[#allocation3 + $0x38] sm:$0xff]
        %v2316 = vld [vmem:[#allocation3 + $0x40] sm:$0xff]
        %v2317 = vld [vmem:[#allocation3 + $0x48] sm:$0xff]
        %v2318 = vld [vmem:[#allocation3 + $0x50] sm:$0xff]
        %v2319 = vld [vmem:[#allocation3 + $0x58] sm:$0xff]
        %v2320 = vld [vmem:[#allocation3 + $0x60] sm:$0xff]
        %v2321 = vld [vmem:[#allocation3 + $0x68] sm:$0xff]
        %v2322 = vld [vmem:[#allocation3 + $0x70] sm:$0xff]
        %v2323 = vld [vmem:[#allocation3 + $0x78] sm:$0xff]
        %v2324 = vld [vmem:[#allocation3 + $0x80] sm:$0xff]
        %v2325 = vld [vmem:[#allocation3 + $0x88] sm:$0xff]
        %v2326 = vld [vmem:[#allocation3 + $0x90] sm:$0xff]
        %v2327 = vld [vmem:[#allocation3 + $0x98] sm:$0xff]
        %v2328 = vld [vmem:[#allocation3 + $0xa0] sm:$0xff]
        %v2329 = vld [vmem:[#allocation3 + $0xa8] sm:$0xff]
        %v2330 = vld [vmem:[#allocation3 + $0xb0] sm:$0xff]
        %v2331 = vld [vmem:[#allocation3 + $0xb8] sm:$0xff]
        %v2332 = vld [vmem:[#allocation3 + $0xc0] sm:$0xff]
        %v2333 = vld [vmem:[#allocation3 + $0xc8] sm:$0xff]
        %v2334 = vld [vmem:[#allocation3 + $0xd0] sm:$0xff]
        %v2335 = vld [vmem:[#allocation3 + $0xd8] sm:$0xff]
        %v2336 = vld [vmem:[#allocation3 + $0xe0] sm:$0xff]
        %v2337 = vld [vmem:[#allocation3 + $0xe8] sm:$0xff]
        %v2338 = vld [vmem:[#allocation3 + $0xf0] sm:$0xff]
        %v2339 = vld [vmem:[#allocation3 + $0xf8] sm:$0xff]
        %v2340 = vld [vmem:[#allocation3 + $0x100] sm:$0xff]
        %v2341 = vld [vmem:[#allocation3 + $0x108] sm:$0xff]
        %v2342 = vld [vmem:[#allocation3 + $0x110] sm:$0xff]
        %v2343 = vld [vmem:[#allocation3 + $0x118] sm:$0xff]
        %v2344 = vld [vmem:[#allocation3 + $0x120] sm:$0xff]
        %v2345 = vld [vmem:[#allocation3 + $0x128] sm:$0xff]
        %v2346 = vld [vmem:[#allocation3 + $0x130] sm:$0xff]
        %v2347 = vld [vmem:[#allocation3 + $0x138] sm:$0xff]
        %v2348 = vld [vmem:[#allocation3 + $0x140] sm:$0xff]
        %v2349 = vld [vmem:[#allocation3 + $0x148] sm:$0xff]
        %v2350 = vld [vmem:[#allocation3 + $0x150] sm:$0xff]
        %v2351 = vld [vmem:[#allocation3 + $0x158] sm:$0xff]
        %v2352 = vld [vmem:[#allocation3 + $0x160] sm:$0xff]
        %v2353 = vld [vmem:[#allocation3 + $0x168] sm:$0xff]
        %v2354 = vld [vmem:[#allocation3 + $0x170] sm:$0xff]
        %v2355 = vld [vmem:[#allocation3 + $0x178] sm:$0xff]
        %v2356 = vld [vmem:[#allocation3 + $0x180] sm:$0xff]
        %v2357 = vld [vmem:[#allocation3 + $0x188] sm:$0xff]
        %v2358 = vld [vmem:[#allocation3 + $0x190] sm:$0xff]
        %v2359 = vld [vmem:[#allocation3 + $0x198] sm:$0xff]
        %v2360 = vld [vmem:[#allocation3 + $0x1a0] sm:$0xff]
        %v2361 = vld [vmem:[#allocation3 + $0x1a8] sm:$0xff]
        %v2362 = vld [vmem:[#allocation3 + $0x1b0] sm:$0xff]
        %v2363 = vld [vmem:[#allocation3 + $0x1b8] sm:$0xff]
        %v2364 = vld [vmem:[#allocation3 + $0x1c0] sm:$0xff]
        %v2365 = vld [vmem:[#allocation3 + $0x1c8] sm:$0xff]
        %v2366 = vld [vmem:[#allocation3 + $0x1d0] sm:$0xff]
        %v2367 = vld [vmem:[#allocation3 + $0x1d8] sm:$0xff]
        %v2368 = vld [vmem:[#allocation3 + $0x1e0] sm:$0xff]
        %v2369 = vld [vmem:[#allocation3 + $0x1e8] sm:$0xff]
        %v2370 = vld [vmem:[#allocation3 + $0x1f0] sm:$0xff]
        %v2371 = vld [vmem:[#allocation3 + $0x1f8] sm:$0xff]
        %v2372 = vld [vmem:[#allocation3 + $0x200] sm:$0xff]
        %v2373 = vld [vmem:[#allocation3 + $0x208] sm:$0xff]
        %v2374 = vld [vmem:[#allocation3 + $0x210] sm:$0xff]
        %v2375 = vld [vmem:[#allocation3 + $0x218] sm:$0xff]
        %v2376 = vld [vmem:[#allocation3 + $0x220] sm:$0xff]
        %v2377 = vld [vmem:[#allocation3 + $0x228] sm:$0xff]
        %v2378 = vld [vmem:[#allocation3 + $0x230] sm:$0xff]
        %v2379 = vld [vmem:[#allocation3 + $0x238] sm:$0xff]
        %v2380 = vld [vmem:[#allocation3 + $0x240] sm:$0xff]
        %v2381 = vld [vmem:[#allocation3 + $0x248] sm:$0xff]
        %v2382 = vld [vmem:[#allocation3 + $0x250] sm:$0xff]
        %v2383 = vld [vmem:[#allocation3 + $0x258] sm:$0xff]
        %v2384 = vld [vmem:[#allocation3 + $0x260] sm:$0xff]
        %v2385 = vld [vmem:[#allocation3 + $0x268] sm:$0xff]
        %v2386 = vld [vmem:[#allocation3 + $0x270] sm:$0xff]
        %v2387 = vld [vmem:[#allocation3 + $0x278] sm:$0xff]
        %v2388 = vld [vmem:[#allocation3 + $0x280] sm:$0xff]
        %v2389 = vld [vmem:[#allocation3 + $0x288] sm:$0xff]
        %v2390 = vld [vmem:[#allocation3 + $0x290] sm:$0xff]
        %v2391 = vld [vmem:[#allocation3 + $0x298] sm:$0xff]
        %v2392 = vld [vmem:[#allocation3 + $0x2a0] sm:$0xff]
        %v2393 = vld [vmem:[#allocation3 + $0x2a8] sm:$0xff]
        %v2394 = vld [vmem:[#allocation3 + $0x2b0] sm:$0xff]
        %v2395 = vld [vmem:[#allocation3 + $0x2b8] sm:$0xff]
        %v2396 = vld [vmem:[#allocation3 + $0x2c0] sm:$0xff]
        %v2397 = vld [vmem:[#allocation3 + $0x2c8] sm:$0xff]
        %v2398 = vld [vmem:[#allocation3 + $0x2d0] sm:$0xff]
        %v2399 = vld [vmem:[#allocation3 + $0x2d8] sm:$0xff]
        %v2400 = vld [vmem:[#allocation3 + $0x2e0] sm:$0xff]
        %v2401 = vld [vmem:[#allocation3 + $0x2e8] sm:$0xff]
        %v2402 = vld [vmem:[#allocation3 + $0x2f0] sm:$0xff]
        %v2403 = vld [vmem:[#allocation3 + $0x2f8] sm:$0xff]
        %v2404 = vld [vmem:[%s449] sm:$0xff]
        %v2405 = vld [vmem:[%s449 + $0x8] sm:$0xff]
        %v2406 = vld [vmem:[%s449 + $0x10] sm:$0xff]
        %v2407 = vld [vmem:[%s449 + $0x18] sm:$0xff]
        %v2408 = vld [vmem:[%s449 + $0x20] sm:$0xff]
        %v2409 = vld [vmem:[%s449 + $0x28] sm:$0xff]
        %v2410 = vld [vmem:[%s449 + $0x30] sm:$0xff]
        %v2411 = vld [vmem:[%s449 + $0x38] sm:$0xff]
        %v2412 = vld [vmem:[%s449 + $0x40] sm:$0xff]
        %v2413 = vld [vmem:[%s449 + $0x48] sm:$0xff]
        %v2414 = vld [vmem:[%s449 + $0x50] sm:$0xff]
        %v2415 = vld [vmem:[%s449 + $0x58] sm:$0xff]
        %v2416 = vld [vmem:[%s449 + $0x60] sm:$0xff]
        %v2417 = vld [vmem:[%s449 + $0x68] sm:$0xff]
        %v2418 = vld [vmem:[%s449 + $0x70] sm:$0xff]
        %v2419 = vld [vmem:[%s449 + $0x78] sm:$0xff]
        %v2420 = vld [vmem:[%s449 + $0x80] sm:$0xff]
        %v2421 = vld [vmem:[%s449 + $0x88] sm:$0xff]
        %v2422 = vld [vmem:[%s449 + $0x90] sm:$0xff]
        %v2423 = vld [vmem:[%s449 + $0x98] sm:$0xff]
        %v2424 = vld [vmem:[%s449 + $0xa0] sm:$0xff]
        %v2425 = vld [vmem:[%s449 + $0xa8] sm:$0xff]
        %v2426 = vld [vmem:[%s449 + $0xb0] sm:$0xff]
        %v2427 = vld [vmem:[%s449 + $0xb8] sm:$0xff]
        %v2428 = vld [vmem:[%s449 + $0xc0] sm:$0xff]
        %v2429 = vld [vmem:[%s449 + $0xc8] sm:$0xff]
        %v2430 = vld [vmem:[%s449 + $0xd0] sm:$0xff]
        %v2431 = vld [vmem:[%s449 + $0xd8] sm:$0xff]
        %v2432 = vld [vmem:[%s449 + $0xe0] sm:$0xff]
        %v2433 = vld [vmem:[%s449 + $0xe8] sm:$0xff]
        %v2434 = vld [vmem:[%s449 + $0xf0] sm:$0xff]
        %v2435 = vld [vmem:[%s449 + $0xf8] sm:$0xff]
        %v2436 = vld [vmem:[%s449 + $0x100] sm:$0xff]
        %v2437 = vld [vmem:[%s449 + $0x108] sm:$0xff]
        %v2438 = vld [vmem:[%s449 + $0x110] sm:$0xff]
        %v2439 = vld [vmem:[%s449 + $0x118] sm:$0xff]
        %v2440 = vld [vmem:[%s449 + $0x120] sm:$0xff]
        %v2441 = vld [vmem:[%s449 + $0x128] sm:$0xff]
        %v2442 = vld [vmem:[%s449 + $0x130] sm:$0xff]
        %v2443 = vld [vmem:[%s449 + $0x138] sm:$0xff]
        %v2444 = vld [vmem:[%s449 + $0x140] sm:$0xff]
        %v2445 = vld [vmem:[%s449 + $0x148] sm:$0xff]
        %v2446 = vld [vmem:[%s449 + $0x150] sm:$0xff]
        %v2447 = vld [vmem:[%s449 + $0x158] sm:$0xff]
        %v2448 = vld [vmem:[%s449 + $0x160] sm:$0xff]
        %v2449 = vld [vmem:[%s449 + $0x168] sm:$0xff]
        %v2450 = vld [vmem:[%s449 + $0x170] sm:$0xff]
        %v2451 = vld [vmem:[%s449 + $0x178] sm:$0xff]
        %v2452 = vld [vmem:[%s449 + $0x180] sm:$0xff]
        %v2453 = vld [vmem:[%s449 + $0x188] sm:$0xff]
        %v2454 = vld [vmem:[%s449 + $0x190] sm:$0xff]
        %v2455 = vld [vmem:[%s449 + $0x198] sm:$0xff]
        %v2456 = vld [vmem:[%s449 + $0x1a0] sm:$0xff]
        %v2457 = vld [vmem:[%s449 + $0x1a8] sm:$0xff]
        %v2458 = vld [vmem:[%s449 + $0x1b0] sm:$0xff]
        %v2459 = vld [vmem:[%s449 + $0x1b8] sm:$0xff]
        %v2460 = vld [vmem:[%s449 + $0x1c0] sm:$0xff]
        %v2461 = vld [vmem:[%s449 + $0x1c8] sm:$0xff]
        %v2462 = vld [vmem:[%s449 + $0x1d0] sm:$0xff]
        %v2463 = vld [vmem:[%s449 + $0x1d8] sm:$0xff]
        %v2464 = vld [vmem:[%s449 + $0x1e0] sm:$0xff]
        %v2465 = vld [vmem:[%s449 + $0x1e8] sm:$0xff]
        %v2466 = vld [vmem:[%s449 + $0x1f0] sm:$0xff]
        %v2467 = vld [vmem:[%s449 + $0x1f8] sm:$0xff]
        %v2468 = vld [vmem:[%s449 + $0x200] sm:$0xff]
        %v2469 = vld [vmem:[%s449 + $0x208] sm:$0xff]
        %v2470 = vld [vmem:[%s449 + $0x210] sm:$0xff]
        %v2471 = vld [vmem:[%s449 + $0x218] sm:$0xff]
        %v2472 = vld [vmem:[%s449 + $0x220] sm:$0xff]
        %v2473 = vld [vmem:[%s449 + $0x228] sm:$0xff]
        %v2474 = vld [vmem:[%s449 + $0x230] sm:$0xff]
        %v2475 = vld [vmem:[%s449 + $0x238] sm:$0xff]
        %v2476 = vld [vmem:[%s449 + $0x240] sm:$0xff]
        %v2477 = vld [vmem:[%s449 + $0x248] sm:$0xff]
        %v2478 = vld [vmem:[%s449 + $0x250] sm:$0xff]
        %v2479 = vld [vmem:[%s449 + $0x258] sm:$0xff]
        %v2480 = vld [vmem:[%s449 + $0x260] sm:$0xff]
        %v2481 = vld [vmem:[%s449 + $0x268] sm:$0xff]
        %v2482 = vld [vmem:[%s449 + $0x270] sm:$0xff]
        %v2483 = vld [vmem:[%s449 + $0x278] sm:$0xff]
        %v2484 = vld [vmem:[%s449 + $0x280] sm:$0xff]
        %v2485 = vld [vmem:[%s449 + $0x288] sm:$0xff]
        %v2486 = vld [vmem:[%s449 + $0x290] sm:$0xff]
        %v2487 = vld [vmem:[%s449 + $0x298] sm:$0xff]
        %v2488 = vld [vmem:[%s449 + $0x2a0] sm:$0xff]
        %v2489 = vld [vmem:[%s449 + $0x2a8] sm:$0xff]
        %v2490 = vld [vmem:[%s449 + $0x2b0] sm:$0xff]
        %v2491 = vld [vmem:[%s449 + $0x2b8] sm:$0xff]
        %v2492 = vld [vmem:[%s449 + $0x2c0] sm:$0xff]
        %v2493 = vld [vmem:[%s449 + $0x2c8] sm:$0xff]
        %v2494 = vld [vmem:[%s449 + $0x2d0] sm:$0xff]
        %v2495 = vld [vmem:[%s449 + $0x2d8] sm:$0xff]
        %v2496 = vld [vmem:[%s449 + $0x2e0] sm:$0xff]
        %v2497 = vld [vmem:[%s449 + $0x2e8] sm:$0xff]
        %v2498 = vld [vmem:[%s449 + $0x2f0] sm:$0xff]
        %v2499 = vld [vmem:[%s449 + $0x2f8] sm:$0xff]
        %v2500 = vld [vmem:[%s449 + $0x300] sm:$0xff]
        %v2501 = vld [vmem:[%s449 + $0x308] sm:$0xff]
        %v2502 = vld [vmem:[%s449 + $0x310] sm:$0xff]
        %v2503 = vld [vmem:[%s449 + $0x318] sm:$0xff]
        %v2504 = vld [vmem:[%s449 + $0x320] sm:$0xff]
        %v2505 = vld [vmem:[%s449 + $0x328] sm:$0xff]
        %v2506 = vld [vmem:[%s449 + $0x330] sm:$0xff]
        %v2507 = vld [vmem:[%s449 + $0x338] sm:$0xff]
        %v2508 = vld [vmem:[%s449 + $0x340] sm:$0xff]
        %v2509 = vld [vmem:[%s449 + $0x348] sm:$0xff]
        %v2510 = vld [vmem:[%s449 + $0x350] sm:$0xff]
        %v2511 = vld [vmem:[%s449 + $0x358] sm:$0xff]
        %v2512 = vld [vmem:[%s449 + $0x360] sm:$0xff]
        %v2513 = vld [vmem:[%s449 + $0x368] sm:$0xff]
        %v2514 = vld [vmem:[%s449 + $0x370] sm:$0xff]
        %v2515 = vld [vmem:[%s449 + $0x378] sm:$0xff]
        %v2516 = vld [vmem:[%s449 + $0x380] sm:$0xff]
        %v2517 = vld [vmem:[%s449 + $0x388] sm:$0xff]
        %v2518 = vld [vmem:[%s449 + $0x390] sm:$0xff]
        %v2519 = vld [vmem:[%s449 + $0x398] sm:$0xff]
        %v2520 = vld [vmem:[%s449 + $0x3a0] sm:$0xff]
        %v2521 = vld [vmem:[%s449 + $0x3a8] sm:$0xff]
        %v2522 = vld [vmem:[%s449 + $0x3b0] sm:$0xff]
        %v2523 = vld [vmem:[%s449 + $0x3b8] sm:$0xff]
        %v2524 = vld [vmem:[%s449 + $0x3c0] sm:$0xff]
        %v2525 = vld [vmem:[%s449 + $0x3c8] sm:$0xff]
        %v2526 = vld [vmem:[%s449 + $0x3d0] sm:$0xff]
        %v2527 = vld [vmem:[%s449 + $0x3d8] sm:$0xff]
        %v2528 = vld [vmem:[%s449 + $0x3e0] sm:$0xff]
        %v2529 = vld [vmem:[%s449 + $0x3e8] sm:$0xff]
        %v2530 = vld [vmem:[%s449 + $0x3f0] sm:$0xff]
        %v2531 = vld [vmem:[%s449 + $0x3f8] sm:$0xff]
        %v2532 = vld [vmem:[%s449 + $0x400] sm:$0xff]
        %v2533 = vld [vmem:[%s449 + $0x408] sm:$0xff]
        %v2534 = vld [vmem:[%s449 + $0x410] sm:$0xff]
        %v2535 = vld [vmem:[%s449 + $0x418] sm:$0xff]
        %v2536 = vld [vmem:[%s449 + $0x420] sm:$0xff]
        %v2537 = vld [vmem:[%s449 + $0x428] sm:$0xff]
        %v2538 = vld [vmem:[%s449 + $0x430] sm:$0xff]
        %v2539 = vld [vmem:[%s449 + $0x438] sm:$0xff]
        %v2540 = vld [vmem:[%s449 + $0x440] sm:$0xff]
        %v2541 = vld [vmem:[%s449 + $0x448] sm:$0xff]
        %v2542 = vld [vmem:[%s449 + $0x450] sm:$0xff]
        %v2543 = vld [vmem:[%s449 + $0x458] sm:$0xff]
        %v2544 = vld [vmem:[%s449 + $0x460] sm:$0xff]
        %v2545 = vld [vmem:[%s449 + $0x468] sm:$0xff]
        %v2546 = vld [vmem:[%s449 + $0x470] sm:$0xff]
        %v2547 = vld [vmem:[%s449 + $0x478] sm:$0xff]
        %v2548 = vld [vmem:[%s449 + $0x480] sm:$0xff]
        %v2549 = vld [vmem:[%s449 + $0x488] sm:$0xff]
        %v2550 = vld [vmem:[%s449 + $0x490] sm:$0xff]
        %v2551 = vld [vmem:[%s449 + $0x498] sm:$0xff]
        %v2552 = vld [vmem:[%s449 + $0x4a0] sm:$0xff]
        %v2553 = vld [vmem:[%s449 + $0x4a8] sm:$0xff]
        %v2554 = vld [vmem:[%s449 + $0x4b0] sm:$0xff]
        %v2555 = vld [vmem:[%s449 + $0x4b8] sm:$0xff]
        %v2556 = vld [vmem:[%s449 + $0x4c0] sm:$0xff]
        %v2557 = vld [vmem:[%s449 + $0x4c8] sm:$0xff]
        %v2558 = vld [vmem:[%s449 + $0x4d0] sm:$0xff]
        %v2559 = vld [vmem:[%s449 + $0x4d8] sm:$0xff]
        %v2560 = vld [vmem:[%s449 + $0x4e0] sm:$0xff]
        %v2561 = vld [vmem:[%s449 + $0x4e8] sm:$0xff]
        %v2562 = vld [vmem:[%s449 + $0x4f0] sm:$0xff]
        %v2563 = vld [vmem:[%s449 + $0x4f8] sm:$0xff]
        %v2564 = vld [vmem:[%s449 + $0x500] sm:$0xff]
        %v2565 = vld [vmem:[%s449 + $0x508] sm:$0xff]
        %v2566 = vld [vmem:[%s449 + $0x510] sm:$0xff]
        %v2567 = vld [vmem:[%s449 + $0x518] sm:$0xff]
        %v2568 = vld [vmem:[%s449 + $0x520] sm:$0xff]
        %v2569 = vld [vmem:[%s449 + $0x528] sm:$0xff]
        %v2570 = vld [vmem:[%s449 + $0x530] sm:$0xff]
        %v2571 = vld [vmem:[%s449 + $0x538] sm:$0xff]
        %v2572 = vld [vmem:[%s449 + $0x540] sm:$0xff]
        %v2573 = vld [vmem:[%s449 + $0x548] sm:$0xff]
        %v2574 = vld [vmem:[%s449 + $0x550] sm:$0xff]
        %v2575 = vld [vmem:[%s449 + $0x558] sm:$0xff]
        %v2576 = vld [vmem:[%s449 + $0x560] sm:$0xff]
        %v2577 = vld [vmem:[%s449 + $0x568] sm:$0xff]
        %v2578 = vld [vmem:[%s449 + $0x570] sm:$0xff]
        %v2579 = vld [vmem:[%s449 + $0x578] sm:$0xff]
        %v2580 = vld [vmem:[%s449 + $0x580] sm:$0xff]
        %v2581 = vld [vmem:[%s449 + $0x588] sm:$0xff]
        %v2582 = vld [vmem:[%s449 + $0x590] sm:$0xff]
        %v2583 = vld [vmem:[%s449 + $0x598] sm:$0xff]
        %v2584 = vld [vmem:[%s449 + $0x5a0] sm:$0xff]
        %v2585 = vld [vmem:[%s449 + $0x5a8] sm:$0xff]
        %v2586 = vld [vmem:[%s449 + $0x5b0] sm:$0xff]
        %v2587 = vld [vmem:[%s449 + $0x5b8] sm:$0xff]
        %v2588 = vld [vmem:[%s449 + $0x5c0] sm:$0xff]
        %v2589 = vld [vmem:[%s449 + $0x5c8] sm:$0xff]
        %v2590 = vld [vmem:[%s449 + $0x5d0] sm:$0xff]
        %v2591 = vld [vmem:[%s449 + $0x5d8] sm:$0xff]
        %v2592 = vld [vmem:[%s449 + $0x5e0] sm:$0xff]
        %v2593 = vld [vmem:[%s449 + $0x5e8] sm:$0xff]
        %v2594 = vld [vmem:[%s449 + $0x5f0] sm:$0xff]
        %v2595 = vld [vmem:[%s449 + $0x5f8] sm:$0xff]
        %v2596 = vld [vmem:[#allocation3 + $0x300] sm:$0xff]
        %v2597 = vld [vmem:[#allocation3 + $0x308] sm:$0xff]
        %v2598 = vld [vmem:[#allocation3 + $0x310] sm:$0xff]
        %v2599 = vld [vmem:[#allocation3 + $0x318] sm:$0xff]
        %v2600 = vld [vmem:[#allocation3 + $0x320] sm:$0xff]
        %v2601 = vld [vmem:[#allocation3 + $0x328] sm:$0xff]
        %v2602 = vld [vmem:[#allocation3 + $0x330] sm:$0xff]
        %v2603 = vld [vmem:[#allocation3 + $0x338] sm:$0xff]
        %v2604 = vld [vmem:[#allocation3 + $0x340] sm:$0xff]
        %v2605 = vld [vmem:[#allocation3 + $0x348] sm:$0xff]
        %v2606 = vld [vmem:[#allocation3 + $0x350] sm:$0xff]
        %v2607 = vld [vmem:[#allocation3 + $0x358] sm:$0xff]
        %s2608 = scalar_lea.vmem %s449, 1536 [#allocation6]
        %v2609 = vld [vmem:[%s2608] sm:$0xff]
        %v2610 = vld [vmem:[%s2608 + $0x8] sm:$0xff]
        %v2611 = vld [vmem:[%s2608 + $0x10] sm:$0xff]
        %v2612 = vld [vmem:[%s2608 + $0x18] sm:$0xff]
        %v2613 = vld [vmem:[%s2608 + $0x20] sm:$0xff]
        %v2614 = vld [vmem:[%s2608 + $0x28] sm:$0xff]
        %v2615 = vld [vmem:[%s2608 + $0x30] sm:$0xff]
        %v2616 = vld [vmem:[%s2608 + $0x38] sm:$0xff]
        %v2617 = vld [vmem:[%s2608 + $0x40] sm:$0xff]
        %v2618 = vld [vmem:[%s2608 + $0x48] sm:$0xff]
        %v2619 = vld [vmem:[%s2608 + $0x50] sm:$0xff]
        %v2620 = vld [vmem:[%s2608 + $0x58] sm:$0xff]
        %v2621 = vld [vmem:[%s2608 + $0x60] sm:$0xff]
        %v2622 = vld [vmem:[%s2608 + $0x68] sm:$0xff]
        %v2623 = vld [vmem:[%s2608 + $0x70] sm:$0xff]
        %v2624 = vld [vmem:[%s2608 + $0x78] sm:$0xff]
        %v2625 = vld [vmem:[%s2608 + $0x80] sm:$0xff]
        %v2626 = vld [vmem:[%s2608 + $0x88] sm:$0xff]
        %v2627 = vld [vmem:[%s2608 + $0x90] sm:$0xff]
        %v2628 = vld [vmem:[%s2608 + $0x98] sm:$0xff]
        %v2629 = vld [vmem:[%s2608 + $0xa0] sm:$0xff]
        %v2630 = vld [vmem:[%s2608 + $0xa8] sm:$0xff]
        %v2631 = vld [vmem:[%s2608 + $0xb0] sm:$0xff]
        %v2632 = vld [vmem:[%s2608 + $0xb8] sm:$0xff]
        %v2633 = vld [vmem:[%s2608 + $0xc0] sm:$0xff]
        %v2634 = vld [vmem:[%s2608 + $0xc8] sm:$0xff]
        %v2635 = vld [vmem:[%s2608 + $0xd0] sm:$0xff]
        %v2636 = vld [vmem:[%s2608 + $0xd8] sm:$0xff]
        %v2637 = vld [vmem:[%s2608 + $0xe0] sm:$0xff]
        %v2638 = vld [vmem:[%s2608 + $0xe8] sm:$0xff]
        %v2639 = vld [vmem:[%s2608 + $0xf0] sm:$0xff]
        %v2640 = vld [vmem:[%s2608 + $0xf8] sm:$0xff]
        %v2641 = vld [vmem:[%s2608 + $0x100] sm:$0xff]
        %v2642 = vld [vmem:[%s2608 + $0x108] sm:$0xff]
        %v2643 = vld [vmem:[%s2608 + $0x110] sm:$0xff]
        %v2644 = vld [vmem:[%s2608 + $0x118] sm:$0xff]
        %v2645 = vld [vmem:[%s2608 + $0x120] sm:$0xff]
        %v2646 = vld [vmem:[%s2608 + $0x128] sm:$0xff]
        %v2647 = vld [vmem:[%s2608 + $0x130] sm:$0xff]
        %v2648 = vld [vmem:[%s2608 + $0x138] sm:$0xff]
        %v2649 = vld [vmem:[%s2608 + $0x140] sm:$0xff]
        %v2650 = vld [vmem:[%s2608 + $0x148] sm:$0xff]
        %v2651 = vld [vmem:[%s2608 + $0x150] sm:$0xff]
        %v2652 = vld [vmem:[%s2608 + $0x158] sm:$0xff]
        %v2653 = vld [vmem:[%s2608 + $0x160] sm:$0xff]
        %v2654 = vld [vmem:[%s2608 + $0x168] sm:$0xff]
        %v2655 = vld [vmem:[%s2608 + $0x170] sm:$0xff]
        %v2656 = vld [vmem:[%s2608 + $0x178] sm:$0xff]
        %v2657 = vld [vmem:[%s2608 + $0x180] sm:$0xff]
        %v2658 = vld [vmem:[%s2608 + $0x188] sm:$0xff]
        %v2659 = vld [vmem:[%s2608 + $0x190] sm:$0xff]
        %v2660 = vld [vmem:[%s2608 + $0x198] sm:$0xff]
        %v2661 = vld [vmem:[%s2608 + $0x1a0] sm:$0xff]
        %v2662 = vld [vmem:[%s2608 + $0x1a8] sm:$0xff]
        %v2663 = vld [vmem:[%s2608 + $0x1b0] sm:$0xff]
        %v2664 = vld [vmem:[%s2608 + $0x1b8] sm:$0xff]
        %v2665 = vld [vmem:[%s2608 + $0x1c0] sm:$0xff]
        %v2666 = vld [vmem:[%s2608 + $0x1c8] sm:$0xff]
        %v2667 = vld [vmem:[%s2608 + $0x1d0] sm:$0xff]
        %v2668 = vld [vmem:[%s2608 + $0x1d8] sm:$0xff]
        %v2669 = vld [vmem:[%s2608 + $0x1e0] sm:$0xff]
        %v2670 = vld [vmem:[%s2608 + $0x1e8] sm:$0xff]
        %v2671 = vld [vmem:[%s2608 + $0x1f0] sm:$0xff]
        %v2672 = vld [vmem:[%s2608 + $0x1f8] sm:$0xff]
        %v2673 = vld [vmem:[%s2608 + $0x200] sm:$0xff]
        %v2674 = vld [vmem:[%s2608 + $0x208] sm:$0xff]
        %v2675 = vld [vmem:[%s2608 + $0x210] sm:$0xff]
        %v2676 = vld [vmem:[%s2608 + $0x218] sm:$0xff]
        %v2677 = vld [vmem:[%s2608 + $0x220] sm:$0xff]
        %v2678 = vld [vmem:[%s2608 + $0x228] sm:$0xff]
        %v2679 = vld [vmem:[%s2608 + $0x230] sm:$0xff]
        %v2680 = vld [vmem:[%s2608 + $0x238] sm:$0xff]
        %v2681 = vld [vmem:[%s2608 + $0x240] sm:$0xff]
        %v2682 = vld [vmem:[%s2608 + $0x248] sm:$0xff]
        %v2683 = vld [vmem:[%s2608 + $0x250] sm:$0xff]
        %v2684 = vld [vmem:[%s2608 + $0x258] sm:$0xff]
        %v2685 = vld [vmem:[%s2608 + $0x260] sm:$0xff]
        %v2686 = vld [vmem:[%s2608 + $0x268] sm:$0xff]
        %v2687 = vld [vmem:[%s2608 + $0x270] sm:$0xff]
        %v2688 = vld [vmem:[%s2608 + $0x278] sm:$0xff]
        %v2689 = vld [vmem:[%s2608 + $0x280] sm:$0xff]
        %v2690 = vld [vmem:[%s2608 + $0x288] sm:$0xff]
        %v2691 = vld [vmem:[%s2608 + $0x290] sm:$0xff]
        %v2692 = vld [vmem:[%s2608 + $0x298] sm:$0xff]
        %v2693 = vld [vmem:[%s2608 + $0x2a0] sm:$0xff]
        %v2694 = vld [vmem:[%s2608 + $0x2a8] sm:$0xff]
        %v2695 = vld [vmem:[%s2608 + $0x2b0] sm:$0xff]
        %v2696 = vld [vmem:[%s2608 + $0x2b8] sm:$0xff]
        %v2697 = vld [vmem:[%s2608 + $0x2c0] sm:$0xff]
        %v2698 = vld [vmem:[%s2608 + $0x2c8] sm:$0xff]
        %v2699 = vld [vmem:[%s2608 + $0x2d0] sm:$0xff]
        %v2700 = vld [vmem:[%s2608 + $0x2d8] sm:$0xff]
        %v2701 = vld [vmem:[%s2608 + $0x2e0] sm:$0xff]
        %v2702 = vld [vmem:[%s2608 + $0x2e8] sm:$0xff]
        %v2703 = vld [vmem:[%s2608 + $0x2f0] sm:$0xff]
        %v2704 = vld [vmem:[%s2608 + $0x2f8] sm:$0xff]
        %v2705 = vld [vmem:[%s2608 + $0x300] sm:$0xff]
        %v2706 = vld [vmem:[%s2608 + $0x308] sm:$0xff]
        %v2707 = vld [vmem:[%s2608 + $0x310] sm:$0xff]
        %v2708 = vld [vmem:[%s2608 + $0x318] sm:$0xff]
        %v2709 = vld [vmem:[%s2608 + $0x320] sm:$0xff]
        %v2710 = vld [vmem:[%s2608 + $0x328] sm:$0xff]
        %v2711 = vld [vmem:[%s2608 + $0x330] sm:$0xff]
        %v2712 = vld [vmem:[%s2608 + $0x338] sm:$0xff]
        %v2713 = vld [vmem:[%s2608 + $0x340] sm:$0xff]
        %v2714 = vld [vmem:[%s2608 + $0x348] sm:$0xff]
        %v2715 = vld [vmem:[%s2608 + $0x350] sm:$0xff]
        %v2716 = vld [vmem:[%s2608 + $0x358] sm:$0xff]
        %v2717 = vld [vmem:[%s2608 + $0x360] sm:$0xff]
        %v2718 = vld [vmem:[%s2608 + $0x368] sm:$0xff]
        %v2719 = vld [vmem:[%s2608 + $0x370] sm:$0xff]
        %v2720 = vld [vmem:[%s2608 + $0x378] sm:$0xff]
        %v2721 = vld [vmem:[%s2608 + $0x380] sm:$0xff]
        %v2722 = vld [vmem:[%s2608 + $0x388] sm:$0xff]
        %v2723 = vld [vmem:[%s2608 + $0x390] sm:$0xff]
        %v2724 = vld [vmem:[%s2608 + $0x398] sm:$0xff]
        %v2725 = vld [vmem:[%s2608 + $0x3a0] sm:$0xff]
        %v2726 = vld [vmem:[%s2608 + $0x3a8] sm:$0xff]
        %v2727 = vld [vmem:[%s2608 + $0x3b0] sm:$0xff]
        %v2728 = vld [vmem:[%s2608 + $0x3b8] sm:$0xff]
        %v2729 = vld [vmem:[%s2608 + $0x3c0] sm:$0xff]
        %v2730 = vld [vmem:[%s2608 + $0x3c8] sm:$0xff]
        %v2731 = vld [vmem:[%s2608 + $0x3d0] sm:$0xff]
        %v2732 = vld [vmem:[%s2608 + $0x3d8] sm:$0xff]
        %v2733 = vld [vmem:[%s2608 + $0x3e0] sm:$0xff]
        %v2734 = vld [vmem:[%s2608 + $0x3e8] sm:$0xff]
        %v2735 = vld [vmem:[%s2608 + $0x3f0] sm:$0xff]
        %v2736 = vld [vmem:[%s2608 + $0x3f8] sm:$0xff]
        %v2737 = vld [vmem:[%s2608 + $0x400] sm:$0xff]
        %v2738 = vld [vmem:[%s2608 + $0x408] sm:$0xff]
        %v2739 = vld [vmem:[%s2608 + $0x410] sm:$0xff]
        %v2740 = vld [vmem:[%s2608 + $0x418] sm:$0xff]
        %v2741 = vld [vmem:[%s2608 + $0x420] sm:$0xff]
        %v2742 = vld [vmem:[%s2608 + $0x428] sm:$0xff]
        %v2743 = vld [vmem:[%s2608 + $0x430] sm:$0xff]
        %v2744 = vld [vmem:[%s2608 + $0x438] sm:$0xff]
        %v2745 = vld [vmem:[%s2608 + $0x440] sm:$0xff]
        %v2746 = vld [vmem:[%s2608 + $0x448] sm:$0xff]
        %v2747 = vld [vmem:[%s2608 + $0x450] sm:$0xff]
        %v2748 = vld [vmem:[%s2608 + $0x458] sm:$0xff]
        %v2749 = vld [vmem:[%s2608 + $0x460] sm:$0xff]
        %v2750 = vld [vmem:[%s2608 + $0x468] sm:$0xff]
        %v2751 = vld [vmem:[%s2608 + $0x470] sm:$0xff]
        %v2752 = vld [vmem:[%s2608 + $0x478] sm:$0xff]
        %v2753 = vld [vmem:[%s2608 + $0x480] sm:$0xff]
        %v2754 = vld [vmem:[%s2608 + $0x488] sm:$0xff]
        %v2755 = vld [vmem:[%s2608 + $0x490] sm:$0xff]
        %v2756 = vld [vmem:[%s2608 + $0x498] sm:$0xff]
        %v2757 = vld [vmem:[%s2608 + $0x4a0] sm:$0xff]
        %v2758 = vld [vmem:[%s2608 + $0x4a8] sm:$0xff]
        %v2759 = vld [vmem:[%s2608 + $0x4b0] sm:$0xff]
        %v2760 = vld [vmem:[%s2608 + $0x4b8] sm:$0xff]
        %v2761 = vld [vmem:[%s2608 + $0x4c0] sm:$0xff]
        %v2762 = vld [vmem:[%s2608 + $0x4c8] sm:$0xff]
        %v2763 = vld [vmem:[%s2608 + $0x4d0] sm:$0xff]
        %v2764 = vld [vmem:[%s2608 + $0x4d8] sm:$0xff]
        %v2765 = vld [vmem:[%s2608 + $0x4e0] sm:$0xff]
        %v2766 = vld [vmem:[%s2608 + $0x4e8] sm:$0xff]
        %v2767 = vld [vmem:[%s2608 + $0x4f0] sm:$0xff]
        %v2768 = vld [vmem:[%s2608 + $0x4f8] sm:$0xff]
        %v2769 = vld [vmem:[%s2608 + $0x500] sm:$0xff]
        %v2770 = vld [vmem:[%s2608 + $0x508] sm:$0xff]
        %v2771 = vld [vmem:[%s2608 + $0x510] sm:$0xff]
        %v2772 = vld [vmem:[%s2608 + $0x518] sm:$0xff]
        %v2773 = vld [vmem:[%s2608 + $0x520] sm:$0xff]
        %v2774 = vld [vmem:[%s2608 + $0x528] sm:$0xff]
        %v2775 = vld [vmem:[%s2608 + $0x530] sm:$0xff]
        %v2776 = vld [vmem:[%s2608 + $0x538] sm:$0xff]
        %v2777 = vld [vmem:[%s2608 + $0x540] sm:$0xff]
        %v2778 = vld [vmem:[%s2608 + $0x548] sm:$0xff]
        %v2779 = vld [vmem:[%s2608 + $0x550] sm:$0xff]
        %v2780 = vld [vmem:[%s2608 + $0x558] sm:$0xff]
        %v2781 = vld [vmem:[%s2608 + $0x560] sm:$0xff]
        %v2782 = vld [vmem:[%s2608 + $0x568] sm:$0xff]
        %v2783 = vld [vmem:[%s2608 + $0x570] sm:$0xff]
        %v2784 = vld [vmem:[%s2608 + $0x578] sm:$0xff]
        %v2785 = vld [vmem:[%s2608 + $0x580] sm:$0xff]
        %v2786 = vld [vmem:[%s2608 + $0x588] sm:$0xff]
        %v2787 = vld [vmem:[%s2608 + $0x590] sm:$0xff]
        %v2788 = vld [vmem:[%s2608 + $0x598] sm:$0xff]
        %v2789 = vld [vmem:[%s2608 + $0x5a0] sm:$0xff]
        %v2790 = vld [vmem:[%s2608 + $0x5a8] sm:$0xff]
        %v2791 = vld [vmem:[%s2608 + $0x5b0] sm:$0xff]
        %v2792 = vld [vmem:[%s2608 + $0x5b8] sm:$0xff]
        %v2793 = vld [vmem:[%s2608 + $0x5c0] sm:$0xff]
        %v2794 = vld [vmem:[%s2608 + $0x5c8] sm:$0xff]
        %v2795 = vld [vmem:[%s2608 + $0x5d0] sm:$0xff]
        %v2796 = vld [vmem:[%s2608 + $0x5d8] sm:$0xff]
        %v2797 = vld [vmem:[%s2608 + $0x5e0] sm:$0xff]
        %v2798 = vld [vmem:[%s2608 + $0x5e8] sm:$0xff]
        %v2799 = vld [vmem:[%s2608 + $0x5f0] sm:$0xff]
        %v2800 = vld [vmem:[%s2608 + $0x5f8] sm:$0xff]
        %2801 = vmatprep.subr.mxu0 %v2610
        %2802 = vmatpush1.msra.mxu0 %v2609
        %2803 = vmatprep.subr.mxu0 %v2612
        %2804 = vmatpush1.msra.mxu0 %v2611
        %2805 = vmatprep.subr.mxu0 %v2614
        %2806 = vmatpush1.msra.mxu0 %v2613
        %2807 = vmatprep.subr.mxu0 %v2616
        %2808 = vmatpush1.msra.mxu0 %v2615
        %2809 = vmatprep.subr.mxu0 %v2618
        %2810 = vmatpush1.msra.mxu0 %v2617
        %2811 = vmatprep.subr.mxu0 %v2620
        %2812 = vmatpush1.msra.mxu0 %v2619
        %2813 = vmatprep.subr.mxu0 %v2622
        %2814 = vmatpush1.msra.mxu0 %v2621
        %2815 = vmatprep.subr.mxu0 %v2624
        %2816 = vmatpush1.msra.mxu0 %v2623
        %2817 = vmatprep.subr.mxu0 %v2626
        %2818 = vmatpush1.msra.mxu0 %v2625
        %2819 = vmatprep.subr.mxu0 %v2628
        %2820 = vmatpush1.msra.mxu0 %v2627
        %2821 = vmatprep.subr.mxu0 %v2630
        %2822 = vmatpush1.msra.mxu0 %v2629
        %2823 = vmatprep.subr.mxu0 %v2632
        %2824 = vmatpush1.msra.mxu0 %v2631
        %2825 = vmatprep.subr.mxu0 %v2634
        %2826 = vmatpush1.msra.mxu0 %v2633
        %2827 = vmatprep.subr.mxu0 %v2636
        %2828 = vmatpush1.msra.mxu0 %v2635
        %2829 = vmatprep.subr.mxu0 %v2638
        %2830 = vmatpush1.msra.mxu0 %v2637
        %2831 = vmatprep.subr.mxu0 %v2640
        %2832 = vmatpush1.msra.mxu0 %v2639
        %2833 = vmatprep.subr.mxu0 %v2642
        %2834 = vmatpush1.msra.mxu0 %v2641
        %2835 = vmatprep.subr.mxu0 %v2644
        %2836 = vmatpush1.msra.mxu0 %v2643
        %2837 = vmatprep.subr.mxu0 %v2646
        %2838 = vmatpush1.msra.mxu0 %v2645
        %2839 = vmatprep.subr.mxu0 %v2648
        %2840 = vmatpush1.msra.mxu0 %v2647
        %2841 = vmatprep.subr.mxu0 %v2650
        %2842 = vmatpush1.msra.mxu0 %v2649
        %2843 = vmatprep.subr.mxu0 %v2652
        %2844 = vmatpush1.msra.mxu0 %v2651
        %2845 = vmatprep.subr.mxu0 %v2654
        %2846 = vmatpush1.msra.mxu0 %v2653
        %2847 = vmatprep.subr.mxu0 %v2656
        %2848 = vmatpush1.msra.mxu0 %v2655
        %2849 = vmatprep.subr.mxu0 %v2658
        %2850 = vmatpush1.msra.mxu0 %v2657
        %2851 = vmatprep.subr.mxu0 %v2660
        %2852 = vmatpush1.msra.mxu0 %v2659
        %2853 = vmatprep.subr.mxu0 %v2662
        %2854 = vmatpush1.msra.mxu0 %v2661
        %2855 = vmatprep.subr.mxu0 %v2664
        %2856 = vmatpush1.msra.mxu0 %v2663
        %2857 = vmatprep.subr.mxu0 %v2666
        %2858 = vmatpush1.msra.mxu0 %v2665
        %2859 = vmatprep.subr.mxu0 %v2668
        %2860 = vmatpush1.msra.mxu0 %v2667
        %2861 = vmatprep.subr.mxu0 %v2670
        %2862 = vmatpush1.msra.mxu0 %v2669
        %2863 = vmatprep.subr.mxu0 %v2672
        %2864 = vmatpush1.msra.mxu0 %v2671
        %2865 = vmatprep.mubr.f32.mxu0 %v2321
        %2866 = vmatmul.mubr.f32.gmra.mrb[0].mxu0 %v2320
        %v2867 = vpop.f32.mrb[0].mxu0
        %v2868 = vadd.f32 0.0, %v2867
        %v2869 = vpop.f32.mrb[0].mxu0
        %v2870 = vadd.f32 0.0, %v2869
        %2871 = vmatprep.mubr.f32.mxu0 %v2327
        %2872 = vmatmul.mubr.f32.gmra.mrb[0].mxu0 %v2326
        %v2873 = vpop.f32.mrb[0].mxu0
        %v2874 = vadd.f32 0.0, %v2873
        %v2875 = vpop.f32.mrb[0].mxu0
        %v2876 = vadd.f32 0.0, %v2875
        %2877 = vmatprep.mubr.f32.mxu0 %v2333
        %2878 = vmatmul.mubr.f32.gmra.mrb[0].mxu0 %v2332
        %v2879 = vpop.f32.mrb[0].mxu0
        %v2880 = vadd.f32 0.0, %v2879
        %v2881 = vpop.f32.mrb[0].mxu0
        %v2882 = vadd.f32 0.0, %v2881
        %2883 = vmatprep.mubr.f32.mxu0 %v2339
        %2884 = vmatmul.mubr.f32.gmra.mrb[0].mxu0 %v2338
        %v2885 = vpop.f32.mrb[0].mxu0
        %v2886 = vadd.f32 0.0, %v2885
        %v2887 = vpop.f32.mrb[0].mxu0
        %v2888 = vadd.f32 0.0, %v2887
        %2889 = vmatprep.mubr.f32.mxu0 %v2345
        %2890 = vmatmul.mubr.f32.gmra.mrb[0].mxu0 %v2344
        %v2891 = vpop.f32.mrb[0].mxu0
        %v2892 = vadd.f32 0.0, %v2891
        %v2893 = vpop.f32.mrb[0].mxu0
        %v2894 = vadd.f32 0.0, %v2893
        %2895 = vmatprep.mubr.f32.mxu0 %v2351
        %2896 = vmatmul.mubr.f32.gmra.mrb[0].mxu0 %v2350
        %v2897 = vpop.f32.mrb[0].mxu0
        %v2898 = vadd.f32 0.0, %v2897
        %v2899 = vpop.f32.mrb[0].mxu0
        %v2900 = vadd.f32 0.0, %v2899
        %2901 = vmatprep.mubr.f32.mxu0 %v2357
        %2902 = vmatmul.mubr.f32.gmra.mrb[0].mxu0 %v2356
        %v2903 = vpop.f32.mrb[0].mxu0
        %v2904 = vadd.f32 0.0, %v2903
        %v2905 = vpop.f32.mrb[0].mxu0
        %v2906 = vadd.f32 0.0, %v2905
        %2907 = vmatprep.mubr.f32.mxu0 %v2363
        %2908 = vmatmul.mubr.f32.gmra.mrb[0].mxu0 %v2362
        %v2909 = vpop.f32.mrb[0].mxu0
        %v2910 = vadd.f32 0.0, %v2909
        %v2911 = vpop.f32.mrb[0].mxu0
        %v2912 = vadd.f32 0.0, %v2911
        %2913 = vmatprep.mubr.f32.mxu0 %v2369
        %2914 = vmatmul.mubr.f32.gmra.mrb[0].mxu0 %v2368
        %v2915 = vpop.f32.mrb[0].mxu0
        %v2916 = vadd.f32 0.0, %v2915
        %v2917 = vpop.f32.mrb[0].mxu0
        %v2918 = vadd.f32 0.0, %v2917
        %2919 = vmatprep.mubr.f32.mxu0 %v2375
        %2920 = vmatmul.mubr.f32.gmra.mrb[0].mxu0 %v2374
        %v2921 = vpop.f32.mrb[0].mxu0
        %v2922 = vadd.f32 0.0, %v2921
        %v2923 = vpop.f32.mrb[0].mxu0
        %v2924 = vadd.f32 0.0, %v2923
        %2925 = vmatprep.mubr.f32.mxu0 %v2381
        %2926 = vmatmul.mubr.f32.gmra.mrb[0].mxu0 %v2380
        %v2927 = vpop.f32.mrb[0].mxu0
        %v2928 = vadd.f32 0.0, %v2927
        %v2929 = vpop.f32.mrb[0].mxu0
        %v2930 = vadd.f32 0.0, %v2929
        %2931 = vmatprep.mubr.f32.mxu0 %v2387
        %2932 = vmatmul.mubr.f32.gmra.mrb[0].mxu0 %v2386
        %v2933 = vpop.f32.mrb[0].mxu0
        %v2934 = vadd.f32 0.0, %v2933
        %v2935 = vpop.f32.mrb[0].mxu0
        %v2936 = vadd.f32 0.0, %v2935
        %2937 = vmatprep.mubr.f32.mxu0 %v2393
        %2938 = vmatmul.mubr.f32.gmra.mrb[0].mxu0 %v2392
        %v2939 = vpop.f32.mrb[0].mxu0
        %v2940 = vadd.f32 0.0, %v2939
        %v2941 = vpop.f32.mrb[0].mxu0
        %v2942 = vadd.f32 0.0, %v2941
        %2943 = vmatprep.mubr.f32.mxu0 %v2399
        %2944 = vmatmul.mubr.f32.gmra.mrb[0].mxu0 %v2398
        %v2945 = vpop.f32.mrb[0].mxu0
        %v2946 = vadd.f32 0.0, %v2945
        %v2947 = vpop.f32.mrb[0].mxu0
        %v2948 = vadd.f32 0.0, %v2947
        %2949 = vmatprep.mubr.f32.mxu0 %v2597
        %2950 = vmatmul.mubr.f32.gmra.mrb[0].mxu0 %v2596
        %v2951 = vpop.f32.mrb[0].mxu0
        %v2952 = vadd.f32 0.0, %v2951
        %v2953 = vpop.f32.mrb[0].mxu0
        %v2954 = vadd.f32 0.0, %v2953
        %2955 = vmatprep.mubr.f32.mxu0 %v2603
        %2956 = vmatmul.mubr.f32.gmra.mrb[0].mxu0 %v2602
        %v2957 = vpop.f32.mrb[0].mxu0
        %v2958 = vadd.f32 0.0, %v2957
        %v2959 = vpop.f32.mrb[0].mxu0
        %v2960 = vadd.f32 0.0, %v2959
        %2961 = vdwg.mxu0
        %2962 = vmatprep.subr.mxu0 %v2674
        %2963 = vmatpush1.msra.mxu0 %v2673
        %2964 = vmatprep.subr.mxu0 %v2676
        %2965 = vmatpush1.msra.mxu0 %v2675
        %2966 = vmatprep.subr.mxu0 %v2678
        %2967 = vmatpush1.msra.mxu0 %v2677
        %2968 = vmatprep.subr.mxu0 %v2680
        %2969 = vmatpush1.msra.mxu0 %v2679
        %2970 = vmatprep.subr.mxu0 %v2682
        %2971 = vmatpush1.msra.mxu0 %v2681
        %2972 = vmatprep.subr.mxu0 %v2684
        %2973 = vmatpush1.msra.mxu0 %v2683
        %2974 = vmatprep.subr.mxu0 %v2686
        %2975 = vmatpush1.msra.mxu0 %v2685
        %2976 = vmatprep.subr.mxu0 %v2688
        %2977 = vmatpush1.msra.mxu0 %v2687
        %2978 = vmatprep.subr.mxu0 %v2690
        %2979 = vmatpush1.msra.mxu0 %v2689
        %2980 = vmatprep.subr.mxu0 %v2692
        %2981 = vmatpush1.msra.mxu0 %v2691
        %2982 = vmatprep.subr.mxu0 %v2694
        %2983 = vmatpush1.msra.mxu0 %v2693
        %2984 = vmatprep.subr.mxu0 %v2696
        %2985 = vmatpush1.msra.mxu0 %v2695
        %2986 = vmatprep.subr.mxu0 %v2698
        %2987 = vmatpush1.msra.mxu0 %v2697
        %2988 = vmatprep.subr.mxu0 %v2700
        %2989 = vmatpush1.msra.mxu0 %v2699
        %2990 = vmatprep.subr.mxu0 %v2702
        %2991 = vmatpush1.msra.mxu0 %v2701
        %2992 = vmatprep.subr.mxu0 %v2704
        %2993 = vmatpush1.msra.mxu0 %v2703
        %2994 = vmatprep.subr.mxu0 %v2706
        %2995 = vmatpush1.msra.mxu0 %v2705
        %2996 = vmatprep.subr.mxu0 %v2708
        %2997 = vmatpush1.msra.mxu0 %v2707
        %2998 = vmatprep.subr.mxu0 %v2710
        %2999 = vmatpush1.msra.mxu0 %v2709
        %3000 = vmatprep.subr.mxu0 %v2712
        %3001 = vmatpush1.msra.mxu0 %v2711
        %3002 = vmatprep.subr.mxu0 %v2714
        %3003 = vmatpush1.msra.mxu0 %v2713
        %3004 = vmatprep.subr.mxu0 %v2716
        %3005 = vmatpush1.msra.mxu0 %v2715
        %3006 = vmatprep.subr.mxu0 %v2718
        %3007 = vmatpush1.msra.mxu0 %v2717
        %3008 = vmatprep.subr.mxu0 %v2720
        %3009 = vmatpush1.msra.mxu0 %v2719
        %3010 = vmatprep.subr.mxu0 %v2722
        %3011 = vmatpush1.msra.mxu0 %v2721
        %3012 = vmatprep.subr.mxu0 %v2724
        %3013 = vmatpush1.msra.mxu0 %v2723
        %3014 = vmatprep.subr.mxu0 %v2726
        %3015 = vmatpush1.msra.mxu0 %v2725
        %3016 = vmatprep.subr.mxu0 %v2728
        %3017 = vmatpush1.msra.mxu0 %v2727
        %3018 = vmatprep.subr.mxu0 %v2730
        %3019 = vmatpush1.msra.mxu0 %v2729
        %3020 = vmatprep.subr.mxu0 %v2732
        %3021 = vmatpush1.msra.mxu0 %v2731
        %3022 = vmatprep.subr.mxu0 %v2734
        %3023 = vmatpush1.msra.mxu0 %v2733
        %3024 = vmatprep.subr.mxu0 %v2736
        %3025 = vmatpush1.msra.mxu0 %v2735
        %3026 = vmatprep.mubr.f32.mxu0 %v2323
        %3027 = vmatmul.mubr.f32.gmra.mrb[0].mxu0 %v2322
        %v3028 = vpop.f32.mrb[0].mxu0
        %v3029 = vadd.f32 %v2868, %v3028
        %v3030 = vpop.f32.mrb[0].mxu0
        %v3031 = vadd.f32 %v2870, %v3030
        %3032 = vmatprep.mubr.f32.mxu0 %v2329
        %3033 = vmatmul.mubr.f32.gmra.mrb[0].mxu0 %v2328
        %v3034 = vpop.f32.mrb[0].mxu0
        %v3035 = vadd.f32 %v2874, %v3034
        %v3036 = vpop.f32.mrb[0].mxu0
        %v3037 = vadd.f32 %v2876, %v3036
        %3038 = vmatprep.mubr.f32.mxu0 %v2335
        %3039 = vmatmul.mubr.f32.gmra.mrb[0].mxu0 %v2334
        %v3040 = vpop.f32.mrb[0].mxu0
        %v3041 = vadd.f32 %v2880, %v3040
        %v3042 = vpop.f32.mrb[0].mxu0
        %v3043 = vadd.f32 %v2882, %v3042
        %3044 = vmatprep.mubr.f32.mxu0 %v2341
        %3045 = vmatmul.mubr.f32.gmra.mrb[0].mxu0 %v2340
        %v3046 = vpop.f32.mrb[0].mxu0
        %v3047 = vadd.f32 %v2886, %v3046
        %v3048 = vpop.f32.mrb[0].mxu0
        %v3049 = vadd.f32 %v2888, %v3048
        %3050 = vmatprep.mubr.f32.mxu0 %v2347
        %3051 = vmatmul.mubr.f32.gmra.mrb[0].mxu0 %v2346
        %v3052 = vpop.f32.mrb[0].mxu0
        %v3053 = vadd.f32 %v2892, %v3052
        %v3054 = vpop.f32.mrb[0].mxu0
        %v3055 = vadd.f32 %v2894, %v3054
        %3056 = vmatprep.mubr.f32.mxu0 %v2353
        %3057 = vmatmul.mubr.f32.gmra.mrb[0].mxu0 %v2352
        %v3058 = vpop.f32.mrb[0].mxu0
        %v3059 = vadd.f32 %v2898, %v3058
        %v3060 = vpop.f32.mrb[0].mxu0
        %v3061 = vadd.f32 %v2900, %v3060
        %3062 = vmatprep.mubr.f32.mxu0 %v2359
        %3063 = vmatmul.mubr.f32.gmra.mrb[0].mxu0 %v2358
        %v3064 = vpop.f32.mrb[0].mxu0
        %v3065 = vadd.f32 %v2904, %v3064
        %v3066 = vpop.f32.mrb[0].mxu0
        %v3067 = vadd.f32 %v2906, %v3066
        %3068 = vmatprep.mubr.f32.mxu0 %v2365
        %3069 = vmatmul.mubr.f32.gmra.mrb[0].mxu0 %v2364
        %v3070 = vpop.f32.mrb[0].mxu0
        %v3071 = vadd.f32 %v2910, %v3070
        %v3072 = vpop.f32.mrb[0].mxu0
        %v3073 = vadd.f32 %v2912, %v3072
        %3074 = vmatprep.mubr.f32.mxu0 %v2371
        %3075 = vmatmul.mubr.f32.gmra.mrb[0].mxu0 %v2370
        %v3076 = vpop.f32.mrb[0].mxu0
        %v3077 = vadd.f32 %v2916, %v3076
        %v3078 = vpop.f32.mrb[0].mxu0
        %v3079 = vadd.f32 %v2918, %v3078
        %3080 = vmatprep.mubr.f32.mxu0 %v2377
        %3081 = vmatmul.mubr.f32.gmra.mrb[0].mxu0 %v2376
        %v3082 = vpop.f32.mrb[0].mxu0
        %v3083 = vadd.f32 %v2922, %v3082
        %v3084 = vpop.f32.mrb[0].mxu0
        %v3085 = vadd.f32 %v2924, %v3084
        %3086 = vmatprep.mubr.f32.mxu0 %v2383
        %3087 = vmatmul.mubr.f32.gmra.mrb[0].mxu0 %v2382
        %v3088 = vpop.f32.mrb[0].mxu0
        %v3089 = vadd.f32 %v2928, %v3088
        %v3090 = vpop.f32.mrb[0].mxu0
        %v3091 = vadd.f32 %v2930, %v3090
        %3092 = vmatprep.mubr.f32.mxu0 %v2389
        %3093 = vmatmul.mubr.f32.gmra.mrb[0].mxu0 %v2388
        %v3094 = vpop.f32.mrb[0].mxu0
        %v3095 = vadd.f32 %v2934, %v3094
        %v3096 = vpop.f32.mrb[0].mxu0
        %v3097 = vadd.f32 %v2936, %v3096
        %3098 = vmatprep.mubr.f32.mxu0 %v2395
        %3099 = vmatmul.mubr.f32.gmra.mrb[0].mxu0 %v2394
        %v3100 = vpop.f32.mrb[0].mxu0
        %v3101 = vadd.f32 %v2940, %v3100
        %v3102 = vpop.f32.mrb[0].mxu0
        %v3103 = vadd.f32 %v2942, %v3102
        %3104 = vmatprep.mubr.f32.mxu0 %v2401
        %3105 = vmatmul.mubr.f32.gmra.mrb[0].mxu0 %v2400
        %v3106 = vpop.f32.mrb[0].mxu0
        %v3107 = vadd.f32 %v2946, %v3106
        %v3108 = vpop.f32.mrb[0].mxu0
        %v3109 = vadd.f32 %v2948, %v3108
        %3110 = vmatprep.mubr.f32.mxu0 %v2599
        %3111 = vmatmul.mubr.f32.gmra.mrb[0].mxu0 %v2598
        %v3112 = vpop.f32.mrb[0].mxu0
        %v3113 = vadd.f32 %v2952, %v3112
        %v3114 = vpop.f32.mrb[0].mxu0
        %v3115 = vadd.f32 %v2954, %v3114
        %3116 = vmatprep.mubr.f32.mxu0 %v2605
        %3117 = vmatmul.mubr.f32.gmra.mrb[0].mxu0 %v2604
        %v3118 = vpop.f32.mrb[0].mxu0
        %v3119 = vadd.f32 %v2958, %v3118
        %v3120 = vpop.f32.mrb[0].mxu0
        %v3121 = vadd.f32 %v2960, %v3120
        %3122 = vdwg.mxu0
        %3123 = vmatprep.subr.mxu0 %v2738
        %3124 = vmatpush1.msra.mxu0 %v2737
        %3125 = vmatprep.subr.mxu0 %v2740
        %3126 = vmatpush1.msra.mxu0 %v2739
        %3127 = vmatprep.subr.mxu0 %v2742
        %3128 = vmatpush1.msra.mxu0 %v2741
        %3129 = vmatprep.subr.mxu0 %v2744
        %3130 = vmatpush1.msra.mxu0 %v2743
        %3131 = vmatprep.subr.mxu0 %v2746
        %3132 = vmatpush1.msra.mxu0 %v2745
        %3133 = vmatprep.subr.mxu0 %v2748
        %3134 = vmatpush1.msra.mxu0 %v2747
        %3135 = vmatprep.subr.mxu0 %v2750
        %3136 = vmatpush1.msra.mxu0 %v2749
        %3137 = vmatprep.subr.mxu0 %v2752
        %3138 = vmatpush1.msra.mxu0 %v2751
        %3139 = vmatprep.subr.mxu0 %v2754
        %3140 = vmatpush1.msra.mxu0 %v2753
        %3141 = vmatprep.subr.mxu0 %v2756
        %3142 = vmatpush1.msra.mxu0 %v2755
        %3143 = vmatprep.subr.mxu0 %v2758
        %3144 = vmatpush1.msra.mxu0 %v2757
        %3145 = vmatprep.subr.mxu0 %v2760
        %3146 = vmatpush1.msra.mxu0 %v2759
        %3147 = vmatprep.subr.mxu0 %v2762
        %3148 = vmatpush1.msra.mxu0 %v2761
        %3149 = vmatprep.subr.mxu0 %v2764
        %3150 = vmatpush1.msra.mxu0 %v2763
        %3151 = vmatprep.subr.mxu0 %v2766
        %3152 = vmatpush1.msra.mxu0 %v2765
        %3153 = vmatprep.subr.mxu0 %v2768
        %3154 = vmatpush1.msra.mxu0 %v2767
        %3155 = vmatprep.subr.mxu0 %v2770
        %3156 = vmatpush1.msra.mxu0 %v2769
        %3157 = vmatprep.subr.mxu0 %v2772
        %3158 = vmatpush1.msra.mxu0 %v2771
        %3159 = vmatprep.subr.mxu0 %v2774
        %3160 = vmatpush1.msra.mxu0 %v2773
        %3161 = vmatprep.subr.mxu0 %v2776
        %3162 = vmatpush1.msra.mxu0 %v2775
        %3163 = vmatprep.subr.mxu0 %v2778
        %3164 = vmatpush1.msra.mxu0 %v2777
        %3165 = vmatprep.subr.mxu0 %v2780
        %3166 = vmatpush1.msra.mxu0 %v2779
        %3167 = vmatprep.subr.mxu0 %v2782
        %3168 = vmatpush1.msra.mxu0 %v2781
        %3169 = vmatprep.subr.mxu0 %v2784
        %3170 = vmatpush1.msra.mxu0 %v2783
        %3171 = vmatprep.subr.mxu0 %v2786
        %3172 = vmatpush1.msra.mxu0 %v2785
        %3173 = vmatprep.subr.mxu0 %v2788
        %3174 = vmatpush1.msra.mxu0 %v2787
        %3175 = vmatprep.subr.mxu0 %v2790
        %3176 = vmatpush1.msra.mxu0 %v2789
        %3177 = vmatprep.subr.mxu0 %v2792
        %3178 = vmatpush1.msra.mxu0 %v2791
        %3179 = vmatprep.subr.mxu0 %v2794
        %3180 = vmatpush1.msra.mxu0 %v2793
        %3181 = vmatprep.subr.mxu0 %v2796
        %3182 = vmatpush1.msra.mxu0 %v2795
        %3183 = vmatprep.subr.mxu0 %v2798
        %3184 = vmatpush1.msra.mxu0 %v2797
        %3185 = vmatprep.subr.mxu0 %v2800
        %3186 = vmatpush1.msra.mxu0 %v2799
        %3187 = vmatprep.mubr.f32.mxu0 %v2325
        %3188 = vmatmul.mubr.f32.gmra.mrb[0].mxu0 %v2324
        %v3189 = vpop.f32.mrb[0].mxu0
        %v3190 = vadd.f32 %v3029, %v3189
        %v3191 = vpop.f32.mrb[0].mxu0
        %v3192 = vadd.f32 %v3031, %v3191
        %3193 = vmatprep.mubr.f32.mxu0 %v2331
        %3194 = vmatmul.mubr.f32.gmra.mrb[0].mxu0 %v2330
        %v3195 = vpop.f32.mrb[0].mxu0
        %v3196 = vadd.f32 %v3035, %v3195
        %v3197 = vpop.f32.mrb[0].mxu0
        %v3198 = vadd.f32 %v3037, %v3197
        %3199 = vmatprep.mubr.f32.mxu0 %v2337
        %3200 = vmatmul.mubr.f32.gmra.mrb[0].mxu0 %v2336
        %v3201 = vpop.f32.mrb[0].mxu0
        %v3202 = vadd.f32 %v3041, %v3201
        %v3203 = vpop.f32.mrb[0].mxu0
        %v3204 = vadd.f32 %v3043, %v3203
        %3205 = vmatprep.mubr.f32.mxu0 %v2343
        %3206 = vmatmul.mubr.f32.gmra.mrb[0].mxu0 %v2342
        %v3207 = vpop.f32.mrb[0].mxu0
        %v3208 = vadd.f32 %v3047, %v3207
        %v3209 = vpop.f32.mrb[0].mxu0
        %v3210 = vadd.f32 %v3049, %v3209
        %3211 = vmatprep.mubr.f32.mxu0 %v2349
        %3212 = vmatmul.mubr.f32.gmra.mrb[0].mxu0 %v2348
        %v3213 = vpop.f32.mrb[0].mxu0
        %v3214 = vadd.f32 %v3053, %v3213
        %v3215 = vpop.f32.mrb[0].mxu0
        %v3216 = vadd.f32 %v3055, %v3215
        %3217 = vmatprep.mubr.f32.mxu0 %v2355
        %3218 = vmatmul.mubr.f32.gmra.mrb[0].mxu0 %v2354
        %v3219 = vpop.f32.mrb[0].mxu0
        %v3220 = vadd.f32 %v3059, %v3219
        %v3221 = vpop.f32.mrb[0].mxu0
        %v3222 = vadd.f32 %v3061, %v3221
        %3223 = vmatprep.mubr.f32.mxu0 %v2361
        %3224 = vmatmul.mubr.f32.gmra.mrb[0].mxu0 %v2360
        %v3225 = vpop.f32.mrb[0].mxu0
        %v3226 = vadd.f32 %v3065, %v3225
        %v3227 = vpop.f32.mrb[0].mxu0
        %v3228 = vadd.f32 %v3067, %v3227
        %3229 = vmatprep.mubr.f32.mxu0 %v2367
        %3230 = vmatmul.mubr.f32.gmra.mrb[0].mxu0 %v2366
        %v3231 = vpop.f32.mrb[0].mxu0
        %v3232 = vadd.f32 %v3071, %v3231
        %v3233 = vpop.f32.mrb[0].mxu0
        %v3234 = vadd.f32 %v3073, %v3233
        %3235 = vmatprep.mubr.f32.mxu0 %v2373
        %3236 = vmatmul.mubr.f32.gmra.mrb[0].mxu0 %v2372
        %v3237 = vpop.f32.mrb[0].mxu0
        %v3238 = vadd.f32 %v3077, %v3237
        %v3239 = vpop.f32.mrb[0].mxu0
        %v3240 = vadd.f32 %v3079, %v3239
        %3241 = vmatprep.mubr.f32.mxu0 %v2379
        %3242 = vmatmul.mubr.f32.gmra.mrb[0].mxu0 %v2378
        %v3243 = vpop.f32.mrb[0].mxu0
        %v3244 = vadd.f32 %v3083, %v3243
        %v3245 = vpop.f32.mrb[0].mxu0
        %v3246 = vadd.f32 %v3085, %v3245
        %3247 = vmatprep.mubr.f32.mxu0 %v2385
        %3248 = vmatmul.mubr.f32.gmra.mrb[0].mxu0 %v2384
        %v3249 = vpop.f32.mrb[0].mxu0
        %v3250 = vadd.f32 %v3089, %v3249
        %v3251 = vpop.f32.mrb[0].mxu0
        %v3252 = vadd.f32 %v3091, %v3251
        %3253 = vmatprep.mubr.f32.mxu0 %v2391
        %3254 = vmatmul.mubr.f32.gmra.mrb[0].mxu0 %v2390
        %v3255 = vpop.f32.mrb[0].mxu0
        %v3256 = vadd.f32 %v3095, %v3255
        %v3257 = vpop.f32.mrb[0].mxu0
        %v3258 = vadd.f32 %v3097, %v3257
        %3259 = vmatprep.mubr.f32.mxu0 %v2397
        %3260 = vmatmul.mubr.f32.gmra.mrb[0].mxu0 %v2396
        %v3261 = vpop.f32.mrb[0].mxu0
        %v3262 = vadd.f32 %v3101, %v3261
        %v3263 = vpop.f32.mrb[0].mxu0
        %v3264 = vadd.f32 %v3103, %v3263
        %3265 = vmatprep.mubr.f32.mxu0 %v2403
        %3266 = vmatmul.mubr.f32.gmra.mrb[0].mxu0 %v2402
        %v3267 = vpop.f32.mrb[0].mxu0
        %v3268 = vadd.f32 %v3107, %v3267
        %v3269 = vpop.f32.mrb[0].mxu0
        %v3270 = vadd.f32 %v3109, %v3269
        %3271 = vmatprep.mubr.f32.mxu0 %v2601
        %3272 = vmatmul.mubr.f32.gmra.mrb[0].mxu0 %v2600
        %v3273 = vpop.f32.mrb[0].mxu0
        %v3274 = vadd.f32 %v3113, %v3273
        %v3275 = vpop.f32.mrb[0].mxu0
        %v3276 = vadd.f32 %v3115, %v3275
        %3277 = vmatprep.mubr.f32.mxu0 %v2607
        %3278 = vmatmul.mubr.f32.gmra.mrb[0].mxu0 %v2606
        %v3279 = vpop.f32.mrb[0].mxu0
        %v3280 = vadd.f32 %v3119, %v3279
        %v3281 = vpop.f32.mrb[0].mxu0
        %v3282 = vadd.f32 %v3121, %v3281
        %3283 = vdwg.mxu0
        %3284 = vmatprep.subr.mxu0 %v2405
        %3285 = vmatpush1.msra.mxu0 %v2404
        %3286 = vmatprep.subr.mxu0 %v2407
        %3287 = vmatpush1.msra.mxu0 %v2406
        %3288 = vmatprep.subr.mxu0 %v2409
        %3289 = vmatpush1.msra.mxu0 %v2408
        %3290 = vmatprep.subr.mxu0 %v2411
        %3291 = vmatpush1.msra.mxu0 %v2410
        %3292 = vmatprep.subr.mxu0 %v2413
        %3293 = vmatpush1.msra.mxu0 %v2412
        %3294 = vmatprep.subr.mxu0 %v2415
        %3295 = vmatpush1.msra.mxu0 %v2414
        %3296 = vmatprep.subr.mxu0 %v2417
        %3297 = vmatpush1.msra.mxu0 %v2416
        %3298 = vmatprep.subr.mxu0 %v2419
        %3299 = vmatpush1.msra.mxu0 %v2418
        %3300 = vmatprep.subr.mxu0 %v2421
        %3301 = vmatpush1.msra.mxu0 %v2420
        %3302 = vmatprep.subr.mxu0 %v2423
        %3303 = vmatpush1.msra.mxu0 %v2422
        %3304 = vmatprep.subr.mxu0 %v2425
        %3305 = vmatpush1.msra.mxu0 %v2424
        %3306 = vmatprep.subr.mxu0 %v2427
        %3307 = vmatpush1.msra.mxu0 %v2426
        %3308 = vmatprep.subr.mxu0 %v2429
        %3309 = vmatpush1.msra.mxu0 %v2428
        %3310 = vmatprep.subr.mxu0 %v2431
        %3311 = vmatpush1.msra.mxu0 %v2430
        %3312 = vmatprep.subr.mxu0 %v2433
        %3313 = vmatpush1.msra.mxu0 %v2432
        %3314 = vmatprep.subr.mxu0 %v2435
        %3315 = vmatpush1.msra.mxu0 %v2434
        %3316 = vmatprep.subr.mxu0 %v2437
        %3317 = vmatpush1.msra.mxu0 %v2436
        %3318 = vmatprep.subr.mxu0 %v2439
        %3319 = vmatpush1.msra.mxu0 %v2438
        %3320 = vmatprep.subr.mxu0 %v2441
        %3321 = vmatpush1.msra.mxu0 %v2440
        %3322 = vmatprep.subr.mxu0 %v2443
        %3323 = vmatpush1.msra.mxu0 %v2442
        %3324 = vmatprep.subr.mxu0 %v2445
        %3325 = vmatpush1.msra.mxu0 %v2444
        %3326 = vmatprep.subr.mxu0 %v2447
        %3327 = vmatpush1.msra.mxu0 %v2446
        %3328 = vmatprep.subr.mxu0 %v2449
        %3329 = vmatpush1.msra.mxu0 %v2448
        %3330 = vmatprep.subr.mxu0 %v2451
        %3331 = vmatpush1.msra.mxu0 %v2450
        %3332 = vmatprep.subr.mxu0 %v2453
        %3333 = vmatpush1.msra.mxu0 %v2452
        %3334 = vmatprep.subr.mxu0 %v2455
        %3335 = vmatpush1.msra.mxu0 %v2454
        %3336 = vmatprep.subr.mxu0 %v2457
        %3337 = vmatpush1.msra.mxu0 %v2456
        %3338 = vmatprep.subr.mxu0 %v2459
        %3339 = vmatpush1.msra.mxu0 %v2458
        %3340 = vmatprep.subr.mxu0 %v2461
        %3341 = vmatpush1.msra.mxu0 %v2460
        %3342 = vmatprep.subr.mxu0 %v2463
        %3343 = vmatpush1.msra.mxu0 %v2462
        %3344 = vmatprep.subr.mxu0 %v2465
        %3345 = vmatpush1.msra.mxu0 %v2464
        %3346 = vmatprep.subr.mxu0 %v2467
        %3347 = vmatpush1.msra.mxu0 %v2466
        %3348 = vmatprep.mubr.f32.mxu0 %v2309
        %3349 = vmatmul.mubr.f32.gmra.mrb[0].mxu0 %v2308
        %v3350 = vpop.f32.mrb[0].mxu0
        %v3351 = vadd.f32 %v3190, %v3350
        %v3352 = vpop.f32.mrb[0].mxu0
        %v3353 = vadd.f32 %v3192, %v3352
        %3354 = vmatprep.mubr.f32.mxu0 %v2315
        %3355 = vmatmul.mubr.f32.gmra.mrb[0].mxu0 %v2314
        %v3356 = vpop.f32.mrb[0].mxu0
        %v3357 = vadd.f32 %v3196, %v3356
        %v3358 = vpop.f32.mrb[0].mxu0
        %v3359 = vadd.f32 %v3198, %v3358
        %3360 = vmatprep.mubr.f32.mxu0 %v2321
        %3361 = vmatmul.mubr.f32.gmra.mrb[0].mxu0 %v2320
        %v3362 = vpop.f32.mrb[0].mxu0
        %v3363 = vadd.f32 %v3202, %v3362
        %v3364 = vpop.f32.mrb[0].mxu0
        %v3365 = vadd.f32 %v3204, %v3364
        %3366 = vmatprep.mubr.f32.mxu0 %v2327
        %3367 = vmatmul.mubr.f32.gmra.mrb[0].mxu0 %v2326
        %v3368 = vpop.f32.mrb[0].mxu0
        %v3369 = vadd.f32 %v3208, %v3368
        %v3370 = vpop.f32.mrb[0].mxu0
        %v3371 = vadd.f32 %v3210, %v3370
        %3372 = vmatprep.mubr.f32.mxu0 %v2333
        %3373 = vmatmul.mubr.f32.gmra.mrb[0].mxu0 %v2332
        %v3374 = vpop.f32.mrb[0].mxu0
        %v3375 = vadd.f32 %v3214, %v3374
        %v3376 = vpop.f32.mrb[0].mxu0
        %v3377 = vadd.f32 %v3216, %v3376
        %3378 = vmatprep.mubr.f32.mxu0 %v2339
        %3379 = vmatmul.mubr.f32.gmra.mrb[0].mxu0 %v2338
        %v3380 = vpop.f32.mrb[0].mxu0
        %v3381 = vadd.f32 %v3220, %v3380
        %v3382 = vpop.f32.mrb[0].mxu0
        %v3383 = vadd.f32 %v3222, %v3382
        %3384 = vmatprep.mubr.f32.mxu0 %v2345
        %3385 = vmatmul.mubr.f32.gmra.mrb[0].mxu0 %v2344
        %v3386 = vpop.f32.mrb[0].mxu0
        %v3387 = vadd.f32 %v3226, %v3386
        %v3388 = vpop.f32.mrb[0].mxu0
        %v3389 = vadd.f32 %v3228, %v3388
        %3390 = vmatprep.mubr.f32.mxu0 %v2351
        %3391 = vmatmul.mubr.f32.gmra.mrb[0].mxu0 %v2350
        %v3392 = vpop.f32.mrb[0].mxu0
        %v3393 = vadd.f32 %v3232, %v3392
        %v3394 = vpop.f32.mrb[0].mxu0
        %v3395 = vadd.f32 %v3234, %v3394
        %3396 = vmatprep.mubr.f32.mxu0 %v2357
        %3397 = vmatmul.mubr.f32.gmra.mrb[0].mxu0 %v2356
        %v3398 = vpop.f32.mrb[0].mxu0
        %v3399 = vadd.f32 %v3238, %v3398
        %v3400 = vpop.f32.mrb[0].mxu0
        %v3401 = vadd.f32 %v3240, %v3400
        %3402 = vmatprep.mubr.f32.mxu0 %v2363
        %3403 = vmatmul.mubr.f32.gmra.mrb[0].mxu0 %v2362
        %v3404 = vpop.f32.mrb[0].mxu0
        %v3405 = vadd.f32 %v3244, %v3404
        %v3406 = vpop.f32.mrb[0].mxu0
        %v3407 = vadd.f32 %v3246, %v3406
        %3408 = vmatprep.mubr.f32.mxu0 %v2369
        %3409 = vmatmul.mubr.f32.gmra.mrb[0].mxu0 %v2368
        %v3410 = vpop.f32.mrb[0].mxu0
        %v3411 = vadd.f32 %v3250, %v3410
        %v3412 = vpop.f32.mrb[0].mxu0
        %v3413 = vadd.f32 %v3252, %v3412
        %3414 = vmatprep.mubr.f32.mxu0 %v2375
        %3415 = vmatmul.mubr.f32.gmra.mrb[0].mxu0 %v2374
        %v3416 = vpop.f32.mrb[0].mxu0
        %v3417 = vadd.f32 %v3256, %v3416
        %v3418 = vpop.f32.mrb[0].mxu0
        %v3419 = vadd.f32 %v3258, %v3418
        %3420 = vmatprep.mubr.f32.mxu0 %v2381
        %3421 = vmatmul.mubr.f32.gmra.mrb[0].mxu0 %v2380
        %v3422 = vpop.f32.mrb[0].mxu0
        %v3423 = vadd.f32 %v3262, %v3422
        %v3424 = vpop.f32.mrb[0].mxu0
        %v3425 = vadd.f32 %v3264, %v3424
        %3426 = vmatprep.mubr.f32.mxu0 %v2387
        %3427 = vmatmul.mubr.f32.gmra.mrb[0].mxu0 %v2386
        %v3428 = vpop.f32.mrb[0].mxu0
        %v3429 = vadd.f32 %v3268, %v3428
        %v3430 = vpop.f32.mrb[0].mxu0
        %v3431 = vadd.f32 %v3270, %v3430
        %3432 = vmatprep.mubr.f32.mxu0 %v2393
        %3433 = vmatmul.mubr.f32.gmra.mrb[0].mxu0 %v2392
        %v3434 = vpop.f32.mrb[0].mxu0
        %v3435 = vadd.f32 %v3274, %v3434
        %v3436 = vpop.f32.mrb[0].mxu0
        %v3437 = vadd.f32 %v3276, %v3436
        %3438 = vmatprep.mubr.f32.mxu0 %v2399
        %3439 = vmatmul.mubr.f32.gmra.mrb[0].mxu0 %v2398
        %v3440 = vpop.f32.mrb[0].mxu0
        %v3441 = vadd.f32 %v3280, %v3440
        %v3442 = vpop.f32.mrb[0].mxu0
        %v3443 = vadd.f32 %v3282, %v3442
        %3444 = vdwg.mxu0
        %3445 = vmatprep.subr.mxu0 %v2469
        %3446 = vmatpush1.msra.mxu0 %v2468
        %3447 = vmatprep.subr.mxu0 %v2471
        %3448 = vmatpush1.msra.mxu0 %v2470
        %3449 = vmatprep.subr.mxu0 %v2473
        %3450 = vmatpush1.msra.mxu0 %v2472
        %3451 = vmatprep.subr.mxu0 %v2475
        %3452 = vmatpush1.msra.mxu0 %v2474
        %3453 = vmatprep.subr.mxu0 %v2477
        %3454 = vmatpush1.msra.mxu0 %v2476
        %3455 = vmatprep.subr.mxu0 %v2479
        %3456 = vmatpush1.msra.mxu0 %v2478
        %3457 = vmatprep.subr.mxu0 %v2481
        %3458 = vmatpush1.msra.mxu0 %v2480
        %3459 = vmatprep.subr.mxu0 %v2483
        %3460 = vmatpush1.msra.mxu0 %v2482
        %3461 = vmatprep.subr.mxu0 %v2485
        %3462 = vmatpush1.msra.mxu0 %v2484
        %3463 = vmatprep.subr.mxu0 %v2487
        %3464 = vmatpush1.msra.mxu0 %v2486
        %3465 = vmatprep.subr.mxu0 %v2489
        %3466 = vmatpush1.msra.mxu0 %v2488
        %3467 = vmatprep.subr.mxu0 %v2491
        %3468 = vmatpush1.msra.mxu0 %v2490
        %3469 = vmatprep.subr.mxu0 %v2493
        %3470 = vmatpush1.msra.mxu0 %v2492
        %3471 = vmatprep.subr.mxu0 %v2495
        %3472 = vmatpush1.msra.mxu0 %v2494
        %3473 = vmatprep.subr.mxu0 %v2497
        %3474 = vmatpush1.msra.mxu0 %v2496
        %3475 = vmatprep.subr.mxu0 %v2499
        %3476 = vmatpush1.msra.mxu0 %v2498
        %3477 = vmatprep.subr.mxu0 %v2501
        %3478 = vmatpush1.msra.mxu0 %v2500
        %3479 = vmatprep.subr.mxu0 %v2503
        %3480 = vmatpush1.msra.mxu0 %v2502
        %3481 = vmatprep.subr.mxu0 %v2505
        %3482 = vmatpush1.msra.mxu0 %v2504
        %3483 = vmatprep.subr.mxu0 %v2507
        %3484 = vmatpush1.msra.mxu0 %v2506
        %3485 = vmatprep.subr.mxu0 %v2509
        %3486 = vmatpush1.msra.mxu0 %v2508
        %3487 = vmatprep.subr.mxu0 %v2511
        %3488 = vmatpush1.msra.mxu0 %v2510
        %3489 = vmatprep.subr.mxu0 %v2513
        %3490 = vmatpush1.msra.mxu0 %v2512
        %3491 = vmatprep.subr.mxu0 %v2515
        %3492 = vmatpush1.msra.mxu0 %v2514
        %3493 = vmatprep.subr.mxu0 %v2517
        %3494 = vmatpush1.msra.mxu0 %v2516
        %3495 = vmatprep.subr.mxu0 %v2519
        %3496 = vmatpush1.msra.mxu0 %v2518
        %3497 = vmatprep.subr.mxu0 %v2521
        %3498 = vmatpush1.msra.mxu0 %v2520
        %3499 = vmatprep.subr.mxu0 %v2523
        %3500 = vmatpush1.msra.mxu0 %v2522
        %3501 = vmatprep.subr.mxu0 %v2525
        %3502 = vmatpush1.msra.mxu0 %v2524
        %3503 = vmatprep.subr.mxu0 %v2527
        %3504 = vmatpush1.msra.mxu0 %v2526
        %3505 = vmatprep.subr.mxu0 %v2529
        %3506 = vmatpush1.msra.mxu0 %v2528
        %3507 = vmatprep.subr.mxu0 %v2531
        %3508 = vmatpush1.msra.mxu0 %v2530
        %3509 = vmatprep.mubr.f32.mxu0 %v2311
        %3510 = vmatmul.mubr.f32.gmra.mrb[0].mxu0 %v2310
        %v3511 = vpop.f32.mrb[0].mxu0
        %v3512 = vadd.f32 %v3351, %v3511
        %v3513 = vpop.f32.mrb[0].mxu0
        %v3514 = vadd.f32 %v3353, %v3513
        %3515 = vmatprep.mubr.f32.mxu0 %v2317
        %3516 = vmatmul.mubr.f32.gmra.mrb[0].mxu0 %v2316
        %v3517 = vpop.f32.mrb[0].mxu0
        %v3518 = vadd.f32 %v3357, %v3517
        %v3519 = vpop.f32.mrb[0].mxu0
        %v3520 = vadd.f32 %v3359, %v3519
        %3521 = vmatprep.mubr.f32.mxu0 %v2323
        %3522 = vmatmul.mubr.f32.gmra.mrb[0].mxu0 %v2322
        %v3523 = vpop.f32.mrb[0].mxu0
        %v3524 = vadd.f32 %v3363, %v3523
        %v3525 = vpop.f32.mrb[0].mxu0
        %v3526 = vadd.f32 %v3365, %v3525
        %3527 = vmatprep.mubr.f32.mxu0 %v2329
        %3528 = vmatmul.mubr.f32.gmra.mrb[0].mxu0 %v2328
        %v3529 = vpop.f32.mrb[0].mxu0
        %v3530 = vadd.f32 %v3369, %v3529
        %v3531 = vpop.f32.mrb[0].mxu0
        %v3532 = vadd.f32 %v3371, %v3531
        %3533 = vmatprep.mubr.f32.mxu0 %v2335
        %3534 = vmatmul.mubr.f32.gmra.mrb[0].mxu0 %v2334
        %v3535 = vpop.f32.mrb[0].mxu0
        %v3536 = vadd.f32 %v3375, %v3535
        %v3537 = vpop.f32.mrb[0].mxu0
        %v3538 = vadd.f32 %v3377, %v3537
        %3539 = vmatprep.mubr.f32.mxu0 %v2341
        %3540 = vmatmul.mubr.f32.gmra.mrb[0].mxu0 %v2340
        %v3541 = vpop.f32.mrb[0].mxu0
        %v3542 = vadd.f32 %v3381, %v3541
        %v3543 = vpop.f32.mrb[0].mxu0
        %v3544 = vadd.f32 %v3383, %v3543
        %3545 = vmatprep.mubr.f32.mxu0 %v2347
        %3546 = vmatmul.mubr.f32.gmra.mrb[0].mxu0 %v2346
        %v3547 = vpop.f32.mrb[0].mxu0
        %v3548 = vadd.f32 %v3387, %v3547
        %v3549 = vpop.f32.mrb[0].mxu0
        %v3550 = vadd.f32 %v3389, %v3549
        %3551 = vmatprep.mubr.f32.mxu0 %v2353
        %3552 = vmatmul.mubr.f32.gmra.mrb[0].mxu0 %v2352
        %v3553 = vpop.f32.mrb[0].mxu0
        %v3554 = vadd.f32 %v3393, %v3553
        %v3555 = vpop.f32.mrb[0].mxu0
        %v3556 = vadd.f32 %v3395, %v3555
        %3557 = vmatprep.mubr.f32.mxu0 %v2359
        %3558 = vmatmul.mubr.f32.gmra.mrb[0].mxu0 %v2358
        %v3559 = vpop.f32.mrb[0].mxu0
        %v3560 = vadd.f32 %v3399, %v3559
        %v3561 = vpop.f32.mrb[0].mxu0
        %v3562 = vadd.f32 %v3401, %v3561
        %3563 = vmatprep.mubr.f32.mxu0 %v2365
        %3564 = vmatmul.mubr.f32.gmra.mrb[0].mxu0 %v2364
        %v3565 = vpop.f32.mrb[0].mxu0
        %v3566 = vadd.f32 %v3405, %v3565
        %v3567 = vpop.f32.mrb[0].mxu0
        %v3568 = vadd.f32 %v3407, %v3567
        %3569 = vmatprep.mubr.f32.mxu0 %v2371
        %3570 = vmatmul.mubr.f32.gmra.mrb[0].mxu0 %v2370
        %v3571 = vpop.f32.mrb[0].mxu0
        %v3572 = vadd.f32 %v3411, %v3571
        %v3573 = vpop.f32.mrb[0].mxu0
        %v3574 = vadd.f32 %v3413, %v3573
        %3575 = vmatprep.mubr.f32.mxu0 %v2377
        %3576 = vmatmul.mubr.f32.gmra.mrb[0].mxu0 %v2376
        %v3577 = vpop.f32.mrb[0].mxu0
        %v3578 = vadd.f32 %v3417, %v3577
        %v3579 = vpop.f32.mrb[0].mxu0
        %v3580 = vadd.f32 %v3419, %v3579
        %3581 = vmatprep.mubr.f32.mxu0 %v2383
        %3582 = vmatmul.mubr.f32.gmra.mrb[0].mxu0 %v2382
        %v3583 = vpop.f32.mrb[0].mxu0
        %v3584 = vadd.f32 %v3423, %v3583
        %v3585 = vpop.f32.mrb[0].mxu0
        %v3586 = vadd.f32 %v3425, %v3585
        %3587 = vmatprep.mubr.f32.mxu0 %v2389
        %3588 = vmatmul.mubr.f32.gmra.mrb[0].mxu0 %v2388
        %v3589 = vpop.f32.mrb[0].mxu0
        %v3590 = vadd.f32 %v3429, %v3589
        %v3591 = vpop.f32.mrb[0].mxu0
        %v3592 = vadd.f32 %v3431, %v3591
        %3593 = vmatprep.mubr.f32.mxu0 %v2395
        %3594 = vmatmul.mubr.f32.gmra.mrb[0].mxu0 %v2394
        %v3595 = vpop.f32.mrb[0].mxu0
        %v3596 = vadd.f32 %v3435, %v3595
        %v3597 = vpop.f32.mrb[0].mxu0
        %v3598 = vadd.f32 %v3437, %v3597
        %3599 = vmatprep.mubr.f32.mxu0 %v2401
        %3600 = vmatmul.mubr.f32.gmra.mrb[0].mxu0 %v2400
        %v3601 = vpop.f32.mrb[0].mxu0
        %v3602 = vadd.f32 %v3441, %v3601
        %v3603 = vpop.f32.mrb[0].mxu0
        %v3604 = vadd.f32 %v3443, %v3603
        %3605 = vdwg.mxu0
        %3606 = vmatprep.subr.mxu0 %v2533
        %3607 = vmatpush1.msra.mxu0 %v2532
        %3608 = vmatprep.subr.mxu0 %v2535
        %3609 = vmatpush1.msra.mxu0 %v2534
        %3610 = vmatprep.subr.mxu0 %v2537
        %3611 = vmatpush1.msra.mxu0 %v2536
        %3612 = vmatprep.subr.mxu0 %v2539
        %3613 = vmatpush1.msra.mxu0 %v2538
        %3614 = vmatprep.subr.mxu0 %v2541
        %3615 = vmatpush1.msra.mxu0 %v2540
        %3616 = vmatprep.subr.mxu0 %v2543
        %3617 = vmatpush1.msra.mxu0 %v2542
        %3618 = vmatprep.subr.mxu0 %v2545
        %3619 = vmatpush1.msra.mxu0 %v2544
        %3620 = vmatprep.subr.mxu0 %v2547
        %3621 = vmatpush1.msra.mxu0 %v2546
        %3622 = vmatprep.subr.mxu0 %v2549
        %3623 = vmatpush1.msra.mxu0 %v2548
        %3624 = vmatprep.subr.mxu0 %v2551
        %3625 = vmatpush1.msra.mxu0 %v2550
        %3626 = vmatprep.subr.mxu0 %v2553
        %3627 = vmatpush1.msra.mxu0 %v2552
        %3628 = vmatprep.subr.mxu0 %v2555
        %3629 = vmatpush1.msra.mxu0 %v2554
        %3630 = vmatprep.subr.mxu0 %v2557
        %3631 = vmatpush1.msra.mxu0 %v2556
        %3632 = vmatprep.subr.mxu0 %v2559
        %3633 = vmatpush1.msra.mxu0 %v2558
        %3634 = vmatprep.subr.mxu0 %v2561
        %3635 = vmatpush1.msra.mxu0 %v2560
        %3636 = vmatprep.subr.mxu0 %v2563
        %3637 = vmatpush1.msra.mxu0 %v2562
        %3638 = vmatprep.subr.mxu0 %v2565
        %3639 = vmatpush1.msra.mxu0 %v2564
        %3640 = vmatprep.subr.mxu0 %v2567
        %3641 = vmatpush1.msra.mxu0 %v2566
        %3642 = vmatprep.subr.mxu0 %v2569
        %3643 = vmatpush1.msra.mxu0 %v2568
        %3644 = vmatprep.subr.mxu0 %v2571
        %3645 = vmatpush1.msra.mxu0 %v2570
        %3646 = vmatprep.subr.mxu0 %v2573
        %3647 = vmatpush1.msra.mxu0 %v2572
        %3648 = vmatprep.subr.mxu0 %v2575
        %3649 = vmatpush1.msra.mxu0 %v2574
        %3650 = vmatprep.subr.mxu0 %v2577
        %3651 = vmatpush1.msra.mxu0 %v2576
        %3652 = vmatprep.subr.mxu0 %v2579
        %3653 = vmatpush1.msra.mxu0 %v2578
        %3654 = vmatprep.subr.mxu0 %v2581
        %3655 = vmatpush1.msra.mxu0 %v2580
        %3656 = vmatprep.subr.mxu0 %v2583
        %3657 = vmatpush1.msra.mxu0 %v2582
        %3658 = vmatprep.subr.mxu0 %v2585
        %3659 = vmatpush1.msra.mxu0 %v2584
        %3660 = vmatprep.subr.mxu0 %v2587
        %3661 = vmatpush1.msra.mxu0 %v2586
        %3662 = vmatprep.subr.mxu0 %v2589
        %3663 = vmatpush1.msra.mxu0 %v2588
        %3664 = vmatprep.subr.mxu0 %v2591
        %3665 = vmatpush1.msra.mxu0 %v2590
        %3666 = vmatprep.subr.mxu0 %v2593
        %3667 = vmatpush1.msra.mxu0 %v2592
        %3668 = vmatprep.subr.mxu0 %v2595
        %3669 = vmatpush1.msra.mxu0 %v2594
        %3670 = vmatprep.mubr.f32.mxu0 %v2313
        %3671 = vmatmul.mubr.f32.gmra.mrb[0].mxu0 %v2312
        %v3672 = vpop.f32.mrb[0].mxu0
        %v3673 = vadd.f32 %v3512, %v3672
        %v3674 = vpop.f32.mrb[0].mxu0
        %v3675 = vadd.f32 %v3514, %v3674
        %3676 = vmatprep.mubr.f32.mxu0 %v2319
        %3677 = vmatmul.mubr.f32.gmra.mrb[0].mxu0 %v2318
        %v3678 = vpop.f32.mrb[0].mxu0
        %v3679 = vadd.f32 %v3518, %v3678
        %v3680 = vpop.f32.mrb[0].mxu0
        %v3681 = vadd.f32 %v3520, %v3680
        %3682 = vmatprep.mubr.f32.mxu0 %v2325
        %3683 = vmatmul.mubr.f32.gmra.mrb[0].mxu0 %v2324
        %v3684 = vpop.f32.mrb[0].mxu0
        %v3685 = vadd.f32 %v3524, %v3684
        %v3686 = vpop.f32.mrb[0].mxu0
        %v3687 = vadd.f32 %v3526, %v3686
        %3688 = vmatprep.mubr.f32.mxu0 %v2331
        %3689 = vmatmul.mubr.f32.gmra.mrb[0].mxu0 %v2330
        %v3690 = vpop.f32.mrb[0].mxu0
        %v3691 = vadd.f32 %v3530, %v3690
        %v3692 = vpop.f32.mrb[0].mxu0
        %v3693 = vadd.f32 %v3532, %v3692
        %3694 = vmatprep.mubr.f32.mxu0 %v2337
        %3695 = vmatmul.mubr.f32.gmra.mrb[0].mxu0 %v2336
        %v3696 = vpop.f32.mrb[0].mxu0
        %v3697 = vadd.f32 %v3536, %v3696
        %v3698 = vpop.f32.mrb[0].mxu0
        %v3699 = vadd.f32 %v3538, %v3698
        %3700 = vmatprep.mubr.f32.mxu0 %v2343
        %3701 = vmatmul.mubr.f32.gmra.mrb[0].mxu0 %v2342
        %v3702 = vpop.f32.mrb[0].mxu0
        %v3703 = vadd.f32 %v3542, %v3702
        %v3704 = vpop.f32.mrb[0].mxu0
        %v3705 = vadd.f32 %v3544, %v3704
        %3706 = vmatprep.mubr.f32.mxu0 %v2349
        %3707 = vmatmul.mubr.f32.gmra.mrb[0].mxu0 %v2348
        %v3708 = vpop.f32.mrb[0].mxu0
        %v3709 = vadd.f32 %v3548, %v3708
        %v3710 = vpop.f32.mrb[0].mxu0
        %v3711 = vadd.f32 %v3550, %v3710
        %3712 = vmatprep.mubr.f32.mxu0 %v2355
        %3713 = vmatmul.mubr.f32.gmra.mrb[0].mxu0 %v2354
        %v3714 = vpop.f32.mrb[0].mxu0
        %v3715 = vadd.f32 %v3554, %v3714
        %v3716 = vpop.f32.mrb[0].mxu0
        %v3717 = vadd.f32 %v3556, %v3716
        %3718 = vmatprep.mubr.f32.mxu0 %v2361
        %3719 = vmatmul.mubr.f32.gmra.mrb[0].mxu0 %v2360
        %v3720 = vpop.f32.mrb[0].mxu0
        %v3721 = vadd.f32 %v3560, %v3720
        %v3722 = vpop.f32.mrb[0].mxu0
        %v3723 = vadd.f32 %v3562, %v3722
        %3724 = vmatprep.mubr.f32.mxu0 %v2367
        %3725 = vmatmul.mubr.f32.gmra.mrb[0].mxu0 %v2366
        %v3726 = vpop.f32.mrb[0].mxu0
        %v3727 = vadd.f32 %v3566, %v3726
        %v3728 = vpop.f32.mrb[0].mxu0
        %v3729 = vadd.f32 %v3568, %v3728
        %3730 = vmatprep.mubr.f32.mxu0 %v2373
        %3731 = vmatmul.mubr.f32.gmra.mrb[0].mxu0 %v2372
        %v3732 = vpop.f32.mrb[0].mxu0
        %v3733 = vadd.f32 %v3572, %v3732
        %v3734 = vpop.f32.mrb[0].mxu0
        %v3735 = vadd.f32 %v3574, %v3734
        %3736 = vmatprep.mubr.f32.mxu0 %v2379
        %3737 = vmatmul.mubr.f32.gmra.mrb[0].mxu0 %v2378
        %v3738 = vpop.f32.mrb[0].mxu0
        %v3739 = vadd.f32 %v3578, %v3738
        %v3740 = vpop.f32.mrb[0].mxu0
        %v3741 = vadd.f32 %v3580, %v3740
        %3742 = vmatprep.mubr.f32.mxu0 %v2385
        %3743 = vmatmul.mubr.f32.gmra.mrb[0].mxu0 %v2384
        %v3744 = vpop.f32.mrb[0].mxu0
        %v3745 = vadd.f32 %v3584, %v3744
        %v3746 = vpop.f32.mrb[0].mxu0
        %v3747 = vadd.f32 %v3586, %v3746
        %3748 = vmatprep.mubr.f32.mxu0 %v2391
        %3749 = vmatmul.mubr.f32.gmra.mrb[0].mxu0 %v2390
        %v3750 = vpop.f32.mrb[0].mxu0
        %v3751 = vadd.f32 %v3590, %v3750
        %v3752 = vpop.f32.mrb[0].mxu0
        %v3753 = vadd.f32 %v3592, %v3752
        %3754 = vmatprep.mubr.f32.mxu0 %v2397
        %3755 = vmatmul.mubr.f32.gmra.mrb[0].mxu0 %v2396
        %v3756 = vpop.f32.mrb[0].mxu0
        %v3757 = vadd.f32 %v3596, %v3756
        %v3758 = vpop.f32.mrb[0].mxu0
        %v3759 = vadd.f32 %v3598, %v3758
        %3760 = vmatprep.mubr.f32.mxu0 %v2403
        %3761 = vmatmul.mubr.f32.gmra.mrb[0].mxu0 %v2402
        %v3762 = vpop.f32.mrb[0].mxu0
        %v3763 = vadd.f32 %v3602, %v3762
        %v3764 = vpop.f32.mrb[0].mxu0
        %v3765 = vadd.f32 %v3604, %v3764
        %3766 = vdwg.mxu0
        %v3767 = vld [vmem:[#allocation3 + $0xc0] sm:$0xff]
        %v3768 = vld [vmem:[#allocation3 + $0xc8] sm:$0xff]
        %v3769 = vld [vmem:[#allocation3 + $0xd0] sm:$0xff]
        %v3770 = vld [vmem:[#allocation3 + $0xd8] sm:$0xff]
        %v3771 = vld [vmem:[#allocation3 + $0xe0] sm:$0xff]
        %v3772 = vld [vmem:[#allocation3 + $0xe8] sm:$0xff]
        %v3773 = vld [vmem:[#allocation3 + $0xf0] sm:$0xff]
        %v3774 = vld [vmem:[#allocation3 + $0xf8] sm:$0xff]
        %v3775 = vld [vmem:[#allocation3 + $0x100] sm:$0xff]
        %v3776 = vld [vmem:[#allocation3 + $0x108] sm:$0xff]
        %v3777 = vld [vmem:[#allocation3 + $0x110] sm:$0xff]
        %v3778 = vld [vmem:[#allocation3 + $0x118] sm:$0xff]
        %v3779 = vld [vmem:[#allocation3 + $0x120] sm:$0xff]
        %v3780 = vld [vmem:[#allocation3 + $0x128] sm:$0xff]
        %v3781 = vld [vmem:[#allocation3 + $0x130] sm:$0xff]
        %v3782 = vld [vmem:[#allocation3 + $0x138] sm:$0xff]
        %v3783 = vld [vmem:[#allocation3 + $0x140] sm:$0xff]
        %v3784 = vld [vmem:[#allocation3 + $0x148] sm:$0xff]
        %v3785 = vld [vmem:[#allocation3 + $0x150] sm:$0xff]
        %v3786 = vld [vmem:[#allocation3 + $0x158] sm:$0xff]
        %v3787 = vld [vmem:[#allocation3 + $0x160] sm:$0xff]
        %v3788 = vld [vmem:[#allocation3 + $0x168] sm:$0xff]
        %v3789 = vld [vmem:[#allocation3 + $0x170] sm:$0xff]
        %v3790 = vld [vmem:[#allocation3 + $0x178] sm:$0xff]
        %v3791 = vld [vmem:[#allocation3 + $0x180] sm:$0xff]
        %v3792 = vld [vmem:[#allocation3 + $0x188] sm:$0xff]
        %v3793 = vld [vmem:[#allocation3 + $0x190] sm:$0xff]
        %v3794 = vld [vmem:[#allocation3 + $0x198] sm:$0xff]
        %v3795 = vld [vmem:[#allocation3 + $0x1a0] sm:$0xff]
        %v3796 = vld [vmem:[#allocation3 + $0x1a8] sm:$0xff]
        %v3797 = vld [vmem:[#allocation3 + $0x1b0] sm:$0xff]
        %v3798 = vld [vmem:[#allocation3 + $0x1b8] sm:$0xff]
        %v3799 = vld [vmem:[#allocation3 + $0x1c0] sm:$0xff]
        %v3800 = vld [vmem:[#allocation3 + $0x1c8] sm:$0xff]
        %v3801 = vld [vmem:[#allocation3 + $0x1d0] sm:$0xff]
        %v3802 = vld [vmem:[#allocation3 + $0x1d8] sm:$0xff]
        %v3803 = vld [vmem:[#allocation3 + $0x1e0] sm:$0xff]
        %v3804 = vld [vmem:[#allocation3 + $0x1e8] sm:$0xff]
        %v3805 = vld [vmem:[#allocation3 + $0x1f0] sm:$0xff]
        %v3806 = vld [vmem:[#allocation3 + $0x1f8] sm:$0xff]
        %v3807 = vld [vmem:[#allocation3 + $0x200] sm:$0xff]
        %v3808 = vld [vmem:[#allocation3 + $0x208] sm:$0xff]
        %v3809 = vld [vmem:[#allocation3 + $0x210] sm:$0xff]
        %v3810 = vld [vmem:[#allocation3 + $0x218] sm:$0xff]
        %v3811 = vld [vmem:[#allocation3 + $0x220] sm:$0xff]
        %v3812 = vld [vmem:[#allocation3 + $0x228] sm:$0xff]
        %v3813 = vld [vmem:[#allocation3 + $0x230] sm:$0xff]
        %v3814 = vld [vmem:[#allocation3 + $0x238] sm:$0xff]
        %v3815 = vld [vmem:[#allocation3 + $0x240] sm:$0xff]
        %v3816 = vld [vmem:[#allocation3 + $0x248] sm:$0xff]
        %v3817 = vld [vmem:[#allocation3 + $0x250] sm:$0xff]
        %v3818 = vld [vmem:[#allocation3 + $0x258] sm:$0xff]
        %v3819 = vld [vmem:[#allocation3 + $0x260] sm:$0xff]
        %v3820 = vld [vmem:[#allocation3 + $0x268] sm:$0xff]
        %v3821 = vld [vmem:[#allocation3 + $0x270] sm:$0xff]
        %v3822 = vld [vmem:[#allocation3 + $0x278] sm:$0xff]
        %v3823 = vld [vmem:[#allocation3 + $0x280] sm:$0xff]
        %v3824 = vld [vmem:[#allocation3 + $0x288] sm:$0xff]
        %v3825 = vld [vmem:[#allocation3 + $0x290] sm:$0xff]
        %v3826 = vld [vmem:[#allocation3 + $0x298] sm:$0xff]
        %v3827 = vld [vmem:[#allocation3 + $0x2a0] sm:$0xff]
        %v3828 = vld [vmem:[#allocation3 + $0x2a8] sm:$0xff]
        %v3829 = vld [vmem:[#allocation3 + $0x2b0] sm:$0xff]
        %v3830 = vld [vmem:[#allocation3 + $0x2b8] sm:$0xff]
        %v3831 = vld [vmem:[#allocation3 + $0x2c0] sm:$0xff]
        %v3832 = vld [vmem:[#allocation3 + $0x2c8] sm:$0xff]
        %v3833 = vld [vmem:[#allocation3 + $0x2d0] sm:$0xff]
        %v3834 = vld [vmem:[#allocation3 + $0x2d8] sm:$0xff]
        %v3835 = vld [vmem:[#allocation3 + $0x2e0] sm:$0xff]
        %v3836 = vld [vmem:[#allocation3 + $0x2e8] sm:$0xff]
        %v3837 = vld [vmem:[#allocation3 + $0x2f0] sm:$0xff]
        %v3838 = vld [vmem:[#allocation3 + $0x2f8] sm:$0xff]
        %v3839 = vld [vmem:[#allocation3 + $0x300] sm:$0xff]
        %v3840 = vld [vmem:[#allocation3 + $0x308] sm:$0xff]
        %v3841 = vld [vmem:[#allocation3 + $0x310] sm:$0xff]
        %v3842 = vld [vmem:[#allocation3 + $0x318] sm:$0xff]
        %v3843 = vld [vmem:[#allocation3 + $0x320] sm:$0xff]
        %v3844 = vld [vmem:[#allocation3 + $0x328] sm:$0xff]
        %v3845 = vld [vmem:[#allocation3 + $0x330] sm:$0xff]
        %v3846 = vld [vmem:[#allocation3 + $0x338] sm:$0xff]
        %v3847 = vld [vmem:[#allocation3 + $0x340] sm:$0xff]
        %v3848 = vld [vmem:[#allocation3 + $0x348] sm:$0xff]
        %v3849 = vld [vmem:[#allocation3 + $0x350] sm:$0xff]
        %v3850 = vld [vmem:[#allocation3 + $0x358] sm:$0xff]
        %v3851 = vld [vmem:[#allocation3 + $0x360] sm:$0xff]
        %v3852 = vld [vmem:[#allocation3 + $0x368] sm:$0xff]
        %v3853 = vld [vmem:[#allocation3 + $0x370] sm:$0xff]
        %v3854 = vld [vmem:[#allocation3 + $0x378] sm:$0xff]
        %v3855 = vld [vmem:[#allocation3 + $0x380] sm:$0xff]
        %v3856 = vld [vmem:[#allocation3 + $0x388] sm:$0xff]
        %v3857 = vld [vmem:[#allocation3 + $0x390] sm:$0xff]
        %v3858 = vld [vmem:[#allocation3 + $0x398] sm:$0xff]
        %v3859 = vld [vmem:[#allocation3 + $0x3a0] sm:$0xff]
        %v3860 = vld [vmem:[#allocation3 + $0x3a8] sm:$0xff]
        %v3861 = vld [vmem:[#allocation3 + $0x3b0] sm:$0xff]
        %v3862 = vld [vmem:[#allocation3 + $0x3b8] sm:$0xff]
        %s3863 = scalar_lea.vmem %s449, 3072 [#allocation6]
        %v3864 = vld [vmem:[%s3863] sm:$0xff]
        %v3865 = vld [vmem:[%s3863 + $0x8] sm:$0xff]
        %v3866 = vld [vmem:[%s3863 + $0x10] sm:$0xff]
        %v3867 = vld [vmem:[%s3863 + $0x18] sm:$0xff]
        %v3868 = vld [vmem:[%s3863 + $0x20] sm:$0xff]
        %v3869 = vld [vmem:[%s3863 + $0x28] sm:$0xff]
        %v3870 = vld [vmem:[%s3863 + $0x30] sm:$0xff]
        %v3871 = vld [vmem:[%s3863 + $0x38] sm:$0xff]
        %v3872 = vld [vmem:[%s3863 + $0x40] sm:$0xff]
        %v3873 = vld [vmem:[%s3863 + $0x48] sm:$0xff]
        %v3874 = vld [vmem:[%s3863 + $0x50] sm:$0xff]
        %v3875 = vld [vmem:[%s3863 + $0x58] sm:$0xff]
        %v3876 = vld [vmem:[%s3863 + $0x60] sm:$0xff]
        %v3877 = vld [vmem:[%s3863 + $0x68] sm:$0xff]
        %v3878 = vld [vmem:[%s3863 + $0x70] sm:$0xff]
        %v3879 = vld [vmem:[%s3863 + $0x78] sm:$0xff]
        %v3880 = vld [vmem:[%s3863 + $0x80] sm:$0xff]
        %v3881 = vld [vmem:[%s3863 + $0x88] sm:$0xff]
        %v3882 = vld [vmem:[%s3863 + $0x90] sm:$0xff]
        %v3883 = vld [vmem:[%s3863 + $0x98] sm:$0xff]
        %v3884 = vld [vmem:[%s3863 + $0xa0] sm:$0xff]
        %v3885 = vld [vmem:[%s3863 + $0xa8] sm:$0xff]
        %v3886 = vld [vmem:[%s3863 + $0xb0] sm:$0xff]
        %v3887 = vld [vmem:[%s3863 + $0xb8] sm:$0xff]
        %v3888 = vld [vmem:[%s3863 + $0xc0] sm:$0xff]
        %v3889 = vld [vmem:[%s3863 + $0xc8] sm:$0xff]
        %v3890 = vld [vmem:[%s3863 + $0xd0] sm:$0xff]
        %v3891 = vld [vmem:[%s3863 + $0xd8] sm:$0xff]
        %v3892 = vld [vmem:[%s3863 + $0xe0] sm:$0xff]
        %v3893 = vld [vmem:[%s3863 + $0xe8] sm:$0xff]
        %v3894 = vld [vmem:[%s3863 + $0xf0] sm:$0xff]
        %v3895 = vld [vmem:[%s3863 + $0xf8] sm:$0xff]
        %v3896 = vld [vmem:[%s3863 + $0x100] sm:$0xff]
        %v3897 = vld [vmem:[%s3863 + $0x108] sm:$0xff]
        %v3898 = vld [vmem:[%s3863 + $0x110] sm:$0xff]
        %v3899 = vld [vmem:[%s3863 + $0x118] sm:$0xff]
        %v3900 = vld [vmem:[%s3863 + $0x120] sm:$0xff]
        %v3901 = vld [vmem:[%s3863 + $0x128] sm:$0xff]
        %v3902 = vld [vmem:[%s3863 + $0x130] sm:$0xff]
        %v3903 = vld [vmem:[%s3863 + $0x138] sm:$0xff]
        %v3904 = vld [vmem:[%s3863 + $0x140] sm:$0xff]
        %v3905 = vld [vmem:[%s3863 + $0x148] sm:$0xff]
        %v3906 = vld [vmem:[%s3863 + $0x150] sm:$0xff]
        %v3907 = vld [vmem:[%s3863 + $0x158] sm:$0xff]
        %v3908 = vld [vmem:[%s3863 + $0x160] sm:$0xff]
        %v3909 = vld [vmem:[%s3863 + $0x168] sm:$0xff]
        %v3910 = vld [vmem:[%s3863 + $0x170] sm:$0xff]
        %v3911 = vld [vmem:[%s3863 + $0x178] sm:$0xff]
        %v3912 = vld [vmem:[%s3863 + $0x180] sm:$0xff]
        %v3913 = vld [vmem:[%s3863 + $0x188] sm:$0xff]
        %v3914 = vld [vmem:[%s3863 + $0x190] sm:$0xff]
        %v3915 = vld [vmem:[%s3863 + $0x198] sm:$0xff]
        %v3916 = vld [vmem:[%s3863 + $0x1a0] sm:$0xff]
        %v3917 = vld [vmem:[%s3863 + $0x1a8] sm:$0xff]
        %v3918 = vld [vmem:[%s3863 + $0x1b0] sm:$0xff]
        %v3919 = vld [vmem:[%s3863 + $0x1b8] sm:$0xff]
        %v3920 = vld [vmem:[%s3863 + $0x1c0] sm:$0xff]
        %v3921 = vld [vmem:[%s3863 + $0x1c8] sm:$0xff]
        %v3922 = vld [vmem:[%s3863 + $0x1d0] sm:$0xff]
        %v3923 = vld [vmem:[%s3863 + $0x1d8] sm:$0xff]
        %v3924 = vld [vmem:[%s3863 + $0x1e0] sm:$0xff]
        %v3925 = vld [vmem:[%s3863 + $0x1e8] sm:$0xff]
        %v3926 = vld [vmem:[%s3863 + $0x1f0] sm:$0xff]
        %v3927 = vld [vmem:[%s3863 + $0x1f8] sm:$0xff]
        %v3928 = vld [vmem:[%s3863 + $0x200] sm:$0xff]
        %v3929 = vld [vmem:[%s3863 + $0x208] sm:$0xff]
        %v3930 = vld [vmem:[%s3863 + $0x210] sm:$0xff]
        %v3931 = vld [vmem:[%s3863 + $0x218] sm:$0xff]
        %v3932 = vld [vmem:[%s3863 + $0x220] sm:$0xff]
        %v3933 = vld [vmem:[%s3863 + $0x228] sm:$0xff]
        %v3934 = vld [vmem:[%s3863 + $0x230] sm:$0xff]
        %v3935 = vld [vmem:[%s3863 + $0x238] sm:$0xff]
        %v3936 = vld [vmem:[%s3863 + $0x240] sm:$0xff]
        %v3937 = vld [vmem:[%s3863 + $0x248] sm:$0xff]
        %v3938 = vld [vmem:[%s3863 + $0x250] sm:$0xff]
        %v3939 = vld [vmem:[%s3863 + $0x258] sm:$0xff]
        %v3940 = vld [vmem:[%s3863 + $0x260] sm:$0xff]
        %v3941 = vld [vmem:[%s3863 + $0x268] sm:$0xff]
        %v3942 = vld [vmem:[%s3863 + $0x270] sm:$0xff]
        %v3943 = vld [vmem:[%s3863 + $0x278] sm:$0xff]
        %v3944 = vld [vmem:[%s3863 + $0x280] sm:$0xff]
        %v3945 = vld [vmem:[%s3863 + $0x288] sm:$0xff]
        %v3946 = vld [vmem:[%s3863 + $0x290] sm:$0xff]
        %v3947 = vld [vmem:[%s3863 + $0x298] sm:$0xff]
        %v3948 = vld [vmem:[%s3863 + $0x2a0] sm:$0xff]
        %v3949 = vld [vmem:[%s3863 + $0x2a8] sm:$0xff]
        %v3950 = vld [vmem:[%s3863 + $0x2b0] sm:$0xff]
        %v3951 = vld [vmem:[%s3863 + $0x2b8] sm:$0xff]
        %v3952 = vld [vmem:[%s3863 + $0x2c0] sm:$0xff]
        %v3953 = vld [vmem:[%s3863 + $0x2c8] sm:$0xff]
        %v3954 = vld [vmem:[%s3863 + $0x2d0] sm:$0xff]
        %v3955 = vld [vmem:[%s3863 + $0x2d8] sm:$0xff]
        %v3956 = vld [vmem:[%s3863 + $0x2e0] sm:$0xff]
        %v3957 = vld [vmem:[%s3863 + $0x2e8] sm:$0xff]
        %v3958 = vld [vmem:[%s3863 + $0x2f0] sm:$0xff]
        %v3959 = vld [vmem:[%s3863 + $0x2f8] sm:$0xff]
        %v3960 = vld [vmem:[%s3863 + $0x300] sm:$0xff]
        %v3961 = vld [vmem:[%s3863 + $0x308] sm:$0xff]
        %v3962 = vld [vmem:[%s3863 + $0x310] sm:$0xff]
        %v3963 = vld [vmem:[%s3863 + $0x318] sm:$0xff]
        %v3964 = vld [vmem:[%s3863 + $0x320] sm:$0xff]
        %v3965 = vld [vmem:[%s3863 + $0x328] sm:$0xff]
        %v3966 = vld [vmem:[%s3863 + $0x330] sm:$0xff]
        %v3967 = vld [vmem:[%s3863 + $0x338] sm:$0xff]
        %v3968 = vld [vmem:[%s3863 + $0x340] sm:$0xff]
        %v3969 = vld [vmem:[%s3863 + $0x348] sm:$0xff]
        %v3970 = vld [vmem:[%s3863 + $0x350] sm:$0xff]
        %v3971 = vld [vmem:[%s3863 + $0x358] sm:$0xff]
        %v3972 = vld [vmem:[%s3863 + $0x360] sm:$0xff]
        %v3973 = vld [vmem:[%s3863 + $0x368] sm:$0xff]
        %v3974 = vld [vmem:[%s3863 + $0x370] sm:$0xff]
        %v3975 = vld [vmem:[%s3863 + $0x378] sm:$0xff]
        %v3976 = vld [vmem:[%s3863 + $0x380] sm:$0xff]
        %v3977 = vld [vmem:[%s3863 + $0x388] sm:$0xff]
        %v3978 = vld [vmem:[%s3863 + $0x390] sm:$0xff]
        %v3979 = vld [vmem:[%s3863 + $0x398] sm:$0xff]
        %v3980 = vld [vmem:[%s3863 + $0x3a0] sm:$0xff]
        %v3981 = vld [vmem:[%s3863 + $0x3a8] sm:$0xff]
        %v3982 = vld [vmem:[%s3863 + $0x3b0] sm:$0xff]
        %v3983 = vld [vmem:[%s3863 + $0x3b8] sm:$0xff]
        %v3984 = vld [vmem:[%s3863 + $0x3c0] sm:$0xff]
        %v3985 = vld [vmem:[%s3863 + $0x3c8] sm:$0xff]
        %v3986 = vld [vmem:[%s3863 + $0x3d0] sm:$0xff]
        %v3987 = vld [vmem:[%s3863 + $0x3d8] sm:$0xff]
        %v3988 = vld [vmem:[%s3863 + $0x3e0] sm:$0xff]
        %v3989 = vld [vmem:[%s3863 + $0x3e8] sm:$0xff]
        %v3990 = vld [vmem:[%s3863 + $0x3f0] sm:$0xff]
        %v3991 = vld [vmem:[%s3863 + $0x3f8] sm:$0xff]
        %v3992 = vld [vmem:[%s3863 + $0x400] sm:$0xff]
        %v3993 = vld [vmem:[%s3863 + $0x408] sm:$0xff]
        %v3994 = vld [vmem:[%s3863 + $0x410] sm:$0xff]
        %v3995 = vld [vmem:[%s3863 + $0x418] sm:$0xff]
        %v3996 = vld [vmem:[%s3863 + $0x420] sm:$0xff]
        %v3997 = vld [vmem:[%s3863 + $0x428] sm:$0xff]
        %v3998 = vld [vmem:[%s3863 + $0x430] sm:$0xff]
        %v3999 = vld [vmem:[%s3863 + $0x438] sm:$0xff]
        %v4000 = vld [vmem:[%s3863 + $0x440] sm:$0xff]
        %v4001 = vld [vmem:[%s3863 + $0x448] sm:$0xff]
        %v4002 = vld [vmem:[%s3863 + $0x450] sm:$0xff]
        %v4003 = vld [vmem:[%s3863 + $0x458] sm:$0xff]
        %v4004 = vld [vmem:[%s3863 + $0x460] sm:$0xff]
        %v4005 = vld [vmem:[%s3863 + $0x468] sm:$0xff]
        %v4006 = vld [vmem:[%s3863 + $0x470] sm:$0xff]
        %v4007 = vld [vmem:[%s3863 + $0x478] sm:$0xff]
        %v4008 = vld [vmem:[%s3863 + $0x480] sm:$0xff]
        %v4009 = vld [vmem:[%s3863 + $0x488] sm:$0xff]
        %v4010 = vld [vmem:[%s3863 + $0x490] sm:$0xff]
        %v4011 = vld [vmem:[%s3863 + $0x498] sm:$0xff]
        %v4012 = vld [vmem:[%s3863 + $0x4a0] sm:$0xff]
        %v4013 = vld [vmem:[%s3863 + $0x4a8] sm:$0xff]
        %v4014 = vld [vmem:[%s3863 + $0x4b0] sm:$0xff]
        %v4015 = vld [vmem:[%s3863 + $0x4b8] sm:$0xff]
        %v4016 = vld [vmem:[%s3863 + $0x4c0] sm:$0xff]
        %v4017 = vld [vmem:[%s3863 + $0x4c8] sm:$0xff]
        %v4018 = vld [vmem:[%s3863 + $0x4d0] sm:$0xff]
        %v4019 = vld [vmem:[%s3863 + $0x4d8] sm:$0xff]
        %v4020 = vld [vmem:[%s3863 + $0x4e0] sm:$0xff]
        %v4021 = vld [vmem:[%s3863 + $0x4e8] sm:$0xff]
        %v4022 = vld [vmem:[%s3863 + $0x4f0] sm:$0xff]
        %v4023 = vld [vmem:[%s3863 + $0x4f8] sm:$0xff]
        %v4024 = vld [vmem:[%s3863 + $0x500] sm:$0xff]
        %v4025 = vld [vmem:[%s3863 + $0x508] sm:$0xff]
        %v4026 = vld [vmem:[%s3863 + $0x510] sm:$0xff]
        %v4027 = vld [vmem:[%s3863 + $0x518] sm:$0xff]
        %v4028 = vld [vmem:[%s3863 + $0x520] sm:$0xff]
        %v4029 = vld [vmem:[%s3863 + $0x528] sm:$0xff]
        %v4030 = vld [vmem:[%s3863 + $0x530] sm:$0xff]
        %v4031 = vld [vmem:[%s3863 + $0x538] sm:$0xff]
        %v4032 = vld [vmem:[%s3863 + $0x540] sm:$0xff]
        %v4033 = vld [vmem:[%s3863 + $0x548] sm:$0xff]
        %v4034 = vld [vmem:[%s3863 + $0x550] sm:$0xff]
        %v4035 = vld [vmem:[%s3863 + $0x558] sm:$0xff]
        %v4036 = vld [vmem:[%s3863 + $0x560] sm:$0xff]
        %v4037 = vld [vmem:[%s3863 + $0x568] sm:$0xff]
        %v4038 = vld [vmem:[%s3863 + $0x570] sm:$0xff]
        %v4039 = vld [vmem:[%s3863 + $0x578] sm:$0xff]
        %v4040 = vld [vmem:[%s3863 + $0x580] sm:$0xff]
        %v4041 = vld [vmem:[%s3863 + $0x588] sm:$0xff]
        %v4042 = vld [vmem:[%s3863 + $0x590] sm:$0xff]
        %v4043 = vld [vmem:[%s3863 + $0x598] sm:$0xff]
        %v4044 = vld [vmem:[%s3863 + $0x5a0] sm:$0xff]
        %v4045 = vld [vmem:[%s3863 + $0x5a8] sm:$0xff]
        %v4046 = vld [vmem:[%s3863 + $0x5b0] sm:$0xff]
        %v4047 = vld [vmem:[%s3863 + $0x5b8] sm:$0xff]
        %v4048 = vld [vmem:[%s3863 + $0x5c0] sm:$0xff]
        %v4049 = vld [vmem:[%s3863 + $0x5c8] sm:$0xff]
        %v4050 = vld [vmem:[%s3863 + $0x5d0] sm:$0xff]
        %v4051 = vld [vmem:[%s3863 + $0x5d8] sm:$0xff]
        %v4052 = vld [vmem:[%s3863 + $0x5e0] sm:$0xff]
        %v4053 = vld [vmem:[%s3863 + $0x5e8] sm:$0xff]
        %v4054 = vld [vmem:[%s3863 + $0x5f0] sm:$0xff]
        %v4055 = vld [vmem:[%s3863 + $0x5f8] sm:$0xff]
        %4056 = vmatprep.subr.mxu0 %v3865
        %4057 = vmatpush1.msra.mxu0 %v3864
        %4058 = vmatprep.subr.mxu0 %v3867
        %4059 = vmatpush1.msra.mxu0 %v3866
        %4060 = vmatprep.subr.mxu0 %v3869
        %4061 = vmatpush1.msra.mxu0 %v3868
        %4062 = vmatprep.subr.mxu0 %v3871
        %4063 = vmatpush1.msra.mxu0 %v3870
        %4064 = vmatprep.subr.mxu0 %v3873
        %4065 = vmatpush1.msra.mxu0 %v3872
        %4066 = vmatprep.subr.mxu0 %v3875
        %4067 = vmatpush1.msra.mxu0 %v3874
        %4068 = vmatprep.subr.mxu0 %v3877
        %4069 = vmatpush1.msra.mxu0 %v3876
        %4070 = vmatprep.subr.mxu0 %v3879
        %4071 = vmatpush1.msra.mxu0 %v3878
        %4072 = vmatprep.subr.mxu0 %v3881
        %4073 = vmatpush1.msra.mxu0 %v3880
        %4074 = vmatprep.subr.mxu0 %v3883
        %4075 = vmatpush1.msra.mxu0 %v3882
        %4076 = vmatprep.subr.mxu0 %v3885
        %4077 = vmatpush1.msra.mxu0 %v3884
        %4078 = vmatprep.subr.mxu0 %v3887
        %4079 = vmatpush1.msra.mxu0 %v3886
        %4080 = vmatprep.subr.mxu0 %v3889
        %4081 = vmatpush1.msra.mxu0 %v3888
        %4082 = vmatprep.subr.mxu0 %v3891
        %4083 = vmatpush1.msra.mxu0 %v3890
        %4084 = vmatprep.subr.mxu0 %v3893
        %4085 = vmatpush1.msra.mxu0 %v3892
        %4086 = vmatprep.subr.mxu0 %v3895
        %4087 = vmatpush1.msra.mxu0 %v3894
        %4088 = vmatprep.subr.mxu0 %v3897
        %4089 = vmatpush1.msra.mxu0 %v3896
        %4090 = vmatprep.subr.mxu0 %v3899
        %4091 = vmatpush1.msra.mxu0 %v3898
        %4092 = vmatprep.subr.mxu0 %v3901
        %4093 = vmatpush1.msra.mxu0 %v3900
        %4094 = vmatprep.subr.mxu0 %v3903
        %4095 = vmatpush1.msra.mxu0 %v3902
        %4096 = vmatprep.subr.mxu0 %v3905
        %4097 = vmatpush1.msra.mxu0 %v3904
        %4098 = vmatprep.subr.mxu0 %v3907
        %4099 = vmatpush1.msra.mxu0 %v3906
        %4100 = vmatprep.subr.mxu0 %v3909
        %4101 = vmatpush1.msra.mxu0 %v3908
        %4102 = vmatprep.subr.mxu0 %v3911
        %4103 = vmatpush1.msra.mxu0 %v3910
        %4104 = vmatprep.subr.mxu0 %v3913
        %4105 = vmatpush1.msra.mxu0 %v3912
        %4106 = vmatprep.subr.mxu0 %v3915
        %4107 = vmatpush1.msra.mxu0 %v3914
        %4108 = vmatprep.subr.mxu0 %v3917
        %4109 = vmatpush1.msra.mxu0 %v3916
        %4110 = vmatprep.subr.mxu0 %v3919
        %4111 = vmatpush1.msra.mxu0 %v3918
        %4112 = vmatprep.subr.mxu0 %v3921
        %4113 = vmatpush1.msra.mxu0 %v3920
        %4114 = vmatprep.subr.mxu0 %v3923
        %4115 = vmatpush1.msra.mxu0 %v3922
        %4116 = vmatprep.subr.mxu0 %v3925
        %4117 = vmatpush1.msra.mxu0 %v3924
        %4118 = vmatprep.subr.mxu0 %v3927
        %4119 = vmatpush1.msra.mxu0 %v3926
        %4120 = vmatprep.mubr.f32.mxu0 %v3768
        %4121 = vmatmul.mubr.f32.gmra.mrb[0].mxu0 %v3767
        %v4122 = vpop.f32.mrb[0].mxu0
        %v4123 = vadd.f32 0.0, %v4122
        %v4124 = vpop.f32.mrb[0].mxu0
        %v4125 = vadd.f32 0.0, %v4124
        %4126 = vmatprep.mubr.f32.mxu0 %v3774
        %4127 = vmatmul.mubr.f32.gmra.mrb[0].mxu0 %v3773
        %v4128 = vpop.f32.mrb[0].mxu0
        %v4129 = vadd.f32 0.0, %v4128
        %v4130 = vpop.f32.mrb[0].mxu0
        %v4131 = vadd.f32 0.0, %v4130
        %4132 = vmatprep.mubr.f32.mxu0 %v3780
        %4133 = vmatmul.mubr.f32.gmra.mrb[0].mxu0 %v3779
        %v4134 = vpop.f32.mrb[0].mxu0
        %v4135 = vadd.f32 0.0, %v4134
        %v4136 = vpop.f32.mrb[0].mxu0
        %v4137 = vadd.f32 0.0, %v4136
        %4138 = vmatprep.mubr.f32.mxu0 %v3786
        %4139 = vmatmul.mubr.f32.gmra.mrb[0].mxu0 %v3785
        %v4140 = vpop.f32.mrb[0].mxu0
        %v4141 = vadd.f32 0.0, %v4140
        %v4142 = vpop.f32.mrb[0].mxu0
        %v4143 = vadd.f32 0.0, %v4142
        %4144 = vmatprep.mubr.f32.mxu0 %v3792
        %4145 = vmatmul.mubr.f32.gmra.mrb[0].mxu0 %v3791
        %v4146 = vpop.f32.mrb[0].mxu0
        %v4147 = vadd.f32 0.0, %v4146
        %v4148 = vpop.f32.mrb[0].mxu0
        %v4149 = vadd.f32 0.0, %v4148
        %4150 = vmatprep.mubr.f32.mxu0 %v3798
        %4151 = vmatmul.mubr.f32.gmra.mrb[0].mxu0 %v3797
        %v4152 = vpop.f32.mrb[0].mxu0
        %v4153 = vadd.f32 0.0, %v4152
        %v4154 = vpop.f32.mrb[0].mxu0
        %v4155 = vadd.f32 0.0, %v4154
        %4156 = vmatprep.mubr.f32.mxu0 %v3804
        %4157 = vmatmul.mubr.f32.gmra.mrb[0].mxu0 %v3803
        %v4158 = vpop.f32.mrb[0].mxu0
        %v4159 = vadd.f32 0.0, %v4158
        %v4160 = vpop.f32.mrb[0].mxu0
        %v4161 = vadd.f32 0.0, %v4160
        %4162 = vmatprep.mubr.f32.mxu0 %v3810
        %4163 = vmatmul.mubr.f32.gmra.mrb[0].mxu0 %v3809
        %v4164 = vpop.f32.mrb[0].mxu0
        %v4165 = vadd.f32 0.0, %v4164
        %v4166 = vpop.f32.mrb[0].mxu0
        %v4167 = vadd.f32 0.0, %v4166
        %4168 = vmatprep.mubr.f32.mxu0 %v3816
        %4169 = vmatmul.mubr.f32.gmra.mrb[0].mxu0 %v3815
        %v4170 = vpop.f32.mrb[0].mxu0
        %v4171 = vadd.f32 0.0, %v4170
        %v4172 = vpop.f32.mrb[0].mxu0
        %v4173 = vadd.f32 0.0, %v4172
        %4174 = vmatprep.mubr.f32.mxu0 %v3822
        %4175 = vmatmul.mubr.f32.gmra.mrb[0].mxu0 %v3821
        %v4176 = vpop.f32.mrb[0].mxu0
        %v4177 = vadd.f32 0.0, %v4176
        %v4178 = vpop.f32.mrb[0].mxu0
        %v4179 = vadd.f32 0.0, %v4178
        %4180 = vmatprep.mubr.f32.mxu0 %v3828
        %4181 = vmatmul.mubr.f32.gmra.mrb[0].mxu0 %v3827
        %v4182 = vpop.f32.mrb[0].mxu0
        %v4183 = vadd.f32 0.0, %v4182
        %v4184 = vpop.f32.mrb[0].mxu0
        %v4185 = vadd.f32 0.0, %v4184
        %4186 = vmatprep.mubr.f32.mxu0 %v3834
        %4187 = vmatmul.mubr.f32.gmra.mrb[0].mxu0 %v3833
        %v4188 = vpop.f32.mrb[0].mxu0
        %v4189 = vadd.f32 0.0, %v4188
        %v4190 = vpop.f32.mrb[0].mxu0
        %v4191 = vadd.f32 0.0, %v4190
        %4192 = vmatprep.mubr.f32.mxu0 %v3840
        %4193 = vmatmul.mubr.f32.gmra.mrb[0].mxu0 %v3839
        %v4194 = vpop.f32.mrb[0].mxu0
        %v4195 = vadd.f32 0.0, %v4194
        %v4196 = vpop.f32.mrb[0].mxu0
        %v4197 = vadd.f32 0.0, %v4196
        %4198 = vmatprep.mubr.f32.mxu0 %v3846
        %4199 = vmatmul.mubr.f32.gmra.mrb[0].mxu0 %v3845
        %v4200 = vpop.f32.mrb[0].mxu0
        %v4201 = vadd.f32 0.0, %v4200
        %v4202 = vpop.f32.mrb[0].mxu0
        %v4203 = vadd.f32 0.0, %v4202
        %4204 = vmatprep.mubr.f32.mxu0 %v3852
        %4205 = vmatmul.mubr.f32.gmra.mrb[0].mxu0 %v3851
        %v4206 = vpop.f32.mrb[0].mxu0
        %v4207 = vadd.f32 0.0, %v4206
        %v4208 = vpop.f32.mrb[0].mxu0
        %v4209 = vadd.f32 0.0, %v4208
        %4210 = vmatprep.mubr.f32.mxu0 %v3858
        %4211 = vmatmul.mubr.f32.gmra.mrb[0].mxu0 %v3857
        %v4212 = vpop.f32.mrb[0].mxu0
        %v4213 = vadd.f32 0.0, %v4212
        %v4214 = vpop.f32.mrb[0].mxu0
        %v4215 = vadd.f32 0.0, %v4214
        %4216 = vdwg.mxu0
        %4217 = vmatprep.subr.mxu0 %v3929
        %4218 = vmatpush1.msra.mxu0 %v3928
        %4219 = vmatprep.subr.mxu0 %v3931
        %4220 = vmatpush1.msra.mxu0 %v3930
        %4221 = vmatprep.subr.mxu0 %v3933
        %4222 = vmatpush1.msra.mxu0 %v3932
        %4223 = vmatprep.subr.mxu0 %v3935
        %4224 = vmatpush1.msra.mxu0 %v3934
        %4225 = vmatprep.subr.mxu0 %v3937
        %4226 = vmatpush1.msra.mxu0 %v3936
        %4227 = vmatprep.subr.mxu0 %v3939
        %4228 = vmatpush1.msra.mxu0 %v3938
        %4229 = vmatprep.subr.mxu0 %v3941
        %4230 = vmatpush1.msra.mxu0 %v3940
        %4231 = vmatprep.subr.mxu0 %v3943
        %4232 = vmatpush1.msra.mxu0 %v3942
        %4233 = vmatprep.subr.mxu0 %v3945
        %4234 = vmatpush1.msra.mxu0 %v3944
        %4235 = vmatprep.subr.mxu0 %v3947
        %4236 = vmatpush1.msra.mxu0 %v3946
        %4237 = vmatprep.subr.mxu0 %v3949
        %4238 = vmatpush1.msra.mxu0 %v3948
        %4239 = vmatprep.subr.mxu0 %v3951
        %4240 = vmatpush1.msra.mxu0 %v3950
        %4241 = vmatprep.subr.mxu0 %v3953
        %4242 = vmatpush1.msra.mxu0 %v3952
        %4243 = vmatprep.subr.mxu0 %v3955
        %4244 = vmatpush1.msra.mxu0 %v3954
        %4245 = vmatprep.subr.mxu0 %v3957
        %4246 = vmatpush1.msra.mxu0 %v3956
        %4247 = vmatprep.subr.mxu0 %v3959
        %4248 = vmatpush1.msra.mxu0 %v3958
        %4249 = vmatprep.subr.mxu0 %v3961
        %4250 = vmatpush1.msra.mxu0 %v3960
        %4251 = vmatprep.subr.mxu0 %v3963
        %4252 = vmatpush1.msra.mxu0 %v3962
        %4253 = vmatprep.subr.mxu0 %v3965
        %4254 = vmatpush1.msra.mxu0 %v3964
        %4255 = vmatprep.subr.mxu0 %v3967
        %4256 = vmatpush1.msra.mxu0 %v3966
        %4257 = vmatprep.subr.mxu0 %v3969
        %4258 = vmatpush1.msra.mxu0 %v3968
        %4259 = vmatprep.subr.mxu0 %v3971
        %4260 = vmatpush1.msra.mxu0 %v3970
        %4261 = vmatprep.subr.mxu0 %v3973
        %4262 = vmatpush1.msra.mxu0 %v3972
        %4263 = vmatprep.subr.mxu0 %v3975
        %4264 = vmatpush1.msra.mxu0 %v3974
        %4265 = vmatprep.subr.mxu0 %v3977
        %4266 = vmatpush1.msra.mxu0 %v3976
        %4267 = vmatprep.subr.mxu0 %v3979
        %4268 = vmatpush1.msra.mxu0 %v3978
        %4269 = vmatprep.subr.mxu0 %v3981
        %4270 = vmatpush1.msra.mxu0 %v3980
        %4271 = vmatprep.subr.mxu0 %v3983
        %4272 = vmatpush1.msra.mxu0 %v3982
        %4273 = vmatprep.subr.mxu0 %v3985
        %4274 = vmatpush1.msra.mxu0 %v3984
        %4275 = vmatprep.subr.mxu0 %v3987
        %4276 = vmatpush1.msra.mxu0 %v3986
        %4277 = vmatprep.subr.mxu0 %v3989
        %4278 = vmatpush1.msra.mxu0 %v3988
        %4279 = vmatprep.subr.mxu0 %v3991
        %4280 = vmatpush1.msra.mxu0 %v3990
        %4281 = vmatprep.mubr.f32.mxu0 %v3770
        %4282 = vmatmul.mubr.f32.gmra.mrb[0].mxu0 %v3769
        %v4283 = vpop.f32.mrb[0].mxu0
        %v4284 = vadd.f32 %v4123, %v4283
        %v4285 = vpop.f32.mrb[0].mxu0
        %v4286 = vadd.f32 %v4125, %v4285
        %4287 = vmatprep.mubr.f32.mxu0 %v3776
        %4288 = vmatmul.mubr.f32.gmra.mrb[0].mxu0 %v3775
        %v4289 = vpop.f32.mrb[0].mxu0
        %v4290 = vadd.f32 %v4129, %v4289
        %v4291 = vpop.f32.mrb[0].mxu0
        %v4292 = vadd.f32 %v4131, %v4291
        %4293 = vmatprep.mubr.f32.mxu0 %v3782
        %4294 = vmatmul.mubr.f32.gmra.mrb[0].mxu0 %v3781
        %v4295 = vpop.f32.mrb[0].mxu0
        %v4296 = vadd.f32 %v4135, %v4295
        %v4297 = vpop.f32.mrb[0].mxu0
        %v4298 = vadd.f32 %v4137, %v4297
        %4299 = vmatprep.mubr.f32.mxu0 %v3788
        %4300 = vmatmul.mubr.f32.gmra.mrb[0].mxu0 %v3787
        %v4301 = vpop.f32.mrb[0].mxu0
        %v4302 = vadd.f32 %v4141, %v4301
        %v4303 = vpop.f32.mrb[0].mxu0
        %v4304 = vadd.f32 %v4143, %v4303
        %4305 = vmatprep.mubr.f32.mxu0 %v3794
        %4306 = vmatmul.mubr.f32.gmra.mrb[0].mxu0 %v3793
        %v4307 = vpop.f32.mrb[0].mxu0
        %v4308 = vadd.f32 %v4147, %v4307
        %v4309 = vpop.f32.mrb[0].mxu0
        %v4310 = vadd.f32 %v4149, %v4309
        %4311 = vmatprep.mubr.f32.mxu0 %v3800
        %4312 = vmatmul.mubr.f32.gmra.mrb[0].mxu0 %v3799
        %v4313 = vpop.f32.mrb[0].mxu0
        %v4314 = vadd.f32 %v4153, %v4313
        %v4315 = vpop.f32.mrb[0].mxu0
        %v4316 = vadd.f32 %v4155, %v4315
        %4317 = vmatprep.mubr.f32.mxu0 %v3806
        %4318 = vmatmul.mubr.f32.gmra.mrb[0].mxu0 %v3805
        %v4319 = vpop.f32.mrb[0].mxu0
        %v4320 = vadd.f32 %v4159, %v4319
        %v4321 = vpop.f32.mrb[0].mxu0
        %v4322 = vadd.f32 %v4161, %v4321
        %4323 = vmatprep.mubr.f32.mxu0 %v3812
        %4324 = vmatmul.mubr.f32.gmra.mrb[0].mxu0 %v3811
        %v4325 = vpop.f32.mrb[0].mxu0
        %v4326 = vadd.f32 %v4165, %v4325
        %v4327 = vpop.f32.mrb[0].mxu0
        %v4328 = vadd.f32 %v4167, %v4327
        %4329 = vmatprep.mubr.f32.mxu0 %v3818
        %4330 = vmatmul.mubr.f32.gmra.mrb[0].mxu0 %v3817
        %v4331 = vpop.f32.mrb[0].mxu0
        %v4332 = vadd.f32 %v4171, %v4331
        %v4333 = vpop.f32.mrb[0].mxu0
        %v4334 = vadd.f32 %v4173, %v4333
        %4335 = vmatprep.mubr.f32.mxu0 %v3824
        %4336 = vmatmul.mubr.f32.gmra.mrb[0].mxu0 %v3823
        %v4337 = vpop.f32.mrb[0].mxu0
        %v4338 = vadd.f32 %v4177, %v4337
        %v4339 = vpop.f32.mrb[0].mxu0
        %v4340 = vadd.f32 %v4179, %v4339
        %4341 = vmatprep.mubr.f32.mxu0 %v3830
        %4342 = vmatmul.mubr.f32.gmra.mrb[0].mxu0 %v3829
        %v4343 = vpop.f32.mrb[0].mxu0
        %v4344 = vadd.f32 %v4183, %v4343
        %v4345 = vpop.f32.mrb[0].mxu0
        %v4346 = vadd.f32 %v4185, %v4345
        %4347 = vmatprep.mubr.f32.mxu0 %v3836
        %4348 = vmatmul.mubr.f32.gmra.mrb[0].mxu0 %v3835
        %v4349 = vpop.f32.mrb[0].mxu0
        %v4350 = vadd.f32 %v4189, %v4349
        %v4351 = vpop.f32.mrb[0].mxu0
        %v4352 = vadd.f32 %v4191, %v4351
        %4353 = vmatprep.mubr.f32.mxu0 %v3842
        %4354 = vmatmul.mubr.f32.gmra.mrb[0].mxu0 %v3841
        %v4355 = vpop.f32.mrb[0].mxu0
        %v4356 = vadd.f32 %v4195, %v4355
        %v4357 = vpop.f32.mrb[0].mxu0
        %v4358 = vadd.f32 %v4197, %v4357
        %4359 = vmatprep.mubr.f32.mxu0 %v3848
        %4360 = vmatmul.mubr.f32.gmra.mrb[0].mxu0 %v3847
        %v4361 = vpop.f32.mrb[0].mxu0
        %v4362 = vadd.f32 %v4201, %v4361
        %v4363 = vpop.f32.mrb[0].mxu0
        %v4364 = vadd.f32 %v4203, %v4363
        %4365 = vmatprep.mubr.f32.mxu0 %v3854
        %4366 = vmatmul.mubr.f32.gmra.mrb[0].mxu0 %v3853
        %v4367 = vpop.f32.mrb[0].mxu0
        %v4368 = vadd.f32 %v4207, %v4367
        %v4369 = vpop.f32.mrb[0].mxu0
        %v4370 = vadd.f32 %v4209, %v4369
        %4371 = vmatprep.mubr.f32.mxu0 %v3860
        %4372 = vmatmul.mubr.f32.gmra.mrb[0].mxu0 %v3859
        %v4373 = vpop.f32.mrb[0].mxu0
        %v4374 = vadd.f32 %v4213, %v4373
        %v4375 = vpop.f32.mrb[0].mxu0
        %v4376 = vadd.f32 %v4215, %v4375
        %4377 = vdwg.mxu0
        %4378 = vmatprep.subr.mxu0 %v3993
        %4379 = vmatpush1.msra.mxu0 %v3992
        %4380 = vmatprep.subr.mxu0 %v3995
        %4381 = vmatpush1.msra.mxu0 %v3994
        %4382 = vmatprep.subr.mxu0 %v3997
        %4383 = vmatpush1.msra.mxu0 %v3996
        %4384 = vmatprep.subr.mxu0 %v3999
        %4385 = vmatpush1.msra.mxu0 %v3998
        %4386 = vmatprep.subr.mxu0 %v4001
        %4387 = vmatpush1.msra.mxu0 %v4000
        %4388 = vmatprep.subr.mxu0 %v4003
        %4389 = vmatpush1.msra.mxu0 %v4002
        %4390 = vmatprep.subr.mxu0 %v4005
        %4391 = vmatpush1.msra.mxu0 %v4004
        %4392 = vmatprep.subr.mxu0 %v4007
        %4393 = vmatpush1.msra.mxu0 %v4006
        %4394 = vmatprep.subr.mxu0 %v4009
        %4395 = vmatpush1.msra.mxu0 %v4008
        %4396 = vmatprep.subr.mxu0 %v4011
        %4397 = vmatpush1.msra.mxu0 %v4010
        %4398 = vmatprep.subr.mxu0 %v4013
        %4399 = vmatpush1.msra.mxu0 %v4012
        %4400 = vmatprep.subr.mxu0 %v4015
        %4401 = vmatpush1.msra.mxu0 %v4014
        %4402 = vmatprep.subr.mxu0 %v4017
        %4403 = vmatpush1.msra.mxu0 %v4016
        %4404 = vmatprep.subr.mxu0 %v4019
        %4405 = vmatpush1.msra.mxu0 %v4018
        %4406 = vmatprep.subr.mxu0 %v4021
        %4407 = vmatpush1.msra.mxu0 %v4020
        %4408 = vmatprep.subr.mxu0 %v4023
        %4409 = vmatpush1.msra.mxu0 %v4022
        %4410 = vmatprep.subr.mxu0 %v4025
        %4411 = vmatpush1.msra.mxu0 %v4024
        %4412 = vmatprep.subr.mxu0 %v4027
        %4413 = vmatpush1.msra.mxu0 %v4026
        %4414 = vmatprep.subr.mxu0 %v4029
        %4415 = vmatpush1.msra.mxu0 %v4028
        %4416 = vmatprep.subr.mxu0 %v4031
        %4417 = vmatpush1.msra.mxu0 %v4030
        %4418 = vmatprep.subr.mxu0 %v4033
        %4419 = vmatpush1.msra.mxu0 %v4032
        %4420 = vmatprep.subr.mxu0 %v4035
        %4421 = vmatpush1.msra.mxu0 %v4034
        %4422 = vmatprep.subr.mxu0 %v4037
        %4423 = vmatpush1.msra.mxu0 %v4036
        %4424 = vmatprep.subr.mxu0 %v4039
        %4425 = vmatpush1.msra.mxu0 %v4038
        %4426 = vmatprep.subr.mxu0 %v4041
        %4427 = vmatpush1.msra.mxu0 %v4040
        %4428 = vmatprep.subr.mxu0 %v4043
        %4429 = vmatpush1.msra.mxu0 %v4042
        %4430 = vmatprep.subr.mxu0 %v4045
        %4431 = vmatpush1.msra.mxu0 %v4044
        %4432 = vmatprep.subr.mxu0 %v4047
        %4433 = vmatpush1.msra.mxu0 %v4046
        %4434 = vmatprep.subr.mxu0 %v4049
        %4435 = vmatpush1.msra.mxu0 %v4048
        %4436 = vmatprep.subr.mxu0 %v4051
        %4437 = vmatpush1.msra.mxu0 %v4050
        %4438 = vmatprep.subr.mxu0 %v4053
        %4439 = vmatpush1.msra.mxu0 %v4052
        %4440 = vmatprep.subr.mxu0 %v4055
        %4441 = vmatpush1.msra.mxu0 %v4054
        %4442 = vmatprep.mubr.f32.mxu0 %v3772
        %4443 = vmatmul.mubr.f32.gmra.mrb[0].mxu0 %v3771
        %v4444 = vpop.f32.mrb[0].mxu0
        %v4445 = vadd.f32 %v4284, %v4444
        %v4446 = vpop.f32.mrb[0].mxu0
        %v4447 = vadd.f32 %v4286, %v4446
        %4448 = vmatprep.mubr.f32.mxu0 %v3778
        %4449 = vmatmul.mubr.f32.gmra.mrb[0].mxu0 %v3777
        %v4450 = vpop.f32.mrb[0].mxu0
        %v4451 = vadd.f32 %v4290, %v4450
        %v4452 = vpop.f32.mrb[0].mxu0
        %v4453 = vadd.f32 %v4292, %v4452
        %4454 = vmatprep.mubr.f32.mxu0 %v3784
        %4455 = vmatmul.mubr.f32.gmra.mrb[0].mxu0 %v3783
        %v4456 = vpop.f32.mrb[0].mxu0
        %v4457 = vadd.f32 %v4296, %v4456
        %v4458 = vpop.f32.mrb[0].mxu0
        %v4459 = vadd.f32 %v4298, %v4458
        %4460 = vmatprep.mubr.f32.mxu0 %v3790
        %4461 = vmatmul.mubr.f32.gmra.mrb[0].mxu0 %v3789
        %v4462 = vpop.f32.mrb[0].mxu0
        %v4463 = vadd.f32 %v4302, %v4462
        %v4464 = vpop.f32.mrb[0].mxu0
        %v4465 = vadd.f32 %v4304, %v4464
        %4466 = vmatprep.mubr.f32.mxu0 %v3796
        %4467 = vmatmul.mubr.f32.gmra.mrb[0].mxu0 %v3795
        %v4468 = vpop.f32.mrb[0].mxu0
        %v4469 = vadd.f32 %v4308, %v4468
        %v4470 = vpop.f32.mrb[0].mxu0
        %v4471 = vadd.f32 %v4310, %v4470
        %4472 = vmatprep.mubr.f32.mxu0 %v3802
        %4473 = vmatmul.mubr.f32.gmra.mrb[0].mxu0 %v3801
        %v4474 = vpop.f32.mrb[0].mxu0
        %v4475 = vadd.f32 %v4314, %v4474
        %v4476 = vpop.f32.mrb[0].mxu0
        %v4477 = vadd.f32 %v4316, %v4476
        %4478 = vmatprep.mubr.f32.mxu0 %v3808
        %4479 = vmatmul.mubr.f32.gmra.mrb[0].mxu0 %v3807
        %v4480 = vpop.f32.mrb[0].mxu0
        %v4481 = vadd.f32 %v4320, %v4480
        %v4482 = vpop.f32.mrb[0].mxu0
        %v4483 = vadd.f32 %v4322, %v4482
        %4484 = vmatprep.mubr.f32.mxu0 %v3814
        %4485 = vmatmul.mubr.f32.gmra.mrb[0].mxu0 %v3813
        %v4486 = vpop.f32.mrb[0].mxu0
        %v4487 = vadd.f32 %v4326, %v4486
        %v4488 = vpop.f32.mrb[0].mxu0
        %v4489 = vadd.f32 %v4328, %v4488
        %4490 = vmatprep.mubr.f32.mxu0 %v3820
        %4491 = vmatmul.mubr.f32.gmra.mrb[0].mxu0 %v3819
        %v4492 = vpop.f32.mrb[0].mxu0
        %v4493 = vadd.f32 %v4332, %v4492
        %v4494 = vpop.f32.mrb[0].mxu0
        %v4495 = vadd.f32 %v4334, %v4494
        %4496 = vmatprep.mubr.f32.mxu0 %v3826
        %4497 = vmatmul.mubr.f32.gmra.mrb[0].mxu0 %v3825
        %v4498 = vpop.f32.mrb[0].mxu0
        %v4499 = vadd.f32 %v4338, %v4498
        %v4500 = vpop.f32.mrb[0].mxu0
        %v4501 = vadd.f32 %v4340, %v4500
        %4502 = vmatprep.mubr.f32.mxu0 %v3832
        %4503 = vmatmul.mubr.f32.gmra.mrb[0].mxu0 %v3831
        %v4504 = vpop.f32.mrb[0].mxu0
        %v4505 = vadd.f32 %v4344, %v4504
        %v4506 = vpop.f32.mrb[0].mxu0
        %v4507 = vadd.f32 %v4346, %v4506
        %4508 = vmatprep.mubr.f32.mxu0 %v3838
        %4509 = vmatmul.mubr.f32.gmra.mrb[0].mxu0 %v3837
        %v4510 = vpop.f32.mrb[0].mxu0
        %v4511 = vadd.f32 %v4350, %v4510
        %v4512 = vpop.f32.mrb[0].mxu0
        %v4513 = vadd.f32 %v4352, %v4512
        %4514 = vmatprep.mubr.f32.mxu0 %v3844
        %4515 = vmatmul.mubr.f32.gmra.mrb[0].mxu0 %v3843
        %v4516 = vpop.f32.mrb[0].mxu0
        %v4517 = vadd.f32 %v4356, %v4516
        %v4518 = vpop.f32.mrb[0].mxu0
        %v4519 = vadd.f32 %v4358, %v4518
        %4520 = vmatprep.mubr.f32.mxu0 %v3850
        %4521 = vmatmul.mubr.f32.gmra.mrb[0].mxu0 %v3849
        %v4522 = vpop.f32.mrb[0].mxu0
        %v4523 = vadd.f32 %v4362, %v4522
        %v4524 = vpop.f32.mrb[0].mxu0
        %v4525 = vadd.f32 %v4364, %v4524
        %4526 = vmatprep.mubr.f32.mxu0 %v3856
        %4527 = vmatmul.mubr.f32.gmra.mrb[0].mxu0 %v3855
        %v4528 = vpop.f32.mrb[0].mxu0
        %v4529 = vadd.f32 %v4368, %v4528
        %v4530 = vpop.f32.mrb[0].mxu0
        %v4531 = vadd.f32 %v4370, %v4530
        %4532 = vmatprep.mubr.f32.mxu0 %v3862
        %4533 = vmatmul.mubr.f32.gmra.mrb[0].mxu0 %v3861
        %v4534 = vpop.f32.mrb[0].mxu0
        %v4535 = vadd.f32 %v4374, %v4534
        %v4536 = vpop.f32.mrb[0].mxu0
        %v4537 = vadd.f32 %v4376, %v4536
        %4538 = vdwg.mxu0
        %v4539 = vadd.f32 %v3673, %v4445
        %v4540 = vadd.f32 %v3675, %v4447
        %v4541 = vadd.f32 %v3679, %v4451
        %v4542 = vadd.f32 %v3681, %v4453
        %v4543 = vadd.f32 %v3685, %v4457
        %v4544 = vadd.f32 %v3687, %v4459
        %v4545 = vadd.f32 %v3691, %v4463
        %v4546 = vadd.f32 %v3693, %v4465
        %v4547 = vadd.f32 %v3697, %v4469
        %v4548 = vadd.f32 %v3699, %v4471
        %v4549 = vadd.f32 %v3703, %v4475
        %v4550 = vadd.f32 %v3705, %v4477
        %v4551 = vadd.f32 %v3709, %v4481
        %v4552 = vadd.f32 %v3711, %v4483
        %v4553 = vadd.f32 %v3715, %v4487
        %v4554 = vadd.f32 %v3717, %v4489
        %v4555 = vadd.f32 %v3721, %v4493
        %v4556 = vadd.f32 %v3723, %v4495
        %v4557 = vadd.f32 %v3727, %v4499
        %v4558 = vadd.f32 %v3729, %v4501
        %v4559 = vadd.f32 %v3733, %v4505
        %v4560 = vadd.f32 %v3735, %v4507
        %v4561 = vadd.f32 %v3739, %v4511
        %v4562 = vadd.f32 %v3741, %v4513
        %v4563 = vadd.f32 %v3745, %v4517
        %v4564 = vadd.f32 %v3747, %v4519
        %v4565 = vadd.f32 %v3751, %v4523
        %v4566 = vadd.f32 %v3753, %v4525
        %v4567 = vadd.f32 %v3757, %v4529
        %v4568 = vadd.f32 %v3759, %v4531
        %v4569 = vadd.f32 %v3763, %v4535
        %v4570 = vadd.f32 %v3765, %v4537
        %v4572 = vlaneseq
        %v4573 = vshrl.u32 %v4572, 7
        %v4574 = vsub.s32 0, %v4573
        %v4575 = vrot.slane %v2306, %v4574
        %v4576 = vlaneseq
        %v4577 = vshrl.u32 %v4576, 7
        %v4578 = vsub.s32 1, %v4577
        %v4579 = vrot.slane %v2306, %v4578
        %v4582 = vmul.f32 %v4539, %v4575
        %v4583 = vmul.f32 %v4540, %v4579
        %v4584 = vmul.f32 %v4541, %v4575
        %v4585 = vmul.f32 %v4542, %v4579
        %v4586 = vmul.f32 %v4543, %v4575
        %v4587 = vmul.f32 %v4544, %v4579
        %v4588 = vmul.f32 %v4545, %v4575
        %v4589 = vmul.f32 %v4546, %v4579
        %v4590 = vmul.f32 %v4547, %v4575
        %v4591 = vmul.f32 %v4548, %v4579
        %v4592 = vmul.f32 %v4549, %v4575
        %v4593 = vmul.f32 %v4550, %v4579
        %v4594 = vmul.f32 %v4551, %v4575
        %v4595 = vmul.f32 %v4552, %v4579
        %v4596 = vmul.f32 %v4553, %v4575
        %v4597 = vmul.f32 %v4554, %v4579
        %v4598 = vmul.f32 %v4555, %v4575
        %v4599 = vmul.f32 %v4556, %v4579
        %v4600 = vmul.f32 %v4557, %v4575
        %v4601 = vmul.f32 %v4558, %v4579
        %v4602 = vmul.f32 %v4559, %v4575
        %v4603 = vmul.f32 %v4560, %v4579
        %v4604 = vmul.f32 %v4561, %v4575
        %v4605 = vmul.f32 %v4562, %v4579
        %v4606 = vmul.f32 %v4563, %v4575
        %v4607 = vmul.f32 %v4564, %v4579
        %v4608 = vmul.f32 %v4565, %v4575
        %v4609 = vmul.f32 %v4566, %v4579
        %v4610 = vmul.f32 %v4567, %v4575
        %v4611 = vmul.f32 %v4568, %v4579
        %v4612 = vmul.f32 %v4569, %v4575
        %v4613 = vmul.f32 %v4570, %v4579
        %v4614 = vld [vmem:[%s560] sm:$0xff]
        %v4615 = vld [vmem:[%s560 + $0x8] sm:$0xff]
        %v4616 = vld [vmem:[%s560 + $0x10] sm:$0xff]
        %v4617 = vld [vmem:[%s560 + $0x18] sm:$0xff]
        %v4618 = vld [vmem:[%s560 + $0x20] sm:$0xff]
        %v4619 = vld [vmem:[%s560 + $0x28] sm:$0xff]
        %v4620 = vld [vmem:[%s560 + $0x30] sm:$0xff]
        %v4621 = vld [vmem:[%s560 + $0x38] sm:$0xff]
        %v4622 = vld [vmem:[%s560 + $0x40] sm:$0xff]
        %v4623 = vld [vmem:[%s560 + $0x48] sm:$0xff]
        %v4624 = vld [vmem:[%s560 + $0x50] sm:$0xff]
        %v4625 = vld [vmem:[%s560 + $0x58] sm:$0xff]
        %v4626 = vld [vmem:[%s560 + $0x60] sm:$0xff]
        %v4627 = vld [vmem:[%s560 + $0x68] sm:$0xff]
        %v4628 = vld [vmem:[%s560 + $0x70] sm:$0xff]
        %v4629 = vld [vmem:[%s560 + $0x78] sm:$0xff]
        %4631 = vset.pattern.permute.xlu0 0
        %4632 = vperm.xlu0 %4631, %v4614
        %v4633 = vpop.permute.xlu0 %4632
        %4636 = vset.pattern.permute.xlu0 0
        %4637 = vperm.xlu0 %4636, %v4615
        %v4638 = vpop.permute.xlu0 %4637
        %4641 = vset.pattern.permute.xlu0 0
        %4642 = vperm.xlu0 %4641, %v4616
        %v4643 = vpop.permute.xlu0 %4642
        %4646 = vset.pattern.permute.xlu0 0
        %4647 = vperm.xlu0 %4646, %v4617
        %v4648 = vpop.permute.xlu0 %4647
        %4651 = vset.pattern.permute.xlu0 0
        %4652 = vperm.xlu0 %4651, %v4618
        %v4653 = vpop.permute.xlu0 %4652
        %4656 = vset.pattern.permute.xlu0 0
        %4657 = vperm.xlu0 %4656, %v4619
        %v4658 = vpop.permute.xlu0 %4657
        %4661 = vset.pattern.permute.xlu0 0
        %4662 = vperm.xlu0 %4661, %v4620
        %v4663 = vpop.permute.xlu0 %4662
        %4666 = vset.pattern.permute.xlu0 0
        %4667 = vperm.xlu0 %4666, %v4621
        %v4668 = vpop.permute.xlu0 %4667
        %4671 = vset.pattern.permute.xlu0 0
        %4672 = vperm.xlu0 %4671, %v4622
        %v4673 = vpop.permute.xlu0 %4672
        %4676 = vset.pattern.permute.xlu0 0
        %4677 = vperm.xlu0 %4676, %v4623
        %v4678 = vpop.permute.xlu0 %4677
        %4681 = vset.pattern.permute.xlu0 0
        %4682 = vperm.xlu0 %4681, %v4624
        %v4683 = vpop.permute.xlu0 %4682
        %4686 = vset.pattern.permute.xlu0 0
        %4687 = vperm.xlu0 %4686, %v4625
        %v4688 = vpop.permute.xlu0 %4687
        %4691 = vset.pattern.permute.xlu0 0
        %4692 = vperm.xlu0 %4691, %v4626
        %v4693 = vpop.permute.xlu0 %4692
        %4696 = vset.pattern.permute.xlu0 0
        %4697 = vperm.xlu0 %4696, %v4627
        %v4698 = vpop.permute.xlu0 %4697
        %4701 = vset.pattern.permute.xlu0 0
        %4702 = vperm.xlu0 %4701, %v4628
        %v4703 = vpop.permute.xlu0 %4702
        %4706 = vset.pattern.permute.xlu0 0
        %4707 = vperm.xlu0 %4706, %v4629
        %v4708 = vpop.permute.xlu0 %4707
        %v4710 = vadd.f32 %v4582, %v4633
        %v4711 = vadd.f32 %v4583, %v4633
        %v4712 = vadd.f32 %v4584, %v4638
        %v4713 = vadd.f32 %v4585, %v4638
        %v4714 = vadd.f32 %v4586, %v4643
        %v4715 = vadd.f32 %v4587, %v4643
        %v4716 = vadd.f32 %v4588, %v4648
        %v4717 = vadd.f32 %v4589, %v4648
        %v4718 = vadd.f32 %v4590, %v4653
        %v4719 = vadd.f32 %v4591, %v4653
        %v4720 = vadd.f32 %v4592, %v4658
        %v4721 = vadd.f32 %v4593, %v4658
        %v4722 = vadd.f32 %v4594, %v4663
        %v4723 = vadd.f32 %v4595, %v4663
        %v4724 = vadd.f32 %v4596, %v4668
        %v4725 = vadd.f32 %v4597, %v4668
        %v4726 = vadd.f32 %v4598, %v4673
        %v4727 = vadd.f32 %v4599, %v4673
        %v4728 = vadd.f32 %v4600, %v4678
        %v4729 = vadd.f32 %v4601, %v4678
        %v4730 = vadd.f32 %v4602, %v4683
        %v4731 = vadd.f32 %v4603, %v4683
        %v4732 = vadd.f32 %v4604, %v4688
        %v4733 = vadd.f32 %v4605, %v4688
        %v4734 = vadd.f32 %v4606, %v4693
        %v4735 = vadd.f32 %v4607, %v4693
        %v4736 = vadd.f32 %v4608, %v4698
        %v4737 = vadd.f32 %v4609, %v4698
        %v4738 = vadd.f32 %v4610, %v4703
        %v4739 = vadd.f32 %v4611, %v4703
        %v4740 = vadd.f32 %v4612, %v4708
        %v4741 = vadd.f32 %v4613, %v4708
        %v4743 = vlaneseq
        %v4744 = vshrl.u32 %v4743, 7
        %v4745 = vsub.s32 0, %v4744
        %v4746 = vrot.slane %v2307, %v4745
        %v4747 = vlaneseq
        %v4748 = vshrl.u32 %v4747, 7
        %v4749 = vsub.s32 1, %v4748
        %v4750 = vrot.slane %v2307, %v4749
        %v4753 = vadd.f32 %v4710, %v4746
        %v4754 = vadd.f32 %v4711, %v4750
        %v4755 = vadd.f32 %v4712, %v4746
        %v4756 = vadd.f32 %v4713, %v4750
        %v4757 = vadd.f32 %v4714, %v4746
        %v4758 = vadd.f32 %v4715, %v4750
        %v4759 = vadd.f32 %v4716, %v4746
        %v4760 = vadd.f32 %v4717, %v4750
        %v4761 = vadd.f32 %v4718, %v4746
        %v4762 = vadd.f32 %v4719, %v4750
        %v4763 = vadd.f32 %v4720, %v4746
        %v4764 = vadd.f32 %v4721, %v4750
        %v4765 = vadd.f32 %v4722, %v4746
        %v4766 = vadd.f32 %v4723, %v4750
        %v4767 = vadd.f32 %v4724, %v4746
        %v4768 = vadd.f32 %v4725, %v4750
        %v4769 = vadd.f32 %v4726, %v4746
        %v4770 = vadd.f32 %v4727, %v4750
        %v4771 = vadd.f32 %v4728, %v4746
        %v4772 = vadd.f32 %v4729, %v4750
        %v4773 = vadd.f32 %v4730, %v4746
        %v4774 = vadd.f32 %v4731, %v4750
        %v4775 = vadd.f32 %v4732, %v4746
        %v4776 = vadd.f32 %v4733, %v4750
        %v4777 = vadd.f32 %v4734, %v4746
        %v4778 = vadd.f32 %v4735, %v4750
        %v4779 = vadd.f32 %v4736, %v4746
        %v4780 = vadd.f32 %v4737, %v4750
        %v4781 = vadd.f32 %v4738, %v4746
        %v4782 = vadd.f32 %v4739, %v4750
        %v4783 = vadd.f32 %v4740, %v4746
        %v4784 = vadd.f32 %v4741, %v4750
        %vm4785 = vcmp.ge.f32.partialorder %v4753, 0.0
        %vm4786 = vcmp.ge.f32.partialorder %v4754, 0.0
        %vm4787 = vcmp.ge.f32.partialorder %v4755, 0.0
        %vm4788 = vcmp.ge.f32.partialorder %v4756, 0.0
        %vm4789 = vcmp.ge.f32.partialorder %v4757, 0.0
        %vm4790 = vcmp.ge.f32.partialorder %v4758, 0.0
        %vm4791 = vcmp.ge.f32.partialorder %v4759, 0.0
        %vm4792 = vcmp.ge.f32.partialorder %v4760, 0.0
        %vm4793 = vcmp.ge.f32.partialorder %v4761, 0.0
        %vm4794 = vcmp.ge.f32.partialorder %v4762, 0.0
        %vm4795 = vcmp.ge.f32.partialorder %v4763, 0.0
        %vm4796 = vcmp.ge.f32.partialorder %v4764, 0.0
        %vm4797 = vcmp.ge.f32.partialorder %v4765, 0.0
        %vm4798 = vcmp.ge.f32.partialorder %v4766, 0.0
        %vm4799 = vcmp.ge.f32.partialorder %v4767, 0.0
        %vm4800 = vcmp.ge.f32.partialorder %v4768, 0.0
        %vm4801 = vcmp.ge.f32.partialorder %v4769, 0.0
        %vm4802 = vcmp.ge.f32.partialorder %v4770, 0.0
        %vm4803 = vcmp.ge.f32.partialorder %v4771, 0.0
        %vm4804 = vcmp.ge.f32.partialorder %v4772, 0.0
        %vm4805 = vcmp.ge.f32.partialorder %v4773, 0.0
        %vm4806 = vcmp.ge.f32.partialorder %v4774, 0.0
        %vm4807 = vcmp.ge.f32.partialorder %v4775, 0.0
        %vm4808 = vcmp.ge.f32.partialorder %v4776, 0.0
        %vm4809 = vcmp.ge.f32.partialorder %v4777, 0.0
        %vm4810 = vcmp.ge.f32.partialorder %v4778, 0.0
        %vm4811 = vcmp.ge.f32.partialorder %v4779, 0.0
        %vm4812 = vcmp.ge.f32.partialorder %v4780, 0.0
        %vm4813 = vcmp.ge.f32.partialorder %v4781, 0.0
        %vm4814 = vcmp.ge.f32.partialorder %v4782, 0.0
        %vm4815 = vcmp.ge.f32.partialorder %v4783, 0.0
        %vm4816 = vcmp.ge.f32.partialorder %v4784, 0.0
        %v4817 = vmul.f32 %v4753, 0.2
        %v4818 = vmul.f32 %v4754, 0.2
        %v4819 = vmul.f32 %v4755, 0.2
        %v4820 = vmul.f32 %v4756, 0.2
        %v4821 = vmul.f32 %v4757, 0.2
        %v4822 = vmul.f32 %v4758, 0.2
        %v4823 = vmul.f32 %v4759, 0.2
        %v4824 = vmul.f32 %v4760, 0.2
        %v4825 = vmul.f32 %v4761, 0.2
        %v4826 = vmul.f32 %v4762, 0.2
        %v4827 = vmul.f32 %v4763, 0.2
        %v4828 = vmul.f32 %v4764, 0.2
        %v4829 = vmul.f32 %v4765, 0.2
        %v4830 = vmul.f32 %v4766, 0.2
        %v4831 = vmul.f32 %v4767, 0.2
        %v4832 = vmul.f32 %v4768, 0.2
        %v4833 = vmul.f32 %v4769, 0.2
        %v4834 = vmul.f32 %v4770, 0.2
        %v4835 = vmul.f32 %v4771, 0.2
        %v4836 = vmul.f32 %v4772, 0.2
        %v4837 = vmul.f32 %v4773, 0.2
        %v4838 = vmul.f32 %v4774, 0.2
        %v4839 = vmul.f32 %v4775, 0.2
        %v4840 = vmul.f32 %v4776, 0.2
        %v4841 = vmul.f32 %v4777, 0.2
        %v4842 = vmul.f32 %v4778, 0.2
        %v4843 = vmul.f32 %v4779, 0.2
        %v4844 = vmul.f32 %v4780, 0.2
        %v4845 = vmul.f32 %v4781, 0.2
        %v4846 = vmul.f32 %v4782, 0.2
        %v4847 = vmul.f32 %v4783, 0.2
        %v4848 = vmul.f32 %v4784, 0.2
        %v4849 = vsel %vm4785, %v4753, %v4817
        %v4850 = vsel %vm4786, %v4754, %v4818
        %v4851 = vsel %vm4787, %v4755, %v4819
        %v4852 = vsel %vm4788, %v4756, %v4820
        %v4853 = vsel %vm4789, %v4757, %v4821
        %v4854 = vsel %vm4790, %v4758, %v4822
        %v4855 = vsel %vm4791, %v4759, %v4823
        %v4856 = vsel %vm4792, %v4760, %v4824
        %v4857 = vsel %vm4793, %v4761, %v4825
        %v4858 = vsel %vm4794, %v4762, %v4826
        %v4859 = vsel %vm4795, %v4763, %v4827
        %v4860 = vsel %vm4796, %v4764, %v4828
        %v4861 = vsel %vm4797, %v4765, %v4829
        %v4862 = vsel %vm4798, %v4766, %v4830
        %v4863 = vsel %vm4799, %v4767, %v4831
        %v4864 = vsel %vm4800, %v4768, %v4832
        %v4865 = vsel %vm4801, %v4769, %v4833
        %v4866 = vsel %vm4802, %v4770, %v4834
        %v4867 = vsel %vm4803, %v4771, %v4835
        %v4868 = vsel %vm4804, %v4772, %v4836
        %v4869 = vsel %vm4805, %v4773, %v4837
        %v4870 = vsel %vm4806, %v4774, %v4838
        %v4871 = vsel %vm4807, %v4775, %v4839
        %v4872 = vsel %vm4808, %v4776, %v4840
        %v4873 = vsel %vm4809, %v4777, %v4841
        %v4874 = vsel %vm4810, %v4778, %v4842
        %v4875 = vsel %vm4811, %v4779, %v4843
        %v4876 = vsel %vm4812, %v4780, %v4844
        %v4877 = vsel %vm4813, %v4781, %v4845
        %v4878 = vsel %vm4814, %v4782, %v4846
        %v4879 = vsel %vm4815, %v4783, %v4847
        %v4880 = vsel %vm4816, %v4784, %v4848
        %v4881 = vmul.f32 %v4849, 1.4142135
        %v4882 = vmul.f32 %v4850, 1.4142135
        %v4883 = vmul.f32 %v4851, 1.4142135
        %v4884 = vmul.f32 %v4852, 1.4142135
        %v4885 = vmul.f32 %v4853, 1.4142135
        %v4886 = vmul.f32 %v4854, 1.4142135
        %v4887 = vmul.f32 %v4855, 1.4142135
        %v4888 = vmul.f32 %v4856, 1.4142135
        %v4889 = vmul.f32 %v4857, 1.4142135
        %v4890 = vmul.f32 %v4858, 1.4142135
        %v4891 = vmul.f32 %v4859, 1.4142135
        %v4892 = vmul.f32 %v4860, 1.4142135
        %v4893 = vmul.f32 %v4861, 1.4142135
        %v4894 = vmul.f32 %v4862, 1.4142135
        %v4895 = vmul.f32 %v4863, 1.4142135
        %v4896 = vmul.f32 %v4864, 1.4142135
        %v4897 = vmul.f32 %v4865, 1.4142135
        %v4898 = vmul.f32 %v4866, 1.4142135
        %v4899 = vmul.f32 %v4867, 1.4142135
        %v4900 = vmul.f32 %v4868, 1.4142135
        %v4901 = vmul.f32 %v4869, 1.4142135
        %v4902 = vmul.f32 %v4870, 1.4142135
        %v4903 = vmul.f32 %v4871, 1.4142135
        %v4904 = vmul.f32 %v4872, 1.4142135
        %v4905 = vmul.f32 %v4873, 1.4142135
        %v4906 = vmul.f32 %v4874, 1.4142135
        %v4907 = vmul.f32 %v4875, 1.4142135
        %v4908 = vmul.f32 %v4876, 1.4142135
        %v4909 = vmul.f32 %v4877, 1.4142135
        %v4910 = vmul.f32 %v4878, 1.4142135
        %v4911 = vmul.f32 %v4879, 1.4142135
        %v4912 = vmul.f32 %v4880, 1.4142135
        %s4913 = scalar_lea.vmem [#allocation2], 64
        %4914 = vst [vmem:[%s4913 + $0x10] sm:$0xff] %v4881
        %4915 = vst [vmem:[%s4913 + $0x18] sm:$0xff] %v4882
        %4916 = vst [vmem:[%s4913 + $0x20] sm:$0xff] %v4883
        %4917 = vst [vmem:[%s4913 + $0x28] sm:$0xff] %v4884
        %4918 = vst [vmem:[%s4913 + $0x50] sm:$0xff] %v4885
        %4919 = vst [vmem:[%s4913 + $0x58] sm:$0xff] %v4886
        %4920 = vst [vmem:[%s4913 + $0x60] sm:$0xff] %v4887
        %4921 = vst [vmem:[%s4913 + $0x68] sm:$0xff] %v4888
        %4922 = vst [vmem:[%s4913 + $0x90] sm:$0xff] %v4889
        %4923 = vst [vmem:[%s4913 + $0x98] sm:$0xff] %v4890
        %4924 = vst [vmem:[%s4913 + $0xa0] sm:$0xff] %v4891
        %4925 = vst [vmem:[%s4913 + $0xa8] sm:$0xff] %v4892
        %4926 = vst [vmem:[%s4913 + $0xd0] sm:$0xff] %v4893
        %4927 = vst [vmem:[%s4913 + $0xd8] sm:$0xff] %v4894
        %4928 = vst [vmem:[%s4913 + $0xe0] sm:$0xff] %v4895
        %4929 = vst [vmem:[%s4913 + $0xe8] sm:$0xff] %v4896
        %4930 = vst [vmem:[%s4913 + $0x110] sm:$0xff] %v4897
        %4931 = vst [vmem:[%s4913 + $0x118] sm:$0xff] %v4898
        %4932 = vst [vmem:[%s4913 + $0x120] sm:$0xff] %v4899
        %4933 = vst [vmem:[%s4913 + $0x128] sm:$0xff] %v4900
        %4934 = vst [vmem:[%s4913 + $0x150] sm:$0xff] %v4901
        %4935 = vst [vmem:[%s4913 + $0x158] sm:$0xff] %v4902
        %4936 = vst [vmem:[%s4913 + $0x160] sm:$0xff] %v4903
        %4937 = vst [vmem:[%s4913 + $0x168] sm:$0xff] %v4904
        %4938 = vst [vmem:[%s4913 + $0x190] sm:$0xff] %v4905
        %4939 = vst [vmem:[%s4913 + $0x198] sm:$0xff] %v4906
        %4940 = vst [vmem:[%s4913 + $0x1a0] sm:$0xff] %v4907
        %4941 = vst [vmem:[%s4913 + $0x1a8] sm:$0xff] %v4908
        %4942 = vst [vmem:[%s4913 + $0x1d0] sm:$0xff] %v4909
        %4943 = vst [vmem:[%s4913 + $0x1d8] sm:$0xff] %v4910
        %4944 = vst [vmem:[%s4913 + $0x1e0] sm:$0xff] %v4911
        %4945 = vst [vmem:[%s4913 + $0x1e8] sm:$0xff] %v4912
        %v4946 = vld [vmem:[#allocation3 + $0x300] sm:$0xff]
        %v4947 = vld [vmem:[#allocation3 + $0x308] sm:$0xff]
        %v4948 = vld [vmem:[#allocation3 + $0x310] sm:$0xff]
        %v4949 = vld [vmem:[#allocation3 + $0x318] sm:$0xff]
        %v4950 = vld [vmem:[#allocation3 + $0x320] sm:$0xff]
        %v4951 = vld [vmem:[#allocation3 + $0x328] sm:$0xff]
        %v4952 = vld [vmem:[#allocation3 + $0x330] sm:$0xff]
        %v4953 = vld [vmem:[#allocation3 + $0x338] sm:$0xff]
        %v4954 = vld [vmem:[#allocation3 + $0x340] sm:$0xff]
        %v4955 = vld [vmem:[#allocation3 + $0x348] sm:$0xff]
        %v4956 = vld [vmem:[#allocation3 + $0x350] sm:$0xff]
        %v4957 = vld [vmem:[#allocation3 + $0x358] sm:$0xff]
        %v4958 = vld [vmem:[#allocation3 + $0x360] sm:$0xff]
        %v4959 = vld [vmem:[#allocation3 + $0x368] sm:$0xff]
        %v4960 = vld [vmem:[#allocation3 + $0x370] sm:$0xff]
        %v4961 = vld [vmem:[#allocation3 + $0x378] sm:$0xff]
        %v4962 = vld [vmem:[#allocation3 + $0x380] sm:$0xff]
        %v4963 = vld [vmem:[#allocation3 + $0x388] sm:$0xff]
        %v4964 = vld [vmem:[#allocation3 + $0x390] sm:$0xff]
        %v4965 = vld [vmem:[#allocation3 + $0x398] sm:$0xff]
        %v4966 = vld [vmem:[#allocation3 + $0x3a0] sm:$0xff]
        %v4967 = vld [vmem:[#allocation3 + $0x3a8] sm:$0xff]
        %v4968 = vld [vmem:[#allocation3 + $0x3b0] sm:$0xff]
        %v4969 = vld [vmem:[#allocation3 + $0x3b8] sm:$0xff]
        %v4970 = vld [vmem:[#allocation3 + $0x3c0] sm:$0xff]
        %v4971 = vld [vmem:[#allocation3 + $0x3c8] sm:$0xff]
        %v4972 = vld [vmem:[#allocation3 + $0x3d0] sm:$0xff]
        %v4973 = vld [vmem:[#allocation3 + $0x3d8] sm:$0xff]
        %v4974 = vld [vmem:[#allocation3 + $0x3e0] sm:$0xff]
        %v4975 = vld [vmem:[#allocation3 + $0x3e8] sm:$0xff]
        %v4976 = vld [vmem:[#allocation3 + $0x3f0] sm:$0xff]
        %v4977 = vld [vmem:[#allocation3 + $0x3f8] sm:$0xff]
        %v4978 = vld [vmem:[#allocation3 + $0x400] sm:$0xff]
        %v4979 = vld [vmem:[#allocation3 + $0x408] sm:$0xff]
        %v4980 = vld [vmem:[#allocation3 + $0x410] sm:$0xff]
        %v4981 = vld [vmem:[#allocation3 + $0x418] sm:$0xff]
        %v4982 = vld [vmem:[#allocation3 + $0x420] sm:$0xff]
        %v4983 = vld [vmem:[#allocation3 + $0x428] sm:$0xff]
        %v4984 = vld [vmem:[#allocation3 + $0x430] sm:$0xff]
        %v4985 = vld [vmem:[#allocation3 + $0x438] sm:$0xff]
        %v4986 = vld [vmem:[#allocation3 + $0x440] sm:$0xff]
        %v4987 = vld [vmem:[#allocation3 + $0x448] sm:$0xff]
        %v4988 = vld [vmem:[#allocation3 + $0x450] sm:$0xff]
        %v4989 = vld [vmem:[#allocation3 + $0x458] sm:$0xff]
        %v4990 = vld [vmem:[#allocation3 + $0x460] sm:$0xff]
        %v4991 = vld [vmem:[#allocation3 + $0x468] sm:$0xff]
        %v4992 = vld [vmem:[#allocation3 + $0x470] sm:$0xff]
        %v4993 = vld [vmem:[#allocation3 + $0x478] sm:$0xff]
        %v4994 = vld [vmem:[#allocation3 + $0x480] sm:$0xff]
        %v4995 = vld [vmem:[#allocation3 + $0x488] sm:$0xff]
        %v4996 = vld [vmem:[#allocation3 + $0x490] sm:$0xff]
        %v4997 = vld [vmem:[#allocation3 + $0x498] sm:$0xff]
        %v4998 = vld [vmem:[#allocation3 + $0x4a0] sm:$0xff]
        %v4999 = vld [vmem:[#allocation3 + $0x4a8] sm:$0xff]
        %v5000 = vld [vmem:[#allocation3 + $0x4b0] sm:$0xff]
        %v5001 = vld [vmem:[#allocation3 + $0x4b8] sm:$0xff]
        %v5002 = vld [vmem:[#allocation3 + $0x4c0] sm:$0xff]
        %v5003 = vld [vmem:[#allocation3 + $0x4c8] sm:$0xff]
        %v5004 = vld [vmem:[#allocation3 + $0x4d0] sm:$0xff]
        %v5005 = vld [vmem:[#allocation3 + $0x4d8] sm:$0xff]
        %v5006 = vld [vmem:[#allocation3 + $0x4e0] sm:$0xff]
        %v5007 = vld [vmem:[#allocation3 + $0x4e8] sm:$0xff]
        %v5008 = vld [vmem:[#allocation3 + $0x4f0] sm:$0xff]
        %v5009 = vld [vmem:[#allocation3 + $0x4f8] sm:$0xff]
        %v5010 = vld [vmem:[#allocation3 + $0x500] sm:$0xff]
        %v5011 = vld [vmem:[#allocation3 + $0x508] sm:$0xff]
        %v5012 = vld [vmem:[#allocation3 + $0x510] sm:$0xff]
        %v5013 = vld [vmem:[#allocation3 + $0x518] sm:$0xff]
        %v5014 = vld [vmem:[#allocation3 + $0x520] sm:$0xff]
        %v5015 = vld [vmem:[#allocation3 + $0x528] sm:$0xff]
        %v5016 = vld [vmem:[#allocation3 + $0x530] sm:$0xff]
        %v5017 = vld [vmem:[#allocation3 + $0x538] sm:$0xff]
        %v5018 = vld [vmem:[#allocation3 + $0x540] sm:$0xff]
        %v5019 = vld [vmem:[#allocation3 + $0x548] sm:$0xff]
        %v5020 = vld [vmem:[#allocation3 + $0x550] sm:$0xff]
        %v5021 = vld [vmem:[#allocation3 + $0x558] sm:$0xff]
        %v5022 = vld [vmem:[#allocation3 + $0x560] sm:$0xff]
        %v5023 = vld [vmem:[#allocation3 + $0x568] sm:$0xff]
        %v5024 = vld [vmem:[#allocation3 + $0x570] sm:$0xff]
        %v5025 = vld [vmem:[#allocation3 + $0x578] sm:$0xff]
        %v5026 = vld [vmem:[#allocation3 + $0x580] sm:$0xff]
        %v5027 = vld [vmem:[#allocation3 + $0x588] sm:$0xff]
        %v5028 = vld [vmem:[#allocation3 + $0x590] sm:$0xff]
        %v5029 = vld [vmem:[#allocation3 + $0x598] sm:$0xff]
        %v5030 = vld [vmem:[#allocation3 + $0x5a0] sm:$0xff]
        %v5031 = vld [vmem:[#allocation3 + $0x5a8] sm:$0xff]
        %v5032 = vld [vmem:[#allocation3 + $0x5b0] sm:$0xff]
        %v5033 = vld [vmem:[#allocation3 + $0x5b8] sm:$0xff]
        %v5034 = vld [vmem:[#allocation3 + $0x5c0] sm:$0xff]
        %v5035 = vld [vmem:[#allocation3 + $0x5c8] sm:$0xff]
        %v5036 = vld [vmem:[#allocation3 + $0x5d0] sm:$0xff]
        %v5037 = vld [vmem:[#allocation3 + $0x5d8] sm:$0xff]
        %v5038 = vld [vmem:[#allocation3 + $0x5e0] sm:$0xff]
        %v5039 = vld [vmem:[#allocation3 + $0x5e8] sm:$0xff]
        %v5040 = vld [vmem:[#allocation3 + $0x5f0] sm:$0xff]
        %v5041 = vld [vmem:[#allocation3 + $0x5f8] sm:$0xff]
        %v5042 = vld [vmem:[%s449] sm:$0xff]
        %v5043 = vld [vmem:[%s449 + $0x8] sm:$0xff]
        %v5044 = vld [vmem:[%s449 + $0x10] sm:$0xff]
        %v5045 = vld [vmem:[%s449 + $0x18] sm:$0xff]
        %v5046 = vld [vmem:[%s449 + $0x20] sm:$0xff]
        %v5047 = vld [vmem:[%s449 + $0x28] sm:$0xff]
        %v5048 = vld [vmem:[%s449 + $0x30] sm:$0xff]
        %v5049 = vld [vmem:[%s449 + $0x38] sm:$0xff]
        %v5050 = vld [vmem:[%s449 + $0x40] sm:$0xff]
        %v5051 = vld [vmem:[%s449 + $0x48] sm:$0xff]
        %v5052 = vld [vmem:[%s449 + $0x50] sm:$0xff]
        %v5053 = vld [vmem:[%s449 + $0x58] sm:$0xff]
        %v5054 = vld [vmem:[%s449 + $0x60] sm:$0xff]
        %v5055 = vld [vmem:[%s449 + $0x68] sm:$0xff]
        %v5056 = vld [vmem:[%s449 + $0x70] sm:$0xff]
        %v5057 = vld [vmem:[%s449 + $0x78] sm:$0xff]
        %v5058 = vld [vmem:[%s449 + $0x80] sm:$0xff]
        %v5059 = vld [vmem:[%s449 + $0x88] sm:$0xff]
        %v5060 = vld [vmem:[%s449 + $0x90] sm:$0xff]
        %v5061 = vld [vmem:[%s449 + $0x98] sm:$0xff]
        %v5062 = vld [vmem:[%s449 + $0xa0] sm:$0xff]
        %v5063 = vld [vmem:[%s449 + $0xa8] sm:$0xff]
        %v5064 = vld [vmem:[%s449 + $0xb0] sm:$0xff]
        %v5065 = vld [vmem:[%s449 + $0xb8] sm:$0xff]
        %v5066 = vld [vmem:[%s449 + $0xc0] sm:$0xff]
        %v5067 = vld [vmem:[%s449 + $0xc8] sm:$0xff]
        %v5068 = vld [vmem:[%s449 + $0xd0] sm:$0xff]
        %v5069 = vld [vmem:[%s449 + $0xd8] sm:$0xff]
        %v5070 = vld [vmem:[%s449 + $0xe0] sm:$0xff]
        %v5071 = vld [vmem:[%s449 + $0xe8] sm:$0xff]
        %v5072 = vld [vmem:[%s449 + $0xf0] sm:$0xff]
        %v5073 = vld [vmem:[%s449 + $0xf8] sm:$0xff]
        %v5074 = vld [vmem:[%s449 + $0x100] sm:$0xff]
        %v5075 = vld [vmem:[%s449 + $0x108] sm:$0xff]
        %v5076 = vld [vmem:[%s449 + $0x110] sm:$0xff]
        %v5077 = vld [vmem:[%s449 + $0x118] sm:$0xff]
        %v5078 = vld [vmem:[%s449 + $0x120] sm:$0xff]
        %v5079 = vld [vmem:[%s449 + $0x128] sm:$0xff]
        %v5080 = vld [vmem:[%s449 + $0x130] sm:$0xff]
        %v5081 = vld [vmem:[%s449 + $0x138] sm:$0xff]
        %v5082 = vld [vmem:[%s449 + $0x140] sm:$0xff]
        %v5083 = vld [vmem:[%s449 + $0x148] sm:$0xff]
        %v5084 = vld [vmem:[%s449 + $0x150] sm:$0xff]
        %v5085 = vld [vmem:[%s449 + $0x158] sm:$0xff]
        %v5086 = vld [vmem:[%s449 + $0x160] sm:$0xff]
        %v5087 = vld [vmem:[%s449 + $0x168] sm:$0xff]
        %v5088 = vld [vmem:[%s449 + $0x170] sm:$0xff]
        %v5089 = vld [vmem:[%s449 + $0x178] sm:$0xff]
        %v5090 = vld [vmem:[%s449 + $0x180] sm:$0xff]
        %v5091 = vld [vmem:[%s449 + $0x188] sm:$0xff]
        %v5092 = vld [vmem:[%s449 + $0x190] sm:$0xff]
        %v5093 = vld [vmem:[%s449 + $0x198] sm:$0xff]
        %v5094 = vld [vmem:[%s449 + $0x1a0] sm:$0xff]
        %v5095 = vld [vmem:[%s449 + $0x1a8] sm:$0xff]
        %v5096 = vld [vmem:[%s449 + $0x1b0] sm:$0xff]
        %v5097 = vld [vmem:[%s449 + $0x1b8] sm:$0xff]
        %v5098 = vld [vmem:[%s449 + $0x1c0] sm:$0xff]
        %v5099 = vld [vmem:[%s449 + $0x1c8] sm:$0xff]
        %v5100 = vld [vmem:[%s449 + $0x1d0] sm:$0xff]
        %v5101 = vld [vmem:[%s449 + $0x1d8] sm:$0xff]
        %v5102 = vld [vmem:[%s449 + $0x1e0] sm:$0xff]
        %v5103 = vld [vmem:[%s449 + $0x1e8] sm:$0xff]
        %v5104 = vld [vmem:[%s449 + $0x1f0] sm:$0xff]
        %v5105 = vld [vmem:[%s449 + $0x1f8] sm:$0xff]
        %v5106 = vld [vmem:[%s449 + $0x200] sm:$0xff]
        %v5107 = vld [vmem:[%s449 + $0x208] sm:$0xff]
        %v5108 = vld [vmem:[%s449 + $0x210] sm:$0xff]
        %v5109 = vld [vmem:[%s449 + $0x218] sm:$0xff]
        %v5110 = vld [vmem:[%s449 + $0x220] sm:$0xff]
        %v5111 = vld [vmem:[%s449 + $0x228] sm:$0xff]
        %v5112 = vld [vmem:[%s449 + $0x230] sm:$0xff]
        %v5113 = vld [vmem:[%s449 + $0x238] sm:$0xff]
        %v5114 = vld [vmem:[%s449 + $0x240] sm:$0xff]
        %v5115 = vld [vmem:[%s449 + $0x248] sm:$0xff]
        %v5116 = vld [vmem:[%s449 + $0x250] sm:$0xff]
        %v5117 = vld [vmem:[%s449 + $0x258] sm:$0xff]
        %v5118 = vld [vmem:[%s449 + $0x260] sm:$0xff]
        %v5119 = vld [vmem:[%s449 + $0x268] sm:$0xff]
        %v5120 = vld [vmem:[%s449 + $0x270] sm:$0xff]
        %v5121 = vld [vmem:[%s449 + $0x278] sm:$0xff]
        %v5122 = vld [vmem:[%s449 + $0x280] sm:$0xff]
        %v5123 = vld [vmem:[%s449 + $0x288] sm:$0xff]
        %v5124 = vld [vmem:[%s449 + $0x290] sm:$0xff]
        %v5125 = vld [vmem:[%s449 + $0x298] sm:$0xff]
        %v5126 = vld [vmem:[%s449 + $0x2a0] sm:$0xff]
        %v5127 = vld [vmem:[%s449 + $0x2a8] sm:$0xff]
        %v5128 = vld [vmem:[%s449 + $0x2b0] sm:$0xff]
        %v5129 = vld [vmem:[%s449 + $0x2b8] sm:$0xff]
        %v5130 = vld [vmem:[%s449 + $0x2c0] sm:$0xff]
        %v5131 = vld [vmem:[%s449 + $0x2c8] sm:$0xff]
        %v5132 = vld [vmem:[%s449 + $0x2d0] sm:$0xff]
        %v5133 = vld [vmem:[%s449 + $0x2d8] sm:$0xff]
        %v5134 = vld [vmem:[%s449 + $0x2e0] sm:$0xff]
        %v5135 = vld [vmem:[%s449 + $0x2e8] sm:$0xff]
        %v5136 = vld [vmem:[%s449 + $0x2f0] sm:$0xff]
        %v5137 = vld [vmem:[%s449 + $0x2f8] sm:$0xff]
        %v5138 = vld [vmem:[%s449 + $0x300] sm:$0xff]
        %v5139 = vld [vmem:[%s449 + $0x308] sm:$0xff]
        %v5140 = vld [vmem:[%s449 + $0x310] sm:$0xff]
        %v5141 = vld [vmem:[%s449 + $0x318] sm:$0xff]
        %v5142 = vld [vmem:[%s449 + $0x320] sm:$0xff]
        %v5143 = vld [vmem:[%s449 + $0x328] sm:$0xff]
        %v5144 = vld [vmem:[%s449 + $0x330] sm:$0xff]
        %v5145 = vld [vmem:[%s449 + $0x338] sm:$0xff]
        %v5146 = vld [vmem:[%s449 + $0x340] sm:$0xff]
        %v5147 = vld [vmem:[%s449 + $0x348] sm:$0xff]
        %v5148 = vld [vmem:[%s449 + $0x350] sm:$0xff]
        %v5149 = vld [vmem:[%s449 + $0x358] sm:$0xff]
        %v5150 = vld [vmem:[%s449 + $0x360] sm:$0xff]
        %v5151 = vld [vmem:[%s449 + $0x368] sm:$0xff]
        %v5152 = vld [vmem:[%s449 + $0x370] sm:$0xff]
        %v5153 = vld [vmem:[%s449 + $0x378] sm:$0xff]
        %v5154 = vld [vmem:[%s449 + $0x380] sm:$0xff]
        %v5155 = vld [vmem:[%s449 + $0x388] sm:$0xff]
        %v5156 = vld [vmem:[%s449 + $0x390] sm:$0xff]
        %v5157 = vld [vmem:[%s449 + $0x398] sm:$0xff]
        %v5158 = vld [vmem:[%s449 + $0x3a0] sm:$0xff]
        %v5159 = vld [vmem:[%s449 + $0x3a8] sm:$0xff]
        %v5160 = vld [vmem:[%s449 + $0x3b0] sm:$0xff]
        %v5161 = vld [vmem:[%s449 + $0x3b8] sm:$0xff]
        %v5162 = vld [vmem:[%s449 + $0x3c0] sm:$0xff]
        %v5163 = vld [vmem:[%s449 + $0x3c8] sm:$0xff]
        %v5164 = vld [vmem:[%s449 + $0x3d0] sm:$0xff]
        %v5165 = vld [vmem:[%s449 + $0x3d8] sm:$0xff]
        %v5166 = vld [vmem:[%s449 + $0x3e0] sm:$0xff]
        %v5167 = vld [vmem:[%s449 + $0x3e8] sm:$0xff]
        %v5168 = vld [vmem:[%s449 + $0x3f0] sm:$0xff]
        %v5169 = vld [vmem:[%s449 + $0x3f8] sm:$0xff]
        %v5170 = vld [vmem:[%s449 + $0x400] sm:$0xff]
        %v5171 = vld [vmem:[%s449 + $0x408] sm:$0xff]
        %v5172 = vld [vmem:[%s449 + $0x410] sm:$0xff]
        %v5173 = vld [vmem:[%s449 + $0x418] sm:$0xff]
        %v5174 = vld [vmem:[%s449 + $0x420] sm:$0xff]
        %v5175 = vld [vmem:[%s449 + $0x428] sm:$0xff]
        %v5176 = vld [vmem:[%s449 + $0x430] sm:$0xff]
        %v5177 = vld [vmem:[%s449 + $0x438] sm:$0xff]
        %v5178 = vld [vmem:[%s449 + $0x440] sm:$0xff]
        %v5179 = vld [vmem:[%s449 + $0x448] sm:$0xff]
        %v5180 = vld [vmem:[%s449 + $0x450] sm:$0xff]
        %v5181 = vld [vmem:[%s449 + $0x458] sm:$0xff]
        %v5182 = vld [vmem:[%s449 + $0x460] sm:$0xff]
        %v5183 = vld [vmem:[%s449 + $0x468] sm:$0xff]
        %v5184 = vld [vmem:[%s449 + $0x470] sm:$0xff]
        %v5185 = vld [vmem:[%s449 + $0x478] sm:$0xff]
        %v5186 = vld [vmem:[%s449 + $0x480] sm:$0xff]
        %v5187 = vld [vmem:[%s449 + $0x488] sm:$0xff]
        %v5188 = vld [vmem:[%s449 + $0x490] sm:$0xff]
        %v5189 = vld [vmem:[%s449 + $0x498] sm:$0xff]
        %v5190 = vld [vmem:[%s449 + $0x4a0] sm:$0xff]
        %v5191 = vld [vmem:[%s449 + $0x4a8] sm:$0xff]
        %v5192 = vld [vmem:[%s449 + $0x4b0] sm:$0xff]
        %v5193 = vld [vmem:[%s449 + $0x4b8] sm:$0xff]
        %v5194 = vld [vmem:[%s449 + $0x4c0] sm:$0xff]
        %v5195 = vld [vmem:[%s449 + $0x4c8] sm:$0xff]
        %v5196 = vld [vmem:[%s449 + $0x4d0] sm:$0xff]
        %v5197 = vld [vmem:[%s449 + $0x4d8] sm:$0xff]
        %v5198 = vld [vmem:[%s449 + $0x4e0] sm:$0xff]
        %v5199 = vld [vmem:[%s449 + $0x4e8] sm:$0xff]
        %v5200 = vld [vmem:[%s449 + $0x4f0] sm:$0xff]
        %v5201 = vld [vmem:[%s449 + $0x4f8] sm:$0xff]
        %v5202 = vld [vmem:[%s449 + $0x500] sm:$0xff]
        %v5203 = vld [vmem:[%s449 + $0x508] sm:$0xff]
        %v5204 = vld [vmem:[%s449 + $0x510] sm:$0xff]
        %v5205 = vld [vmem:[%s449 + $0x518] sm:$0xff]
        %v5206 = vld [vmem:[%s449 + $0x520] sm:$0xff]
        %v5207 = vld [vmem:[%s449 + $0x528] sm:$0xff]
        %v5208 = vld [vmem:[%s449 + $0x530] sm:$0xff]
        %v5209 = vld [vmem:[%s449 + $0x538] sm:$0xff]
        %v5210 = vld [vmem:[%s449 + $0x540] sm:$0xff]
        %v5211 = vld [vmem:[%s449 + $0x548] sm:$0xff]
        %v5212 = vld [vmem:[%s449 + $0x550] sm:$0xff]
        %v5213 = vld [vmem:[%s449 + $0x558] sm:$0xff]
        %v5214 = vld [vmem:[%s449 + $0x560] sm:$0xff]
        %v5215 = vld [vmem:[%s449 + $0x568] sm:$0xff]
        %v5216 = vld [vmem:[%s449 + $0x570] sm:$0xff]
        %v5217 = vld [vmem:[%s449 + $0x578] sm:$0xff]
        %v5218 = vld [vmem:[%s449 + $0x580] sm:$0xff]
        %v5219 = vld [vmem:[%s449 + $0x588] sm:$0xff]
        %v5220 = vld [vmem:[%s449 + $0x590] sm:$0xff]
        %v5221 = vld [vmem:[%s449 + $0x598] sm:$0xff]
        %v5222 = vld [vmem:[%s449 + $0x5a0] sm:$0xff]
        %v5223 = vld [vmem:[%s449 + $0x5a8] sm:$0xff]
        %v5224 = vld [vmem:[%s449 + $0x5b0] sm:$0xff]
        %v5225 = vld [vmem:[%s449 + $0x5b8] sm:$0xff]
        %v5226 = vld [vmem:[%s449 + $0x5c0] sm:$0xff]
        %v5227 = vld [vmem:[%s449 + $0x5c8] sm:$0xff]
        %v5228 = vld [vmem:[%s449 + $0x5d0] sm:$0xff]
        %v5229 = vld [vmem:[%s449 + $0x5d8] sm:$0xff]
        %v5230 = vld [vmem:[%s449 + $0x5e0] sm:$0xff]
        %v5231 = vld [vmem:[%s449 + $0x5e8] sm:$0xff]
        %v5232 = vld [vmem:[%s449 + $0x5f0] sm:$0xff]
        %v5233 = vld [vmem:[%s449 + $0x5f8] sm:$0xff]
        %v5234 = vld [vmem:[#allocation3 + $0x600] sm:$0xff]
        %v5235 = vld [vmem:[#allocation3 + $0x608] sm:$0xff]
        %v5236 = vld [vmem:[#allocation3 + $0x610] sm:$0xff]
        %v5237 = vld [vmem:[#allocation3 + $0x618] sm:$0xff]
        %v5238 = vld [vmem:[#allocation3 + $0x620] sm:$0xff]
        %v5239 = vld [vmem:[#allocation3 + $0x628] sm:$0xff]
        %v5240 = vld [vmem:[#allocation3 + $0x630] sm:$0xff]
        %v5241 = vld [vmem:[#allocation3 + $0x638] sm:$0xff]
        %v5242 = vld [vmem:[#allocation3 + $0x640] sm:$0xff]
        %v5243 = vld [vmem:[#allocation3 + $0x648] sm:$0xff]
        %v5244 = vld [vmem:[#allocation3 + $0x650] sm:$0xff]
        %v5245 = vld [vmem:[#allocation3 + $0x658] sm:$0xff]
        %v5246 = vld [vmem:[%s2608] sm:$0xff]
        %v5247 = vld [vmem:[%s2608 + $0x8] sm:$0xff]
        %v5248 = vld [vmem:[%s2608 + $0x10] sm:$0xff]
        %v5249 = vld [vmem:[%s2608 + $0x18] sm:$0xff]
        %v5250 = vld [vmem:[%s2608 + $0x20] sm:$0xff]
        %v5251 = vld [vmem:[%s2608 + $0x28] sm:$0xff]
        %v5252 = vld [vmem:[%s2608 + $0x30] sm:$0xff]
        %v5253 = vld [vmem:[%s2608 + $0x38] sm:$0xff]
        %v5254 = vld [vmem:[%s2608 + $0x40] sm:$0xff]
        %v5255 = vld [vmem:[%s2608 + $0x48] sm:$0xff]
        %v5256 = vld [vmem:[%s2608 + $0x50] sm:$0xff]
        %v5257 = vld [vmem:[%s2608 + $0x58] sm:$0xff]
        %v5258 = vld [vmem:[%s2608 + $0x60] sm:$0xff]
        %v5259 = vld [vmem:[%s2608 + $0x68] sm:$0xff]
        %v5260 = vld [vmem:[%s2608 + $0x70] sm:$0xff]
        %v5261 = vld [vmem:[%s2608 + $0x78] sm:$0xff]
        %v5262 = vld [vmem:[%s2608 + $0x80] sm:$0xff]
        %v5263 = vld [vmem:[%s2608 + $0x88] sm:$0xff]
        %v5264 = vld [vmem:[%s2608 + $0x90] sm:$0xff]
        %v5265 = vld [vmem:[%s2608 + $0x98] sm:$0xff]
        %v5266 = vld [vmem:[%s2608 + $0xa0] sm:$0xff]
        %v5267 = vld [vmem:[%s2608 + $0xa8] sm:$0xff]
        %v5268 = vld [vmem:[%s2608 + $0xb0] sm:$0xff]
        %v5269 = vld [vmem:[%s2608 + $0xb8] sm:$0xff]
        %v5270 = vld [vmem:[%s2608 + $0xc0] sm:$0xff]
        %v5271 = vld [vmem:[%s2608 + $0xc8] sm:$0xff]
        %v5272 = vld [vmem:[%s2608 + $0xd0] sm:$0xff]
        %v5273 = vld [vmem:[%s2608 + $0xd8] sm:$0xff]
        %v5274 = vld [vmem:[%s2608 + $0xe0] sm:$0xff]
        %v5275 = vld [vmem:[%s2608 + $0xe8] sm:$0xff]
        %v5276 = vld [vmem:[%s2608 + $0xf0] sm:$0xff]
        %v5277 = vld [vmem:[%s2608 + $0xf8] sm:$0xff]
        %v5278 = vld [vmem:[%s2608 + $0x100] sm:$0xff]
        %v5279 = vld [vmem:[%s2608 + $0x108] sm:$0xff]
        %v5280 = vld [vmem:[%s2608 + $0x110] sm:$0xff]
        %v5281 = vld [vmem:[%s2608 + $0x118] sm:$0xff]
        %v5282 = vld [vmem:[%s2608 + $0x120] sm:$0xff]
        %v5283 = vld [vmem:[%s2608 + $0x128] sm:$0xff]
        %v5284 = vld [vmem:[%s2608 + $0x130] sm:$0xff]
        %v5285 = vld [vmem:[%s2608 + $0x138] sm:$0xff]
        %v5286 = vld [vmem:[%s2608 + $0x140] sm:$0xff]
        %v5287 = vld [vmem:[%s2608 + $0x148] sm:$0xff]
        %v5288 = vld [vmem:[%s2608 + $0x150] sm:$0xff]
        %v5289 = vld [vmem:[%s2608 + $0x158] sm:$0xff]
        %v5290 = vld [vmem:[%s2608 + $0x160] sm:$0xff]
        %v5291 = vld [vmem:[%s2608 + $0x168] sm:$0xff]
        %v5292 = vld [vmem:[%s2608 + $0x170] sm:$0xff]
        %v5293 = vld [vmem:[%s2608 + $0x178] sm:$0xff]
        %v5294 = vld [vmem:[%s2608 + $0x180] sm:$0xff]
        %v5295 = vld [vmem:[%s2608 + $0x188] sm:$0xff]
        %v5296 = vld [vmem:[%s2608 + $0x190] sm:$0xff]
        %v5297 = vld [vmem:[%s2608 + $0x198] sm:$0xff]
        %v5298 = vld [vmem:[%s2608 + $0x1a0] sm:$0xff]
        %v5299 = vld [vmem:[%s2608 + $0x1a8] sm:$0xff]
        %v5300 = vld [vmem:[%s2608 + $0x1b0] sm:$0xff]
        %v5301 = vld [vmem:[%s2608 + $0x1b8] sm:$0xff]
        %v5302 = vld [vmem:[%s2608 + $0x1c0] sm:$0xff]
        %v5303 = vld [vmem:[%s2608 + $0x1c8] sm:$0xff]
        %v5304 = vld [vmem:[%s2608 + $0x1d0] sm:$0xff]
        %v5305 = vld [vmem:[%s2608 + $0x1d8] sm:$0xff]
        %v5306 = vld [vmem:[%s2608 + $0x1e0] sm:$0xff]
        %v5307 = vld [vmem:[%s2608 + $0x1e8] sm:$0xff]
        %v5308 = vld [vmem:[%s2608 + $0x1f0] sm:$0xff]
        %v5309 = vld [vmem:[%s2608 + $0x1f8] sm:$0xff]
        %v5310 = vld [vmem:[%s2608 + $0x200] sm:$0xff]
        %v5311 = vld [vmem:[%s2608 + $0x208] sm:$0xff]
        %v5312 = vld [vmem:[%s2608 + $0x210] sm:$0xff]
        %v5313 = vld [vmem:[%s2608 + $0x218] sm:$0xff]
        %v5314 = vld [vmem:[%s2608 + $0x220] sm:$0xff]
        %v5315 = vld [vmem:[%s2608 + $0x228] sm:$0xff]
        %v5316 = vld [vmem:[%s2608 + $0x230] sm:$0xff]
        %v5317 = vld [vmem:[%s2608 + $0x238] sm:$0xff]
        %v5318 = vld [vmem:[%s2608 + $0x240] sm:$0xff]
        %v5319 = vld [vmem:[%s2608 + $0x248] sm:$0xff]
        %v5320 = vld [vmem:[%s2608 + $0x250] sm:$0xff]
        %v5321 = vld [vmem:[%s2608 + $0x258] sm:$0xff]
        %v5322 = vld [vmem:[%s2608 + $0x260] sm:$0xff]
        %v5323 = vld [vmem:[%s2608 + $0x268] sm:$0xff]
        %v5324 = vld [vmem:[%s2608 + $0x270] sm:$0xff]
        %v5325 = vld [vmem:[%s2608 + $0x278] sm:$0xff]
        %v5326 = vld [vmem:[%s2608 + $0x280] sm:$0xff]
        %v5327 = vld [vmem:[%s2608 + $0x288] sm:$0xff]
        %v5328 = vld [vmem:[%s2608 + $0x290] sm:$0xff]
        %v5329 = vld [vmem:[%s2608 + $0x298] sm:$0xff]
        %v5330 = vld [vmem:[%s2608 + $0x2a0] sm:$0xff]
        %v5331 = vld [vmem:[%s2608 + $0x2a8] sm:$0xff]
        %v5332 = vld [vmem:[%s2608 + $0x2b0] sm:$0xff]
        %v5333 = vld [vmem:[%s2608 + $0x2b8] sm:$0xff]
        %v5334 = vld [vmem:[%s2608 + $0x2c0] sm:$0xff]
        %v5335 = vld [vmem:[%s2608 + $0x2c8] sm:$0xff]
        %v5336 = vld [vmem:[%s2608 + $0x2d0] sm:$0xff]
        %v5337 = vld [vmem:[%s2608 + $0x2d8] sm:$0xff]
        %v5338 = vld [vmem:[%s2608 + $0x2e0] sm:$0xff]
        %v5339 = vld [vmem:[%s2608 + $0x2e8] sm:$0xff]
        %v5340 = vld [vmem:[%s2608 + $0x2f0] sm:$0xff]
        %v5341 = vld [vmem:[%s2608 + $0x2f8] sm:$0xff]
        %v5342 = vld [vmem:[%s2608 + $0x300] sm:$0xff]
        %v5343 = vld [vmem:[%s2608 + $0x308] sm:$0xff]
        %v5344 = vld [vmem:[%s2608 + $0x310] sm:$0xff]
        %v5345 = vld [vmem:[%s2608 + $0x318] sm:$0xff]
        %v5346 = vld [vmem:[%s2608 + $0x320] sm:$0xff]
        %v5347 = vld [vmem:[%s2608 + $0x328] sm:$0xff]
        %v5348 = vld [vmem:[%s2608 + $0x330] sm:$0xff]
        %v5349 = vld [vmem:[%s2608 + $0x338] sm:$0xff]
        %v5350 = vld [vmem:[%s2608 + $0x340] sm:$0xff]
        %v5351 = vld [vmem:[%s2608 + $0x348] sm:$0xff]
        %v5352 = vld [vmem:[%s2608 + $0x350] sm:$0xff]
        %v5353 = vld [vmem:[%s2608 + $0x358] sm:$0xff]
        %v5354 = vld [vmem:[%s2608 + $0x360] sm:$0xff]
        %v5355 = vld [vmem:[%s2608 + $0x368] sm:$0xff]
        %v5356 = vld [vmem:[%s2608 + $0x370] sm:$0xff]
        %v5357 = vld [vmem:[%s2608 + $0x378] sm:$0xff]
        %v5358 = vld [vmem:[%s2608 + $0x380] sm:$0xff]
        %v5359 = vld [vmem:[%s2608 + $0x388] sm:$0xff]
        %v5360 = vld [vmem:[%s2608 + $0x390] sm:$0xff]
        %v5361 = vld [vmem:[%s2608 + $0x398] sm:$0xff]
        %v5362 = vld [vmem:[%s2608 + $0x3a0] sm:$0xff]
        %v5363 = vld [vmem:[%s2608 + $0x3a8] sm:$0xff]
        %v5364 = vld [vmem:[%s2608 + $0x3b0] sm:$0xff]
        %v5365 = vld [vmem:[%s2608 + $0x3b8] sm:$0xff]
        %v5366 = vld [vmem:[%s2608 + $0x3c0] sm:$0xff]
        %v5367 = vld [vmem:[%s2608 + $0x3c8] sm:$0xff]
        %v5368 = vld [vmem:[%s2608 + $0x3d0] sm:$0xff]
        %v5369 = vld [vmem:[%s2608 + $0x3d8] sm:$0xff]
        %v5370 = vld [vmem:[%s2608 + $0x3e0] sm:$0xff]
        %v5371 = vld [vmem:[%s2608 + $0x3e8] sm:$0xff]
        %v5372 = vld [vmem:[%s2608 + $0x3f0] sm:$0xff]
        %v5373 = vld [vmem:[%s2608 + $0x3f8] sm:$0xff]
        %v5374 = vld [vmem:[%s2608 + $0x400] sm:$0xff]
        %v5375 = vld [vmem:[%s2608 + $0x408] sm:$0xff]
        %v5376 = vld [vmem:[%s2608 + $0x410] sm:$0xff]
        %v5377 = vld [vmem:[%s2608 + $0x418] sm:$0xff]
        %v5378 = vld [vmem:[%s2608 + $0x420] sm:$0xff]
        %v5379 = vld [vmem:[%s2608 + $0x428] sm:$0xff]
        %v5380 = vld [vmem:[%s2608 + $0x430] sm:$0xff]
        %v5381 = vld [vmem:[%s2608 + $0x438] sm:$0xff]
        %v5382 = vld [vmem:[%s2608 + $0x440] sm:$0xff]
        %v5383 = vld [vmem:[%s2608 + $0x448] sm:$0xff]
        %v5384 = vld [vmem:[%s2608 + $0x450] sm:$0xff]
        %v5385 = vld [vmem:[%s2608 + $0x458] sm:$0xff]
        %v5386 = vld [vmem:[%s2608 + $0x460] sm:$0xff]
        %v5387 = vld [vmem:[%s2608 + $0x468] sm:$0xff]
        %v5388 = vld [vmem:[%s2608 + $0x470] sm:$0xff]
        %v5389 = vld [vmem:[%s2608 + $0x478] sm:$0xff]
        %v5390 = vld [vmem:[%s2608 + $0x480] sm:$0xff]
        %v5391 = vld [vmem:[%s2608 + $0x488] sm:$0xff]
        %v5392 = vld [vmem:[%s2608 + $0x490] sm:$0xff]
        %v5393 = vld [vmem:[%s2608 + $0x498] sm:$0xff]
        %v5394 = vld [vmem:[%s2608 + $0x4a0] sm:$0xff]
        %v5395 = vld [vmem:[%s2608 + $0x4a8] sm:$0xff]
        %v5396 = vld [vmem:[%s2608 + $0x4b0] sm:$0xff]
        %v5397 = vld [vmem:[%s2608 + $0x4b8] sm:$0xff]
        %v5398 = vld [vmem:[%s2608 + $0x4c0] sm:$0xff]
        %v5399 = vld [vmem:[%s2608 + $0x4c8] sm:$0xff]
        %v5400 = vld [vmem:[%s2608 + $0x4d0] sm:$0xff]
        %v5401 = vld [vmem:[%s2608 + $0x4d8] sm:$0xff]
        %v5402 = vld [vmem:[%s2608 + $0x4e0] sm:$0xff]
        %v5403 = vld [vmem:[%s2608 + $0x4e8] sm:$0xff]
        %v5404 = vld [vmem:[%s2608 + $0x4f0] sm:$0xff]
        %v5405 = vld [vmem:[%s2608 + $0x4f8] sm:$0xff]
        %v5406 = vld [vmem:[%s2608 + $0x500] sm:$0xff]
        %v5407 = vld [vmem:[%s2608 + $0x508] sm:$0xff]
        %v5408 = vld [vmem:[%s2608 + $0x510] sm:$0xff]
        %v5409 = vld [vmem:[%s2608 + $0x518] sm:$0xff]
        %v5410 = vld [vmem:[%s2608 + $0x520] sm:$0xff]
        %v5411 = vld [vmem:[%s2608 + $0x528] sm:$0xff]
        %v5412 = vld [vmem:[%s2608 + $0x530] sm:$0xff]
        %v5413 = vld [vmem:[%s2608 + $0x538] sm:$0xff]
        %v5414 = vld [vmem:[%s2608 + $0x540] sm:$0xff]
        %v5415 = vld [vmem:[%s2608 + $0x548] sm:$0xff]
        %v5416 = vld [vmem:[%s2608 + $0x550] sm:$0xff]
        %v5417 = vld [vmem:[%s2608 + $0x558] sm:$0xff]
        %v5418 = vld [vmem:[%s2608 + $0x560] sm:$0xff]
        %v5419 = vld [vmem:[%s2608 + $0x568] sm:$0xff]
        %v5420 = vld [vmem:[%s2608 + $0x570] sm:$0xff]
        %v5421 = vld [vmem:[%s2608 + $0x578] sm:$0xff]
        %v5422 = vld [vmem:[%s2608 + $0x580] sm:$0xff]
        %v5423 = vld [vmem:[%s2608 + $0x588] sm:$0xff]
        %v5424 = vld [vmem:[%s2608 + $0x590] sm:$0xff]
        %v5425 = vld [vmem:[%s2608 + $0x598] sm:$0xff]
        %v5426 = vld [vmem:[%s2608 + $0x5a0] sm:$0xff]
        %v5427 = vld [vmem:[%s2608 + $0x5a8] sm:$0xff]
        %v5428 = vld [vmem:[%s2608 + $0x5b0] sm:$0xff]
        %v5429 = vld [vmem:[%s2608 + $0x5b8] sm:$0xff]
        %v5430 = vld [vmem:[%s2608 + $0x5c0] sm:$0xff]
        %v5431 = vld [vmem:[%s2608 + $0x5c8] sm:$0xff]
        %v5432 = vld [vmem:[%s2608 + $0x5d0] sm:$0xff]
        %v5433 = vld [vmem:[%s2608 + $0x5d8] sm:$0xff]
        %v5434 = vld [vmem:[%s2608 + $0x5e0] sm:$0xff]
        %v5435 = vld [vmem:[%s2608 + $0x5e8] sm:$0xff]
        %v5436 = vld [vmem:[%s2608 + $0x5f0] sm:$0xff]
        %v5437 = vld [vmem:[%s2608 + $0x5f8] sm:$0xff]
        %5438 = vmatprep.subr.mxu0 %v5247
        %5439 = vmatpush1.msra.mxu0 %v5246
        %5440 = vmatprep.subr.mxu0 %v5249
        %5441 = vmatpush1.msra.mxu0 %v5248
        %5442 = vmatprep.subr.mxu0 %v5251
        %5443 = vmatpush1.msra.mxu0 %v5250
        %5444 = vmatprep.subr.mxu0 %v5253
        %5445 = vmatpush1.msra.mxu0 %v5252
        %5446 = vmatprep.subr.mxu0 %v5255
        %5447 = vmatpush1.msra.mxu0 %v5254
        %5448 = vmatprep.subr.mxu0 %v5257
        %5449 = vmatpush1.msra.mxu0 %v5256
        %5450 = vmatprep.subr.mxu0 %v5259
        %5451 = vmatpush1.msra.mxu0 %v5258
        %5452 = vmatprep.subr.mxu0 %v5261
        %5453 = vmatpush1.msra.mxu0 %v5260
        %5454 = vmatprep.subr.mxu0 %v5263
        %5455 = vmatpush1.msra.mxu0 %v5262
        %5456 = vmatprep.subr.mxu0 %v5265
        %5457 = vmatpush1.msra.mxu0 %v5264
        %5458 = vmatprep.subr.mxu0 %v5267
        %5459 = vmatpush1.msra.mxu0 %v5266
        %5460 = vmatprep.subr.mxu0 %v5269
        %5461 = vmatpush1.msra.mxu0 %v5268
        %5462 = vmatprep.subr.mxu0 %v5271
        %5463 = vmatpush1.msra.mxu0 %v5270
        %5464 = vmatprep.subr.mxu0 %v5273
        %5465 = vmatpush1.msra.mxu0 %v5272
        %5466 = vmatprep.subr.mxu0 %v5275
        %5467 = vmatpush1.msra.mxu0 %v5274
        %5468 = vmatprep.subr.mxu0 %v5277
        %5469 = vmatpush1.msra.mxu0 %v5276
        %5470 = vmatprep.subr.mxu0 %v5279
        %5471 = vmatpush1.msra.mxu0 %v5278
        %5472 = vmatprep.subr.mxu0 %v5281
        %5473 = vmatpush1.msra.mxu0 %v5280
        %5474 = vmatprep.subr.mxu0 %v5283
        %5475 = vmatpush1.msra.mxu0 %v5282
        %5476 = vmatprep.subr.mxu0 %v5285
        %5477 = vmatpush1.msra.mxu0 %v5284
        %5478 = vmatprep.subr.mxu0 %v5287
        %5479 = vmatpush1.msra.mxu0 %v5286
        %5480 = vmatprep.subr.mxu0 %v5289
        %5481 = vmatpush1.msra.mxu0 %v5288
        %5482 = vmatprep.subr.mxu0 %v5291
        %5483 = vmatpush1.msra.mxu0 %v5290
        %5484 = vmatprep.subr.mxu0 %v5293
        %5485 = vmatpush1.msra.mxu0 %v5292
        %5486 = vmatprep.subr.mxu0 %v5295
        %5487 = vmatpush1.msra.mxu0 %v5294
        %5488 = vmatprep.subr.mxu0 %v5297
        %5489 = vmatpush1.msra.mxu0 %v5296
        %5490 = vmatprep.subr.mxu0 %v5299
        %5491 = vmatpush1.msra.mxu0 %v5298
        %5492 = vmatprep.subr.mxu0 %v5301
        %5493 = vmatpush1.msra.mxu0 %v5300
        %5494 = vmatprep.subr.mxu0 %v5303
        %5495 = vmatpush1.msra.mxu0 %v5302
        %5496 = vmatprep.subr.mxu0 %v5305
        %5497 = vmatpush1.msra.mxu0 %v5304
        %5498 = vmatprep.subr.mxu0 %v5307
        %5499 = vmatpush1.msra.mxu0 %v5306
        %5500 = vmatprep.subr.mxu0 %v5309
        %5501 = vmatpush1.msra.mxu0 %v5308
        %5502 = vmatprep.mubr.f32.mxu0 %v4959
        %5503 = vmatmul.mubr.f32.gmra.mrb[0].mxu0 %v4958
        %v5504 = vpop.f32.mrb[0].mxu0
        %v5505 = vadd.f32 0.0, %v5504
        %v5506 = vpop.f32.mrb[0].mxu0
        %v5507 = vadd.f32 0.0, %v5506
        %5508 = vmatprep.mubr.f32.mxu0 %v4965
        %5509 = vmatmul.mubr.f32.gmra.mrb[0].mxu0 %v4964
        %v5510 = vpop.f32.mrb[0].mxu0
        %v5511 = vadd.f32 0.0, %v5510
        %v5512 = vpop.f32.mrb[0].mxu0
        %v5513 = vadd.f32 0.0, %v5512
        %5514 = vmatprep.mubr.f32.mxu0 %v4971
        %5515 = vmatmul.mubr.f32.gmra.mrb[0].mxu0 %v4970
        %v5516 = vpop.f32.mrb[0].mxu0
        %v5517 = vadd.f32 0.0, %v5516
        %v5518 = vpop.f32.mrb[0].mxu0
        %v5519 = vadd.f32 0.0, %v5518
        %5520 = vmatprep.mubr.f32.mxu0 %v4977
        %5521 = vmatmul.mubr.f32.gmra.mrb[0].mxu0 %v4976
        %v5522 = vpop.f32.mrb[0].mxu0
        %v5523 = vadd.f32 0.0, %v5522
        %v5524 = vpop.f32.mrb[0].mxu0
        %v5525 = vadd.f32 0.0, %v5524
        %5526 = vmatprep.mubr.f32.mxu0 %v4983
        %5527 = vmatmul.mubr.f32.gmra.mrb[0].mxu0 %v4982
        %v5528 = vpop.f32.mrb[0].mxu0
        %v5529 = vadd.f32 0.0, %v5528
        %v5530 = vpop.f32.mrb[0].mxu0
        %v5531 = vadd.f32 0.0, %v5530
        %5532 = vmatprep.mubr.f32.mxu0 %v4989
        %5533 = vmatmul.mubr.f32.gmra.mrb[0].mxu0 %v4988
        %v5534 = vpop.f32.mrb[0].mxu0
        %v5535 = vadd.f32 0.0, %v5534
        %v5536 = vpop.f32.mrb[0].mxu0
        %v5537 = vadd.f32 0.0, %v5536
        %5538 = vmatprep.mubr.f32.mxu0 %v4995
        %5539 = vmatmul.mubr.f32.gmra.mrb[0].mxu0 %v4994
        %v5540 = vpop.f32.mrb[0].mxu0
        %v5541 = vadd.f32 0.0, %v5540
        %v5542 = vpop.f32.mrb[0].mxu0
        %v5543 = vadd.f32 0.0, %v5542
        %5544 = vmatprep.mubr.f32.mxu0 %v5001
        %5545 = vmatmul.mubr.f32.gmra.mrb[0].mxu0 %v5000
        %v5546 = vpop.f32.mrb[0].mxu0
        %v5547 = vadd.f32 0.0, %v5546
        %v5548 = vpop.f32.mrb[0].mxu0
        %v5549 = vadd.f32 0.0, %v5548
        %5550 = vmatprep.mubr.f32.mxu0 %v5007
        %5551 = vmatmul.mubr.f32.gmra.mrb[0].mxu0 %v5006
        %v5552 = vpop.f32.mrb[0].mxu0
        %v5553 = vadd.f32 0.0, %v5552
        %v5554 = vpop.f32.mrb[0].mxu0
        %v5555 = vadd.f32 0.0, %v5554
        %5556 = vmatprep.mubr.f32.mxu0 %v5013
        %5557 = vmatmul.mubr.f32.gmra.mrb[0].mxu0 %v5012
        %v5558 = vpop.f32.mrb[0].mxu0
        %v5559 = vadd.f32 0.0, %v5558
        %v5560 = vpop.f32.mrb[0].mxu0
        %v5561 = vadd.f32 0.0, %v5560
        %5562 = vmatprep.mubr.f32.mxu0 %v5019
        %5563 = vmatmul.mubr.f32.gmra.mrb[0].mxu0 %v5018
        %v5564 = vpop.f32.mrb[0].mxu0
        %v5565 = vadd.f32 0.0, %v5564
        %v5566 = vpop.f32.mrb[0].mxu0
        %v5567 = vadd.f32 0.0, %v5566
        %5568 = vmatprep.mubr.f32.mxu0 %v5025
        %5569 = vmatmul.mubr.f32.gmra.mrb[0].mxu0 %v5024
        %v5570 = vpop.f32.mrb[0].mxu0
        %v5571 = vadd.f32 0.0, %v5570
        %v5572 = vpop.f32.mrb[0].mxu0
        %v5573 = vadd.f32 0.0, %v5572
        %5574 = vmatprep.mubr.f32.mxu0 %v5031
        %5575 = vmatmul.mubr.f32.gmra.mrb[0].mxu0 %v5030
        %v5576 = vpop.f32.mrb[0].mxu0
        %v5577 = vadd.f32 0.0, %v5576
        %v5578 = vpop.f32.mrb[0].mxu0
        %v5579 = vadd.f32 0.0, %v5578
        %5580 = vmatprep.mubr.f32.mxu0 %v5037
        %5581 = vmatmul.mubr.f32.gmra.mrb[0].mxu0 %v5036
        %v5582 = vpop.f32.mrb[0].mxu0
        %v5583 = vadd.f32 0.0, %v5582
        %v5584 = vpop.f32.mrb[0].mxu0
        %v5585 = vadd.f32 0.0, %v5584
        %5586 = vmatprep.mubr.f32.mxu0 %v5235
        %5587 = vmatmul.mubr.f32.gmra.mrb[0].mxu0 %v5234
        %v5588 = vpop.f32.mrb[0].mxu0
        %v5589 = vadd.f32 0.0, %v5588
        %v5590 = vpop.f32.mrb[0].mxu0
        %v5591 = vadd.f32 0.0, %v5590
        %5592 = vmatprep.mubr.f32.mxu0 %v5241
        %5593 = vmatmul.mubr.f32.gmra.mrb[0].mxu0 %v5240
        %v5594 = vpop.f32.mrb[0].mxu0
        %v5595 = vadd.f32 0.0, %v5594
        %v5596 = vpop.f32.mrb[0].mxu0
        %v5597 = vadd.f32 0.0, %v5596
        %5598 = vdwg.mxu0
        %5599 = vmatprep.subr.mxu0 %v5311
        %5600 = vmatpush1.msra.mxu0 %v5310
        %5601 = vmatprep.subr.mxu0 %v5313
        %5602 = vmatpush1.msra.mxu0 %v5312
        %5603 = vmatprep.subr.mxu0 %v5315
        %5604 = vmatpush1.msra.mxu0 %v5314
        %5605 = vmatprep.subr.mxu0 %v5317
        %5606 = vmatpush1.msra.mxu0 %v5316
        %5607 = vmatprep.subr.mxu0 %v5319
        %5608 = vmatpush1.msra.mxu0 %v5318
        %5609 = vmatprep.subr.mxu0 %v5321
        %5610 = vmatpush1.msra.mxu0 %v5320
        %5611 = vmatprep.subr.mxu0 %v5323
        %5612 = vmatpush1.msra.mxu0 %v5322
        %5613 = vmatprep.subr.mxu0 %v5325
        %5614 = vmatpush1.msra.mxu0 %v5324
        %5615 = vmatprep.subr.mxu0 %v5327
        %5616 = vmatpush1.msra.mxu0 %v5326
        %5617 = vmatprep.subr.mxu0 %v5329
        %5618 = vmatpush1.msra.mxu0 %v5328
        %5619 = vmatprep.subr.mxu0 %v5331
        %5620 = vmatpush1.msra.mxu0 %v5330
        %5621 = vmatprep.subr.mxu0 %v5333
        %5622 = vmatpush1.msra.mxu0 %v5332
        %5623 = vmatprep.subr.mxu0 %v5335
        %5624 = vmatpush1.msra.mxu0 %v5334
        %5625 = vmatprep.subr.mxu0 %v5337
        %5626 = vmatpush1.msra.mxu0 %v5336
        %5627 = vmatprep.subr.mxu0 %v5339
        %5628 = vmatpush1.msra.mxu0 %v5338
        %5629 = vmatprep.subr.mxu0 %v5341
        %5630 = vmatpush1.msra.mxu0 %v5340
        %5631 = vmatprep.subr.mxu0 %v5343
        %5632 = vmatpush1.msra.mxu0 %v5342
        %5633 = vmatprep.subr.mxu0 %v5345
        %5634 = vmatpush1.msra.mxu0 %v5344
        %5635 = vmatprep.subr.mxu0 %v5347
        %5636 = vmatpush1.msra.mxu0 %v5346
        %5637 = vmatprep.subr.mxu0 %v5349
        %5638 = vmatpush1.msra.mxu0 %v5348
        %5639 = vmatprep.subr.mxu0 %v5351
        %5640 = vmatpush1.msra.mxu0 %v5350
        %5641 = vmatprep.subr.mxu0 %v5353
        %5642 = vmatpush1.msra.mxu0 %v5352
        %5643 = vmatprep.subr.mxu0 %v5355
        %5644 = vmatpush1.msra.mxu0 %v5354
        %5645 = vmatprep.subr.mxu0 %v5357
        %5646 = vmatpush1.msra.mxu0 %v5356
        %5647 = vmatprep.subr.mxu0 %v5359
        %5648 = vmatpush1.msra.mxu0 %v5358
        %5649 = vmatprep.subr.mxu0 %v5361
        %5650 = vmatpush1.msra.mxu0 %v5360
        %5651 = vmatprep.subr.mxu0 %v5363
        %5652 = vmatpush1.msra.mxu0 %v5362
        %5653 = vmatprep.subr.mxu0 %v5365
        %5654 = vmatpush1.msra.mxu0 %v5364
        %5655 = vmatprep.subr.mxu0 %v5367
        %5656 = vmatpush1.msra.mxu0 %v5366
        %5657 = vmatprep.subr.mxu0 %v5369
        %5658 = vmatpush1.msra.mxu0 %v5368
        %5659 = vmatprep.subr.mxu0 %v5371
        %5660 = vmatpush1.msra.mxu0 %v5370
        %5661 = vmatprep.subr.mxu0 %v5373
        %5662 = vmatpush1.msra.mxu0 %v5372
        %5663 = vmatprep.mubr.f32.mxu0 %v4961
        %5664 = vmatmul.mubr.f32.gmra.mrb[0].mxu0 %v4960
        %v5665 = vpop.f32.mrb[0].mxu0
        %v5666 = vadd.f32 %v5505, %v5665
        %v5667 = vpop.f32.mrb[0].mxu0
        %v5668 = vadd.f32 %v5507, %v5667
        %5669 = vmatprep.mubr.f32.mxu0 %v4967
        %5670 = vmatmul.mubr.f32.gmra.mrb[0].mxu0 %v4966
        %v5671 = vpop.f32.mrb[0].mxu0
        %v5672 = vadd.f32 %v5511, %v5671
        %v5673 = vpop.f32.mrb[0].mxu0
        %v5674 = vadd.f32 %v5513, %v5673
        %5675 = vmatprep.mubr.f32.mxu0 %v4973
        %5676 = vmatmul.mubr.f32.gmra.mrb[0].mxu0 %v4972
        %v5677 = vpop.f32.mrb[0].mxu0
        %v5678 = vadd.f32 %v5517, %v5677
        %v5679 = vpop.f32.mrb[0].mxu0
        %v5680 = vadd.f32 %v5519, %v5679
        %5681 = vmatprep.mubr.f32.mxu0 %v4979
        %5682 = vmatmul.mubr.f32.gmra.mrb[0].mxu0 %v4978
        %v5683 = vpop.f32.mrb[0].mxu0
        %v5684 = vadd.f32 %v5523, %v5683
        %v5685 = vpop.f32.mrb[0].mxu0
        %v5686 = vadd.f32 %v5525, %v5685
        %5687 = vmatprep.mubr.f32.mxu0 %v4985
        %5688 = vmatmul.mubr.f32.gmra.mrb[0].mxu0 %v4984
        %v5689 = vpop.f32.mrb[0].mxu0
        %v5690 = vadd.f32 %v5529, %v5689
        %v5691 = vpop.f32.mrb[0].mxu0
        %v5692 = vadd.f32 %v5531, %v5691
        %5693 = vmatprep.mubr.f32.mxu0 %v4991
        %5694 = vmatmul.mubr.f32.gmra.mrb[0].mxu0 %v4990
        %v5695 = vpop.f32.mrb[0].mxu0
        %v5696 = vadd.f32 %v5535, %v5695
        %v5697 = vpop.f32.mrb[0].mxu0
        %v5698 = vadd.f32 %v5537, %v5697
        %5699 = vmatprep.mubr.f32.mxu0 %v4997
        %5700 = vmatmul.mubr.f32.gmra.mrb[0].mxu0 %v4996
        %v5701 = vpop.f32.mrb[0].mxu0
        %v5702 = vadd.f32 %v5541, %v5701
        %v5703 = vpop.f32.mrb[0].mxu0
        %v5704 = vadd.f32 %v5543, %v5703
        %5705 = vmatprep.mubr.f32.mxu0 %v5003
        %5706 = vmatmul.mubr.f32.gmra.mrb[0].mxu0 %v5002
        %v5707 = vpop.f32.mrb[0].mxu0
        %v5708 = vadd.f32 %v5547, %v5707
        %v5709 = vpop.f32.mrb[0].mxu0
        %v5710 = vadd.f32 %v5549, %v5709
        %5711 = vmatprep.mubr.f32.mxu0 %v5009
        %5712 = vmatmul.mubr.f32.gmra.mrb[0].mxu0 %v5008
        %v5713 = vpop.f32.mrb[0].mxu0
        %v5714 = vadd.f32 %v5553, %v5713
        %v5715 = vpop.f32.mrb[0].mxu0
        %v5716 = vadd.f32 %v5555, %v5715
        %5717 = vmatprep.mubr.f32.mxu0 %v5015
        %5718 = vmatmul.mubr.f32.gmra.mrb[0].mxu0 %v5014
        %v5719 = vpop.f32.mrb[0].mxu0
        %v5720 = vadd.f32 %v5559, %v5719
        %v5721 = vpop.f32.mrb[0].mxu0
        %v5722 = vadd.f32 %v5561, %v5721
        %5723 = vmatprep.mubr.f32.mxu0 %v5021
        %5724 = vmatmul.mubr.f32.gmra.mrb[0].mxu0 %v5020
        %v5725 = vpop.f32.mrb[0].mxu0
        %v5726 = vadd.f32 %v5565, %v5725
        %v5727 = vpop.f32.mrb[0].mxu0
        %v5728 = vadd.f32 %v5567, %v5727
        %5729 = vmatprep.mubr.f32.mxu0 %v5027
        %5730 = vmatmul.mubr.f32.gmra.mrb[0].mxu0 %v5026
        %v5731 = vpop.f32.mrb[0].mxu0
        %v5732 = vadd.f32 %v5571, %v5731
        %v5733 = vpop.f32.mrb[0].mxu0
        %v5734 = vadd.f32 %v5573, %v5733
        %5735 = vmatprep.mubr.f32.mxu0 %v5033
        %5736 = vmatmul.mubr.f32.gmra.mrb[0].mxu0 %v5032
        %v5737 = vpop.f32.mrb[0].mxu0
        %v5738 = vadd.f32 %v5577, %v5737
        %v5739 = vpop.f32.mrb[0].mxu0
        %v5740 = vadd.f32 %v5579, %v5739
        %5741 = vmatprep.mubr.f32.mxu0 %v5039
        %5742 = vmatmul.mubr.f32.gmra.mrb[0].mxu0 %v5038
        %v5743 = vpop.f32.mrb[0].mxu0
        %v5744 = vadd.f32 %v5583, %v5743
        %v5745 = vpop.f32.mrb[0].mxu0
        %v5746 = vadd.f32 %v5585, %v5745
        %5747 = vmatprep.mubr.f32.mxu0 %v5237
        %5748 = vmatmul.mubr.f32.gmra.mrb[0].mxu0 %v5236
        %v5749 = vpop.f32.mrb[0].mxu0
        %v5750 = vadd.f32 %v5589, %v5749
        %v5751 = vpop.f32.mrb[0].mxu0
        %v5752 = vadd.f32 %v5591, %v5751
        %5753 = vmatprep.mubr.f32.mxu0 %v5243
        %5754 = vmatmul.mubr.f32.gmra.mrb[0].mxu0 %v5242
        %v5755 = vpop.f32.mrb[0].mxu0
        %v5756 = vadd.f32 %v5595, %v5755
        %v5757 = vpop.f32.mrb[0].mxu0
        %v5758 = vadd.f32 %v5597, %v5757
        %5759 = vdwg.mxu0
        %5760 = vmatprep.subr.mxu0 %v5375
        %5761 = vmatpush1.msra.mxu0 %v5374
        %5762 = vmatprep.subr.mxu0 %v5377
        %5763 = vmatpush1.msra.mxu0 %v5376
        %5764 = vmatprep.subr.mxu0 %v5379
        %5765 = vmatpush1.msra.mxu0 %v5378
        %5766 = vmatprep.subr.mxu0 %v5381
        %5767 = vmatpush1.msra.mxu0 %v5380
        %5768 = vmatprep.subr.mxu0 %v5383
        %5769 = vmatpush1.msra.mxu0 %v5382
        %5770 = vmatprep.subr.mxu0 %v5385
        %5771 = vmatpush1.msra.mxu0 %v5384
        %5772 = vmatprep.subr.mxu0 %v5387
        %5773 = vmatpush1.msra.mxu0 %v5386
        %5774 = vmatprep.subr.mxu0 %v5389
        %5775 = vmatpush1.msra.mxu0 %v5388
        %5776 = vmatprep.subr.mxu0 %v5391
        %5777 = vmatpush1.msra.mxu0 %v5390
        %5778 = vmatprep.subr.mxu0 %v5393
        %5779 = vmatpush1.msra.mxu0 %v5392
        %5780 = vmatprep.subr.mxu0 %v5395
        %5781 = vmatpush1.msra.mxu0 %v5394
        %5782 = vmatprep.subr.mxu0 %v5397
        %5783 = vmatpush1.msra.mxu0 %v5396
        %5784 = vmatprep.subr.mxu0 %v5399
        %5785 = vmatpush1.msra.mxu0 %v5398
        %5786 = vmatprep.subr.mxu0 %v5401
        %5787 = vmatpush1.msra.mxu0 %v5400
        %5788 = vmatprep.subr.mxu0 %v5403
        %5789 = vmatpush1.msra.mxu0 %v5402
        %5790 = vmatprep.subr.mxu0 %v5405
        %5791 = vmatpush1.msra.mxu0 %v5404
        %5792 = vmatprep.subr.mxu0 %v5407
        %5793 = vmatpush1.msra.mxu0 %v5406
        %5794 = vmatprep.subr.mxu0 %v5409
        %5795 = vmatpush1.msra.mxu0 %v5408
        %5796 = vmatprep.subr.mxu0 %v5411
        %5797 = vmatpush1.msra.mxu0 %v5410
        %5798 = vmatprep.subr.mxu0 %v5413
        %5799 = vmatpush1.msra.mxu0 %v5412
        %5800 = vmatprep.subr.mxu0 %v5415
        %5801 = vmatpush1.msra.mxu0 %v5414
        %5802 = vmatprep.subr.mxu0 %v5417
        %5803 = vmatpush1.msra.mxu0 %v5416
        %5804 = vmatprep.subr.mxu0 %v5419
        %5805 = vmatpush1.msra.mxu0 %v5418
        %5806 = vmatprep.subr.mxu0 %v5421
        %5807 = vmatpush1.msra.mxu0 %v5420
        %5808 = vmatprep.subr.mxu0 %v5423
        %5809 = vmatpush1.msra.mxu0 %v5422
        %5810 = vmatprep.subr.mxu0 %v5425
        %5811 = vmatpush1.msra.mxu0 %v5424
        %5812 = vmatprep.subr.mxu0 %v5427
        %5813 = vmatpush1.msra.mxu0 %v5426
        %5814 = vmatprep.subr.mxu0 %v5429
        %5815 = vmatpush1.msra.mxu0 %v5428
        %5816 = vmatprep.subr.mxu0 %v5431
        %5817 = vmatpush1.msra.mxu0 %v5430
        %5818 = vmatprep.subr.mxu0 %v5433
        %5819 = vmatpush1.msra.mxu0 %v5432
        %5820 = vmatprep.subr.mxu0 %v5435
        %5821 = vmatpush1.msra.mxu0 %v5434
        %5822 = vmatprep.subr.mxu0 %v5437
        %5823 = vmatpush1.msra.mxu0 %v5436
        %5824 = vmatprep.mubr.f32.mxu0 %v4963
        %5825 = vmatmul.mubr.f32.gmra.mrb[0].mxu0 %v4962
        %v5826 = vpop.f32.mrb[0].mxu0
        %v5827 = vadd.f32 %v5666, %v5826
        %v5828 = vpop.f32.mrb[0].mxu0
        %v5829 = vadd.f32 %v5668, %v5828
        %5830 = vmatprep.mubr.f32.mxu0 %v4969
        %5831 = vmatmul.mubr.f32.gmra.mrb[0].mxu0 %v4968
        %v5832 = vpop.f32.mrb[0].mxu0
        %v5833 = vadd.f32 %v5672, %v5832
        %v5834 = vpop.f32.mrb[0].mxu0
        %v5835 = vadd.f32 %v5674, %v5834
        %5836 = vmatprep.mubr.f32.mxu0 %v4975
        %5837 = vmatmul.mubr.f32.gmra.mrb[0].mxu0 %v4974
        %v5838 = vpop.f32.mrb[0].mxu0
        %v5839 = vadd.f32 %v5678, %v5838
        %v5840 = vpop.f32.mrb[0].mxu0
        %v5841 = vadd.f32 %v5680, %v5840
        %5842 = vmatprep.mubr.f32.mxu0 %v4981
        %5843 = vmatmul.mubr.f32.gmra.mrb[0].mxu0 %v4980
        %v5844 = vpop.f32.mrb[0].mxu0
        %v5845 = vadd.f32 %v5684, %v5844
        %v5846 = vpop.f32.mrb[0].mxu0
        %v5847 = vadd.f32 %v5686, %v5846
        %5848 = vmatprep.mubr.f32.mxu0 %v4987
        %5849 = vmatmul.mubr.f32.gmra.mrb[0].mxu0 %v4986
        %v5850 = vpop.f32.mrb[0].mxu0
        %v5851 = vadd.f32 %v5690, %v5850
        %v5852 = vpop.f32.mrb[0].mxu0
        %v5853 = vadd.f32 %v5692, %v5852
        %5854 = vmatprep.mubr.f32.mxu0 %v4993
        %5855 = vmatmul.mubr.f32.gmra.mrb[0].mxu0 %v4992
        %v5856 = vpop.f32.mrb[0].mxu0
        %v5857 = vadd.f32 %v5696, %v5856
        %v5858 = vpop.f32.mrb[0].mxu0
        %v5859 = vadd.f32 %v5698, %v5858
        %5860 = vmatprep.mubr.f32.mxu0 %v4999
        %5861 = vmatmul.mubr.f32.gmra.mrb[0].mxu0 %v4998
        %v5862 = vpop.f32.mrb[0].mxu0
        %v5863 = vadd.f32 %v5702, %v5862
        %v5864 = vpop.f32.mrb[0].mxu0
        %v5865 = vadd.f32 %v5704, %v5864
        %5866 = vmatprep.mubr.f32.mxu0 %v5005
        %5867 = vmatmul.mubr.f32.gmra.mrb[0].mxu0 %v5004
        %v5868 = vpop.f32.mrb[0].mxu0
        %v5869 = vadd.f32 %v5708, %v5868
        %v5870 = vpop.f32.mrb[0].mxu0
        %v5871 = vadd.f32 %v5710, %v5870
        %5872 = vmatprep.mubr.f32.mxu0 %v5011
        %5873 = vmatmul.mubr.f32.gmra.mrb[0].mxu0 %v5010
        %v5874 = vpop.f32.mrb[0].mxu0
        %v5875 = vadd.f32 %v5714, %v5874
        %v5876 = vpop.f32.mrb[0].mxu0
        %v5877 = vadd.f32 %v5716, %v5876
        %5878 = vmatprep.mubr.f32.mxu0 %v5017
        %5879 = vmatmul.mubr.f32.gmra.mrb[0].mxu0 %v5016
        %v5880 = vpop.f32.mrb[0].mxu0
        %v5881 = vadd.f32 %v5720, %v5880
        %v5882 = vpop.f32.mrb[0].mxu0
        %v5883 = vadd.f32 %v5722, %v5882
        %5884 = vmatprep.mubr.f32.mxu0 %v5023
        %5885 = vmatmul.mubr.f32.gmra.mrb[0].mxu0 %v5022
        %v5886 = vpop.f32.mrb[0].mxu0
        %v5887 = vadd.f32 %v5726, %v5886
        %v5888 = vpop.f32.mrb[0].mxu0
        %v5889 = vadd.f32 %v5728, %v5888
        %5890 = vmatprep.mubr.f32.mxu0 %v5029
        %5891 = vmatmul.mubr.f32.gmra.mrb[0].mxu0 %v5028
        %v5892 = vpop.f32.mrb[0].mxu0
        %v5893 = vadd.f32 %v5732, %v5892
        %v5894 = vpop.f32.mrb[0].mxu0
        %v5895 = vadd.f32 %v5734, %v5894
        %5896 = vmatprep.mubr.f32.mxu0 %v5035
        %5897 = vmatmul.mubr.f32.gmra.mrb[0].mxu0 %v5034
        %v5898 = vpop.f32.mrb[0].mxu0
        %v5899 = vadd.f32 %v5738, %v5898
        %v5900 = vpop.f32.mrb[0].mxu0
        %v5901 = vadd.f32 %v5740, %v5900
        %5902 = vmatprep.mubr.f32.mxu0 %v5041
        %5903 = vmatmul.mubr.f32.gmra.mrb[0].mxu0 %v5040
        %v5904 = vpop.f32.mrb[0].mxu0
        %v5905 = vadd.f32 %v5744, %v5904
        %v5906 = vpop.f32.mrb[0].mxu0
        %v5907 = vadd.f32 %v5746, %v5906
        %5908 = vmatprep.mubr.f32.mxu0 %v5239
        %5909 = vmatmul.mubr.f32.gmra.mrb[0].mxu0 %v5238
        %v5910 = vpop.f32.mrb[0].mxu0
        %v5911 = vadd.f32 %v5750, %v5910
        %v5912 = vpop.f32.mrb[0].mxu0
        %v5913 = vadd.f32 %v5752, %v5912
        %5914 = vmatprep.mubr.f32.mxu0 %v5245
        %5915 = vmatmul.mubr.f32.gmra.mrb[0].mxu0 %v5244
        %v5916 = vpop.f32.mrb[0].mxu0
        %v5917 = vadd.f32 %v5756, %v5916
        %v5918 = vpop.f32.mrb[0].mxu0
        %v5919 = vadd.f32 %v5758, %v5918
        %5920 = vdwg.mxu0
        %5921 = vmatprep.subr.mxu0 %v5043
        %5922 = vmatpush1.msra.mxu0 %v5042
        %5923 = vmatprep.subr.mxu0 %v5045
        %5924 = vmatpush1.msra.mxu0 %v5044
        %5925 = vmatprep.subr.mxu0 %v5047
        %5926 = vmatpush1.msra.mxu0 %v5046
        %5927 = vmatprep.subr.mxu0 %v5049
        %5928 = vmatpush1.msra.mxu0 %v5048
        %5929 = vmatprep.subr.mxu0 %v5051
        %5930 = vmatpush1.msra.mxu0 %v5050
        %5931 = vmatprep.subr.mxu0 %v5053
        %5932 = vmatpush1.msra.mxu0 %v5052
        %5933 = vmatprep.subr.mxu0 %v5055
        %5934 = vmatpush1.msra.mxu0 %v5054
        %5935 = vmatprep.subr.mxu0 %v5057
        %5936 = vmatpush1.msra.mxu0 %v5056
        %5937 = vmatprep.subr.mxu0 %v5059
        %5938 = vmatpush1.msra.mxu0 %v5058
        %5939 = vmatprep.subr.mxu0 %v5061
        %5940 = vmatpush1.msra.mxu0 %v5060
        %5941 = vmatprep.subr.mxu0 %v5063
        %5942 = vmatpush1.msra.mxu0 %v5062
        %5943 = vmatprep.subr.mxu0 %v5065
        %5944 = vmatpush1.msra.mxu0 %v5064
        %5945 = vmatprep.subr.mxu0 %v5067
        %5946 = vmatpush1.msra.mxu0 %v5066
        %5947 = vmatprep.subr.mxu0 %v5069
        %5948 = vmatpush1.msra.mxu0 %v5068
        %5949 = vmatprep.subr.mxu0 %v5071
        %5950 = vmatpush1.msra.mxu0 %v5070
        %5951 = vmatprep.subr.mxu0 %v5073
        %5952 = vmatpush1.msra.mxu0 %v5072
        %5953 = vmatprep.subr.mxu0 %v5075
        %5954 = vmatpush1.msra.mxu0 %v5074
        %5955 = vmatprep.subr.mxu0 %v5077
        %5956 = vmatpush1.msra.mxu0 %v5076
        %5957 = vmatprep.subr.mxu0 %v5079
        %5958 = vmatpush1.msra.mxu0 %v5078
        %5959 = vmatprep.subr.mxu0 %v5081
        %5960 = vmatpush1.msra.mxu0 %v5080
        %5961 = vmatprep.subr.mxu0 %v5083
        %5962 = vmatpush1.msra.mxu0 %v5082
        %5963 = vmatprep.subr.mxu0 %v5085
        %5964 = vmatpush1.msra.mxu0 %v5084
        %5965 = vmatprep.subr.mxu0 %v5087
        %5966 = vmatpush1.msra.mxu0 %v5086
        %5967 = vmatprep.subr.mxu0 %v5089
        %5968 = vmatpush1.msra.mxu0 %v5088
        %5969 = vmatprep.subr.mxu0 %v5091
        %5970 = vmatpush1.msra.mxu0 %v5090
        %5971 = vmatprep.subr.mxu0 %v5093
        %5972 = vmatpush1.msra.mxu0 %v5092
        %5973 = vmatprep.subr.mxu0 %v5095
        %5974 = vmatpush1.msra.mxu0 %v5094
        %5975 = vmatprep.subr.mxu0 %v5097
        %5976 = vmatpush1.msra.mxu0 %v5096
        %5977 = vmatprep.subr.mxu0 %v5099
        %5978 = vmatpush1.msra.mxu0 %v5098
        %5979 = vmatprep.subr.mxu0 %v5101
        %5980 = vmatpush1.msra.mxu0 %v5100
        %5981 = vmatprep.subr.mxu0 %v5103
        %5982 = vmatpush1.msra.mxu0 %v5102
        %5983 = vmatprep.subr.mxu0 %v5105
        %5984 = vmatpush1.msra.mxu0 %v5104
        %5985 = vmatprep.mubr.f32.mxu0 %v4947
        %5986 = vmatmul.mubr.f32.gmra.mrb[0].mxu0 %v4946
        %v5987 = vpop.f32.mrb[0].mxu0
        %v5988 = vadd.f32 %v5827, %v5987
        %v5989 = vpop.f32.mrb[0].mxu0
        %v5990 = vadd.f32 %v5829, %v5989
        %5991 = vmatprep.mubr.f32.mxu0 %v4953
        %5992 = vmatmul.mubr.f32.gmra.mrb[0].mxu0 %v4952
        %v5993 = vpop.f32.mrb[0].mxu0
        %v5994 = vadd.f32 %v5833, %v5993
        %v5995 = vpop.f32.mrb[0].mxu0
        %v5996 = vadd.f32 %v5835, %v5995
        %5997 = vmatprep.mubr.f32.mxu0 %v4959
        %5998 = vmatmul.mubr.f32.gmra.mrb[0].mxu0 %v4958
        %v5999 = vpop.f32.mrb[0].mxu0
        %v6000 = vadd.f32 %v5839, %v5999
        %v6001 = vpop.f32.mrb[0].mxu0
        %v6002 = vadd.f32 %v5841, %v6001
        %6003 = vmatprep.mubr.f32.mxu0 %v4965
        %6004 = vmatmul.mubr.f32.gmra.mrb[0].mxu0 %v4964
        %v6005 = vpop.f32.mrb[0].mxu0
        %v6006 = vadd.f32 %v5845, %v6005
        %v6007 = vpop.f32.mrb[0].mxu0
        %v6008 = vadd.f32 %v5847, %v6007
        %6009 = vmatprep.mubr.f32.mxu0 %v4971
        %6010 = vmatmul.mubr.f32.gmra.mrb[0].mxu0 %v4970
        %v6011 = vpop.f32.mrb[0].mxu0
        %v6012 = vadd.f32 %v5851, %v6011
        %v6013 = vpop.f32.mrb[0].mxu0
        %v6014 = vadd.f32 %v5853, %v6013
        %6015 = vmatprep.mubr.f32.mxu0 %v4977
        %6016 = vmatmul.mubr.f32.gmra.mrb[0].mxu0 %v4976
        %v6017 = vpop.f32.mrb[0].mxu0
        %v6018 = vadd.f32 %v5857, %v6017
        %v6019 = vpop.f32.mrb[0].mxu0
        %v6020 = vadd.f32 %v5859, %v6019
        %6021 = vmatprep.mubr.f32.mxu0 %v4983
        %6022 = vmatmul.mubr.f32.gmra.mrb[0].mxu0 %v4982
        %v6023 = vpop.f32.mrb[0].mxu0
        %v6024 = vadd.f32 %v5863, %v6023
        %v6025 = vpop.f32.mrb[0].mxu0
        %v6026 = vadd.f32 %v5865, %v6025
        %6027 = vmatprep.mubr.f32.mxu0 %v4989
        %6028 = vmatmul.mubr.f32.gmra.mrb[0].mxu0 %v4988
        %v6029 = vpop.f32.mrb[0].mxu0
        %v6030 = vadd.f32 %v5869, %v6029
        %v6031 = vpop.f32.mrb[0].mxu0
        %v6032 = vadd.f32 %v5871, %v6031
        %6033 = vmatprep.mubr.f32.mxu0 %v4995
        %6034 = vmatmul.mubr.f32.gmra.mrb[0].mxu0 %v4994
        %v6035 = vpop.f32.mrb[0].mxu0
        %v6036 = vadd.f32 %v5875, %v6035
        %v6037 = vpop.f32.mrb[0].mxu0
        %v6038 = vadd.f32 %v5877, %v6037
        %6039 = vmatprep.mubr.f32.mxu0 %v5001
        %6040 = vmatmul.mubr.f32.gmra.mrb[0].mxu0 %v5000
        %v6041 = vpop.f32.mrb[0].mxu0
        %v6042 = vadd.f32 %v5881, %v6041
        %v6043 = vpop.f32.mrb[0].mxu0
        %v6044 = vadd.f32 %v5883, %v6043
        %6045 = vmatprep.mubr.f32.mxu0 %v5007
        %6046 = vmatmul.mubr.f32.gmra.mrb[0].mxu0 %v5006
        %v6047 = vpop.f32.mrb[0].mxu0
        %v6048 = vadd.f32 %v5887, %v6047
        %v6049 = vpop.f32.mrb[0].mxu0
        %v6050 = vadd.f32 %v5889, %v6049
        %6051 = vmatprep.mubr.f32.mxu0 %v5013
        %6052 = vmatmul.mubr.f32.gmra.mrb[0].mxu0 %v5012
        %v6053 = vpop.f32.mrb[0].mxu0
        %v6054 = vadd.f32 %v5893, %v6053
        %v6055 = vpop.f32.mrb[0].mxu0
        %v6056 = vadd.f32 %v5895, %v6055
        %6057 = vmatprep.mubr.f32.mxu0 %v5019
        %6058 = vmatmul.mubr.f32.gmra.mrb[0].mxu0 %v5018
        %v6059 = vpop.f32.mrb[0].mxu0
        %v6060 = vadd.f32 %v5899, %v6059
        %v6061 = vpop.f32.mrb[0].mxu0
        %v6062 = vadd.f32 %v5901, %v6061
        %6063 = vmatprep.mubr.f32.mxu0 %v5025
        %6064 = vmatmul.mubr.f32.gmra.mrb[0].mxu0 %v5024
        %v6065 = vpop.f32.mrb[0].mxu0
        %v6066 = vadd.f32 %v5905, %v6065
        %v6067 = vpop.f32.mrb[0].mxu0
        %v6068 = vadd.f32 %v5907, %v6067
        %6069 = vmatprep.mubr.f32.mxu0 %v5031
        %6070 = vmatmul.mubr.f32.gmra.mrb[0].mxu0 %v5030
        %v6071 = vpop.f32.mrb[0].mxu0
        %v6072 = vadd.f32 %v5911, %v6071
        %v6073 = vpop.f32.mrb[0].mxu0
        %v6074 = vadd.f32 %v5913, %v6073
        %6075 = vmatprep.mubr.f32.mxu0 %v5037
        %6076 = vmatmul.mubr.f32.gmra.mrb[0].mxu0 %v5036
        %v6077 = vpop.f32.mrb[0].mxu0
        %v6078 = vadd.f32 %v5917, %v6077
        %v6079 = vpop.f32.mrb[0].mxu0
        %v6080 = vadd.f32 %v5919, %v6079
        %6081 = vdwg.mxu0
        %6082 = vmatprep.subr.mxu0 %v5107
        %6083 = vmatpush1.msra.mxu0 %v5106
        %6084 = vmatprep.subr.mxu0 %v5109
        %6085 = vmatpush1.msra.mxu0 %v5108
        %6086 = vmatprep.subr.mxu0 %v5111
        %6087 = vmatpush1.msra.mxu0 %v5110
        %6088 = vmatprep.subr.mxu0 %v5113
        %6089 = vmatpush1.msra.mxu0 %v5112
        %6090 = vmatprep.subr.mxu0 %v5115
        %6091 = vmatpush1.msra.mxu0 %v5114
        %6092 = vmatprep.subr.mxu0 %v5117
        %6093 = vmatpush1.msra.mxu0 %v5116
        %6094 = vmatprep.subr.mxu0 %v5119
        %6095 = vmatpush1.msra.mxu0 %v5118
        %6096 = vmatprep.subr.mxu0 %v5121
        %6097 = vmatpush1.msra.mxu0 %v5120
        %6098 = vmatprep.subr.mxu0 %v5123
        %6099 = vmatpush1.msra.mxu0 %v5122
        %6100 = vmatprep.subr.mxu0 %v5125
        %6101 = vmatpush1.msra.mxu0 %v5124
        %6102 = vmatprep.subr.mxu0 %v5127
        %6103 = vmatpush1.msra.mxu0 %v5126
        %6104 = vmatprep.subr.mxu0 %v5129
        %6105 = vmatpush1.msra.mxu0 %v5128
        %6106 = vmatprep.subr.mxu0 %v5131
        %6107 = vmatpush1.msra.mxu0 %v5130
        %6108 = vmatprep.subr.mxu0 %v5133
        %6109 = vmatpush1.msra.mxu0 %v5132
        %6110 = vmatprep.subr.mxu0 %v5135
        %6111 = vmatpush1.msra.mxu0 %v5134
        %6112 = vmatprep.subr.mxu0 %v5137
        %6113 = vmatpush1.msra.mxu0 %v5136
        %6114 = vmatprep.subr.mxu0 %v5139
        %6115 = vmatpush1.msra.mxu0 %v5138
        %6116 = vmatprep.subr.mxu0 %v5141
        %6117 = vmatpush1.msra.mxu0 %v5140
        %6118 = vmatprep.subr.mxu0 %v5143
        %6119 = vmatpush1.msra.mxu0 %v5142
        %6120 = vmatprep.subr.mxu0 %v5145
        %6121 = vmatpush1.msra.mxu0 %v5144
        %6122 = vmatprep.subr.mxu0 %v5147
        %6123 = vmatpush1.msra.mxu0 %v5146
        %6124 = vmatprep.subr.mxu0 %v5149
        %6125 = vmatpush1.msra.mxu0 %v5148
        %6126 = vmatprep.subr.mxu0 %v5151
        %6127 = vmatpush1.msra.mxu0 %v5150
        %6128 = vmatprep.subr.mxu0 %v5153
        %6129 = vmatpush1.msra.mxu0 %v5152
        %6130 = vmatprep.subr.mxu0 %v5155
        %6131 = vmatpush1.msra.mxu0 %v5154
        %6132 = vmatprep.subr.mxu0 %v5157
        %6133 = vmatpush1.msra.mxu0 %v5156
        %6134 = vmatprep.subr.mxu0 %v5159
        %6135 = vmatpush1.msra.mxu0 %v5158
        %6136 = vmatprep.subr.mxu0 %v5161
        %6137 = vmatpush1.msra.mxu0 %v5160
        %6138 = vmatprep.subr.mxu0 %v5163
        %6139 = vmatpush1.msra.mxu0 %v5162
        %6140 = vmatprep.subr.mxu0 %v5165
        %6141 = vmatpush1.msra.mxu0 %v5164
        %6142 = vmatprep.subr.mxu0 %v5167
        %6143 = vmatpush1.msra.mxu0 %v5166
        %6144 = vmatprep.subr.mxu0 %v5169
        %6145 = vmatpush1.msra.mxu0 %v5168
        %6146 = vmatprep.mubr.f32.mxu0 %v4949
        %6147 = vmatmul.mubr.f32.gmra.mrb[0].mxu0 %v4948
        %v6148 = vpop.f32.mrb[0].mxu0
        %v6149 = vadd.f32 %v5988, %v6148
        %v6150 = vpop.f32.mrb[0].mxu0
        %v6151 = vadd.f32 %v5990, %v6150
        %6152 = vmatprep.mubr.f32.mxu0 %v4955
        %6153 = vmatmul.mubr.f32.gmra.mrb[0].mxu0 %v4954
        %v6154 = vpop.f32.mrb[0].mxu0
        %v6155 = vadd.f32 %v5994, %v6154
        %v6156 = vpop.f32.mrb[0].mxu0
        %v6157 = vadd.f32 %v5996, %v6156
        %6158 = vmatprep.mubr.f32.mxu0 %v4961
        %6159 = vmatmul.mubr.f32.gmra.mrb[0].mxu0 %v4960
        %v6160 = vpop.f32.mrb[0].mxu0
        %v6161 = vadd.f32 %v6000, %v6160
        %v6162 = vpop.f32.mrb[0].mxu0
        %v6163 = vadd.f32 %v6002, %v6162
        %6164 = vmatprep.mubr.f32.mxu0 %v4967
        %6165 = vmatmul.mubr.f32.gmra.mrb[0].mxu0 %v4966
        %v6166 = vpop.f32.mrb[0].mxu0
        %v6167 = vadd.f32 %v6006, %v6166
        %v6168 = vpop.f32.mrb[0].mxu0
        %v6169 = vadd.f32 %v6008, %v6168
        %6170 = vmatprep.mubr.f32.mxu0 %v4973
        %6171 = vmatmul.mubr.f32.gmra.mrb[0].mxu0 %v4972
        %v6172 = vpop.f32.mrb[0].mxu0
        %v6173 = vadd.f32 %v6012, %v6172
        %v6174 = vpop.f32.mrb[0].mxu0
        %v6175 = vadd.f32 %v6014, %v6174
        %6176 = vmatprep.mubr.f32.mxu0 %v4979
        %6177 = vmatmul.mubr.f32.gmra.mrb[0].mxu0 %v4978
        %v6178 = vpop.f32.mrb[0].mxu0
        %v6179 = vadd.f32 %v6018, %v6178
        %v6180 = vpop.f32.mrb[0].mxu0
        %v6181 = vadd.f32 %v6020, %v6180
        %6182 = vmatprep.mubr.f32.mxu0 %v4985
        %6183 = vmatmul.mubr.f32.gmra.mrb[0].mxu0 %v4984
        %v6184 = vpop.f32.mrb[0].mxu0
        %v6185 = vadd.f32 %v6024, %v6184
        %v6186 = vpop.f32.mrb[0].mxu0
        %v6187 = vadd.f32 %v6026, %v6186
        %6188 = vmatprep.mubr.f32.mxu0 %v4991
        %6189 = vmatmul.mubr.f32.gmra.mrb[0].mxu0 %v4990
        %v6190 = vpop.f32.mrb[0].mxu0
        %v6191 = vadd.f32 %v6030, %v6190
        %v6192 = vpop.f32.mrb[0].mxu0
        %v6193 = vadd.f32 %v6032, %v6192
        %6194 = vmatprep.mubr.f32.mxu0 %v4997
        %6195 = vmatmul.mubr.f32.gmra.mrb[0].mxu0 %v4996
        %v6196 = vpop.f32.mrb[0].mxu0
        %v6197 = vadd.f32 %v6036, %v6196
        %v6198 = vpop.f32.mrb[0].mxu0
        %v6199 = vadd.f32 %v6038, %v6198
        %6200 = vmatprep.mubr.f32.mxu0 %v5003
        %6201 = vmatmul.mubr.f32.gmra.mrb[0].mxu0 %v5002
        %v6202 = vpop.f32.mrb[0].mxu0
        %v6203 = vadd.f32 %v6042, %v6202
        %v6204 = vpop.f32.mrb[0].mxu0
        %v6205 = vadd.f32 %v6044, %v6204
        %6206 = vmatprep.mubr.f32.mxu0 %v5009
        %6207 = vmatmul.mubr.f32.gmra.mrb[0].mxu0 %v5008
        %v6208 = vpop.f32.mrb[0].mxu0
        %v6209 = vadd.f32 %v6048, %v6208
        %v6210 = vpop.f32.mrb[0].mxu0
        %v6211 = vadd.f32 %v6050, %v6210
        %6212 = vmatprep.mubr.f32.mxu0 %v5015
        %6213 = vmatmul.mubr.f32.gmra.mrb[0].mxu0 %v5014
        %v6214 = vpop.f32.mrb[0].mxu0
        %v6215 = vadd.f32 %v6054, %v6214
        %v6216 = vpop.f32.mrb[0].mxu0
        %v6217 = vadd.f32 %v6056, %v6216
        %6218 = vmatprep.mubr.f32.mxu0 %v5021
        %6219 = vmatmul.mubr.f32.gmra.mrb[0].mxu0 %v5020
        %v6220 = vpop.f32.mrb[0].mxu0
        %v6221 = vadd.f32 %v6060, %v6220
        %v6222 = vpop.f32.mrb[0].mxu0
        %v6223 = vadd.f32 %v6062, %v6222
        %6224 = vmatprep.mubr.f32.mxu0 %v5027
        %6225 = vmatmul.mubr.f32.gmra.mrb[0].mxu0 %v5026
        %v6226 = vpop.f32.mrb[0].mxu0
        %v6227 = vadd.f32 %v6066, %v6226
        %v6228 = vpop.f32.mrb[0].mxu0
        %v6229 = vadd.f32 %v6068, %v6228
        %6230 = vmatprep.mubr.f32.mxu0 %v5033
        %6231 = vmatmul.mubr.f32.gmra.mrb[0].mxu0 %v5032
        %v6232 = vpop.f32.mrb[0].mxu0
        %v6233 = vadd.f32 %v6072, %v6232
        %v6234 = vpop.f32.mrb[0].mxu0
        %v6235 = vadd.f32 %v6074, %v6234
        %6236 = vmatprep.mubr.f32.mxu0 %v5039
        %6237 = vmatmul.mubr.f32.gmra.mrb[0].mxu0 %v5038
        %v6238 = vpop.f32.mrb[0].mxu0
        %v6239 = vadd.f32 %v6078, %v6238
        %v6240 = vpop.f32.mrb[0].mxu0
        %v6241 = vadd.f32 %v6080, %v6240
        %6242 = vdwg.mxu0
        %6243 = vmatprep.subr.mxu0 %v5171
        %6244 = vmatpush1.msra.mxu0 %v5170
        %6245 = vmatprep.subr.mxu0 %v5173
        %6246 = vmatpush1.msra.mxu0 %v5172
        %6247 = vmatprep.subr.mxu0 %v5175
        %6248 = vmatpush1.msra.mxu0 %v5174
        %6249 = vmatprep.subr.mxu0 %v5177
        %6250 = vmatpush1.msra.mxu0 %v5176
        %6251 = vmatprep.subr.mxu0 %v5179
        %6252 = vmatpush1.msra.mxu0 %v5178
        %6253 = vmatprep.subr.mxu0 %v5181
        %6254 = vmatpush1.msra.mxu0 %v5180
        %6255 = vmatprep.subr.mxu0 %v5183
        %6256 = vmatpush1.msra.mxu0 %v5182
        %6257 = vmatprep.subr.mxu0 %v5185
        %6258 = vmatpush1.msra.mxu0 %v5184
        %6259 = vmatprep.subr.mxu0 %v5187
        %6260 = vmatpush1.msra.mxu0 %v5186
        %6261 = vmatprep.subr.mxu0 %v5189
        %6262 = vmatpush1.msra.mxu0 %v5188
        %6263 = vmatprep.subr.mxu0 %v5191
        %6264 = vmatpush1.msra.mxu0 %v5190
        %6265 = vmatprep.subr.mxu0 %v5193
        %6266 = vmatpush1.msra.mxu0 %v5192
        %6267 = vmatprep.subr.mxu0 %v5195
        %6268 = vmatpush1.msra.mxu0 %v5194
        %6269 = vmatprep.subr.mxu0 %v5197
        %6270 = vmatpush1.msra.mxu0 %v5196
        %6271 = vmatprep.subr.mxu0 %v5199
        %6272 = vmatpush1.msra.mxu0 %v5198
        %6273 = vmatprep.subr.mxu0 %v5201
        %6274 = vmatpush1.msra.mxu0 %v5200
        %6275 = vmatprep.subr.mxu0 %v5203
        %6276 = vmatpush1.msra.mxu0 %v5202
        %6277 = vmatprep.subr.mxu0 %v5205
        %6278 = vmatpush1.msra.mxu0 %v5204
        %6279 = vmatprep.subr.mxu0 %v5207
        %6280 = vmatpush1.msra.mxu0 %v5206
        %6281 = vmatprep.subr.mxu0 %v5209
        %6282 = vmatpush1.msra.mxu0 %v5208
        %6283 = vmatprep.subr.mxu0 %v5211
        %6284 = vmatpush1.msra.mxu0 %v5210
        %6285 = vmatprep.subr.mxu0 %v5213
        %6286 = vmatpush1.msra.mxu0 %v5212
        %6287 = vmatprep.subr.mxu0 %v5215
        %6288 = vmatpush1.msra.mxu0 %v5214
        %6289 = vmatprep.subr.mxu0 %v5217
        %6290 = vmatpush1.msra.mxu0 %v5216
        %6291 = vmatprep.subr.mxu0 %v5219
        %6292 = vmatpush1.msra.mxu0 %v5218
        %6293 = vmatprep.subr.mxu0 %v5221
        %6294 = vmatpush1.msra.mxu0 %v5220
        %6295 = vmatprep.subr.mxu0 %v5223
        %6296 = vmatpush1.msra.mxu0 %v5222
        %6297 = vmatprep.subr.mxu0 %v5225
        %6298 = vmatpush1.msra.mxu0 %v5224
        %6299 = vmatprep.subr.mxu0 %v5227
        %6300 = vmatpush1.msra.mxu0 %v5226
        %6301 = vmatprep.subr.mxu0 %v5229
        %6302 = vmatpush1.msra.mxu0 %v5228
        %6303 = vmatprep.subr.mxu0 %v5231
        %6304 = vmatpush1.msra.mxu0 %v5230
        %6305 = vmatprep.subr.mxu0 %v5233
        %6306 = vmatpush1.msra.mxu0 %v5232
        %6307 = vmatprep.mubr.f32.mxu0 %v4951
        %6308 = vmatmul.mubr.f32.gmra.mrb[0].mxu0 %v4950
        %v6309 = vpop.f32.mrb[0].mxu0
        %v6310 = vadd.f32 %v6149, %v6309
        %v6311 = vpop.f32.mrb[0].mxu0
        %v6312 = vadd.f32 %v6151, %v6311
        %6313 = vmatprep.mubr.f32.mxu0 %v4957
        %6314 = vmatmul.mubr.f32.gmra.mrb[0].mxu0 %v4956
        %v6315 = vpop.f32.mrb[0].mxu0
        %v6316 = vadd.f32 %v6155, %v6315
        %v6317 = vpop.f32.mrb[0].mxu0
        %v6318 = vadd.f32 %v6157, %v6317
        %6319 = vmatprep.mubr.f32.mxu0 %v4963
        %6320 = vmatmul.mubr.f32.gmra.mrb[0].mxu0 %v4962
        %v6321 = vpop.f32.mrb[0].mxu0
        %v6322 = vadd.f32 %v6161, %v6321
        %v6323 = vpop.f32.mrb[0].mxu0
        %v6324 = vadd.f32 %v6163, %v6323
        %6325 = vmatprep.mubr.f32.mxu0 %v4969
        %6326 = vmatmul.mubr.f32.gmra.mrb[0].mxu0 %v4968
        %v6327 = vpop.f32.mrb[0].mxu0
        %v6328 = vadd.f32 %v6167, %v6327
        %v6329 = vpop.f32.mrb[0].mxu0
        %v6330 = vadd.f32 %v6169, %v6329
        %6331 = vmatprep.mubr.f32.mxu0 %v4975
        %6332 = vmatmul.mubr.f32.gmra.mrb[0].mxu0 %v4974
        %v6333 = vpop.f32.mrb[0].mxu0
        %v6334 = vadd.f32 %v6173, %v6333
        %v6335 = vpop.f32.mrb[0].mxu0
        %v6336 = vadd.f32 %v6175, %v6335
        %6337 = vmatprep.mubr.f32.mxu0 %v4981
        %6338 = vmatmul.mubr.f32.gmra.mrb[0].mxu0 %v4980
        %v6339 = vpop.f32.mrb[0].mxu0
        %v6340 = vadd.f32 %v6179, %v6339
        %v6341 = vpop.f32.mrb[0].mxu0
        %v6342 = vadd.f32 %v6181, %v6341
        %6343 = vmatprep.mubr.f32.mxu0 %v4987
        %6344 = vmatmul.mubr.f32.gmra.mrb[0].mxu0 %v4986
        %v6345 = vpop.f32.mrb[0].mxu0
        %v6346 = vadd.f32 %v6185, %v6345
        %v6347 = vpop.f32.mrb[0].mxu0
        %v6348 = vadd.f32 %v6187, %v6347
        %6349 = vmatprep.mubr.f32.mxu0 %v4993
        %6350 = vmatmul.mubr.f32.gmra.mrb[0].mxu0 %v4992
        %v6351 = vpop.f32.mrb[0].mxu0
        %v6352 = vadd.f32 %v6191, %v6351
        %v6353 = vpop.f32.mrb[0].mxu0
        %v6354 = vadd.f32 %v6193, %v6353
        %6355 = vmatprep.mubr.f32.mxu0 %v4999
        %6356 = vmatmul.mubr.f32.gmra.mrb[0].mxu0 %v4998
        %v6357 = vpop.f32.mrb[0].mxu0
        %v6358 = vadd.f32 %v6197, %v6357
        %v6359 = vpop.f32.mrb[0].mxu0
        %v6360 = vadd.f32 %v6199, %v6359
        %6361 = vmatprep.mubr.f32.mxu0 %v5005
        %6362 = vmatmul.mubr.f32.gmra.mrb[0].mxu0 %v5004
        %v6363 = vpop.f32.mrb[0].mxu0
        %v6364 = vadd.f32 %v6203, %v6363
        %v6365 = vpop.f32.mrb[0].mxu0
        %v6366 = vadd.f32 %v6205, %v6365
        %6367 = vmatprep.mubr.f32.mxu0 %v5011
        %6368 = vmatmul.mubr.f32.gmra.mrb[0].mxu0 %v5010
        %v6369 = vpop.f32.mrb[0].mxu0
        %v6370 = vadd.f32 %v6209, %v6369
        %v6371 = vpop.f32.mrb[0].mxu0
        %v6372 = vadd.f32 %v6211, %v6371
        %6373 = vmatprep.mubr.f32.mxu0 %v5017
        %6374 = vmatmul.mubr.f32.gmra.mrb[0].mxu0 %v5016
        %v6375 = vpop.f32.mrb[0].mxu0
        %v6376 = vadd.f32 %v6215, %v6375
        %v6377 = vpop.f32.mrb[0].mxu0
        %v6378 = vadd.f32 %v6217, %v6377
        %6379 = vmatprep.mubr.f32.mxu0 %v5023
        %6380 = vmatmul.mubr.f32.gmra.mrb[0].mxu0 %v5022
        %v6381 = vpop.f32.mrb[0].mxu0
        %v6382 = vadd.f32 %v6221, %v6381
        %v6383 = vpop.f32.mrb[0].mxu0
        %v6384 = vadd.f32 %v6223, %v6383
        %6385 = vmatprep.mubr.f32.mxu0 %v5029
        %6386 = vmatmul.mubr.f32.gmra.mrb[0].mxu0 %v5028
        %v6387 = vpop.f32.mrb[0].mxu0
        %v6388 = vadd.f32 %v6227, %v6387
        %v6389 = vpop.f32.mrb[0].mxu0
        %v6390 = vadd.f32 %v6229, %v6389
        %6391 = vmatprep.mubr.f32.mxu0 %v5035
        %6392 = vmatmul.mubr.f32.gmra.mrb[0].mxu0 %v5034
        %v6393 = vpop.f32.mrb[0].mxu0
        %v6394 = vadd.f32 %v6233, %v6393
        %v6395 = vpop.f32.mrb[0].mxu0
        %v6396 = vadd.f32 %v6235, %v6395
        %6397 = vmatprep.mubr.f32.mxu0 %v5041
        %6398 = vmatmul.mubr.f32.gmra.mrb[0].mxu0 %v5040
        %v6399 = vpop.f32.mrb[0].mxu0
        %v6400 = vadd.f32 %v6239, %v6399
        %v6401 = vpop.f32.mrb[0].mxu0
        %v6402 = vadd.f32 %v6241, %v6401
        %6403 = vdwg.mxu0
        %v6404 = vld [vmem:[#allocation3 + $0x3c0] sm:$0xff]
        %v6405 = vld [vmem:[#allocation3 + $0x3c8] sm:$0xff]
        %v6406 = vld [vmem:[#allocation3 + $0x3d0] sm:$0xff]
        %v6407 = vld [vmem:[#allocation3 + $0x3d8] sm:$0xff]
        %v6408 = vld [vmem:[#allocation3 + $0x3e0] sm:$0xff]
        %v6409 = vld [vmem:[#allocation3 + $0x3e8] sm:$0xff]
        %v6410 = vld [vmem:[#allocation3 + $0x3f0] sm:$0xff]
        %v6411 = vld [vmem:[#allocation3 + $0x3f8] sm:$0xff]
        %v6412 = vld [vmem:[#allocation3 + $0x400] sm:$0xff]
        %v6413 = vld [vmem:[#allocation3 + $0x408] sm:$0xff]
        %v6414 = vld [vmem:[#allocation3 + $0x410] sm:$0xff]
        %v6415 = vld [vmem:[#allocation3 + $0x418] sm:$0xff]
        %v6416 = vld [vmem:[#allocation3 + $0x420] sm:$0xff]
        %v6417 = vld [vmem:[#allocation3 + $0x428] sm:$0xff]
        %v6418 = vld [vmem:[#allocation3 + $0x430] sm:$0xff]
        %v6419 = vld [vmem:[#allocation3 + $0x438] sm:$0xff]
        %v6420 = vld [vmem:[#allocation3 + $0x440] sm:$0xff]
        %v6421 = vld [vmem:[#allocation3 + $0x448] sm:$0xff]
        %v6422 = vld [vmem:[#allocation3 + $0x450] sm:$0xff]
        %v6423 = vld [vmem:[#allocation3 + $0x458] sm:$0xff]
        %v6424 = vld [vmem:[#allocation3 + $0x460] sm:$0xff]
        %v6425 = vld [vmem:[#allocation3 + $0x468] sm:$0xff]
        %v6426 = vld [vmem:[#allocation3 + $0x470] sm:$0xff]
        %v6427 = vld [vmem:[#allocation3 + $0x478] sm:$0xff]
        %v6428 = vld [vmem:[#allocation3 + $0x480] sm:$0xff]
        %v6429 = vld [vmem:[#allocation3 + $0x488] sm:$0xff]
        %v6430 = vld [vmem:[#allocation3 + $0x490] sm:$0xff]
        %v6431 = vld [vmem:[#allocation3 + $0x498] sm:$0xff]
        %v6432 = vld [vmem:[#allocation3 + $0x4a0] sm:$0xff]
        %v6433 = vld [vmem:[#allocation3 + $0x4a8] sm:$0xff]
        %v6434 = vld [vmem:[#allocation3 + $0x4b0] sm:$0xff]
        %v6435 = vld [vmem:[#allocation3 + $0x4b8] sm:$0xff]
        %v6436 = vld [vmem:[#allocation3 + $0x4c0] sm:$0xff]
        %v6437 = vld [vmem:[#allocation3 + $0x4c8] sm:$0xff]
        %v6438 = vld [vmem:[#allocation3 + $0x4d0] sm:$0xff]
        %v6439 = vld [vmem:[#allocation3 + $0x4d8] sm:$0xff]
        %v6440 = vld [vmem:[#allocation3 + $0x4e0] sm:$0xff]
        %v6441 = vld [vmem:[#allocation3 + $0x4e8] sm:$0xff]
        %v6442 = vld [vmem:[#allocation3 + $0x4f0] sm:$0xff]
        %v6443 = vld [vmem:[#allocation3 + $0x4f8] sm:$0xff]
        %v6444 = vld [vmem:[#allocation3 + $0x500] sm:$0xff]
        %v6445 = vld [vmem:[#allocation3 + $0x508] sm:$0xff]
        %v6446 = vld [vmem:[#allocation3 + $0x510] sm:$0xff]
        %v6447 = vld [vmem:[#allocation3 + $0x518] sm:$0xff]
        %v6448 = vld [vmem:[#allocation3 + $0x520] sm:$0xff]
        %v6449 = vld [vmem:[#allocation3 + $0x528] sm:$0xff]
        %v6450 = vld [vmem:[#allocation3 + $0x530] sm:$0xff]
        %v6451 = vld [vmem:[#allocation3 + $0x538] sm:$0xff]
        %v6452 = vld [vmem:[#allocation3 + $0x540] sm:$0xff]
        %v6453 = vld [vmem:[#allocation3 + $0x548] sm:$0xff]
        %v6454 = vld [vmem:[#allocation3 + $0x550] sm:$0xff]
        %v6455 = vld [vmem:[#allocation3 + $0x558] sm:$0xff]
        %v6456 = vld [vmem:[#allocation3 + $0x560] sm:$0xff]
        %v6457 = vld [vmem:[#allocation3 + $0x568] sm:$0xff]
        %v6458 = vld [vmem:[#allocation3 + $0x570] sm:$0xff]
        %v6459 = vld [vmem:[#allocation3 + $0x578] sm:$0xff]
        %v6460 = vld [vmem:[#allocation3 + $0x580] sm:$0xff]
        %v6461 = vld [vmem:[#allocation3 + $0x588] sm:$0xff]
        %v6462 = vld [vmem:[#allocation3 + $0x590] sm:$0xff]
        %v6463 = vld [vmem:[#allocation3 + $0x598] sm:$0xff]
        %v6464 = vld [vmem:[#allocation3 + $0x5a0] sm:$0xff]
        %v6465 = vld [vmem:[#allocation3 + $0x5a8] sm:$0xff]
        %v6466 = vld [vmem:[#allocation3 + $0x5b0] sm:$0xff]
        %v6467 = vld [vmem:[#allocation3 + $0x5b8] sm:$0xff]
        %v6468 = vld [vmem:[#allocation3 + $0x5c0] sm:$0xff]
        %v6469 = vld [vmem:[#allocation3 + $0x5c8] sm:$0xff]
        %v6470 = vld [vmem:[#allocation3 + $0x5d0] sm:$0xff]
        %v6471 = vld [vmem:[#allocation3 + $0x5d8] sm:$0xff]
        %v6472 = vld [vmem:[#allocation3 + $0x5e0] sm:$0xff]
        %v6473 = vld [vmem:[#allocation3 + $0x5e8] sm:$0xff]
        %v6474 = vld [vmem:[#allocation3 + $0x5f0] sm:$0xff]
        %v6475 = vld [vmem:[#allocation3 + $0x5f8] sm:$0xff]
        %v6476 = vld [vmem:[#allocation3 + $0x600] sm:$0xff]
        %v6477 = vld [vmem:[#allocation3 + $0x608] sm:$0xff]
        %v6478 = vld [vmem:[#allocation3 + $0x610] sm:$0xff]
        %v6479 = vld [vmem:[#allocation3 + $0x618] sm:$0xff]
        %v6480 = vld [vmem:[#allocation3 + $0x620] sm:$0xff]
        %v6481 = vld [vmem:[#allocation3 + $0x628] sm:$0xff]
        %v6482 = vld [vmem:[#allocation3 + $0x630] sm:$0xff]
        %v6483 = vld [vmem:[#allocation3 + $0x638] sm:$0xff]
        %v6484 = vld [vmem:[#allocation3 + $0x640] sm:$0xff]
        %v6485 = vld [vmem:[#allocation3 + $0x648] sm:$0xff]
        %v6486 = vld [vmem:[#allocation3 + $0x650] sm:$0xff]
        %v6487 = vld [vmem:[#allocation3 + $0x658] sm:$0xff]
        %v6488 = vld [vmem:[#allocation3 + $0x660] sm:$0xff]
        %v6489 = vld [vmem:[#allocation3 + $0x668] sm:$0xff]
        %v6490 = vld [vmem:[#allocation3 + $0x670] sm:$0xff]
        %v6491 = vld [vmem:[#allocation3 + $0x678] sm:$0xff]
        %v6492 = vld [vmem:[#allocation3 + $0x680] sm:$0xff]
        %v6493 = vld [vmem:[#allocation3 + $0x688] sm:$0xff]
        %v6494 = vld [vmem:[#allocation3 + $0x690] sm:$0xff]
        %v6495 = vld [vmem:[#allocation3 + $0x698] sm:$0xff]
        %v6496 = vld [vmem:[#allocation3 + $0x6a0] sm:$0xff]
        %v6497 = vld [vmem:[#allocation3 + $0x6a8] sm:$0xff]
        %v6498 = vld [vmem:[#allocation3 + $0x6b0] sm:$0xff]
        %v6499 = vld [vmem:[#allocation3 + $0x6b8] sm:$0xff]
        %v6500 = vld [vmem:[%s3863] sm:$0xff]
        %v6501 = vld [vmem:[%s3863 + $0x8] sm:$0xff]
        %v6502 = vld [vmem:[%s3863 + $0x10] sm:$0xff]
        %v6503 = vld [vmem:[%s3863 + $0x18] sm:$0xff]
        %v6504 = vld [vmem:[%s3863 + $0x20] sm:$0xff]
        %v6505 = vld [vmem:[%s3863 + $0x28] sm:$0xff]
        %v6506 = vld [vmem:[%s3863 + $0x30] sm:$0xff]
        %v6507 = vld [vmem:[%s3863 + $0x38] sm:$0xff]
        %v6508 = vld [vmem:[%s3863 + $0x40] sm:$0xff]
        %v6509 = vld [vmem:[%s3863 + $0x48] sm:$0xff]
        %v6510 = vld [vmem:[%s3863 + $0x50] sm:$0xff]
        %v6511 = vld [vmem:[%s3863 + $0x58] sm:$0xff]
        %v6512 = vld [vmem:[%s3863 + $0x60] sm:$0xff]
        %v6513 = vld [vmem:[%s3863 + $0x68] sm:$0xff]
        %v6514 = vld [vmem:[%s3863 + $0x70] sm:$0xff]
        %v6515 = vld [vmem:[%s3863 + $0x78] sm:$0xff]
        %v6516 = vld [vmem:[%s3863 + $0x80] sm:$0xff]
        %v6517 = vld [vmem:[%s3863 + $0x88] sm:$0xff]
        %v6518 = vld [vmem:[%s3863 + $0x90] sm:$0xff]
        %v6519 = vld [vmem:[%s3863 + $0x98] sm:$0xff]
        %v6520 = vld [vmem:[%s3863 + $0xa0] sm:$0xff]
        %v6521 = vld [vmem:[%s3863 + $0xa8] sm:$0xff]
        %v6522 = vld [vmem:[%s3863 + $0xb0] sm:$0xff]
        %v6523 = vld [vmem:[%s3863 + $0xb8] sm:$0xff]
        %v6524 = vld [vmem:[%s3863 + $0xc0] sm:$0xff]
        %v6525 = vld [vmem:[%s3863 + $0xc8] sm:$0xff]
        %v6526 = vld [vmem:[%s3863 + $0xd0] sm:$0xff]
        %v6527 = vld [vmem:[%s3863 + $0xd8] sm:$0xff]
        %v6528 = vld [vmem:[%s3863 + $0xe0] sm:$0xff]
        %v6529 = vld [vmem:[%s3863 + $0xe8] sm:$0xff]
        %v6530 = vld [vmem:[%s3863 + $0xf0] sm:$0xff]
        %v6531 = vld [vmem:[%s3863 + $0xf8] sm:$0xff]
        %v6532 = vld [vmem:[%s3863 + $0x100] sm:$0xff]
        %v6533 = vld [vmem:[%s3863 + $0x108] sm:$0xff]
        %v6534 = vld [vmem:[%s3863 + $0x110] sm:$0xff]
        %v6535 = vld [vmem:[%s3863 + $0x118] sm:$0xff]
        %v6536 = vld [vmem:[%s3863 + $0x120] sm:$0xff]
        %v6537 = vld [vmem:[%s3863 + $0x128] sm:$0xff]
        %v6538 = vld [vmem:[%s3863 + $0x130] sm:$0xff]
        %v6539 = vld [vmem:[%s3863 + $0x138] sm:$0xff]
        %v6540 = vld [vmem:[%s3863 + $0x140] sm:$0xff]
        %v6541 = vld [vmem:[%s3863 + $0x148] sm:$0xff]
        %v6542 = vld [vmem:[%s3863 + $0x150] sm:$0xff]
        %v6543 = vld [vmem:[%s3863 + $0x158] sm:$0xff]
        %v6544 = vld [vmem:[%s3863 + $0x160] sm:$0xff]
        %v6545 = vld [vmem:[%s3863 + $0x168] sm:$0xff]
        %v6546 = vld [vmem:[%s3863 + $0x170] sm:$0xff]
        %v6547 = vld [vmem:[%s3863 + $0x178] sm:$0xff]
        %v6548 = vld [vmem:[%s3863 + $0x180] sm:$0xff]
        %v6549 = vld [vmem:[%s3863 + $0x188] sm:$0xff]
        %v6550 = vld [vmem:[%s3863 + $0x190] sm:$0xff]
        %v6551 = vld [vmem:[%s3863 + $0x198] sm:$0xff]
        %v6552 = vld [vmem:[%s3863 + $0x1a0] sm:$0xff]
        %v6553 = vld [vmem:[%s3863 + $0x1a8] sm:$0xff]
        %v6554 = vld [vmem:[%s3863 + $0x1b0] sm:$0xff]
        %v6555 = vld [vmem:[%s3863 + $0x1b8] sm:$0xff]
        %v6556 = vld [vmem:[%s3863 + $0x1c0] sm:$0xff]
        %v6557 = vld [vmem:[%s3863 + $0x1c8] sm:$0xff]
        %v6558 = vld [vmem:[%s3863 + $0x1d0] sm:$0xff]
        %v6559 = vld [vmem:[%s3863 + $0x1d8] sm:$0xff]
        %v6560 = vld [vmem:[%s3863 + $0x1e0] sm:$0xff]
        %v6561 = vld [vmem:[%s3863 + $0x1e8] sm:$0xff]
        %v6562 = vld [vmem:[%s3863 + $0x1f0] sm:$0xff]
        %v6563 = vld [vmem:[%s3863 + $0x1f8] sm:$0xff]
        %v6564 = vld [vmem:[%s3863 + $0x200] sm:$0xff]
        %v6565 = vld [vmem:[%s3863 + $0x208] sm:$0xff]
        %v6566 = vld [vmem:[%s3863 + $0x210] sm:$0xff]
        %v6567 = vld [vmem:[%s3863 + $0x218] sm:$0xff]
        %v6568 = vld [vmem:[%s3863 + $0x220] sm:$0xff]
        %v6569 = vld [vmem:[%s3863 + $0x228] sm:$0xff]
        %v6570 = vld [vmem:[%s3863 + $0x230] sm:$0xff]
        %v6571 = vld [vmem:[%s3863 + $0x238] sm:$0xff]
        %v6572 = vld [vmem:[%s3863 + $0x240] sm:$0xff]
        %v6573 = vld [vmem:[%s3863 + $0x248] sm:$0xff]
        %v6574 = vld [vmem:[%s3863 + $0x250] sm:$0xff]
        %v6575 = vld [vmem:[%s3863 + $0x258] sm:$0xff]
        %v6576 = vld [vmem:[%s3863 + $0x260] sm:$0xff]
        %v6577 = vld [vmem:[%s3863 + $0x268] sm:$0xff]
        %v6578 = vld [vmem:[%s3863 + $0x270] sm:$0xff]
        %v6579 = vld [vmem:[%s3863 + $0x278] sm:$0xff]
        %v6580 = vld [vmem:[%s3863 + $0x280] sm:$0xff]
        %v6581 = vld [vmem:[%s3863 + $0x288] sm:$0xff]
        %v6582 = vld [vmem:[%s3863 + $0x290] sm:$0xff]
        %v6583 = vld [vmem:[%s3863 + $0x298] sm:$0xff]
        %v6584 = vld [vmem:[%s3863 + $0x2a0] sm:$0xff]
        %v6585 = vld [vmem:[%s3863 + $0x2a8] sm:$0xff]
        %v6586 = vld [vmem:[%s3863 + $0x2b0] sm:$0xff]
        %v6587 = vld [vmem:[%s3863 + $0x2b8] sm:$0xff]
        %v6588 = vld [vmem:[%s3863 + $0x2c0] sm:$0xff]
        %v6589 = vld [vmem:[%s3863 + $0x2c8] sm:$0xff]
        %v6590 = vld [vmem:[%s3863 + $0x2d0] sm:$0xff]
        %v6591 = vld [vmem:[%s3863 + $0x2d8] sm:$0xff]
        %v6592 = vld [vmem:[%s3863 + $0x2e0] sm:$0xff]
        %v6593 = vld [vmem:[%s3863 + $0x2e8] sm:$0xff]
        %v6594 = vld [vmem:[%s3863 + $0x2f0] sm:$0xff]
        %v6595 = vld [vmem:[%s3863 + $0x2f8] sm:$0xff]
        %v6596 = vld [vmem:[%s3863 + $0x300] sm:$0xff]
        %v6597 = vld [vmem:[%s3863 + $0x308] sm:$0xff]
        %v6598 = vld [vmem:[%s3863 + $0x310] sm:$0xff]
        %v6599 = vld [vmem:[%s3863 + $0x318] sm:$0xff]
        %v6600 = vld [vmem:[%s3863 + $0x320] sm:$0xff]
        %v6601 = vld [vmem:[%s3863 + $0x328] sm:$0xff]
        %v6602 = vld [vmem:[%s3863 + $0x330] sm:$0xff]
        %v6603 = vld [vmem:[%s3863 + $0x338] sm:$0xff]
        %v6604 = vld [vmem:[%s3863 + $0x340] sm:$0xff]
        %v6605 = vld [vmem:[%s3863 + $0x348] sm:$0xff]
        %v6606 = vld [vmem:[%s3863 + $0x350] sm:$0xff]
        %v6607 = vld [vmem:[%s3863 + $0x358] sm:$0xff]
        %v6608 = vld [vmem:[%s3863 + $0x360] sm:$0xff]
        %v6609 = vld [vmem:[%s3863 + $0x368] sm:$0xff]
        %v6610 = vld [vmem:[%s3863 + $0x370] sm:$0xff]
        %v6611 = vld [vmem:[%s3863 + $0x378] sm:$0xff]
        %v6612 = vld [vmem:[%s3863 + $0x380] sm:$0xff]
        %v6613 = vld [vmem:[%s3863 + $0x388] sm:$0xff]
        %v6614 = vld [vmem:[%s3863 + $0x390] sm:$0xff]
        %v6615 = vld [vmem:[%s3863 + $0x398] sm:$0xff]
        %v6616 = vld [vmem:[%s3863 + $0x3a0] sm:$0xff]
        %v6617 = vld [vmem:[%s3863 + $0x3a8] sm:$0xff]
        %v6618 = vld [vmem:[%s3863 + $0x3b0] sm:$0xff]
        %v6619 = vld [vmem:[%s3863 + $0x3b8] sm:$0xff]
        %v6620 = vld [vmem:[%s3863 + $0x3c0] sm:$0xff]
        %v6621 = vld [vmem:[%s3863 + $0x3c8] sm:$0xff]
        %v6622 = vld [vmem:[%s3863 + $0x3d0] sm:$0xff]
        %v6623 = vld [vmem:[%s3863 + $0x3d8] sm:$0xff]
        %v6624 = vld [vmem:[%s3863 + $0x3e0] sm:$0xff]
        %v6625 = vld [vmem:[%s3863 + $0x3e8] sm:$0xff]
        %v6626 = vld [vmem:[%s3863 + $0x3f0] sm:$0xff]
        %v6627 = vld [vmem:[%s3863 + $0x3f8] sm:$0xff]
        %v6628 = vld [vmem:[%s3863 + $0x400] sm:$0xff]
        %v6629 = vld [vmem:[%s3863 + $0x408] sm:$0xff]
        %v6630 = vld [vmem:[%s3863 + $0x410] sm:$0xff]
        %v6631 = vld [vmem:[%s3863 + $0x418] sm:$0xff]
        %v6632 = vld [vmem:[%s3863 + $0x420] sm:$0xff]
        %v6633 = vld [vmem:[%s3863 + $0x428] sm:$0xff]
        %v6634 = vld [vmem:[%s3863 + $0x430] sm:$0xff]
        %v6635 = vld [vmem:[%s3863 + $0x438] sm:$0xff]
        %v6636 = vld [vmem:[%s3863 + $0x440] sm:$0xff]
        %v6637 = vld [vmem:[%s3863 + $0x448] sm:$0xff]
        %v6638 = vld [vmem:[%s3863 + $0x450] sm:$0xff]
        %v6639 = vld [vmem:[%s3863 + $0x458] sm:$0xff]
        %v6640 = vld [vmem:[%s3863 + $0x460] sm:$0xff]
        %v6641 = vld [vmem:[%s3863 + $0x468] sm:$0xff]
        %v6642 = vld [vmem:[%s3863 + $0x470] sm:$0xff]
        %v6643 = vld [vmem:[%s3863 + $0x478] sm:$0xff]
        %v6644 = vld [vmem:[%s3863 + $0x480] sm:$0xff]
        %v6645 = vld [vmem:[%s3863 + $0x488] sm:$0xff]
        %v6646 = vld [vmem:[%s3863 + $0x490] sm:$0xff]
        %v6647 = vld [vmem:[%s3863 + $0x498] sm:$0xff]
        %v6648 = vld [vmem:[%s3863 + $0x4a0] sm:$0xff]
        %v6649 = vld [vmem:[%s3863 + $0x4a8] sm:$0xff]
        %v6650 = vld [vmem:[%s3863 + $0x4b0] sm:$0xff]
        %v6651 = vld [vmem:[%s3863 + $0x4b8] sm:$0xff]
        %v6652 = vld [vmem:[%s3863 + $0x4c0] sm:$0xff]
        %v6653 = vld [vmem:[%s3863 + $0x4c8] sm:$0xff]
        %v6654 = vld [vmem:[%s3863 + $0x4d0] sm:$0xff]
        %v6655 = vld [vmem:[%s3863 + $0x4d8] sm:$0xff]
        %v6656 = vld [vmem:[%s3863 + $0x4e0] sm:$0xff]
        %v6657 = vld [vmem:[%s3863 + $0x4e8] sm:$0xff]
        %v6658 = vld [vmem:[%s3863 + $0x4f0] sm:$0xff]
        %v6659 = vld [vmem:[%s3863 + $0x4f8] sm:$0xff]
        %v6660 = vld [vmem:[%s3863 + $0x500] sm:$0xff]
        %v6661 = vld [vmem:[%s3863 + $0x508] sm:$0xff]
        %v6662 = vld [vmem:[%s3863 + $0x510] sm:$0xff]
        %v6663 = vld [vmem:[%s3863 + $0x518] sm:$0xff]
        %v6664 = vld [vmem:[%s3863 + $0x520] sm:$0xff]
        %v6665 = vld [vmem:[%s3863 + $0x528] sm:$0xff]
        %v6666 = vld [vmem:[%s3863 + $0x530] sm:$0xff]
        %v6667 = vld [vmem:[%s3863 + $0x538] sm:$0xff]
        %v6668 = vld [vmem:[%s3863 + $0x540] sm:$0xff]
        %v6669 = vld [vmem:[%s3863 + $0x548] sm:$0xff]
        %v6670 = vld [vmem:[%s3863 + $0x550] sm:$0xff]
        %v6671 = vld [vmem:[%s3863 + $0x558] sm:$0xff]
        %v6672 = vld [vmem:[%s3863 + $0x560] sm:$0xff]
        %v6673 = vld [vmem:[%s3863 + $0x568] sm:$0xff]
        %v6674 = vld [vmem:[%s3863 + $0x570] sm:$0xff]
        %v6675 = vld [vmem:[%s3863 + $0x578] sm:$0xff]
        %v6676 = vld [vmem:[%s3863 + $0x580] sm:$0xff]
        %v6677 = vld [vmem:[%s3863 + $0x588] sm:$0xff]
        %v6678 = vld [vmem:[%s3863 + $0x590] sm:$0xff]
        %v6679 = vld [vmem:[%s3863 + $0x598] sm:$0xff]
        %v6680 = vld [vmem:[%s3863 + $0x5a0] sm:$0xff]
        %v6681 = vld [vmem:[%s3863 + $0x5a8] sm:$0xff]
        %v6682 = vld [vmem:[%s3863 + $0x5b0] sm:$0xff]
        %v6683 = vld [vmem:[%s3863 + $0x5b8] sm:$0xff]
        %v6684 = vld [vmem:[%s3863 + $0x5c0] sm:$0xff]
        %v6685 = vld [vmem:[%s3863 + $0x5c8] sm:$0xff]
        %v6686 = vld [vmem:[%s3863 + $0x5d0] sm:$0xff]
        %v6687 = vld [vmem:[%s3863 + $0x5d8] sm:$0xff]
        %v6688 = vld [vmem:[%s3863 + $0x5e0] sm:$0xff]
        %v6689 = vld [vmem:[%s3863 + $0x5e8] sm:$0xff]
        %v6690 = vld [vmem:[%s3863 + $0x5f0] sm:$0xff]
        %v6691 = vld [vmem:[%s3863 + $0x5f8] sm:$0xff]
        %6692 = vmatprep.subr.mxu0 %v6501
        %6693 = vmatpush1.msra.mxu0 %v6500
        %6694 = vmatprep.subr.mxu0 %v6503
        %6695 = vmatpush1.msra.mxu0 %v6502
        %6696 = vmatprep.subr.mxu0 %v6505
        %6697 = vmatpush1.msra.mxu0 %v6504
        %6698 = vmatprep.subr.mxu0 %v6507
        %6699 = vmatpush1.msra.mxu0 %v6506
        %6700 = vmatprep.subr.mxu0 %v6509
        %6701 = vmatpush1.msra.mxu0 %v6508
        %6702 = vmatprep.subr.mxu0 %v6511
        %6703 = vmatpush1.msra.mxu0 %v6510
        %6704 = vmatprep.subr.mxu0 %v6513
        %6705 = vmatpush1.msra.mxu0 %v6512
        %6706 = vmatprep.subr.mxu0 %v6515
        %6707 = vmatpush1.msra.mxu0 %v6514
        %6708 = vmatprep.subr.mxu0 %v6517
        %6709 = vmatpush1.msra.mxu0 %v6516
        %6710 = vmatprep.subr.mxu0 %v6519
        %6711 = vmatpush1.msra.mxu0 %v6518
        %6712 = vmatprep.subr.mxu0 %v6521
        %6713 = vmatpush1.msra.mxu0 %v6520
        %6714 = vmatprep.subr.mxu0 %v6523
        %6715 = vmatpush1.msra.mxu0 %v6522
        %6716 = vmatprep.subr.mxu0 %v6525
        %6717 = vmatpush1.msra.mxu0 %v6524
        %6718 = vmatprep.subr.mxu0 %v6527
        %6719 = vmatpush1.msra.mxu0 %v6526
        %6720 = vmatprep.subr.mxu0 %v6529
        %6721 = vmatpush1.msra.mxu0 %v6528
        %6722 = vmatprep.subr.mxu0 %v6531
        %6723 = vmatpush1.msra.mxu0 %v6530
        %6724 = vmatprep.subr.mxu0 %v6533
        %6725 = vmatpush1.msra.mxu0 %v6532
        %6726 = vmatprep.subr.mxu0 %v6535
        %6727 = vmatpush1.msra.mxu0 %v6534
        %6728 = vmatprep.subr.mxu0 %v6537
        %6729 = vmatpush1.msra.mxu0 %v6536
        %6730 = vmatprep.subr.mxu0 %v6539
        %6731 = vmatpush1.msra.mxu0 %v6538
        %6732 = vmatprep.subr.mxu0 %v6541
        %6733 = vmatpush1.msra.mxu0 %v6540
        %6734 = vmatprep.subr.mxu0 %v6543
        %6735 = vmatpush1.msra.mxu0 %v6542
        %6736 = vmatprep.subr.mxu0 %v6545
        %6737 = vmatpush1.msra.mxu0 %v6544
        %6738 = vmatprep.subr.mxu0 %v6547
        %6739 = vmatpush1.msra.mxu0 %v6546
        %6740 = vmatprep.subr.mxu0 %v6549
        %6741 = vmatpush1.msra.mxu0 %v6548
        %6742 = vmatprep.subr.mxu0 %v6551
        %6743 = vmatpush1.msra.mxu0 %v6550
        %6744 = vmatprep.subr.mxu0 %v6553
        %6745 = vmatpush1.msra.mxu0 %v6552
        %6746 = vmatprep.subr.mxu0 %v6555
        %6747 = vmatpush1.msra.mxu0 %v6554
        %6748 = vmatprep.subr.mxu0 %v6557
        %6749 = vmatpush1.msra.mxu0 %v6556
        %6750 = vmatprep.subr.mxu0 %v6559
        %6751 = vmatpush1.msra.mxu0 %v6558
        %6752 = vmatprep.subr.mxu0 %v6561
        %6753 = vmatpush1.msra.mxu0 %v6560
        %6754 = vmatprep.subr.mxu0 %v6563
        %6755 = vmatpush1.msra.mxu0 %v6562
        %6756 = vmatprep.mubr.f32.mxu0 %v6405
        %6757 = vmatmul.mubr.f32.gmra.mrb[0].mxu0 %v6404
        %v6758 = vpop.f32.mrb[0].mxu0
        %v6759 = vadd.f32 0.0, %v6758
        %v6760 = vpop.f32.mrb[0].mxu0
        %v6761 = vadd.f32 0.0, %v6760
        %6762 = vmatprep.mubr.f32.mxu0 %v6411
        %6763 = vmatmul.mubr.f32.gmra.mrb[0].mxu0 %v6410
        %v6764 = vpop.f32.mrb[0].mxu0
        %v6765 = vadd.f32 0.0, %v6764
        %v6766 = vpop.f32.mrb[0].mxu0
        %v6767 = vadd.f32 0.0, %v6766
        %6768 = vmatprep.mubr.f32.mxu0 %v6417
        %6769 = vmatmul.mubr.f32.gmra.mrb[0].mxu0 %v6416
        %v6770 = vpop.f32.mrb[0].mxu0
        %v6771 = vadd.f32 0.0, %v6770
        %v6772 = vpop.f32.mrb[0].mxu0
        %v6773 = vadd.f32 0.0, %v6772
        %6774 = vmatprep.mubr.f32.mxu0 %v6423
        %6775 = vmatmul.mubr.f32.gmra.mrb[0].mxu0 %v6422
        %v6776 = vpop.f32.mrb[0].mxu0
        %v6777 = vadd.f32 0.0, %v6776
        %v6778 = vpop.f32.mrb[0].mxu0
        %v6779 = vadd.f32 0.0, %v6778
        %6780 = vmatprep.mubr.f32.mxu0 %v6429
        %6781 = vmatmul.mubr.f32.gmra.mrb[0].mxu0 %v6428
        %v6782 = vpop.f32.mrb[0].mxu0
        %v6783 = vadd.f32 0.0, %v6782
        %v6784 = vpop.f32.mrb[0].mxu0
        %v6785 = vadd.f32 0.0, %v6784
        %6786 = vmatprep.mubr.f32.mxu0 %v6435
        %6787 = vmatmul.mubr.f32.gmra.mrb[0].mxu0 %v6434
        %v6788 = vpop.f32.mrb[0].mxu0
        %v6789 = vadd.f32 0.0, %v6788
        %v6790 = vpop.f32.mrb[0].mxu0
        %v6791 = vadd.f32 0.0, %v6790
        %6792 = vmatprep.mubr.f32.mxu0 %v6441
        %6793 = vmatmul.mubr.f32.gmra.mrb[0].mxu0 %v6440
        %v6794 = vpop.f32.mrb[0].mxu0
        %v6795 = vadd.f32 0.0, %v6794
        %v6796 = vpop.f32.mrb[0].mxu0
        %v6797 = vadd.f32 0.0, %v6796
        %6798 = vmatprep.mubr.f32.mxu0 %v6447
        %6799 = vmatmul.mubr.f32.gmra.mrb[0].mxu0 %v6446
        %v6800 = vpop.f32.mrb[0].mxu0
        %v6801 = vadd.f32 0.0, %v6800
        %v6802 = vpop.f32.mrb[0].mxu0
        %v6803 = vadd.f32 0.0, %v6802
        %6804 = vmatprep.mubr.f32.mxu0 %v6453
        %6805 = vmatmul.mubr.f32.gmra.mrb[0].mxu0 %v6452
        %v6806 = vpop.f32.mrb[0].mxu0
        %v6807 = vadd.f32 0.0, %v6806
        %v6808 = vpop.f32.mrb[0].mxu0
        %v6809 = vadd.f32 0.0, %v6808
        %6810 = vmatprep.mubr.f32.mxu0 %v6459
        %6811 = vmatmul.mubr.f32.gmra.mrb[0].mxu0 %v6458
        %v6812 = vpop.f32.mrb[0].mxu0
        %v6813 = vadd.f32 0.0, %v6812
        %v6814 = vpop.f32.mrb[0].mxu0
        %v6815 = vadd.f32 0.0, %v6814
        %6816 = vmatprep.mubr.f32.mxu0 %v6465
        %6817 = vmatmul.mubr.f32.gmra.mrb[0].mxu0 %v6464
        %v6818 = vpop.f32.mrb[0].mxu0
        %v6819 = vadd.f32 0.0, %v6818
        %v6820 = vpop.f32.mrb[0].mxu0
        %v6821 = vadd.f32 0.0, %v6820
        %6822 = vmatprep.mubr.f32.mxu0 %v6471
        %6823 = vmatmul.mubr.f32.gmra.mrb[0].mxu0 %v6470
        %v6824 = vpop.f32.mrb[0].mxu0
        %v6825 = vadd.f32 0.0, %v6824
        %v6826 = vpop.f32.mrb[0].mxu0
        %v6827 = vadd.f32 0.0, %v6826
        %6828 = vmatprep.mubr.f32.mxu0 %v6477
        %6829 = vmatmul.mubr.f32.gmra.mrb[0].mxu0 %v6476
        %v6830 = vpop.f32.mrb[0].mxu0
        %v6831 = vadd.f32 0.0, %v6830
        %v6832 = vpop.f32.mrb[0].mxu0
        %v6833 = vadd.f32 0.0, %v6832
        %6834 = vmatprep.mubr.f32.mxu0 %v6483
        %6835 = vmatmul.mubr.f32.gmra.mrb[0].mxu0 %v6482
        %v6836 = vpop.f32.mrb[0].mxu0
        %v6837 = vadd.f32 0.0, %v6836
        %v6838 = vpop.f32.mrb[0].mxu0
        %v6839 = vadd.f32 0.0, %v6838
        %6840 = vmatprep.mubr.f32.mxu0 %v6489
        %6841 = vmatmul.mubr.f32.gmra.mrb[0].mxu0 %v6488
        %v6842 = vpop.f32.mrb[0].mxu0
        %v6843 = vadd.f32 0.0, %v6842
        %v6844 = vpop.f32.mrb[0].mxu0
        %v6845 = vadd.f32 0.0, %v6844
        %6846 = vmatprep.mubr.f32.mxu0 %v6495
        %6847 = vmatmul.mubr.f32.gmra.mrb[0].mxu0 %v6494
        %v6848 = vpop.f32.mrb[0].mxu0
        %v6849 = vadd.f32 0.0, %v6848
        %v6850 = vpop.f32.mrb[0].mxu0
        %v6851 = vadd.f32 0.0, %v6850
        %6852 = vdwg.mxu0
        %6853 = vmatprep.subr.mxu0 %v6565
        %6854 = vmatpush1.msra.mxu0 %v6564
        %6855 = vmatprep.subr.mxu0 %v6567
        %6856 = vmatpush1.msra.mxu0 %v6566
        %6857 = vmatprep.subr.mxu0 %v6569
        %6858 = vmatpush1.msra.mxu0 %v6568
        %6859 = vmatprep.subr.mxu0 %v6571
        %6860 = vmatpush1.msra.mxu0 %v6570
        %6861 = vmatprep.subr.mxu0 %v6573
        %6862 = vmatpush1.msra.mxu0 %v6572
        %6863 = vmatprep.subr.mxu0 %v6575
        %6864 = vmatpush1.msra.mxu0 %v6574
        %6865 = vmatprep.subr.mxu0 %v6577
        %6866 = vmatpush1.msra.mxu0 %v6576
        %6867 = vmatprep.subr.mxu0 %v6579
        %6868 = vmatpush1.msra.mxu0 %v6578
        %6869 = vmatprep.subr.mxu0 %v6581
        %6870 = vmatpush1.msra.mxu0 %v6580
        %6871 = vmatprep.subr.mxu0 %v6583
        %6872 = vmatpush1.msra.mxu0 %v6582
        %6873 = vmatprep.subr.mxu0 %v6585
        %6874 = vmatpush1.msra.mxu0 %v6584
        %6875 = vmatprep.subr.mxu0 %v6587
        %6876 = vmatpush1.msra.mxu0 %v6586
        %6877 = vmatprep.subr.mxu0 %v6589
        %6878 = vmatpush1.msra.mxu0 %v6588
        %6879 = vmatprep.subr.mxu0 %v6591
        %6880 = vmatpush1.msra.mxu0 %v6590
        %6881 = vmatprep.subr.mxu0 %v6593
        %6882 = vmatpush1.msra.mxu0 %v6592
        %6883 = vmatprep.subr.mxu0 %v6595
        %6884 = vmatpush1.msra.mxu0 %v6594
        %6885 = vmatprep.subr.mxu0 %v6597
        %6886 = vmatpush1.msra.mxu0 %v6596
        %6887 = vmatprep.subr.mxu0 %v6599
        %6888 = vmatpush1.msra.mxu0 %v6598
        %6889 = vmatprep.subr.mxu0 %v6601
        %6890 = vmatpush1.msra.mxu0 %v6600
        %6891 = vmatprep.subr.mxu0 %v6603
        %6892 = vmatpush1.msra.mxu0 %v6602
        %6893 = vmatprep.subr.mxu0 %v6605
        %6894 = vmatpush1.msra.mxu0 %v6604
        %6895 = vmatprep.subr.mxu0 %v6607
        %6896 = vmatpush1.msra.mxu0 %v6606
        %6897 = vmatprep.subr.mxu0 %v6609
        %6898 = vmatpush1.msra.mxu0 %v6608
        %6899 = vmatprep.subr.mxu0 %v6611
        %6900 = vmatpush1.msra.mxu0 %v6610
        %6901 = vmatprep.subr.mxu0 %v6613
        %6902 = vmatpush1.msra.mxu0 %v6612
        %6903 = vmatprep.subr.mxu0 %v6615
        %6904 = vmatpush1.msra.mxu0 %v6614
        %6905 = vmatprep.subr.mxu0 %v6617
        %6906 = vmatpush1.msra.mxu0 %v6616
        %6907 = vmatprep.subr.mxu0 %v6619
        %6908 = vmatpush1.msra.mxu0 %v6618
        %6909 = vmatprep.subr.mxu0 %v6621
        %6910 = vmatpush1.msra.mxu0 %v6620
        %6911 = vmatprep.subr.mxu0 %v6623
        %6912 = vmatpush1.msra.mxu0 %v6622
        %6913 = vmatprep.subr.mxu0 %v6625
        %6914 = vmatpush1.msra.mxu0 %v6624
        %6915 = vmatprep.subr.mxu0 %v6627
        %6916 = vmatpush1.msra.mxu0 %v6626
        %6917 = vmatprep.mubr.f32.mxu0 %v6407
        %6918 = vmatmul.mubr.f32.gmra.mrb[0].mxu0 %v6406
        %v6919 = vpop.f32.mrb[0].mxu0
        %v6920 = vadd.f32 %v6759, %v6919
        %v6921 = vpop.f32.mrb[0].mxu0
        %v6922 = vadd.f32 %v6761, %v6921
        %6923 = vmatprep.mubr.f32.mxu0 %v6413
        %6924 = vmatmul.mubr.f32.gmra.mrb[0].mxu0 %v6412
        %v6925 = vpop.f32.mrb[0].mxu0
        %v6926 = vadd.f32 %v6765, %v6925
        %v6927 = vpop.f32.mrb[0].mxu0
        %v6928 = vadd.f32 %v6767, %v6927
        %6929 = vmatprep.mubr.f32.mxu0 %v6419
        %6930 = vmatmul.mubr.f32.gmra.mrb[0].mxu0 %v6418
        %v6931 = vpop.f32.mrb[0].mxu0
        %v6932 = vadd.f32 %v6771, %v6931
        %v6933 = vpop.f32.mrb[0].mxu0
        %v6934 = vadd.f32 %v6773, %v6933
        %6935 = vmatprep.mubr.f32.mxu0 %v6425
        %6936 = vmatmul.mubr.f32.gmra.mrb[0].mxu0 %v6424
        %v6937 = vpop.f32.mrb[0].mxu0
        %v6938 = vadd.f32 %v6777, %v6937
        %v6939 = vpop.f32.mrb[0].mxu0
        %v6940 = vadd.f32 %v6779, %v6939
        %6941 = vmatprep.mubr.f32.mxu0 %v6431
        %6942 = vmatmul.mubr.f32.gmra.mrb[0].mxu0 %v6430
        %v6943 = vpop.f32.mrb[0].mxu0
        %v6944 = vadd.f32 %v6783, %v6943
        %v6945 = vpop.f32.mrb[0].mxu0
        %v6946 = vadd.f32 %v6785, %v6945
        %6947 = vmatprep.mubr.f32.mxu0 %v6437
        %6948 = vmatmul.mubr.f32.gmra.mrb[0].mxu0 %v6436
        %v6949 = vpop.f32.mrb[0].mxu0
        %v6950 = vadd.f32 %v6789, %v6949
        %v6951 = vpop.f32.mrb[0].mxu0
        %v6952 = vadd.f32 %v6791, %v6951
        %6953 = vmatprep.mubr.f32.mxu0 %v6443
        %6954 = vmatmul.mubr.f32.gmra.mrb[0].mxu0 %v6442
        %v6955 = vpop.f32.mrb[0].mxu0
        %v6956 = vadd.f32 %v6795, %v6955
        %v6957 = vpop.f32.mrb[0].mxu0
        %v6958 = vadd.f32 %v6797, %v6957
        %6959 = vmatprep.mubr.f32.mxu0 %v6449
        %6960 = vmatmul.mubr.f32.gmra.mrb[0].mxu0 %v6448
        %v6961 = vpop.f32.mrb[0].mxu0
        %v6962 = vadd.f32 %v6801, %v6961
        %v6963 = vpop.f32.mrb[0].mxu0
        %v6964 = vadd.f32 %v6803, %v6963
        %6965 = vmatprep.mubr.f32.mxu0 %v6455
        %6966 = vmatmul.mubr.f32.gmra.mrb[0].mxu0 %v6454
        %v6967 = vpop.f32.mrb[0].mxu0
        %v6968 = vadd.f32 %v6807, %v6967
        %v6969 = vpop.f32.mrb[0].mxu0
        %v6970 = vadd.f32 %v6809, %v6969
        %6971 = vmatprep.mubr.f32.mxu0 %v6461
        %6972 = vmatmul.mubr.f32.gmra.mrb[0].mxu0 %v6460
        %v6973 = vpop.f32.mrb[0].mxu0
        %v6974 = vadd.f32 %v6813, %v6973
        %v6975 = vpop.f32.mrb[0].mxu0
        %v6976 = vadd.f32 %v6815, %v6975
        %6977 = vmatprep.mubr.f32.mxu0 %v6467
        %6978 = vmatmul.mubr.f32.gmra.mrb[0].mxu0 %v6466
        %v6979 = vpop.f32.mrb[0].mxu0
        %v6980 = vadd.f32 %v6819, %v6979
        %v6981 = vpop.f32.mrb[0].mxu0
        %v6982 = vadd.f32 %v6821, %v6981
        %6983 = vmatprep.mubr.f32.mxu0 %v6473
        %6984 = vmatmul.mubr.f32.gmra.mrb[0].mxu0 %v6472
        %v6985 = vpop.f32.mrb[0].mxu0
        %v6986 = vadd.f32 %v6825, %v6985
        %v6987 = vpop.f32.mrb[0].mxu0
        %v6988 = vadd.f32 %v6827, %v6987
        %6989 = vmatprep.mubr.f32.mxu0 %v6479
        %6990 = vmatmul.mubr.f32.gmra.mrb[0].mxu0 %v6478
        %v6991 = vpop.f32.mrb[0].mxu0
        %v6992 = vadd.f32 %v6831, %v6991
        %v6993 = vpop.f32.mrb[0].mxu0
        %v6994 = vadd.f32 %v6833, %v6993
        %6995 = vmatprep.mubr.f32.mxu0 %v6485
        %6996 = vmatmul.mubr.f32.gmra.mrb[0].mxu0 %v6484
        %v6997 = vpop.f32.mrb[0].mxu0
        %v6998 = vadd.f32 %v6837, %v6997
        %v6999 = vpop.f32.mrb[0].mxu0
        %v7000 = vadd.f32 %v6839, %v6999
        %7001 = vmatprep.mubr.f32.mxu0 %v6491
        %7002 = vmatmul.mubr.f32.gmra.mrb[0].mxu0 %v6490
        %v7003 = vpop.f32.mrb[0].mxu0
        %v7004 = vadd.f32 %v6843, %v7003
        %v7005 = vpop.f32.mrb[0].mxu0
        %v7006 = vadd.f32 %v6845, %v7005
        %7007 = vmatprep.mubr.f32.mxu0 %v6497
        %7008 = vmatmul.mubr.f32.gmra.mrb[0].mxu0 %v6496
        %v7009 = vpop.f32.mrb[0].mxu0
        %v7010 = vadd.f32 %v6849, %v7009
        %v7011 = vpop.f32.mrb[0].mxu0
        %v7012 = vadd.f32 %v6851, %v7011
        %7013 = vdwg.mxu0
        %7014 = vmatprep.subr.mxu0 %v6629
        %7015 = vmatpush1.msra.mxu0 %v6628
        %7016 = vmatprep.subr.mxu0 %v6631
        %7017 = vmatpush1.msra.mxu0 %v6630
        %7018 = vmatprep.subr.mxu0 %v6633
        %7019 = vmatpush1.msra.mxu0 %v6632
        %7020 = vmatprep.subr.mxu0 %v6635
        %7021 = vmatpush1.msra.mxu0 %v6634
        %7022 = vmatprep.subr.mxu0 %v6637
        %7023 = vmatpush1.msra.mxu0 %v6636
        %7024 = vmatprep.subr.mxu0 %v6639
        %7025 = vmatpush1.msra.mxu0 %v6638
        %7026 = vmatprep.subr.mxu0 %v6641
        %7027 = vmatpush1.msra.mxu0 %v6640
        %7028 = vmatprep.subr.mxu0 %v6643
        %7029 = vmatpush1.msra.mxu0 %v6642
        %7030 = vmatprep.subr.mxu0 %v6645
        %7031 = vmatpush1.msra.mxu0 %v6644
        %7032 = vmatprep.subr.mxu0 %v6647
        %7033 = vmatpush1.msra.mxu0 %v6646
        %7034 = vmatprep.subr.mxu0 %v6649
        %7035 = vmatpush1.msra.mxu0 %v6648
        %7036 = vmatprep.subr.mxu0 %v6651
        %7037 = vmatpush1.msra.mxu0 %v6650
        %7038 = vmatprep.subr.mxu0 %v6653
        %7039 = vmatpush1.msra.mxu0 %v6652
        %7040 = vmatprep.subr.mxu0 %v6655
        %7041 = vmatpush1.msra.mxu0 %v6654
        %7042 = vmatprep.subr.mxu0 %v6657
        %7043 = vmatpush1.msra.mxu0 %v6656
        %7044 = vmatprep.subr.mxu0 %v6659
        %7045 = vmatpush1.msra.mxu0 %v6658
        %7046 = vmatprep.subr.mxu0 %v6661
        %7047 = vmatpush1.msra.mxu0 %v6660
        %7048 = vmatprep.subr.mxu0 %v6663
        %7049 = vmatpush1.msra.mxu0 %v6662
        %7050 = vmatprep.subr.mxu0 %v6665
        %7051 = vmatpush1.msra.mxu0 %v6664
        %7052 = vmatprep.subr.mxu0 %v6667
        %7053 = vmatpush1.msra.mxu0 %v6666
        %7054 = vmatprep.subr.mxu0 %v6669
        %7055 = vmatpush1.msra.mxu0 %v6668
        %7056 = vmatprep.subr.mxu0 %v6671
        %7057 = vmatpush1.msra.mxu0 %v6670
        %7058 = vmatprep.subr.mxu0 %v6673
        %7059 = vmatpush1.msra.mxu0 %v6672
        %7060 = vmatprep.subr.mxu0 %v6675
        %7061 = vmatpush1.msra.mxu0 %v6674
        %7062 = vmatprep.subr.mxu0 %v6677
        %7063 = vmatpush1.msra.mxu0 %v6676
        %7064 = vmatprep.subr.mxu0 %v6679
        %7065 = vmatpush1.msra.mxu0 %v6678
        %7066 = vmatprep.subr.mxu0 %v6681
        %7067 = vmatpush1.msra.mxu0 %v6680
        %7068 = vmatprep.subr.mxu0 %v6683
        %7069 = vmatpush1.msra.mxu0 %v6682
        %7070 = vmatprep.subr.mxu0 %v6685
        %7071 = vmatpush1.msra.mxu0 %v6684
        %7072 = vmatprep.subr.mxu0 %v6687
        %7073 = vmatpush1.msra.mxu0 %v6686
        %7074 = vmatprep.subr.mxu0 %v6689
        %7075 = vmatpush1.msra.mxu0 %v6688
        %7076 = vmatprep.subr.mxu0 %v6691
        %7077 = vmatpush1.msra.mxu0 %v6690
        %7078 = vmatprep.mubr.f32.mxu0 %v6409
        %7079 = vmatmul.mubr.f32.gmra.mrb[0].mxu0 %v6408
        %v7080 = vpop.f32.mrb[0].mxu0
        %v7081 = vadd.f32 %v6920, %v7080
        %v7082 = vpop.f32.mrb[0].mxu0
        %v7083 = vadd.f32 %v6922, %v7082
        %7084 = vmatprep.mubr.f32.mxu0 %v6415
        %7085 = vmatmul.mubr.f32.gmra.mrb[0].mxu0 %v6414
        %v7086 = vpop.f32.mrb[0].mxu0
        %v7087 = vadd.f32 %v6926, %v7086
        %v7088 = vpop.f32.mrb[0].mxu0
        %v7089 = vadd.f32 %v6928, %v7088
        %7090 = vmatprep.mubr.f32.mxu0 %v6421
        %7091 = vmatmul.mubr.f32.gmra.mrb[0].mxu0 %v6420
        %v7092 = vpop.f32.mrb[0].mxu0
        %v7093 = vadd.f32 %v6932, %v7092
        %v7094 = vpop.f32.mrb[0].mxu0
        %v7095 = vadd.f32 %v6934, %v7094
        %7096 = vmatprep.mubr.f32.mxu0 %v6427
        %7097 = vmatmul.mubr.f32.gmra.mrb[0].mxu0 %v6426
        %v7098 = vpop.f32.mrb[0].mxu0
        %v7099 = vadd.f32 %v6938, %v7098
        %v7100 = vpop.f32.mrb[0].mxu0
        %v7101 = vadd.f32 %v6940, %v7100
        %7102 = vmatprep.mubr.f32.mxu0 %v6433
        %7103 = vmatmul.mubr.f32.gmra.mrb[0].mxu0 %v6432
        %v7104 = vpop.f32.mrb[0].mxu0
        %v7105 = vadd.f32 %v6944, %v7104
        %v7106 = vpop.f32.mrb[0].mxu0
        %v7107 = vadd.f32 %v6946, %v7106
        %7108 = vmatprep.mubr.f32.mxu0 %v6439
        %7109 = vmatmul.mubr.f32.gmra.mrb[0].mxu0 %v6438
        %v7110 = vpop.f32.mrb[0].mxu0
        %v7111 = vadd.f32 %v6950, %v7110
        %v7112 = vpop.f32.mrb[0].mxu0
        %v7113 = vadd.f32 %v6952, %v7112
        %7114 = vmatprep.mubr.f32.mxu0 %v6445
        %7115 = vmatmul.mubr.f32.gmra.mrb[0].mxu0 %v6444
        %v7116 = vpop.f32.mrb[0].mxu0
        %v7117 = vadd.f32 %v6956, %v7116
        %v7118 = vpop.f32.mrb[0].mxu0
        %v7119 = vadd.f32 %v6958, %v7118
        %7120 = vmatprep.mubr.f32.mxu0 %v6451
        %7121 = vmatmul.mubr.f32.gmra.mrb[0].mxu0 %v6450
        %v7122 = vpop.f32.mrb[0].mxu0
        %v7123 = vadd.f32 %v6962, %v7122
        %v7124 = vpop.f32.mrb[0].mxu0
        %v7125 = vadd.f32 %v6964, %v7124
        %7126 = vmatprep.mubr.f32.mxu0 %v6457
        %7127 = vmatmul.mubr.f32.gmra.mrb[0].mxu0 %v6456
        %v7128 = vpop.f32.mrb[0].mxu0
        %v7129 = vadd.f32 %v6968, %v7128
        %v7130 = vpop.f32.mrb[0].mxu0
        %v7131 = vadd.f32 %v6970, %v7130
        %7132 = vmatprep.mubr.f32.mxu0 %v6463
        %7133 = vmatmul.mubr.f32.gmra.mrb[0].mxu0 %v6462
        %v7134 = vpop.f32.mrb[0].mxu0
        %v7135 = vadd.f32 %v6974, %v7134
        %v7136 = vpop.f32.mrb[0].mxu0
        %v7137 = vadd.f32 %v6976, %v7136
        %7138 = vmatprep.mubr.f32.mxu0 %v6469
        %7139 = vmatmul.mubr.f32.gmra.mrb[0].mxu0 %v6468
        %v7140 = vpop.f32.mrb[0].mxu0
        %v7141 = vadd.f32 %v6980, %v7140
        %v7142 = vpop.f32.mrb[0].mxu0
        %v7143 = vadd.f32 %v6982, %v7142
        %7144 = vmatprep.mubr.f32.mxu0 %v6475
        %7145 = vmatmul.mubr.f32.gmra.mrb[0].mxu0 %v6474
        %v7146 = vpop.f32.mrb[0].mxu0
        %v7147 = vadd.f32 %v6986, %v7146
        %v7148 = vpop.f32.mrb[0].mxu0
        %v7149 = vadd.f32 %v6988, %v7148
        %7150 = vmatprep.mubr.f32.mxu0 %v6481
        %7151 = vmatmul.mubr.f32.gmra.mrb[0].mxu0 %v6480
        %v7152 = vpop.f32.mrb[0].mxu0
        %v7153 = vadd.f32 %v6992, %v7152
        %v7154 = vpop.f32.mrb[0].mxu0
        %v7155 = vadd.f32 %v6994, %v7154
        %7156 = vmatprep.mubr.f32.mxu0 %v6487
        %7157 = vmatmul.mubr.f32.gmra.mrb[0].mxu0 %v6486
        %v7158 = vpop.f32.mrb[0].mxu0
        %v7159 = vadd.f32 %v6998, %v7158
        %v7160 = vpop.f32.mrb[0].mxu0
        %v7161 = vadd.f32 %v7000, %v7160
        %7162 = vmatprep.mubr.f32.mxu0 %v6493
        %7163 = vmatmul.mubr.f32.gmra.mrb[0].mxu0 %v6492
        %v7164 = vpop.f32.mrb[0].mxu0
        %v7165 = vadd.f32 %v7004, %v7164
        %v7166 = vpop.f32.mrb[0].mxu0
        %v7167 = vadd.f32 %v7006, %v7166
        %7168 = vmatprep.mubr.f32.mxu0 %v6499
        %7169 = vmatmul.mubr.f32.gmra.mrb[0].mxu0 %v6498
        %v7170 = vpop.f32.mrb[0].mxu0
        %v7171 = vadd.f32 %v7010, %v7170
        %v7172 = vpop.f32.mrb[0].mxu0
        %v7173 = vadd.f32 %v7012, %v7172
        %7174 = vdwg.mxu0
        %v7175 = vadd.f32 %v6310, %v7081
        %v7176 = vadd.f32 %v6312, %v7083
        %v7177 = vadd.f32 %v6316, %v7087
        %v7178 = vadd.f32 %v6318, %v7089
        %v7179 = vadd.f32 %v6322, %v7093
        %v7180 = vadd.f32 %v6324, %v7095
        %v7181 = vadd.f32 %v6328, %v7099
        %v7182 = vadd.f32 %v6330, %v7101
        %v7183 = vadd.f32 %v6334, %v7105
        %v7184 = vadd.f32 %v6336, %v7107
        %v7185 = vadd.f32 %v6340, %v7111
        %v7186 = vadd.f32 %v6342, %v7113
        %v7187 = vadd.f32 %v6346, %v7117
        %v7188 = vadd.f32 %v6348, %v7119
        %v7189 = vadd.f32 %v6352, %v7123
        %v7190 = vadd.f32 %v6354, %v7125
        %v7191 = vadd.f32 %v6358, %v7129
        %v7192 = vadd.f32 %v6360, %v7131
        %v7193 = vadd.f32 %v6364, %v7135
        %v7194 = vadd.f32 %v6366, %v7137
        %v7195 = vadd.f32 %v6370, %v7141
        %v7196 = vadd.f32 %v6372, %v7143
        %v7197 = vadd.f32 %v6376, %v7147
        %v7198 = vadd.f32 %v6378, %v7149
        %v7199 = vadd.f32 %v6382, %v7153
        %v7200 = vadd.f32 %v6384, %v7155
        %v7201 = vadd.f32 %v6388, %v7159
        %v7202 = vadd.f32 %v6390, %v7161
        %v7203 = vadd.f32 %v6394, %v7165
        %v7204 = vadd.f32 %v6396, %v7167
        %v7205 = vadd.f32 %v6400, %v7171
        %v7206 = vadd.f32 %v6402, %v7173
        %v7207 = vmul.f32 %v7175, %v4575
        %v7208 = vmul.f32 %v7176, %v4579
        %v7209 = vmul.f32 %v7177, %v4575
        %v7210 = vmul.f32 %v7178, %v4579
        %v7211 = vmul.f32 %v7179, %v4575
        %v7212 = vmul.f32 %v7180, %v4579
        %v7213 = vmul.f32 %v7181, %v4575
        %v7214 = vmul.f32 %v7182, %v4579
        %v7215 = vmul.f32 %v7183, %v4575
        %v7216 = vmul.f32 %v7184, %v4579
        %v7217 = vmul.f32 %v7185, %v4575
        %v7218 = vmul.f32 %v7186, %v4579
        %v7219 = vmul.f32 %v7187, %v4575
        %v7220 = vmul.f32 %v7188, %v4579
        %v7221 = vmul.f32 %v7189, %v4575
        %v7222 = vmul.f32 %v7190, %v4579
        %v7223 = vmul.f32 %v7191, %v4575
        %v7224 = vmul.f32 %v7192, %v4579
        %v7225 = vmul.f32 %v7193, %v4575
        %v7226 = vmul.f32 %v7194, %v4579
        %v7227 = vmul.f32 %v7195, %v4575
        %v7228 = vmul.f32 %v7196, %v4579
        %v7229 = vmul.f32 %v7197, %v4575
        %v7230 = vmul.f32 %v7198, %v4579
        %v7231 = vmul.f32 %v7199, %v4575
        %v7232 = vmul.f32 %v7200, %v4579
        %v7233 = vmul.f32 %v7201, %v4575
        %v7234 = vmul.f32 %v7202, %v4579
        %v7235 = vmul.f32 %v7203, %v4575
        %v7236 = vmul.f32 %v7204, %v4579
        %v7237 = vmul.f32 %v7205, %v4575
        %v7238 = vmul.f32 %v7206, %v4579
        %v7239 = vld [vmem:[%s560 + $0x80] sm:$0xff]
        %v7240 = vld [vmem:[%s560 + $0x88] sm:$0xff]
        %v7241 = vld [vmem:[%s560 + $0x90] sm:$0xff]
        %v7242 = vld [vmem:[%s560 + $0x98] sm:$0xff]
        %v7243 = vld [vmem:[%s560 + $0xa0] sm:$0xff]
        %v7244 = vld [vmem:[%s560 + $0xa8] sm:$0xff]
        %v7245 = vld [vmem:[%s560 + $0xb0] sm:$0xff]
        %v7246 = vld [vmem:[%s560 + $0xb8] sm:$0xff]
        %v7247 = vld [vmem:[%s560 + $0xc0] sm:$0xff]
        %v7248 = vld [vmem:[%s560 + $0xc8] sm:$0xff]
        %v7249 = vld [vmem:[%s560 + $0xd0] sm:$0xff]
        %v7250 = vld [vmem:[%s560 + $0xd8] sm:$0xff]
        %v7251 = vld [vmem:[%s560 + $0xe0] sm:$0xff]
        %v7252 = vld [vmem:[%s560 + $0xe8] sm:$0xff]
        %v7253 = vld [vmem:[%s560 + $0xf0] sm:$0xff]
        %v7254 = vld [vmem:[%s560 + $0xf8] sm:$0xff]
        %7256 = vset.pattern.permute.xlu0 0
        %7257 = vperm.xlu0 %7256, %v7239
        %v7258 = vpop.permute.xlu0 %7257
        %7261 = vset.pattern.permute.xlu0 0
        %7262 = vperm.xlu0 %7261, %v7240
        %v7263 = vpop.permute.xlu0 %7262
        %7266 = vset.pattern.permute.xlu0 0
        %7267 = vperm.xlu0 %7266, %v7241
        %v7268 = vpop.permute.xlu0 %7267
        %7271 = vset.pattern.permute.xlu0 0
        %7272 = vperm.xlu0 %7271, %v7242
        %v7273 = vpop.permute.xlu0 %7272
        %7276 = vset.pattern.permute.xlu0 0
        %7277 = vperm.xlu0 %7276, %v7243
        %v7278 = vpop.permute.xlu0 %7277
        %7281 = vset.pattern.permute.xlu0 0
        %7282 = vperm.xlu0 %7281, %v7244
        %v7283 = vpop.permute.xlu0 %7282
        %7286 = vset.pattern.permute.xlu0 0
        %7287 = vperm.xlu0 %7286, %v7245
        %v7288 = vpop.permute.xlu0 %7287
        %7291 = vset.pattern.permute.xlu0 0
        %7292 = vperm.xlu0 %7291, %v7246
        %v7293 = vpop.permute.xlu0 %7292
        %7296 = vset.pattern.permute.xlu0 0
        %7297 = vperm.xlu0 %7296, %v7247
        %v7298 = vpop.permute.xlu0 %7297
        %7301 = vset.pattern.permute.xlu0 0
        %7302 = vperm.xlu0 %7301, %v7248
        %v7303 = vpop.permute.xlu0 %7302
        %7306 = vset.pattern.permute.xlu0 0
        %7307 = vperm.xlu0 %7306, %v7249
        %v7308 = vpop.permute.xlu0 %7307
        %7311 = vset.pattern.permute.xlu0 0
        %7312 = vperm.xlu0 %7311, %v7250
        %v7313 = vpop.permute.xlu0 %7312
        %7316 = vset.pattern.permute.xlu0 0
        %7317 = vperm.xlu0 %7316, %v7251
        %v7318 = vpop.permute.xlu0 %7317
        %7321 = vset.pattern.permute.xlu0 0
        %7322 = vperm.xlu0 %7321, %v7252
        %v7323 = vpop.permute.xlu0 %7322
        %7326 = vset.pattern.permute.xlu0 0
        %7327 = vperm.xlu0 %7326, %v7253
        %v7328 = vpop.permute.xlu0 %7327
        %7331 = vset.pattern.permute.xlu0 0
        %7332 = vperm.xlu0 %7331, %v7254
        %v7333 = vpop.permute.xlu0 %7332
        %v7335 = vadd.f32 %v7207, %v7258
        %v7336 = vadd.f32 %v7208, %v7258
        %v7337 = vadd.f32 %v7209, %v7263
        %v7338 = vadd.f32 %v7210, %v7263
        %v7339 = vadd.f32 %v7211, %v7268
        %v7340 = vadd.f32 %v7212, %v7268
        %v7341 = vadd.f32 %v7213, %v7273
        %v7342 = vadd.f32 %v7214, %v7273
        %v7343 = vadd.f32 %v7215, %v7278
        %v7344 = vadd.f32 %v7216, %v7278
        %v7345 = vadd.f32 %v7217, %v7283
        %v7346 = vadd.f32 %v7218, %v7283
        %v7347 = vadd.f32 %v7219, %v7288
        %v7348 = vadd.f32 %v7220, %v7288
        %v7349 = vadd.f32 %v7221, %v7293
        %v7350 = vadd.f32 %v7222, %v7293
        %v7351 = vadd.f32 %v7223, %v7298
        %v7352 = vadd.f32 %v7224, %v7298
        %v7353 = vadd.f32 %v7225, %v7303
        %v7354 = vadd.f32 %v7226, %v7303
        %v7355 = vadd.f32 %v7227, %v7308
        %v7356 = vadd.f32 %v7228, %v7308
        %v7357 = vadd.f32 %v7229, %v7313
        %v7358 = vadd.f32 %v7230, %v7313
        %v7359 = vadd.f32 %v7231, %v7318
        %v7360 = vadd.f32 %v7232, %v7318
        %v7361 = vadd.f32 %v7233, %v7323
        %v7362 = vadd.f32 %v7234, %v7323
        %v7363 = vadd.f32 %v7235, %v7328
        %v7364 = vadd.f32 %v7236, %v7328
        %v7365 = vadd.f32 %v7237, %v7333
        %v7366 = vadd.f32 %v7238, %v7333
        %v7367 = vadd.f32 %v7335, %v4746
        %v7368 = vadd.f32 %v7336, %v4750
        %v7369 = vadd.f32 %v7337, %v4746
        %v7370 = vadd.f32 %v7338, %v4750
        %v7371 = vadd.f32 %v7339, %v4746
        %v7372 = vadd.f32 %v7340, %v4750
        %v7373 = vadd.f32 %v7341, %v4746
        %v7374 = vadd.f32 %v7342, %v4750
        %v7375 = vadd.f32 %v7343, %v4746
        %v7376 = vadd.f32 %v7344, %v4750
        %v7377 = vadd.f32 %v7345, %v4746
        %v7378 = vadd.f32 %v7346, %v4750
        %v7379 = vadd.f32 %v7347, %v4746
        %v7380 = vadd.f32 %v7348, %v4750
        %v7381 = vadd.f32 %v7349, %v4746
        %v7382 = vadd.f32 %v7350, %v4750
        %v7383 = vadd.f32 %v7351, %v4746
        %v7384 = vadd.f32 %v7352, %v4750
        %v7385 = vadd.f32 %v7353, %v4746
        %v7386 = vadd.f32 %v7354, %v4750
        %v7387 = vadd.f32 %v7355, %v4746
        %v7388 = vadd.f32 %v7356, %v4750
        %v7389 = vadd.f32 %v7357, %v4746
        %v7390 = vadd.f32 %v7358, %v4750
        %v7391 = vadd.f32 %v7359, %v4746
        %v7392 = vadd.f32 %v7360, %v4750
        %v7393 = vadd.f32 %v7361, %v4746
        %v7394 = vadd.f32 %v7362, %v4750
        %v7395 = vadd.f32 %v7363, %v4746
        %v7396 = vadd.f32 %v7364, %v4750
        %v7397 = vadd.f32 %v7365, %v4746
        %v7398 = vadd.f32 %v7366, %v4750
        %vm7399 = vcmp.ge.f32.partialorder %v7367, 0.0
        %vm7400 = vcmp.ge.f32.partialorder %v7368, 0.0
        %vm7401 = vcmp.ge.f32.partialorder %v7369, 0.0
        %vm7402 = vcmp.ge.f32.partialorder %v7370, 0.0
        %vm7403 = vcmp.ge.f32.partialorder %v7371, 0.0
        %vm7404 = vcmp.ge.f32.partialorder %v7372, 0.0
        %vm7405 = vcmp.ge.f32.partialorder %v7373, 0.0
        %vm7406 = vcmp.ge.f32.partialorder %v7374, 0.0
        %vm7407 = vcmp.ge.f32.partialorder %v7375, 0.0
        %vm7408 = vcmp.ge.f32.partialorder %v7376, 0.0
        %vm7409 = vcmp.ge.f32.partialorder %v7377, 0.0
        %vm7410 = vcmp.ge.f32.partialorder %v7378, 0.0
        %vm7411 = vcmp.ge.f32.partialorder %v7379, 0.0
        %vm7412 = vcmp.ge.f32.partialorder %v7380, 0.0
        %vm7413 = vcmp.ge.f32.partialorder %v7381, 0.0
        %vm7414 = vcmp.ge.f32.partialorder %v7382, 0.0
        %vm7415 = vcmp.ge.f32.partialorder %v7383, 0.0
        %vm7416 = vcmp.ge.f32.partialorder %v7384, 0.0
        %vm7417 = vcmp.ge.f32.partialorder %v7385, 0.0
        %vm7418 = vcmp.ge.f32.partialorder %v7386, 0.0
        %vm7419 = vcmp.ge.f32.partialorder %v7387, 0.0
        %vm7420 = vcmp.ge.f32.partialorder %v7388, 0.0
        %vm7421 = vcmp.ge.f32.partialorder %v7389, 0.0
        %vm7422 = vcmp.ge.f32.partialorder %v7390, 0.0
        %vm7423 = vcmp.ge.f32.partialorder %v7391, 0.0
        %vm7424 = vcmp.ge.f32.partialorder %v7392, 0.0
        %vm7425 = vcmp.ge.f32.partialorder %v7393, 0.0
        %vm7426 = vcmp.ge.f32.partialorder %v7394, 0.0
        %vm7427 = vcmp.ge.f32.partialorder %v7395, 0.0
        %vm7428 = vcmp.ge.f32.partialorder %v7396, 0.0
        %vm7429 = vcmp.ge.f32.partialorder %v7397, 0.0
        %vm7430 = vcmp.ge.f32.partialorder %v7398, 0.0
        %v7431 = vmul.f32 %v7367, 0.2
        %v7432 = vmul.f32 %v7368, 0.2
        %v7433 = vmul.f32 %v7369, 0.2
        %v7434 = vmul.f32 %v7370, 0.2
        %v7435 = vmul.f32 %v7371, 0.2
        %v7436 = vmul.f32 %v7372, 0.2
        %v7437 = vmul.f32 %v7373, 0.2
        %v7438 = vmul.f32 %v7374, 0.2
        %v7439 = vmul.f32 %v7375, 0.2
        %v7440 = vmul.f32 %v7376, 0.2
        %v7441 = vmul.f32 %v7377, 0.2
        %v7442 = vmul.f32 %v7378, 0.2
        %v7443 = vmul.f32 %v7379, 0.2
        %v7444 = vmul.f32 %v7380, 0.2
        %v7445 = vmul.f32 %v7381, 0.2
        %v7446 = vmul.f32 %v7382, 0.2
        %v7447 = vmul.f32 %v7383, 0.2
        %v7448 = vmul.f32 %v7384, 0.2
        %v7449 = vmul.f32 %v7385, 0.2
        %v7450 = vmul.f32 %v7386, 0.2
        %v7451 = vmul.f32 %v7387, 0.2
        %v7452 = vmul.f32 %v7388, 0.2
        %v7453 = vmul.f32 %v7389, 0.2
        %v7454 = vmul.f32 %v7390, 0.2
        %v7455 = vmul.f32 %v7391, 0.2
        %v7456 = vmul.f32 %v7392, 0.2
        %v7457 = vmul.f32 %v7393, 0.2
        %v7458 = vmul.f32 %v7394, 0.2
        %v7459 = vmul.f32 %v7395, 0.2
        %v7460 = vmul.f32 %v7396, 0.2
        %v7461 = vmul.f32 %v7397, 0.2
        %v7462 = vmul.f32 %v7398, 0.2
        %v7463 = vsel %vm7399, %v7367, %v7431
        %v7464 = vsel %vm7400, %v7368, %v7432
        %v7465 = vsel %vm7401, %v7369, %v7433
        %v7466 = vsel %vm7402, %v7370, %v7434
        %v7467 = vsel %vm7403, %v7371, %v7435
        %v7468 = vsel %vm7404, %v7372, %v7436
        %v7469 = vsel %vm7405, %v7373, %v7437
        %v7470 = vsel %vm7406, %v7374, %v7438
        %v7471 = vsel %vm7407, %v7375, %v7439
        %v7472 = vsel %vm7408, %v7376, %v7440
        %v7473 = vsel %vm7409, %v7377, %v7441
        %v7474 = vsel %vm7410, %v7378, %v7442
        %v7475 = vsel %vm7411, %v7379, %v7443
        %v7476 = vsel %vm7412, %v7380, %v7444
        %v7477 = vsel %vm7413, %v7381, %v7445
        %v7478 = vsel %vm7414, %v7382, %v7446
        %v7479 = vsel %vm7415, %v7383, %v7447
        %v7480 = vsel %vm7416, %v7384, %v7448
        %v7481 = vsel %vm7417, %v7385, %v7449
        %v7482 = vsel %vm7418, %v7386, %v7450
        %v7483 = vsel %vm7419, %v7387, %v7451
        %v7484 = vsel %vm7420, %v7388, %v7452
        %v7485 = vsel %vm7421, %v7389, %v7453
        %v7486 = vsel %vm7422, %v7390, %v7454
        %v7487 = vsel %vm7423, %v7391, %v7455
        %v7488 = vsel %vm7424, %v7392, %v7456
        %v7489 = vsel %vm7425, %v7393, %v7457
        %v7490 = vsel %vm7426, %v7394, %v7458
        %v7491 = vsel %vm7427, %v7395, %v7459
        %v7492 = vsel %vm7428, %v7396, %v7460
        %v7493 = vsel %vm7429, %v7397, %v7461
        %v7494 = vsel %vm7430, %v7398, %v7462
        %v7495 = vmul.f32 %v7463, 1.4142135
        %v7496 = vmul.f32 %v7464, 1.4142135
        %v7497 = vmul.f32 %v7465, 1.4142135
        %v7498 = vmul.f32 %v7466, 1.4142135
        %v7499 = vmul.f32 %v7467, 1.4142135
        %v7500 = vmul.f32 %v7468, 1.4142135
        %v7501 = vmul.f32 %v7469, 1.4142135
        %v7502 = vmul.f32 %v7470, 1.4142135
        %v7503 = vmul.f32 %v7471, 1.4142135
        %v7504 = vmul.f32 %v7472, 1.4142135
        %v7505 = vmul.f32 %v7473, 1.4142135
        %v7506 = vmul.f32 %v7474, 1.4142135
        %v7507 = vmul.f32 %v7475, 1.4142135
        %v7508 = vmul.f32 %v7476, 1.4142135
        %v7509 = vmul.f32 %v7477, 1.4142135
        %v7510 = vmul.f32 %v7478, 1.4142135
        %v7511 = vmul.f32 %v7479, 1.4142135
        %v7512 = vmul.f32 %v7480, 1.4142135
        %v7513 = vmul.f32 %v7481, 1.4142135
        %v7514 = vmul.f32 %v7482, 1.4142135
        %v7515 = vmul.f32 %v7483, 1.4142135
        %v7516 = vmul.f32 %v7484, 1.4142135
        %v7517 = vmul.f32 %v7485, 1.4142135
        %v7518 = vmul.f32 %v7486, 1.4142135
        %v7519 = vmul.f32 %v7487, 1.4142135
        %v7520 = vmul.f32 %v7488, 1.4142135
        %v7521 = vmul.f32 %v7489, 1.4142135
        %v7522 = vmul.f32 %v7490, 1.4142135
        %v7523 = vmul.f32 %v7491, 1.4142135
        %v7524 = vmul.f32 %v7492, 1.4142135
        %v7525 = vmul.f32 %v7493, 1.4142135
        %v7526 = vmul.f32 %v7494, 1.4142135
        %s7527 = scalar_lea.vmem [#allocation2], 576
        %7528 = vst [vmem:[%s7527 + $0x10] sm:$0xff] %v7495
        %7529 = vst [vmem:[%s7527 + $0x18] sm:$0xff] %v7496
        %7530 = vst [vmem:[%s7527 + $0x20] sm:$0xff] %v7497
        %7531 = vst [vmem:[%s7527 + $0x28] sm:$0xff] %v7498
        %7532 = vst [vmem:[%s7527 + $0x50] sm:$0xff] %v7499
        %7533 = vst [vmem:[%s7527 + $0x58] sm:$0xff] %v7500
        %7534 = vst [vmem:[%s7527 + $0x60] sm:$0xff] %v7501
        %7535 = vst [vmem:[%s7527 + $0x68] sm:$0xff] %v7502
        %7536 = vst [vmem:[%s7527 + $0x90] sm:$0xff] %v7503
        %7537 = vst [vmem:[%s7527 + $0x98] sm:$0xff] %v7504
        %7538 = vst [vmem:[%s7527 + $0xa0] sm:$0xff] %v7505
        %7539 = vst [vmem:[%s7527 + $0xa8] sm:$0xff] %v7506
        %7540 = vst [vmem:[%s7527 + $0xd0] sm:$0xff] %v7507
        %7541 = vst [vmem:[%s7527 + $0xd8] sm:$0xff] %v7508
        %7542 = vst [vmem:[%s7527 + $0xe0] sm:$0xff] %v7509
        %7543 = vst [vmem:[%s7527 + $0xe8] sm:$0xff] %v7510
        %7544 = vst [vmem:[%s7527 + $0x110] sm:$0xff] %v7511
        %7545 = vst [vmem:[%s7527 + $0x118] sm:$0xff] %v7512
        %7546 = vst [vmem:[%s7527 + $0x120] sm:$0xff] %v7513
        %7547 = vst [vmem:[%s7527 + $0x128] sm:$0xff] %v7514
        %7548 = vst [vmem:[%s7527 + $0x150] sm:$0xff] %v7515
        %7549 = vst [vmem:[%s7527 + $0x158] sm:$0xff] %v7516
        %7550 = vst [vmem:[%s7527 + $0x160] sm:$0xff] %v7517
        %7551 = vst [vmem:[%s7527 + $0x168] sm:$0xff] %v7518
        %7552 = vst [vmem:[%s7527 + $0x190] sm:$0xff] %v7519
        %7553 = vst [vmem:[%s7527 + $0x198] sm:$0xff] %v7520
        %7554 = vst [vmem:[%s7527 + $0x1a0] sm:$0xff] %v7521
        %7555 = vst [vmem:[%s7527 + $0x1a8] sm:$0xff] %v7522
        %7556 = vst [vmem:[%s7527 + $0x1d0] sm:$0xff] %v7523
        %7557 = vst [vmem:[%s7527 + $0x1d8] sm:$0xff] %v7524
        %7558 = vst [vmem:[%s7527 + $0x1e0] sm:$0xff] %v7525
        %7559 = vst [vmem:[%s7527 + $0x1e8] sm:$0xff] %v7526
        %p7560 = scmp.eq.s32.totalorder %s32, 1
        // Predicated region
        $region81: #{_lambda_.1} parent=55 // pred_check
          %p7561 = pneg %p7560
        $region82: #{_lambda_.1} parent=55 // pred_check_branch
          %7563 = sbr.rel (%p7561) target = $region84
        $region83: #{_lambda_.1} parent=55 // pred_region
          %v7564 = vld [vmem:[%s547] sm:$0x3]
          %v7565 = vld [vmem:[%s4913 + $0x10] sm:$0xff]
          %v7566 = vld [vmem:[%s4913 + $0x18] sm:$0xff]
          %v7567 = vld [vmem:[%s4913 + $0x20] sm:$0xff]
          %v7568 = vld [vmem:[%s4913 + $0x28] sm:$0xff]
          %v7569 = vld [vmem:[%s4913 + $0x50] sm:$0xff]
          %v7570 = vld [vmem:[%s4913 + $0x58] sm:$0xff]
          %v7571 = vld [vmem:[%s4913 + $0x60] sm:$0xff]
          %v7572 = vld [vmem:[%s4913 + $0x68] sm:$0xff]
          %v7573 = vld [vmem:[%s4913 + $0x90] sm:$0xff]
          %v7574 = vld [vmem:[%s4913 + $0x98] sm:$0xff]
          %v7575 = vld [vmem:[%s4913 + $0xa0] sm:$0xff]
          %v7576 = vld [vmem:[%s4913 + $0xa8] sm:$0xff]
          %v7577 = vld [vmem:[%s4913 + $0xd0] sm:$0xff]
          %v7578 = vld [vmem:[%s4913 + $0xd8] sm:$0xff]
          %v7579 = vld [vmem:[%s4913 + $0xe0] sm:$0xff]
          %v7580 = vld [vmem:[%s4913 + $0xe8] sm:$0xff]
          %v7581 = vld [vmem:[%s4913 + $0x110] sm:$0xff]
          %v7582 = vld [vmem:[%s4913 + $0x118] sm:$0xff]
          %v7583 = vld [vmem:[%s4913 + $0x120] sm:$0xff]
          %v7584 = vld [vmem:[%s4913 + $0x128] sm:$0xff]
          %v7585 = vld [vmem:[%s4913 + $0x150] sm:$0xff]
          %v7586 = vld [vmem:[%s4913 + $0x158] sm:$0xff]
          %v7587 = vld [vmem:[%s4913 + $0x160] sm:$0xff]
          %v7588 = vld [vmem:[%s4913 + $0x168] sm:$0xff]
          %v7589 = vld [vmem:[%s4913 + $0x190] sm:$0xff]
          %v7590 = vld [vmem:[%s4913 + $0x198] sm:$0xff]
          %v7591 = vld [vmem:[%s4913 + $0x1a0] sm:$0xff]
          %v7592 = vld [vmem:[%s4913 + $0x1a8] sm:$0xff]
          %v7593 = vld [vmem:[%s4913 + $0x1d0] sm:$0xff]
          %v7594 = vld [vmem:[%s4913 + $0x1d8] sm:$0xff]
          %v7595 = vld [vmem:[%s4913 + $0x1e0] sm:$0xff]
          %v7596 = vld [vmem:[%s4913 + $0x1e8] sm:$0xff]
          %v7598 = vlaneseq
          %v7599 = vshrl.u32 %v7598, 7
          %v7600 = vsub.s32 0, %v7599
          %v7601 = vrot.slane %v7564, %v7600
          %v7602 = vlaneseq
          %v7603 = vshrl.u32 %v7602, 7
          %v7604 = vsub.s32 1, %v7603
          %v7605 = vrot.slane %v7564, %v7604
          %v7608 = vmul.f32 %v7565, %v7601
          %v7609 = vmul.f32 %v7566, %v7605
          %v7610 = vmul.f32 %v7567, %v7601
          %v7611 = vmul.f32 %v7568, %v7605
          %v7612 = vmul.f32 %v7569, %v7601
          %v7613 = vmul.f32 %v7570, %v7605
          %v7614 = vmul.f32 %v7571, %v7601
          %v7615 = vmul.f32 %v7572, %v7605
          %v7616 = vmul.f32 %v7573, %v7601
          %v7617 = vmul.f32 %v7574, %v7605
          %v7618 = vmul.f32 %v7575, %v7601
          %v7619 = vmul.f32 %v7576, %v7605
          %v7620 = vmul.f32 %v7577, %v7601
          %v7621 = vmul.f32 %v7578, %v7605
          %v7622 = vmul.f32 %v7579, %v7601
          %v7623 = vmul.f32 %v7580, %v7605
          %v7624 = vmul.f32 %v7581, %v7601
          %v7625 = vmul.f32 %v7582, %v7605
          %v7626 = vmul.f32 %v7583, %v7601
          %v7627 = vmul.f32 %v7584, %v7605
          %v7628 = vmul.f32 %v7585, %v7601
          %v7629 = vmul.f32 %v7586, %v7605
          %v7630 = vmul.f32 %v7587, %v7601
          %v7631 = vmul.f32 %v7588, %v7605
          %v7632 = vmul.f32 %v7589, %v7601
          %v7633 = vmul.f32 %v7590, %v7605
          %v7634 = vmul.f32 %v7591, %v7601
          %v7635 = vmul.f32 %v7592, %v7605
          %v7636 = vmul.f32 %v7593, %v7601
          %v7637 = vmul.f32 %v7594, %v7605
          %v7638 = vmul.f32 %v7595, %v7601
          %v7639 = vmul.f32 %v7596, %v7605
          %v7640 = vld [vmem:[#allocation9] sm:$0xff]
          %v7641 = vld [vmem:[#allocation9 + $0x8] sm:$0xff]
          %v7642 = vld [vmem:[#allocation9 + $0x10] sm:$0xff]
          %v7643 = vld [vmem:[#allocation9 + $0x18] sm:$0xff]
          %v7644 = vld [vmem:[#allocation9 + $0x20] sm:$0xff]
          %v7645 = vld [vmem:[#allocation9 + $0x28] sm:$0xff]
          %v7646 = vld [vmem:[#allocation9 + $0x30] sm:$0xff]
          %v7647 = vld [vmem:[#allocation9 + $0x38] sm:$0xff]
          %v7648 = vld [vmem:[#allocation9 + $0x40] sm:$0xff]
          %v7649 = vld [vmem:[#allocation9 + $0x48] sm:$0xff]
          %v7650 = vld [vmem:[#allocation9 + $0x50] sm:$0xff]
          %v7651 = vld [vmem:[#allocation9 + $0x58] sm:$0xff]
          %v7652 = vld [vmem:[#allocation9 + $0x60] sm:$0xff]
          %v7653 = vld [vmem:[#allocation9 + $0x68] sm:$0xff]
          %v7654 = vld [vmem:[#allocation9 + $0x70] sm:$0xff]
          %v7655 = vld [vmem:[#allocation9 + $0x78] sm:$0xff]
          %v7656 = vld [vmem:[#allocation9 + $0x80] sm:$0xff]
          %v7657 = vld [vmem:[#allocation9 + $0x88] sm:$0xff]
          %v7658 = vld [vmem:[#allocation9 + $0x90] sm:$0xff]
          %v7659 = vld [vmem:[#allocation9 + $0x98] sm:$0xff]
          %v7660 = vld [vmem:[#allocation9 + $0xa0] sm:$0xff]
          %v7661 = vld [vmem:[#allocation9 + $0xa8] sm:$0xff]
          %v7662 = vld [vmem:[#allocation9 + $0xb0] sm:$0xff]
          %v7663 = vld [vmem:[#allocation9 + $0xb8] sm:$0xff]
          %v7664 = vld [vmem:[#allocation9 + $0xc0] sm:$0xff]
          %v7665 = vld [vmem:[#allocation9 + $0xc8] sm:$0xff]
          %v7666 = vld [vmem:[#allocation9 + $0xd0] sm:$0xff]
          %v7667 = vld [vmem:[#allocation9 + $0xd8] sm:$0xff]
          %v7668 = vld [vmem:[#allocation9 + $0xe0] sm:$0xff]
          %v7669 = vld [vmem:[#allocation9 + $0xe8] sm:$0xff]
          %v7670 = vld [vmem:[#allocation9 + $0xf0] sm:$0xff]
          %v7671 = vld [vmem:[#allocation9 + $0xf8] sm:$0xff]
          %v7672 = vld [vmem:[#allocation11] sm:$0x1]
          %v7674 = vlaneseq
          %v7675 = vshrl.u32 %v7674, 7
          %v7676 = vsub.s32 0, %v7675
          %v7677 = vrot.slane %v7672, %v7676
          %7679 = vmatprep.subr.mxu0 0.0
          %7680 = vmatpush1.msra.mxu0 %v7640
          %7681 = vmatprep.subr.mxu0 0.0
          %7682 = vmatpush1.msra.mxu0 %v7641
          %7683 = vmatprep.subr.mxu0 0.0
          %7684 = vmatpush1.msra.mxu0 %v7642
          %7685 = vmatprep.subr.mxu0 0.0
          %7686 = vmatpush1.msra.mxu0 %v7643
          %7687 = vmatprep.subr.mxu0 0.0
          %7688 = vmatpush1.msra.mxu0 %v7644
          %7689 = vmatprep.subr.mxu0 0.0
          %7690 = vmatpush1.msra.mxu0 %v7645
          %7691 = vmatprep.subr.mxu0 0.0
          %7692 = vmatpush1.msra.mxu0 %v7646
          %7693 = vmatprep.subr.mxu0 0.0
          %7694 = vmatpush1.msra.mxu0 %v7647
          %7695 = vmatprep.subr.mxu0 0.0
          %7696 = vmatpush1.msra.mxu0 %v7648
          %7697 = vmatprep.subr.mxu0 0.0
          %7698 = vmatpush1.msra.mxu0 %v7649
          %7699 = vmatprep.subr.mxu0 0.0
          %7700 = vmatpush1.msra.mxu0 %v7650
          %7701 = vmatprep.subr.mxu0 0.0
          %7702 = vmatpush1.msra.mxu0 %v7651
          %7703 = vmatprep.subr.mxu0 0.0
          %7704 = vmatpush1.msra.mxu0 %v7652
          %7705 = vmatprep.subr.mxu0 0.0
          %7706 = vmatpush1.msra.mxu0 %v7653
          %7707 = vmatprep.subr.mxu0 0.0
          %7708 = vmatpush1.msra.mxu0 %v7654
          %7709 = vmatprep.subr.mxu0 0.0
          %7710 = vmatpush1.msra.mxu0 %v7655
          %7711 = vmatprep.subr.mxu0 0.0
          %7712 = vmatpush1.msra.mxu0 %v7656
          %7713 = vmatprep.subr.mxu0 0.0
          %7714 = vmatpush1.msra.mxu0 %v7657
          %7715 = vmatprep.subr.mxu0 0.0
          %7716 = vmatpush1.msra.mxu0 %v7658
          %7717 = vmatprep.subr.mxu0 0.0
          %7718 = vmatpush1.msra.mxu0 %v7659
          %7719 = vmatprep.subr.mxu0 0.0
          %7720 = vmatpush1.msra.mxu0 %v7660
          %7721 = vmatprep.subr.mxu0 0.0
          %7722 = vmatpush1.msra.mxu0 %v7661
          %7723 = vmatprep.subr.mxu0 0.0
          %7724 = vmatpush1.msra.mxu0 %v7662
          %7725 = vmatprep.subr.mxu0 0.0
          %7726 = vmatpush1.msra.mxu0 %v7663
          %7727 = vmatprep.subr.mxu0 0.0
          %7728 = vmatpush1.msra.mxu0 %v7664
          %7729 = vmatprep.subr.mxu0 0.0
          %7730 = vmatpush1.msra.mxu0 %v7665
          %7731 = vmatprep.subr.mxu0 0.0
          %7732 = vmatpush1.msra.mxu0 %v7666
          %7733 = vmatprep.subr.mxu0 0.0
          %7734 = vmatpush1.msra.mxu0 %v7667
          %7735 = vmatprep.subr.mxu0 0.0
          %7736 = vmatpush1.msra.mxu0 %v7668
          %7737 = vmatprep.subr.mxu0 0.0
          %7738 = vmatpush1.msra.mxu0 %v7669
          %7739 = vmatprep.subr.mxu0 0.0
          %7740 = vmatpush1.msra.mxu0 %v7670
          %7741 = vmatprep.subr.mxu0 0.0
          %7742 = vmatpush1.msra.mxu0 %v7671
          %7743 = vmatprep.mubr.f32.mxu0 %v7609
          %7744 = vmatmul.mubr.f32.gmra.mrb[0].mxu0 %v7608
          %v7745 = vpop.f32.mrb[0].mxu0
          %v7746 = vadd.f32 %v7677, %v7745
          %v7747 = vpop.f32.mrb[0].mxu0
          %7748 = vmatprep.mubr.f32.mxu0 %v7611
          %7749 = vmatmul.mubr.f32.gmra.mrb[0].mxu0 %v7610
          %v7750 = vpop.f32.mrb[0].mxu0
          %v7751 = vadd.f32 %v7677, %v7750
          %v7752 = vpop.f32.mrb[0].mxu0
          %7753 = vmatprep.mubr.f32.mxu0 %v7613
          %7754 = vmatmul.mubr.f32.gmra.mrb[0].mxu0 %v7612
          %v7755 = vpop.f32.mrb[0].mxu0
          %v7756 = vadd.f32 %v7677, %v7755
          %v7757 = vpop.f32.mrb[0].mxu0
          %7758 = vmatprep.mubr.f32.mxu0 %v7615
          %7759 = vmatmul.mubr.f32.gmra.mrb[0].mxu0 %v7614
          %v7760 = vpop.f32.mrb[0].mxu0
          %v7761 = vadd.f32 %v7677, %v7760
          %v7762 = vpop.f32.mrb[0].mxu0
          %7763 = vmatprep.mubr.f32.mxu0 %v7617
          %7764 = vmatmul.mubr.f32.gmra.mrb[0].mxu0 %v7616
          %v7765 = vpop.f32.mrb[0].mxu0
          %v7766 = vadd.f32 %v7677, %v7765
          %v7767 = vpop.f32.mrb[0].mxu0
          %7768 = vmatprep.mubr.f32.mxu0 %v7619
          %7769 = vmatmul.mubr.f32.gmra.mrb[0].mxu0 %v7618
          %v7770 = vpop.f32.mrb[0].mxu0
          %v7771 = vadd.f32 %v7677, %v7770
          %v7772 = vpop.f32.mrb[0].mxu0
          %7773 = vmatprep.mubr.f32.mxu0 %v7621
          %7774 = vmatmul.mubr.f32.gmra.mrb[0].mxu0 %v7620
          %v7775 = vpop.f32.mrb[0].mxu0
          %v7776 = vadd.f32 %v7677, %v7775
          %v7777 = vpop.f32.mrb[0].mxu0
          %7778 = vmatprep.mubr.f32.mxu0 %v7623
          %7779 = vmatmul.mubr.f32.gmra.mrb[0].mxu0 %v7622
          %v7780 = vpop.f32.mrb[0].mxu0
          %v7781 = vadd.f32 %v7677, %v7780
          %v7782 = vpop.f32.mrb[0].mxu0
          %7783 = vmatprep.mubr.f32.mxu0 %v7625
          %7784 = vmatmul.mubr.f32.gmra.mrb[0].mxu0 %v7624
          %v7785 = vpop.f32.mrb[0].mxu0
          %v7786 = vadd.f32 %v7677, %v7785
          %v7787 = vpop.f32.mrb[0].mxu0
          %7788 = vmatprep.mubr.f32.mxu0 %v7627
          %7789 = vmatmul.mubr.f32.gmra.mrb[0].mxu0 %v7626
          %v7790 = vpop.f32.mrb[0].mxu0
          %v7791 = vadd.f32 %v7677, %v7790
          %v7792 = vpop.f32.mrb[0].mxu0
          %7793 = vmatprep.mubr.f32.mxu0 %v7629
          %7794 = vmatmul.mubr.f32.gmra.mrb[0].mxu0 %v7628
          %v7795 = vpop.f32.mrb[0].mxu0
          %v7796 = vadd.f32 %v7677, %v7795
          %v7797 = vpop.f32.mrb[0].mxu0
          %7798 = vmatprep.mubr.f32.mxu0 %v7631
          %7799 = vmatmul.mubr.f32.gmra.mrb[0].mxu0 %v7630
          %v7800 = vpop.f32.mrb[0].mxu0
          %v7801 = vadd.f32 %v7677, %v7800
          %v7802 = vpop.f32.mrb[0].mxu0
          %7803 = vmatprep.mubr.f32.mxu0 %v7633
          %7804 = vmatmul.mubr.f32.gmra.mrb[0].mxu0 %v7632
          %v7805 = vpop.f32.mrb[0].mxu0
          %v7806 = vadd.f32 %v7677, %v7805
          %v7807 = vpop.f32.mrb[0].mxu0
          %7808 = vmatprep.mubr.f32.mxu0 %v7635
          %7809 = vmatmul.mubr.f32.gmra.mrb[0].mxu0 %v7634
          %v7810 = vpop.f32.mrb[0].mxu0
          %v7811 = vadd.f32 %v7677, %v7810
          %v7812 = vpop.f32.mrb[0].mxu0
          %7813 = vmatprep.mubr.f32.mxu0 %v7637
          %7814 = vmatmul.mubr.f32.gmra.mrb[0].mxu0 %v7636
          %v7815 = vpop.f32.mrb[0].mxu0
          %v7816 = vadd.f32 %v7677, %v7815
          %v7817 = vpop.f32.mrb[0].mxu0
          %7818 = vmatprep.mubr.f32.mxu0 %v7639
          %7819 = vmatmul.mubr.f32.gmra.mrb[0].mxu0 %v7638
          %v7820 = vpop.f32.mrb[0].mxu0
          %v7821 = vadd.f32 %v7677, %v7820
          %v7822 = vpop.f32.mrb[0].mxu0
          %7823 = vdwg.mxu0
          %7824 = vst [vmem:[%s565] sm:$0xff] %v7746
          %7825 = vst [vmem:[%s565 + $0x8] sm:$0xff] %v7751
          %7826 = vst [vmem:[%s565 + $0x10] sm:$0xff] %v7756
          %7827 = vst [vmem:[%s565 + $0x18] sm:$0xff] %v7761
          %7828 = vst [vmem:[%s565 + $0x20] sm:$0xff] %v7766
          %7829 = vst [vmem:[%s565 + $0x28] sm:$0xff] %v7771
          %7830 = vst [vmem:[%s565 + $0x30] sm:$0xff] %v7776
          %7831 = vst [vmem:[%s565 + $0x38] sm:$0xff] %v7781
          %7832 = vst [vmem:[%s565 + $0x40] sm:$0xff] %v7786
          %7833 = vst [vmem:[%s565 + $0x48] sm:$0xff] %v7791
          %7834 = vst [vmem:[%s565 + $0x50] sm:$0xff] %v7796
          %7835 = vst [vmem:[%s565 + $0x58] sm:$0xff] %v7801
          %7836 = vst [vmem:[%s565 + $0x60] sm:$0xff] %v7806
          %7837 = vst [vmem:[%s565 + $0x68] sm:$0xff] %v7811
          %7838 = vst [vmem:[%s565 + $0x70] sm:$0xff] %v7816
          %7839 = vst [vmem:[%s565 + $0x78] sm:$0xff] %v7821
          %v7840 = vld [vmem:[%s7527 + $0x10] sm:$0xff]
          %v7841 = vld [vmem:[%s7527 + $0x18] sm:$0xff]
          %v7842 = vld [vmem:[%s7527 + $0x20] sm:$0xff]
          %v7843 = vld [vmem:[%s7527 + $0x28] sm:$0xff]
          %v7844 = vld [vmem:[%s7527 + $0x50] sm:$0xff]
          %v7845 = vld [vmem:[%s7527 + $0x58] sm:$0xff]
          %v7846 = vld [vmem:[%s7527 + $0x60] sm:$0xff]
          %v7847 = vld [vmem:[%s7527 + $0x68] sm:$0xff]
          %v7848 = vld [vmem:[%s7527 + $0x90] sm:$0xff]
          %v7849 = vld [vmem:[%s7527 + $0x98] sm:$0xff]
          %v7850 = vld [vmem:[%s7527 + $0xa0] sm:$0xff]
          %v7851 = vld [vmem:[%s7527 + $0xa8] sm:$0xff]
          %v7852 = vld [vmem:[%s7527 + $0xd0] sm:$0xff]
          %v7853 = vld [vmem:[%s7527 + $0xd8] sm:$0xff]
          %v7854 = vld [vmem:[%s7527 + $0xe0] sm:$0xff]
          %v7855 = vld [vmem:[%s7527 + $0xe8] sm:$0xff]
          %v7856 = vld [vmem:[%s7527 + $0x110] sm:$0xff]
          %v7857 = vld [vmem:[%s7527 + $0x118] sm:$0xff]
          %v7858 = vld [vmem:[%s7527 + $0x120] sm:$0xff]
          %v7859 = vld [vmem:[%s7527 + $0x128] sm:$0xff]
          %v7860 = vld [vmem:[%s7527 + $0x150] sm:$0xff]
          %v7861 = vld [vmem:[%s7527 + $0x158] sm:$0xff]
          %v7862 = vld [vmem:[%s7527 + $0x160] sm:$0xff]
          %v7863 = vld [vmem:[%s7527 + $0x168] sm:$0xff]
          %v7864 = vld [vmem:[%s7527 + $0x190] sm:$0xff]
          %v7865 = vld [vmem:[%s7527 + $0x198] sm:$0xff]
          %v7866 = vld [vmem:[%s7527 + $0x1a0] sm:$0xff]
          %v7867 = vld [vmem:[%s7527 + $0x1a8] sm:$0xff]
          %v7868 = vld [vmem:[%s7527 + $0x1d0] sm:$0xff]
          %v7869 = vld [vmem:[%s7527 + $0x1d8] sm:$0xff]
          %v7870 = vld [vmem:[%s7527 + $0x1e0] sm:$0xff]
          %v7871 = vld [vmem:[%s7527 + $0x1e8] sm:$0xff]
          %v7872 = vmul.f32 %v7840, %v7601
          %v7873 = vmul.f32 %v7841, %v7605
          %v7874 = vmul.f32 %v7842, %v7601
          %v7875 = vmul.f32 %v7843, %v7605
          %v7876 = vmul.f32 %v7844, %v7601
          %v7877 = vmul.f32 %v7845, %v7605
          %v7878 = vmul.f32 %v7846, %v7601
          %v7879 = vmul.f32 %v7847, %v7605
          %v7880 = vmul.f32 %v7848, %v7601
          %v7881 = vmul.f32 %v7849, %v7605
          %v7882 = vmul.f32 %v7850, %v7601
          %v7883 = vmul.f32 %v7851, %v7605
          %v7884 = vmul.f32 %v7852, %v7601
          %v7885 = vmul.f32 %v7853, %v7605
          %v7886 = vmul.f32 %v7854, %v7601
          %v7887 = vmul.f32 %v7855, %v7605
          %v7888 = vmul.f32 %v7856, %v7601
          %v7889 = vmul.f32 %v7857, %v7605
          %v7890 = vmul.f32 %v7858, %v7601
          %v7891 = vmul.f32 %v7859, %v7605
          %v7892 = vmul.f32 %v7860, %v7601
          %v7893 = vmul.f32 %v7861, %v7605
          %v7894 = vmul.f32 %v7862, %v7601
          %v7895 = vmul.f32 %v7863, %v7605
          %v7896 = vmul.f32 %v7864, %v7601
          %v7897 = vmul.f32 %v7865, %v7605
          %v7898 = vmul.f32 %v7866, %v7601
          %v7899 = vmul.f32 %v7867, %v7605
          %v7900 = vmul.f32 %v7868, %v7601
          %v7901 = vmul.f32 %v7869, %v7605
          %v7902 = vmul.f32 %v7870, %v7601
          %v7903 = vmul.f32 %v7871, %v7605
          %v7904 = vld [vmem:[#allocation9] sm:$0xff]
          %v7905 = vld [vmem:[#allocation9 + $0x8] sm:$0xff]
          %v7906 = vld [vmem:[#allocation9 + $0x10] sm:$0xff]
          %v7907 = vld [vmem:[#allocation9 + $0x18] sm:$0xff]
          %v7908 = vld [vmem:[#allocation9 + $0x20] sm:$0xff]
          %v7909 = vld [vmem:[#allocation9 + $0x28] sm:$0xff]
          %v7910 = vld [vmem:[#allocation9 + $0x30] sm:$0xff]
          %v7911 = vld [vmem:[#allocation9 + $0x38] sm:$0xff]
          %v7912 = vld [vmem:[#allocation9 + $0x40] sm:$0xff]
          %v7913 = vld [vmem:[#allocation9 + $0x48] sm:$0xff]
          %v7914 = vld [vmem:[#allocation9 + $0x50] sm:$0xff]
          %v7915 = vld [vmem:[#allocation9 + $0x58] sm:$0xff]
          %v7916 = vld [vmem:[#allocation9 + $0x60] sm:$0xff]
          %v7917 = vld [vmem:[#allocation9 + $0x68] sm:$0xff]
          %v7918 = vld [vmem:[#allocation9 + $0x70] sm:$0xff]
          %v7919 = vld [vmem:[#allocation9 + $0x78] sm:$0xff]
          %v7920 = vld [vmem:[#allocation9 + $0x80] sm:$0xff]
          %v7921 = vld [vmem:[#allocation9 + $0x88] sm:$0xff]
          %v7922 = vld [vmem:[#allocation9 + $0x90] sm:$0xff]
          %v7923 = vld [vmem:[#allocation9 + $0x98] sm:$0xff]
          %v7924 = vld [vmem:[#allocation9 + $0xa0] sm:$0xff]
          %v7925 = vld [vmem:[#allocation9 + $0xa8] sm:$0xff]
          %v7926 = vld [vmem:[#allocation9 + $0xb0] sm:$0xff]
          %v7927 = vld [vmem:[#allocation9 + $0xb8] sm:$0xff]
          %v7928 = vld [vmem:[#allocation9 + $0xc0] sm:$0xff]
          %v7929 = vld [vmem:[#allocation9 + $0xc8] sm:$0xff]
          %v7930 = vld [vmem:[#allocation9 + $0xd0] sm:$0xff]
          %v7931 = vld [vmem:[#allocation9 + $0xd8] sm:$0xff]
          %v7932 = vld [vmem:[#allocation9 + $0xe0] sm:$0xff]
          %v7933 = vld [vmem:[#allocation9 + $0xe8] sm:$0xff]
          %v7934 = vld [vmem:[#allocation9 + $0xf0] sm:$0xff]
          %v7935 = vld [vmem:[#allocation9 + $0xf8] sm:$0xff]
          %v7936 = vld [vmem:[#allocation11] sm:$0x1]
          %v7938 = vlaneseq
          %v7939 = vshrl.u32 %v7938, 7
          %v7940 = vsub.s32 0, %v7939
          %v7941 = vrot.slane %v7936, %v7940
          %7943 = vmatprep.subr.mxu0 0.0
          %7944 = vmatpush1.msra.mxu0 %v7904
          %7945 = vmatprep.subr.mxu0 0.0
          %7946 = vmatpush1.msra.mxu0 %v7905
          %7947 = vmatprep.subr.mxu0 0.0
          %7948 = vmatpush1.msra.mxu0 %v7906
          %7949 = vmatprep.subr.mxu0 0.0
          %7950 = vmatpush1.msra.mxu0 %v7907
          %7951 = vmatprep.subr.mxu0 0.0
          %7952 = vmatpush1.msra.mxu0 %v7908
          %7953 = vmatprep.subr.mxu0 0.0
          %7954 = vmatpush1.msra.mxu0 %v7909
          %7955 = vmatprep.subr.mxu0 0.0
          %7956 = vmatpush1.msra.mxu0 %v7910
          %7957 = vmatprep.subr.mxu0 0.0
          %7958 = vmatpush1.msra.mxu0 %v7911
          %7959 = vmatprep.subr.mxu0 0.0
          %7960 = vmatpush1.msra.mxu0 %v7912
          %7961 = vmatprep.subr.mxu0 0.0
          %7962 = vmatpush1.msra.mxu0 %v7913
          %7963 = vmatprep.subr.mxu0 0.0
          %7964 = vmatpush1.msra.mxu0 %v7914
          %7965 = vmatprep.subr.mxu0 0.0
          %7966 = vmatpush1.msra.mxu0 %v7915
          %7967 = vmatprep.subr.mxu0 0.0
          %7968 = vmatpush1.msra.mxu0 %v7916
          %7969 = vmatprep.subr.mxu0 0.0
          %7970 = vmatpush1.msra.mxu0 %v7917
          %7971 = vmatprep.subr.mxu0 0.0
          %7972 = vmatpush1.msra.mxu0 %v7918
          %7973 = vmatprep.subr.mxu0 0.0
          %7974 = vmatpush1.msra.mxu0 %v7919
          %7975 = vmatprep.subr.mxu0 0.0
          %7976 = vmatpush1.msra.mxu0 %v7920
          %7977 = vmatprep.subr.mxu0 0.0
          %7978 = vmatpush1.msra.mxu0 %v7921
          %7979 = vmatprep.subr.mxu0 0.0
          %7980 = vmatpush1.msra.mxu0 %v7922
          %7981 = vmatprep.subr.mxu0 0.0
          %7982 = vmatpush1.msra.mxu0 %v7923
          %7983 = vmatprep.subr.mxu0 0.0
          %7984 = vmatpush1.msra.mxu0 %v7924
          %7985 = vmatprep.subr.mxu0 0.0
          %7986 = vmatpush1.msra.mxu0 %v7925
          %7987 = vmatprep.subr.mxu0 0.0
          %7988 = vmatpush1.msra.mxu0 %v7926
          %7989 = vmatprep.subr.mxu0 0.0
          %7990 = vmatpush1.msra.mxu0 %v7927
          %7991 = vmatprep.subr.mxu0 0.0
          %7992 = vmatpush1.msra.mxu0 %v7928
          %7993 = vmatprep.subr.mxu0 0.0
          %7994 = vmatpush1.msra.mxu0 %v7929
          %7995 = vmatprep.subr.mxu0 0.0
          %7996 = vmatpush1.msra.mxu0 %v7930
          %7997 = vmatprep.subr.mxu0 0.0
          %7998 = vmatpush1.msra.mxu0 %v7931
          %7999 = vmatprep.subr.mxu0 0.0
          %8000 = vmatpush1.msra.mxu0 %v7932
          %8001 = vmatprep.subr.mxu0 0.0
          %8002 = vmatpush1.msra.mxu0 %v7933
          %8003 = vmatprep.subr.mxu0 0.0
          %8004 = vmatpush1.msra.mxu0 %v7934
          %8005 = vmatprep.subr.mxu0 0.0
          %8006 = vmatpush1.msra.mxu0 %v7935
          %8007 = vmatprep.mubr.f32.mxu0 %v7873
          %8008 = vmatmul.mubr.f32.gmra.mrb[0].mxu0 %v7872
          %v8009 = vpop.f32.mrb[0].mxu0
          %v8010 = vadd.f32 %v7941, %v8009
          %v8011 = vpop.f32.mrb[0].mxu0
          %8012 = vmatprep.mubr.f32.mxu0 %v7875
          %8013 = vmatmul.mubr.f32.gmra.mrb[0].mxu0 %v7874
          %v8014 = vpop.f32.mrb[0].mxu0
          %v8015 = vadd.f32 %v7941, %v8014
          %v8016 = vpop.f32.mrb[0].mxu0
          %8017 = vmatprep.mubr.f32.mxu0 %v7877
          %8018 = vmatmul.mubr.f32.gmra.mrb[0].mxu0 %v7876
          %v8019 = vpop.f32.mrb[0].mxu0
          %v8020 = vadd.f32 %v7941, %v8019
          %v8021 = vpop.f32.mrb[0].mxu0
          %8022 = vmatprep.mubr.f32.mxu0 %v7879
          %8023 = vmatmul.mubr.f32.gmra.mrb[0].mxu0 %v7878
          %v8024 = vpop.f32.mrb[0].mxu0
          %v8025 = vadd.f32 %v7941, %v8024
          %v8026 = vpop.f32.mrb[0].mxu0
          %8027 = vmatprep.mubr.f32.mxu0 %v7881
          %8028 = vmatmul.mubr.f32.gmra.mrb[0].mxu0 %v7880
          %v8029 = vpop.f32.mrb[0].mxu0
          %v8030 = vadd.f32 %v7941, %v8029
          %v8031 = vpop.f32.mrb[0].mxu0
          %8032 = vmatprep.mubr.f32.mxu0 %v7883
          %8033 = vmatmul.mubr.f32.gmra.mrb[0].mxu0 %v7882
          %v8034 = vpop.f32.mrb[0].mxu0
          %v8035 = vadd.f32 %v7941, %v8034
          %v8036 = vpop.f32.mrb[0].mxu0
          %8037 = vmatprep.mubr.f32.mxu0 %v7885
          %8038 = vmatmul.mubr.f32.gmra.mrb[0].mxu0 %v7884
          %v8039 = vpop.f32.mrb[0].mxu0
          %v8040 = vadd.f32 %v7941, %v8039
          %v8041 = vpop.f32.mrb[0].mxu0
          %8042 = vmatprep.mubr.f32.mxu0 %v7887
          %8043 = vmatmul.mubr.f32.gmra.mrb[0].mxu0 %v7886
          %v8044 = vpop.f32.mrb[0].mxu0
          %v8045 = vadd.f32 %v7941, %v8044
          %v8046 = vpop.f32.mrb[0].mxu0
          %8047 = vmatprep.mubr.f32.mxu0 %v7889
          %8048 = vmatmul.mubr.f32.gmra.mrb[0].mxu0 %v7888
          %v8049 = vpop.f32.mrb[0].mxu0
          %v8050 = vadd.f32 %v7941, %v8049
          %v8051 = vpop.f32.mrb[0].mxu0
          %8052 = vmatprep.mubr.f32.mxu0 %v7891
          %8053 = vmatmul.mubr.f32.gmra.mrb[0].mxu0 %v7890
          %v8054 = vpop.f32.mrb[0].mxu0
          %v8055 = vadd.f32 %v7941, %v8054
          %v8056 = vpop.f32.mrb[0].mxu0
          %8057 = vmatprep.mubr.f32.mxu0 %v7893
          %8058 = vmatmul.mubr.f32.gmra.mrb[0].mxu0 %v7892
          %v8059 = vpop.f32.mrb[0].mxu0
          %v8060 = vadd.f32 %v7941, %v8059
          %v8061 = vpop.f32.mrb[0].mxu0
          %8062 = vmatprep.mubr.f32.mxu0 %v7895
          %8063 = vmatmul.mubr.f32.gmra.mrb[0].mxu0 %v7894
          %v8064 = vpop.f32.mrb[0].mxu0
          %v8065 = vadd.f32 %v7941, %v8064
          %v8066 = vpop.f32.mrb[0].mxu0
          %8067 = vmatprep.mubr.f32.mxu0 %v7897
          %8068 = vmatmul.mubr.f32.gmra.mrb[0].mxu0 %v7896
          %v8069 = vpop.f32.mrb[0].mxu0
          %v8070 = vadd.f32 %v7941, %v8069
          %v8071 = vpop.f32.mrb[0].mxu0
          %8072 = vmatprep.mubr.f32.mxu0 %v7899
          %8073 = vmatmul.mubr.f32.gmra.mrb[0].mxu0 %v7898
          %v8074 = vpop.f32.mrb[0].mxu0
          %v8075 = vadd.f32 %v7941, %v8074
          %v8076 = vpop.f32.mrb[0].mxu0
          %8077 = vmatprep.mubr.f32.mxu0 %v7901
          %8078 = vmatmul.mubr.f32.gmra.mrb[0].mxu0 %v7900
          %v8079 = vpop.f32.mrb[0].mxu0
          %v8080 = vadd.f32 %v7941, %v8079
          %v8081 = vpop.f32.mrb[0].mxu0
          %8082 = vmatprep.mubr.f32.mxu0 %v7903
          %8083 = vmatmul.mubr.f32.gmra.mrb[0].mxu0 %v7902
          %v8084 = vpop.f32.mrb[0].mxu0
          %v8085 = vadd.f32 %v7941, %v8084
          %v8086 = vpop.f32.mrb[0].mxu0
          %8087 = vdwg.mxu0
          %8088 = vst [vmem:[%s565 + $0x80] sm:$0xff] %v8010
          %8089 = vst [vmem:[%s565 + $0x88] sm:$0xff] %v8015
          %8090 = vst [vmem:[%s565 + $0x90] sm:$0xff] %v8020
          %8091 = vst [vmem:[%s565 + $0x98] sm:$0xff] %v8025
          %8092 = vst [vmem:[%s565 + $0xa0] sm:$0xff] %v8030
          %8093 = vst [vmem:[%s565 + $0xa8] sm:$0xff] %v8035
          %8094 = vst [vmem:[%s565 + $0xb0] sm:$0xff] %v8040
          %8095 = vst [vmem:[%s565 + $0xb8] sm:$0xff] %v8045
          %8096 = vst [vmem:[%s565 + $0xc0] sm:$0xff] %v8050
          %8097 = vst [vmem:[%s565 + $0xc8] sm:$0xff] %v8055
          %8098 = vst [vmem:[%s565 + $0xd0] sm:$0xff] %v8060
          %8099 = vst [vmem:[%s565 + $0xd8] sm:$0xff] %v8065
          %8100 = vst [vmem:[%s565 + $0xe0] sm:$0xff] %v8070
          %8101 = vst [vmem:[%s565 + $0xe8] sm:$0xff] %v8075
          %8102 = vst [vmem:[%s565 + $0xf0] sm:$0xff] %v8080
          %8103 = vst [vmem:[%s565 + $0xf8] sm:$0xff] %v8085
        $region84: #{_lambda_.1} parent=55 // pred_fallthru
          _
        %p8104 = scmp.lt.s32.totalorder %s31, 1
        %s8105 = scalar_select %p8104, %s31, 1
        %s8106 = smul.addr %s8105, 32
        %s8107 = smul.addr %s8106, 8
        %s8108 = scalar_lea.vmem %s9, %s8107
        // Predicated region
        $region85: #{_lambda_.1} parent=55 // pred_check
          %p8109 = pneg %p285
        $region86: #{_lambda_.1} parent=55 // pred_check_branch
          %8111 = sbr.rel (%p8109) target = $region88
        $region87: #{_lambda_.1} parent=55 // pred_region
          _
        $region88: #{_lambda_.1} parent=55 // pred_fallthru
          _
      $region56: #{_lambda_.1} parent=5 // pred_fallthru
        _
      %p8112 = scmp.le.s32.totalorder 2, %s22
      // Predicated region
      $region89: #{_lambda_.1} parent=5 // pred_check
        %p8113 = pneg %p8112
      $region90: #{_lambda_.1} parent=5 // pred_check_branch
        %8115 = sbr.rel (%p8113) target = $region92
      $region91: #{_lambda_.1} parent=5 // pred_region
        %s8116 = ssub.s32 %s22, 2
        // Predicated region
        $region93: #{_lambda_.1} parent=91 // pred_check
          %p8117 = pneg %p291
        $region94: #{_lambda_.1} parent=91 // pred_check_branch
          %8119 = sbr.rel (%p8117) target = $region96
        $region95: #{_lambda_.1} parent=91 // pred_region
          %p8120 = scmp.lt.s32.totalorder %s33, 1
          %s8121 = scalar_select %p8120, %s33, 1
          %s8122 = smul.addr %s8121, 32
          %s8123 = smul.addr %s8122, 8
          %s8124 = scalar_lea.vmem %s9, %s8123
        $region96: #{_lambda_.1} parent=91 // pred_fallthru
          _
      $region92: #{_lambda_.1} parent=5 // pred_fallthru
        _
    $region6: #{_lambda_.1} parent=1 // loop_footer
      %s26 = sadd.s32 1, %s22
    $region7: #{_lambda_.1} parent=1 // loop_footer_branch
      %21 = sbr.rel target = $region3
    $region8: #{_lambda_.1} parent=1 // loop_exit
      _
    %8125 = vsyncpa [#allocation5], 1
    %s8126 = scalar_lea.sflag [#allocation5], 1
    %8127 = vsyncpa %s8126, 1
    %8128 = vsyncpa [#allocation7], 1
    %s8129 = scalar_lea.sflag [#allocation7], 1
    %8130 = vsyncpa %s8129, 1
    %8131 = vsyncpa [#allocation10], 1

</llo_original>
